<compile_context>
chip_gen: v7x
topology: tpu7x:2x2x1
jax: 0.10.0
libtpu: 0.0.40
codegen_flags: <defaults>
</compile_context>

<pallas_src>
import functools

import jax
import jax.numpy as jnp
from jax import lax
from jax.experimental import pallas as pl
from jax.experimental.pallas import tpu as pltpu

EPS = 1e-5
SLOPE = 0.05


def _round_up(x, m):
    return ((x + m - 1) // m) * m


def _upconv_fused_kernel(x_ref, w1_ref, w2_ref, w3_ref, mask_ref, o_ref,
                         xext_ref, pmat_ref, *, D, H, W, halo_al, cin_pad):
    """All three conv+IN+LeakyReLU layers for one batch element.

    x_ref    : (1, C0, Ppad_al)            f32   flat zero-padded input volume
    w*_ref   : (Cout_i, 27*cin_pad)        bf16  weights, col = t*cin_pad + ci,
                                                 t = kd*9 + kh*3 + kw (zero-padded ci)
    mask_ref : (1, Ppad_al)                f32   1.0 on interior voxels, 0.0 on halo
                                                 voxels and on lane padding
    o_ref    : (1, Cout_last, Ppad_al)     f32   final activation (halo zeroed)
    xext_ref : (cin_pad, Ppad_al+2*halo_al) bf16 VMEM scratch with zero margins
    pmat_ref : (27*cin_pad, Ppad_al)       bf16  VMEM im2col scratch
    """
    s_hw = (H + 2) * (W + 2)
    s_w = W + 2
    ppad_al = pmat_ref.shape[1]

    # Zero only the two lane-aligned halo margins (the interior is fully rewritten
    # every layer).  Done every grid step -> correct regardless of how a "parallel"
    # batch axis is partitioned across TensorCores.
    xext_ref[:, :halo_al] = jnp.zeros((cin_pad, halo_al), jnp.bfloat16)
    xext_ref[:, halo_al + ppad_al:] = jnp.zeros((cin_pad, halo_al), jnp.bfloat16)

    mask = mask_ref[...]                                  # (1, Ppad_al) f32
    inv_m = 1.0 / float(D * H * W)

    def layer(act, w_ref):
        # act: (cin, Ppad_al) f32/bf16 value; halo voxels & padded lanes are zero.
        cin = act.shape[0]
        xext_ref[0:cin, halo_al:halo_al + ppad_al] = act.astype(jnp.bfloat16)
        if cin < cin_pad:
            xext_ref[cin:cin_pad, halo_al:halo_al + ppad_al] = jnp.zeros(
                (cin_pad - cin, ppad_al), jnp.bfloat16)

        # im2col: tap t is the input shifted by its flat offset; every copy is a
        # full (16, Ppad_al) tile-aligned block.
        t = 0
        for kd in range(3):
            for kh in range(3):
                for kw in range(3):
                    off = (kd - 1) * s_hw + (kh - 1) * s_w + (kw - 1)
                    start = halo_al + off
                    pmat_ref[t * cin_pad:(t + 1) * cin_pad, :] = \
                        xext_ref[:, start:start + ppad_al]
                    t += 1

        # Single fused-K MXU matmul: bf16 operands, f32 accumulation.
        y = jnp.dot(w_ref[...], pmat_ref[...],
                    preferred_element_type=jnp.float32)   # (Cout, Ppad_al) f32
        # Conv bias intentionally omitted: InstanceNorm(affine=False) cancels it.

        # One-pass InstanceNorm statistics over interior voxels (mask is 0/1).
        ym = y * mask
        s1 = jnp.sum(ym, axis=-1, keepdims=True)
        s2 = jnp.sum(ym * ym, axis=-1, keepdims=True)
        mean = s1 * inv_m
        var = s2 * inv_m - mean * mean
        z = (y - mean) * lax.rsqrt(var + EPS)

        z = jnp.where(z >= 0, z, SLOPE * z)               # LeakyReLU(0.05)
        # Re-zero halo voxels and padded lanes: load-bearing, this is what gives the
        # next layer's conv its zero-padding (and keeps stats clean).
        return z * mask

    z = layer(x_ref[0], w1_ref)
    z = layer(z, w2_ref)
    z = layer(z, w3_ref)
    o_ref[0] = z


def upconv_block(volume_ncdhw, params):
    """Matches UpConvBlock.forward in eval mode. Input/output are NCDHW f32."""
    N, C0, D, H, W = volume_ncdhw.shape
    Dp, Hp, Wp = D + 2, H + 2, W + 2
    Ppad = Dp * Hp * Wp
    Ppad_al = _round_up(Ppad, 128)
    halo = Hp * Wp + Wp + 1                      # max |flat tap offset|
    halo_al = _round_up(halo, 128)

    cins = [w.shape[1] for w, _b in params]
    couts = [w.shape[0] for w, _b in params]
    assert len(params) == 3, "UpConvBlock has exactly three conv layers"
    cin_pad = max(_round_up(c, 16) for c in cins)   # bf16 sublane-tile height

    # One-time zero pad of the raw input; channels-first flat layout, lane-padded.
    xp = jnp.pad(volume_ncdhw, ((0, 0), (0, 0), (1, 1), (1, 1), (1, 1)))
    xp = xp.reshape(N, C0, Ppad)
    xp = jnp.pad(xp, ((0, 0), (0, 0), (0, Ppad_al - Ppad)))

    # Interior mask (1.0 inside, 0.0 on halo voxels and lane padding); fetched once
    # (constant index_map) and kept resident across the whole grid.
    m = jnp.zeros((Dp, Hp, Wp), jnp.float32).at[1:-1, 1:-1, 1:-1].set(1.0)
    mask = jnp.pad(m.reshape(1, Ppad), ((0, 0), (0, Ppad_al - Ppad)))

    # Weight slabs: (Cout, 27*cin_pad) bf16, tap-major, ci zero-padded to cin_pad.
    wmats = []
    for w, _b in params:        # bias unused: cancelled exactly by InstanceNorm
        cout, cin = w.shape[0], w.shape[1]
        wm = jnp.transpose(w, (0, 2, 3, 4, 1)).reshape(cout, 27, cin)
        wm = jnp.pad(wm, ((0, 0), (0, 0), (0, cin_pad - cin)))
        wmats.append(wm.reshape(cout, 27 * cin_pad).astype(jnp.bfloat16))

    kernel = functools.partial(_upconv_fused_kernel, D=D, H=H, W=W,
                               halo_al=halo_al, cin_pad=cin_pad)

    out = pl.pallas_call(
        kernel,
        out_shape=jax.ShapeDtypeStruct((N, couts[-1], Ppad_al), jnp.float32),
        grid_spec=pltpu.PrefetchScalarGridSpec(
            num_scalar_prefetch=0,
            grid=(N,),
            in_specs=[
                pl.BlockSpec((1, C0, Ppad_al), lambda n: (n, 0, 0)),
                pl.BlockSpec((couts[0], 27 * cin_pad), lambda n: (0, 0)),
                pl.BlockSpec((couts[1], 27 * cin_pad), lambda n: (0, 0)),
                pl.BlockSpec((couts[2], 27 * cin_pad), lambda n: (0, 0)),
                pl.BlockSpec((1, Ppad_al), lambda n: (0, 0)),
            ],
            out_specs=pl.BlockSpec((1, couts[-1], Ppad_al), lambda n: (n, 0, 0)),
            scratch_shapes=[
                pltpu.VMEM((cin_pad, Ppad_al + 2 * halo_al), jnp.bfloat16),
                pltpu.VMEM((27 * cin_pad, Ppad_al), jnp.bfloat16),
            ],
        ),
        compiler_params=pltpu.CompilerParams(
            dimension_semantics=("parallel",)),
    )(xp, wmats[0], wmats[1], wmats[2], mask)

    y = out[:, :, :Ppad].reshape(N, couts[-1], Dp, Hp, Wp)[:, :, 1:-1, 1:-1, 1:-1]
    return y


def init_upconv_params(key, in_chans, out_chans):
    """Deterministic synthetic parameters, PyTorch Conv3d weight layout (O,I,3,3,3)."""
    mid = in_chans // 2
    chans = [(in_chans, mid), (mid, mid), (mid, out_chans)]
    params = []
    for i, (cin, cout) in enumerate(chans):
        kw_, kb_ = jax.random.split(jax.random.fold_in(key, i))
        bound = 1.0 / (cin * 27) ** 0.5          # fan_in = Cin * 3*3*3
        w = jax.random.uniform(kw_, (cout, cin, 3, 3, 3), jnp.float32, -bound, bound)
        b = jax.random.uniform(kb_, (cout,), jnp.float32, -bound, bound)
        params.append((w, b))
    return params


# ---------------------------------------------------------------------------
# Pure-JAX f32 reference (includes the conv bias, which InstanceNorm cancels).
# ---------------------------------------------------------------------------
def _ref_block(volume_ncdhw, params):
    y = volume_ncdhw
    for w, b in params:
        y = lax.conv_general_dilated(
            y, w, window_strides=(1, 1, 1),
            padding=((1, 1), (1, 1), (1, 1)),
            dimension_numbers=("NCDHW", "OIDHW", "NCDHW"),
            precision=lax.Precision.HIGHEST)
        y = y + b[None, :, None, None, None]
        mean = jnp.mean(y, axis=(2, 3, 4), keepdims=True)
        var = jnp.mean((y - mean) ** 2, axis=(2, 3, 4), keepdims=True)
        y = (y - mean) * lax.rsqrt(var + EPS)
        y = jnp.where(y >= 0, y, SLOPE * y)
    return y


if __name__ == "__main__":
    key = jax.random.PRNGKey(0)
    k_x, k_p = jax.random.split(key)

    N, in_chans, out_chans = 2, 4, 4
    D = H = W = 8
    drop_prob = 0.1  # Dropout3d is identity in eval mode

    volume = jax.random.normal(k_x, (N, in_chans, D, H, W), jnp.float32)
    params = init_upconv_params(k_p, in_chans, out_chans)

    out = jax.block_until_ready(jax.jit(upconv_block)(volume, params))
    assert out.shape == (N, out_chans, D, H, W), out.shape

    ref = jax.block_until_ready(_ref_block(volume, params))
    # bf16 MXU operands/weights across three normalized layers vs. the f32/HIGHEST
    # reference; inter-layer activations are now f32 in-VMEM so the error is smaller
    # than before, but the tolerance is kept conservative.
    max_err = float(jnp.max(jnp.abs(out - ref)))
    assert jnp.allclose(out, ref, atol=1e-1, rtol=1e-1), max_err

    print("KERNEL_OK")
</pallas_src>

<mosaic_0001>
module attributes {stable_mosaic.version = 11 : i64} {
  func.func @_upconv_fused_kernel(%arg0: i32, %arg1: memref<1x4x1024xf32, #tpu.memory_space<vmem>>, %arg2: memref<2x432xbf16, #tpu.memory_space<vmem>>, %arg3: memref<2x432xbf16, #tpu.memory_space<vmem>>, %arg4: memref<4x432xbf16, #tpu.memory_space<vmem>>, %arg5: memref<1x1024xf32, #tpu.memory_space<vmem>>, %arg6: memref<1x4x1024xf32, #tpu.memory_space<vmem>>, %arg7: memref<16x1280xbf16, #tpu.memory_space<vmem>>, %arg8: memref<432x1024xbf16, #tpu.memory_space<vmem>>) attributes {dimension_semantics = [#tpu.dimension_semantics<parallel>], iteration_bounds = array<i64: 2>, scalar_prefetch = 0 : i64, scratch_operands = 2 : i64, tpu.core_type = #tpu.core_type<tc>, window_params = [{transform_indices = @transform_0, window_bounds = array<i64: 1, 4, 1024>}, {pipeline_mode = #tpu.pipeline_mode<synchronous>, transform_indices = @transform_1, window_bounds = array<i64: 2, 432>}, {pipeline_mode = #tpu.pipeline_mode<synchronous>, transform_indices = @transform_2, window_bounds = array<i64: 2, 432>}, {pipeline_mode = #tpu.pipeline_mode<synchronous>, transform_indices = @transform_3, window_bounds = array<i64: 4, 432>}, {pipeline_mode = #tpu.pipeline_mode<synchronous>, transform_indices = @transform_4, window_bounds = array<i64: 1, 1024>}, {transform_indices = @transform_5, window_bounds = array<i64: 1, 4, 1024>}]} {
    %cst = arith.constant 0.000000e+00 : bf16
    %0 = vector.broadcast %cst : bf16 to vector<16x128xbf16>
    %c0 = arith.constant 0 : index
    %c0_0 = arith.constant 0 : index
    %1 = vector.load %arg7[%c0, %c0_0] : memref<16x1280xbf16, #tpu.memory_space<vmem>>, vector<16x128xbf16>
    tpu.vector_store %arg7[%c0, %c0_0], %0 {strides = array<i32>} : memref<16x1280xbf16, #tpu.memory_space<vmem>>, vector<16x128xbf16>,
    %cst_1 = arith.constant 0.000000e+00 : bf16
    %2 = vector.broadcast %cst_1 : bf16 to vector<16x128xbf16>
    %c0_2 = arith.constant 0 : index
    %c1152 = arith.constant 1152 : index
    %3 = vector.load %arg7[%c0_2, %c1152] : memref<16x1280xbf16, #tpu.memory_space<vmem>>, vector<16x128xbf16>
    tpu.vector_store %arg7[%c0_2, %c1152], %2 {strides = array<i32>} : memref<16x1280xbf16, #tpu.memory_space<vmem>>, vector<16x128xbf16>,
    %c0_3 = arith.constant 0 : index
    %c0_4 = arith.constant 0 : index
    %4 = vector.load %arg5[%c0_3, %c0_4] : memref<1x1024xf32, #tpu.memory_space<vmem>>, vector<1x1024xf32>
    %c0_5 = arith.constant 0 : index
    %c0_6 = arith.constant 0 : index
    %c0_7 = arith.constant 0 : index
    %5 = vector.load %arg1[%c0_5, %c0_6, %c0_7] : memref<1x4x1024xf32, #tpu.memory_space<vmem>>, vector<1x4x1024xf32>
    %6 = vector.shape_cast %5 : vector<1x4x1024xf32> to vector<4x1024xf32>
    %7 = arith.truncf %6 : vector<4x1024xf32> to vector<4x1024xbf16>
    %c0_8 = arith.constant 0 : index
    %c128 = arith.constant 128 : index
    %8 = vector.load %arg7[%c0_8, %c128] : memref<16x1280xbf16, #tpu.memory_space<vmem>>, vector<4x1024xbf16>
    tpu.vector_store %arg7[%c0_8, %c128], %7 {strides = array<i32>} : memref<16x1280xbf16, #tpu.memory_space<vmem>>, vector<4x1024xbf16>,
    %cst_9 = arith.constant 0.000000e+00 : bf16
    %9 = vector.broadcast %cst_9 : bf16 to vector<12x1024xbf16>
    %c4 = arith.constant 4 : index
    %c128_10 = arith.constant 128 : index
    %10 = vector.load %arg7[%c4, %c128_10] : memref<16x1280xbf16, #tpu.memory_space<vmem>>, vector<12x1024xbf16>
    tpu.vector_store %arg7[%c4, %c128_10], %9 {strides = array<i32>} : memref<16x1280xbf16, #tpu.memory_space<vmem>>, vector<12x1024xbf16>,
    %c0_11 = arith.constant 0 : index
    %c17 = arith.constant 17 : index
    %11 = vector.load %arg7[%c0_11, %c17] : memref<16x1280xbf16, #tpu.memory_space<vmem>>, vector<16x1024xbf16>
    %c0_12 = arith.constant 0 : index
    %c0_13 = arith.constant 0 : index
    %12 = vector.load %arg8[%c0_12, %c0_13] : memref<432x1024xbf16, #tpu.memory_space<vmem>>, vector<16x1024xbf16>
    tpu.vector_store %arg8[%c0_12, %c0_13], %11 {strides = array<i32>} : memref<432x1024xbf16, #tpu.memory_space<vmem>>, vector<16x1024xbf16>,
    %c0_14 = arith.constant 0 : index
    %c18 = arith.constant 18 : index
    %13 = vector.load %arg7[%c0_14, %c18] : memref<16x1280xbf16, #tpu.memory_space<vmem>>, vector<16x1024xbf16>
    %c16 = arith.constant 16 : index
    %c0_15 = arith.constant 0 : index
    %14 = vector.load %arg8[%c16, %c0_15] : memref<432x1024xbf16, #tpu.memory_space<vmem>>, vector<16x1024xbf16>
    tpu.vector_store %arg8[%c16, %c0_15], %13 {strides = array<i32>} : memref<432x1024xbf16, #tpu.memory_space<vmem>>, vector<16x1024xbf16>,
    %c0_16 = arith.constant 0 : index
    %c19 = arith.constant 19 : index
    %15 = vector.load %arg7[%c0_16, %c19] : memref<16x1280xbf16, #tpu.memory_space<vmem>>, vector<16x1024xbf16>
    %c32 = arith.constant 32 : index
    %c0_17 = arith.constant 0 : index
    %16 = vector.load %arg8[%c32, %c0_17] : memref<432x1024xbf16, #tpu.memory_space<vmem>>, vector<16x1024xbf16>
    tpu.vector_store %arg8[%c32, %c0_17], %15 {strides = array<i32>} : memref<432x1024xbf16, #tpu.memory_space<vmem>>, vector<16x1024xbf16>,
    %c0_18 = arith.constant 0 : index
    %c27 = arith.constant 27 : index
    %17 = vector.load %arg7[%c0_18, %c27] : memref<16x1280xbf16, #tpu.memory_space<vmem>>, vector<16x1024xbf16>
    %c48 = arith.constant 48 : index
    %c0_19 = arith.constant 0 : index
    %18 = vector.load %arg8[%c48, %c0_19] : memref<432x1024xbf16, #tpu.memory_space<vmem>>, vector<16x1024xbf16>
    tpu.vector_store %arg8[%c48, %c0_19], %17 {strides = array<i32>} : memref<432x1024xbf16, #tpu.memory_space<vmem>>, vector<16x1024xbf16>,
    %c0_20 = arith.constant 0 : index
    %c28 = arith.constant 28 : index
    %19 = vector.load %arg7[%c0_20, %c28] : memref<16x1280xbf16, #tpu.memory_space<vmem>>, vector<16x1024xbf16>
    %c64 = arith.constant 64 : index
    %c0_21 = arith.constant 0 : index
    %20 = vector.load %arg8[%c64, %c0_21] : memref<432x1024xbf16, #tpu.memory_space<vmem>>, vector<16x1024xbf16>
    tpu.vector_store %arg8[%c64, %c0_21], %19 {strides = array<i32>} : memref<432x1024xbf16, #tpu.memory_space<vmem>>, vector<16x1024xbf16>,
    %c0_22 = arith.constant 0 : index
    %c29 = arith.constant 29 : index
    %21 = vector.load %arg7[%c0_22, %c29] : memref<16x1280xbf16, #tpu.memory_space<vmem>>, vector<16x1024xbf16>
    %c80 = arith.constant 80 : index
    %c0_23 = arith.constant 0 : index
    %22 = vector.load %arg8[%c80, %c0_23] : memref<432x1024xbf16, #tpu.memory_space<vmem>>, vector<16x1024xbf16>
    tpu.vector_store %arg8[%c80, %c0_23], %21 {strides = array<i32>} : memref<432x1024xbf16, #tpu.memory_space<vmem>>, vector<16x1024xbf16>,
    %c0_24 = arith.constant 0 : index
    %c37 = arith.constant 37 : index
    %23 = vector.load %arg7[%c0_24, %c37] : memref<16x1280xbf16, #tpu.memory_space<vmem>>, vector<16x1024xbf16>
    %c96 = arith.constant 96 : index
    %c0_25 = arith.constant 0 : index
    %24 = vector.load %arg8[%c96, %c0_25] : memref<432x1024xbf16, #tpu.memory_space<vmem>>, vector<16x1024xbf16>
    tpu.vector_store %arg8[%c96, %c0_25], %23 {strides = array<i32>} : memref<432x1024xbf16, #tpu.memory_space<vmem>>, vector<16x1024xbf16>,
    %c0_26 = arith.constant 0 : index
    %c38 = arith.constant 38 : index
    %25 = vector.load %arg7[%c0_26, %c38] : memref<16x1280xbf16, #tpu.memory_space<vmem>>, vector<16x1024xbf16>
    %c112 = arith.constant 112 : index
    %c0_27 = arith.constant 0 : index
    %26 = vector.load %arg8[%c112, %c0_27] : memref<432x1024xbf16, #tpu.memory_space<vmem>>, vector<16x1024xbf16>
    tpu.vector_store %arg8[%c112, %c0_27], %25 {strides = array<i32>} : memref<432x1024xbf16, #tpu.memory_space<vmem>>, vector<16x1024xbf16>,
    %c0_28 = arith.constant 0 : index
    %c39 = arith.constant 39 : index
    %27 = vector.load %arg7[%c0_28, %c39] : memref<16x1280xbf16, #tpu.memory_space<vmem>>, vector<16x1024xbf16>
    %c128_29 = arith.constant 128 : index
    %c0_30 = arith.constant 0 : index
    %28 = vector.load %arg8[%c128_29, %c0_30] : memref<432x1024xbf16, #tpu.memory_space<vmem>>, vector<16x1024xbf16>
    tpu.vector_store %arg8[%c128_29, %c0_30], %27 {strides = array<i32>} : memref<432x1024xbf16, #tpu.memory_space<vmem>>, vector<16x1024xbf16>,
    %c0_31 = arith.constant 0 : index
    %c117 = arith.constant 117 : index
    %29 = vector.load %arg7[%c0_31, %c117] : memref<16x1280xbf16, #tpu.memory_space<vmem>>, vector<16x1024xbf16>
    %c144 = arith.constant 144 : index
    %c0_32 = arith.constant 0 : index
    %30 = vector.load %arg8[%c144, %c0_32] : memref<432x1024xbf16, #tpu.memory_space<vmem>>, vector<16x1024xbf16>
    tpu.vector_store %arg8[%c144, %c0_32], %29 {strides = array<i32>} : memref<432x1024xbf16, #tpu.memory_space<vmem>>, vector<16x1024xbf16>,
    %c0_33 = arith.constant 0 : index
    %c118 = arith.constant 118 : index
    %31 = vector.load %arg7[%c0_33, %c118] : memref<16x1280xbf16, #tpu.memory_space<vmem>>, vector<16x1024xbf16>
    %c160 = arith.constant 160 : index
    %c0_34 = arith.constant 0 : index
    %32 = vector.load %arg8[%c160, %c0_34] : memref<432x1024xbf16, #tpu.memory_space<vmem>>, vector<16x1024xbf16>
    tpu.vector_store %arg8[%c160, %c0_34], %31 {strides = array<i32>} : memref<432x1024xbf16, #tpu.memory_space<vmem>>, vector<16x1024xbf16>,
    %c0_35 = arith.constant 0 : index
    %c119 = arith.constant 119 : index
    %33 = vector.load %arg7[%c0_35, %c119] : memref<16x1280xbf16, #tpu.memory_space<vmem>>, vector<16x1024xbf16>
    %c176 = arith.constant 176 : index
    %c0_36 = arith.constant 0 : index
    %34 = vector.load %arg8[%c176, %c0_36] : memref<432x1024xbf16, #tpu.memory_space<vmem>>, vector<16x1024xbf16>
    tpu.vector_store %arg8[%c176, %c0_36], %33 {strides = array<i32>} : memref<432x1024xbf16, #tpu.memory_space<vmem>>, vector<16x1024xbf16>,
    %c0_37 = arith.constant 0 : index
    %c127 = arith.constant 127 : index
    %35 = vector.load %arg7[%c0_37, %c127] : memref<16x1280xbf16, #tpu.memory_space<vmem>>, vector<16x1024xbf16>
    %c192 = arith.constant 192 : index
    %c0_38 = arith.constant 0 : index
    %36 = vector.load %arg8[%c192, %c0_38] : memref<432x1024xbf16, #tpu.memory_space<vmem>>, vector<16x1024xbf16>
    tpu.vector_store %arg8[%c192, %c0_38], %35 {strides = array<i32>} : memref<432x1024xbf16, #tpu.memory_space<vmem>>, vector<16x1024xbf16>,
    %c0_39 = arith.constant 0 : index
    %c128_40 = arith.constant 128 : index
    %37 = vector.load %arg7[%c0_39, %c128_40] : memref<16x1280xbf16, #tpu.memory_space<vmem>>, vector<16x1024xbf16>
    %c208 = arith.constant 208 : index
    %c0_41 = arith.constant 0 : index
    %38 = vector.load %arg8[%c208, %c0_41] : memref<432x1024xbf16, #tpu.memory_space<vmem>>, vector<16x1024xbf16>
    tpu.vector_store %arg8[%c208, %c0_41], %37 {strides = array<i32>} : memref<432x1024xbf16, #tpu.memory_space<vmem>>, vector<16x1024xbf16>,
    %c0_42 = arith.constant 0 : index
    %c129 = arith.constant 129 : index
    %39 = vector.load %arg7[%c0_42, %c129] : memref<16x1280xbf16, #tpu.memory_space<vmem>>, vector<16x1024xbf16>
    %c224 = arith.constant 224 : index
    %c0_43 = arith.constant 0 : index
    %40 = vector.load %arg8[%c224, %c0_43] : memref<432x1024xbf16, #tpu.memory_space<vmem>>, vector<16x1024xbf16>
    tpu.vector_store %arg8[%c224, %c0_43], %39 {strides = array<i32>} : memref<432x1024xbf16, #tpu.memory_space<vmem>>, vector<16x1024xbf16>,
    %c0_44 = arith.constant 0 : index
    %c137 = arith.constant 137 : index
    %41 = vector.load %arg7[%c0_44, %c137] : memref<16x1280xbf16, #tpu.memory_space<vmem>>, vector<16x1024xbf16>
    %c240 = arith.constant 240 : index
    %c0_45 = arith.constant 0 : index
    %42 = vector.load %arg8[%c240, %c0_45] : memref<432x1024xbf16, #tpu.memory_space<vmem>>, vector<16x1024xbf16>
    tpu.vector_store %arg8[%c240, %c0_45], %41 {strides = array<i32>} : memref<432x1024xbf16, #tpu.memory_space<vmem>>, vector<16x1024xbf16>,
    %c0_46 = arith.constant 0 : index
    %c138 = arith.constant 138 : index
    %43 = vector.load %arg7[%c0_46, %c138] : memref<16x1280xbf16, #tpu.memory_space<vmem>>, vector<16x1024xbf16>
    %c256 = arith.constant 256 : index
    %c0_47 = arith.constant 0 : index
    %44 = vector.load %arg8[%c256, %c0_47] : memref<432x1024xbf16, #tpu.memory_space<vmem>>, vector<16x1024xbf16>
    tpu.vector_store %arg8[%c256, %c0_47], %43 {strides = array<i32>} : memref<432x1024xbf16, #tpu.memory_space<vmem>>, vector<16x1024xbf16>,
    %c0_48 = arith.constant 0 : index
    %c139 = arith.constant 139 : index
    %45 = vector.load %arg7[%c0_48, %c139] : memref<16x1280xbf16, #tpu.memory_space<vmem>>, vector<16x1024xbf16>
    %c272 = arith.constant 272 : index
    %c0_49 = arith.constant 0 : index
    %46 = vector.load %arg8[%c272, %c0_49] : memref<432x1024xbf16, #tpu.memory_space<vmem>>, vector<16x1024xbf16>
    tpu.vector_store %arg8[%c272, %c0_49], %45 {strides = array<i32>} : memref<432x1024xbf16, #tpu.memory_space<vmem>>, vector<16x1024xbf16>,
    %c0_50 = arith.constant 0 : index
    %c217 = arith.constant 217 : index
    %47 = vector.load %arg7[%c0_50, %c217] : memref<16x1280xbf16, #tpu.memory_space<vmem>>, vector<16x1024xbf16>
    %c288 = arith.constant 288 : index
    %c0_51 = arith.constant 0 : index
    %48 = vector.load %arg8[%c288, %c0_51] : memref<432x1024xbf16, #tpu.memory_space<vmem>>, vector<16x1024xbf16>
    tpu.vector_store %arg8[%c288, %c0_51], %47 {strides = array<i32>} : memref<432x1024xbf16, #tpu.memory_space<vmem>>, vector<16x1024xbf16>,
    %c0_52 = arith.constant 0 : index
    %c218 = arith.constant 218 : index
    %49 = vector.load %arg7[%c0_52, %c218] : memref<16x1280xbf16, #tpu.memory_space<vmem>>, vector<16x1024xbf16>
    %c304 = arith.constant 304 : index
    %c0_53 = arith.constant 0 : index
    %50 = vector.load %arg8[%c304, %c0_53] : memref<432x1024xbf16, #tpu.memory_space<vmem>>, vector<16x1024xbf16>
    tpu.vector_store %arg8[%c304, %c0_53], %49 {strides = array<i32>} : memref<432x1024xbf16, #tpu.memory_space<vmem>>, vector<16x1024xbf16>,
    %c0_54 = arith.constant 0 : index
    %c219 = arith.constant 219 : index
    %51 = vector.load %arg7[%c0_54, %c219] : memref<16x1280xbf16, #tpu.memory_space<vmem>>, vector<16x1024xbf16>
    %c320 = arith.constant 320 : index
    %c0_55 = arith.constant 0 : index
    %52 = vector.load %arg8[%c320, %c0_55] : memref<432x1024xbf16, #tpu.memory_space<vmem>>, vector<16x1024xbf16>
    tpu.vector_store %arg8[%c320, %c0_55], %51 {strides = array<i32>} : memref<432x1024xbf16, #tpu.memory_space<vmem>>, vector<16x1024xbf16>,
    %c0_56 = arith.constant 0 : index
    %c227 = arith.constant 227 : index
    %53 = vector.load %arg7[%c0_56, %c227] : memref<16x1280xbf16, #tpu.memory_space<vmem>>, vector<16x1024xbf16>
    %c336 = arith.constant 336 : index
    %c0_57 = arith.constant 0 : index
    %54 = vector.load %arg8[%c336, %c0_57] : memref<432x1024xbf16, #tpu.memory_space<vmem>>, vector<16x1024xbf16>
    tpu.vector_store %arg8[%c336, %c0_57], %53 {strides = array<i32>} : memref<432x1024xbf16, #tpu.memory_space<vmem>>, vector<16x1024xbf16>,
    %c0_58 = arith.constant 0 : index
    %c228 = arith.constant 228 : index
    %55 = vector.load %arg7[%c0_58, %c228] : memref<16x1280xbf16, #tpu.memory_space<vmem>>, vector<16x1024xbf16>
    %c352 = arith.constant 352 : index
    %c0_59 = arith.constant 0 : index
    %56 = vector.load %arg8[%c352, %c0_59] : memref<432x1024xbf16, #tpu.memory_space<vmem>>, vector<16x1024xbf16>
    tpu.vector_store %arg8[%c352, %c0_59], %55 {strides = array<i32>} : memref<432x1024xbf16, #tpu.memory_space<vmem>>, vector<16x1024xbf16>,
    %c0_60 = arith.constant 0 : index
    %c229 = arith.constant 229 : index
    %57 = vector.load %arg7[%c0_60, %c229] : memref<16x1280xbf16, #tpu.memory_space<vmem>>, vector<16x1024xbf16>
    %c368 = arith.constant 368 : index
    %c0_61 = arith.constant 0 : index
    %58 = vector.load %arg8[%c368, %c0_61] : memref<432x1024xbf16, #tpu.memory_space<vmem>>, vector<16x1024xbf16>
    tpu.vector_store %arg8[%c368, %c0_61], %57 {strides = array<i32>} : memref<432x1024xbf16, #tpu.memory_space<vmem>>, vector<16x1024xbf16>,
    %c0_62 = arith.constant 0 : index
    %c237 = arith.constant 237 : index
    %59 = vector.load %arg7[%c0_62, %c237] : memref<16x1280xbf16, #tpu.memory_space<vmem>>, vector<16x1024xbf16>
    %c384 = arith.constant 384 : index
    %c0_63 = arith.constant 0 : index
    %60 = vector.load %arg8[%c384, %c0_63] : memref<432x1024xbf16, #tpu.memory_space<vmem>>, vector<16x1024xbf16>
    tpu.vector_store %arg8[%c384, %c0_63], %59 {strides = array<i32>} : memref<432x1024xbf16, #tpu.memory_space<vmem>>, vector<16x1024xbf16>,
    %c0_64 = arith.constant 0 : index
    %c238 = arith.constant 238 : index
    %61 = vector.load %arg7[%c0_64, %c238] : memref<16x1280xbf16, #tpu.memory_space<vmem>>, vector<16x1024xbf16>
    %c400 = arith.constant 400 : index
    %c0_65 = arith.constant 0 : index
    %62 = vector.load %arg8[%c400, %c0_65] : memref<432x1024xbf16, #tpu.memory_space<vmem>>, vector<16x1024xbf16>
    tpu.vector_store %arg8[%c400, %c0_65], %61 {strides = array<i32>} : memref<432x1024xbf16, #tpu.memory_space<vmem>>, vector<16x1024xbf16>,
    %c0_66 = arith.constant 0 : index
    %c239 = arith.constant 239 : index
    %63 = vector.load %arg7[%c0_66, %c239] : memref<16x1280xbf16, #tpu.memory_space<vmem>>, vector<16x1024xbf16>
    %c416 = arith.constant 416 : index
    %c0_67 = arith.constant 0 : index
    %64 = vector.load %arg8[%c416, %c0_67] : memref<432x1024xbf16, #tpu.memory_space<vmem>>, vector<16x1024xbf16>
    tpu.vector_store %arg8[%c416, %c0_67], %63 {strides = array<i32>} : memref<432x1024xbf16, #tpu.memory_space<vmem>>, vector<16x1024xbf16>,
    %c0_68 = arith.constant 0 : index
    %c0_69 = arith.constant 0 : index
    %65 = vector.load %arg2[%c0_68, %c0_69] : memref<2x432xbf16, #tpu.memory_space<vmem>>, vector<2x432xbf16>
    %c0_70 = arith.constant 0 : index
    %c0_71 = arith.constant 0 : index
    %66 = vector.load %arg8[%c0_70, %c0_71] : memref<432x1024xbf16, #tpu.memory_space<vmem>>, vector<432x1024xbf16>
    %cst_72 = arith.constant dense<0.000000e+00> : vector<2x1024xf32>
    %67 = tpu.matmul %65, %66, %cst_72 {dimension_numbers = #tpu.dot_dimension_numbers<[1], [0], [0], [1], [0, 0, 1, 1], [], []>} : vector<2x432xbf16>, vector<432x1024xbf16>, vector<2x1024xf32> -> vector<2x1024xf32>
    %68 = vector.broadcast %4 : vector<1x1024xf32> to vector<2x1024xf32>
    %69 = arith.mulf %67, %68 : vector<2x1024xf32>
    %cst_73 = arith.constant dense<0.000000e+00> : vector<2xf32>
    %70 = vector.multi_reduction <add>, %69, %cst_73 [1] : vector<2x1024xf32> to vector<2xf32>
    %71 = vector.shape_cast %70 : vector<2xf32> to vector<2x1xf32>
    %72 = arith.mulf %69, %69 : vector<2x1024xf32>
    %cst_74 = arith.constant dense<0.000000e+00> : vector<2xf32>
    %73 = vector.multi_reduction <add>, %72, %cst_74 [1] : vector<2x1024xf32> to vector<2xf32>
    %74 = vector.shape_cast %73 : vector<2xf32> to vector<2x1xf32>
    %cst_75 = arith.constant 0.001953125 : f32
    %75 = vector.broadcast %cst_75 : f32 to vector<2x1xf32>
    %76 = arith.mulf %71, %75 : vector<2x1xf32>
    %cst_76 = arith.constant 0.001953125 : f32
    %77 = vector.broadcast %cst_76 : f32 to vector<2x1xf32>
    %78 = arith.mulf %74, %77 : vector<2x1xf32>
    %79 = arith.mulf %76, %76 : vector<2x1xf32>
    %80 = arith.subf %78, %79 : vector<2x1xf32>
    %81 = vector.broadcast %76 : vector<2x1xf32> to vector<2x1024xf32>
    %82 = arith.subf %67, %81 : vector<2x1024xf32>
    %cst_77 = arith.constant 9.99999974E-6 : f32
    %83 = vector.broadcast %cst_77 : f32 to vector<2x1xf32>
    %84 = arith.addf %80, %83 : vector<2x1xf32>
    %85 = math.rsqrt %84 : vector<2x1xf32>
    %86 = vector.broadcast %85 : vector<2x1xf32> to vector<2x1024xf32>
    %87 = arith.mulf %82, %86 : vector<2x1024xf32>
    %cst_78 = arith.constant 0.000000e+00 : f32
    %88 = vector.broadcast %cst_78 : f32 to vector<2x1024xf32>
    %89 = arith.cmpf oge, %87, %88 : vector<2x1024xf32>
    %cst_79 = arith.constant 5.000000e-02 : f32
    %90 = vector.broadcast %cst_79 : f32 to vector<2x1024xf32>
    %91 = arith.mulf %90, %87 : vector<2x1024xf32>
    %92 = arith.select %89, %87, %91 : vector<2x1024xi1>, vector<2x1024xf32>
    %93 = vector.broadcast %4 : vector<1x1024xf32> to vector<2x1024xf32>
    %94 = arith.mulf %92, %93 : vector<2x1024xf32>
    %95 = arith.truncf %94 : vector<2x1024xf32> to vector<2x1024xbf16>
    %c0_80 = arith.constant 0 : index
    %c128_81 = arith.constant 128 : index
    %96 = vector.load %arg7[%c0_80, %c128_81] : memref<16x1280xbf16, #tpu.memory_space<vmem>>, vector<2x1024xbf16>
    tpu.vector_store %arg7[%c0_80, %c128_81], %95 {strides = array<i32>} : memref<16x1280xbf16, #tpu.memory_space<vmem>>, vector<2x1024xbf16>,
    %cst_82 = arith.constant 0.000000e+00 : bf16
    %97 = vector.broadcast %cst_82 : bf16 to vector<14x1024xbf16>
    %c2 = arith.constant 2 : index
    %c128_83 = arith.constant 128 : index
    %98 = vector.load %arg7[%c2, %c128_83] : memref<16x1280xbf16, #tpu.memory_space<vmem>>, vector<14x1024xbf16>
    tpu.vector_store %arg7[%c2, %c128_83], %97 {strides = array<i32>} : memref<16x1280xbf16, #tpu.memory_space<vmem>>, vector<14x1024xbf16>,
    %c0_84 = arith.constant 0 : index
    %c17_85 = arith.constant 17 : index
    %99 = vector.load %arg7[%c0_84, %c17_85] : memref<16x1280xbf16, #tpu.memory_space<vmem>>, vector<16x1024xbf16>
    %c0_86 = arith.constant 0 : index
    %c0_87 = arith.constant 0 : index
    %100 = vector.load %arg8[%c0_86, %c0_87] : memref<432x1024xbf16, #tpu.memory_space<vmem>>, vector<16x1024xbf16>
    tpu.vector_store %arg8[%c0_86, %c0_87], %99 {strides = array<i32>} : memref<432x1024xbf16, #tpu.memory_space<vmem>>, vector<16x1024xbf16>,
    %c0_88 = arith.constant 0 : index
    %c18_89 = arith.constant 18 : index
    %101 = vector.load %arg7[%c0_88, %c18_89] : memref<16x1280xbf16, #tpu.memory_space<vmem>>, vector<16x1024xbf16>
    %c16_90 = arith.constant 16 : index
    %c0_91 = arith.constant 0 : index
    %102 = vector.load %arg8[%c16_90, %c0_91] : memref<432x1024xbf16, #tpu.memory_space<vmem>>, vector<16x1024xbf16>
    tpu.vector_store %arg8[%c16_90, %c0_91], %101 {strides = array<i32>} : memref<432x1024xbf16, #tpu.memory_space<vmem>>, vector<16x1024xbf16>,
    %c0_92 = arith.constant 0 : index
    %c19_93 = arith.constant 19 : index
    %103 = vector.load %arg7[%c0_92, %c19_93] : memref<16x1280xbf16, #tpu.memory_space<vmem>>, vector<16x1024xbf16>
    %c32_94 = arith.constant 32 : index
    %c0_95 = arith.constant 0 : index
    %104 = vector.load %arg8[%c32_94, %c0_95] : memref<432x1024xbf16, #tpu.memory_space<vmem>>, vector<16x1024xbf16>
    tpu.vector_store %arg8[%c32_94, %c0_95], %103 {strides = array<i32>} : memref<432x1024xbf16, #tpu.memory_space<vmem>>, vector<16x1024xbf16>,
    %c0_96 = arith.constant 0 : index
    %c27_97 = arith.constant 27 : index
    %105 = vector.load %arg7[%c0_96, %c27_97] : memref<16x1280xbf16, #tpu.memory_space<vmem>>, vector<16x1024xbf16>
    %c48_98 = arith.constant 48 : index
    %c0_99 = arith.constant 0 : index
    %106 = vector.load %arg8[%c48_98, %c0_99] : memref<432x1024xbf16, #tpu.memory_space<vmem>>, vector<16x1024xbf16>
    tpu.vector_store %arg8[%c48_98, %c0_99], %105 {strides = array<i32>} : memref<432x1024xbf16, #tpu.memory_space<vmem>>, vector<16x1024xbf16>,
    %c0_100 = arith.constant 0 : index
    %c28_101 = arith.constant 28 : index
    %107 = vector.load %arg7[%c0_100, %c28_101] : memref<16x1280xbf16, #tpu.memory_space<vmem>>, vector<16x1024xbf16>
    %c64_102 = arith.constant 64 : index
    %c0_103 = arith.constant 0 : index
    %108 = vector.load %arg8[%c64_102, %c0_103] : memref<432x1024xbf16, #tpu.memory_space<vmem>>, vector<16x1024xbf16>
    tpu.vector_store %arg8[%c64_102, %c0_103], %107 {strides = array<i32>} : memref<432x1024xbf16, #tpu.memory_space<vmem>>, vector<16x1024xbf16>,
    %c0_104 = arith.constant 0 : index
    %c29_105 = arith.constant 29 : index
    %109 = vector.load %arg7[%c0_104, %c29_105] : memref<16x1280xbf16, #tpu.memory_space<vmem>>, vector<16x1024xbf16>
    %c80_106 = arith.constant 80 : index
    %c0_107 = arith.constant 0 : index
    %110 = vector.load %arg8[%c80_106, %c0_107] : memref<432x1024xbf16, #tpu.memory_space<vmem>>, vector<16x1024xbf16>
    tpu.vector_store %arg8[%c80_106, %c0_107], %109 {strides = array<i32>} : memref<432x1024xbf16, #tpu.memory_space<vmem>>, vector<16x1024xbf16>,
    %c0_108 = arith.constant 0 : index
    %c37_109 = arith.constant 37 : index
    %111 = vector.load %arg7[%c0_108, %c37_109] : memref<16x1280xbf16, #tpu.memory_space<vmem>>, vector<16x1024xbf16>
    %c96_110 = arith.constant 96 : index
    %c0_111 = arith.constant 0 : index
    %112 = vector.load %arg8[%c96_110, %c0_111] : memref<432x1024xbf16, #tpu.memory_space<vmem>>, vector<16x1024xbf16>
    tpu.vector_store %arg8[%c96_110, %c0_111], %111 {strides = array<i32>} : memref<432x1024xbf16, #tpu.memory_space<vmem>>, vector<16x1024xbf16>,
    %c0_112 = arith.constant 0 : index
    %c38_113 = arith.constant 38 : index
    %113 = vector.load %arg7[%c0_112, %c38_113] : memref<16x1280xbf16, #tpu.memory_space<vmem>>, vector<16x1024xbf16>
    %c112_114 = arith.constant 112 : index
    %c0_115 = arith.constant 0 : index
    %114 = vector.load %arg8[%c112_114, %c0_115] : memref<432x1024xbf16, #tpu.memory_space<vmem>>, vector<16x1024xbf16>
    tpu.vector_store %arg8[%c112_114, %c0_115], %113 {strides = array<i32>} : memref<432x1024xbf16, #tpu.memory_space<vmem>>, vector<16x1024xbf16>,
    %c0_116 = arith.constant 0 : index
    %c39_117 = arith.constant 39 : index
    %115 = vector.load %arg7[%c0_116, %c39_117] : memref<16x1280xbf16, #tpu.memory_space<vmem>>, vector<16x1024xbf16>
    %c128_118 = arith.constant 128 : index
    %c0_119 = arith.constant 0 : index
    %116 = vector.load %arg8[%c128_118, %c0_119] : memref<432x1024xbf16, #tpu.memory_space<vmem>>, vector<16x1024xbf16>
    tpu.vector_store %arg8[%c128_118, %c0_119], %115 {strides = array<i32>} : memref<432x1024xbf16, #tpu.memory_space<vmem>>, vector<16x1024xbf16>,
    %c0_120 = arith.constant 0 : index
    %c117_121 = arith.constant 117 : index
    %117 = vector.load %arg7[%c0_120, %c117_121] : memref<16x1280xbf16, #tpu.memory_space<vmem>>, vector<16x1024xbf16>
    %c144_122 = arith.constant 144 : index
    %c0_123 = arith.constant 0 : index
    %118 = vector.load %arg8[%c144_122, %c0_123] : memref<432x1024xbf16, #tpu.memory_space<vmem>>, vector<16x1024xbf16>
    tpu.vector_store %arg8[%c144_122, %c0_123], %117 {strides = array<i32>} : memref<432x1024xbf16, #tpu.memory_space<vmem>>, vector<16x1024xbf16>,
    %c0_124 = arith.constant 0 : index
    %c118_125 = arith.constant 118 : index
    %119 = vector.load %arg7[%c0_124, %c118_125] : memref<16x1280xbf16, #tpu.memory_space<vmem>>, vector<16x1024xbf16>
    %c160_126 = arith.constant 160 : index
    %c0_127 = arith.constant 0 : index
    %120 = vector.load %arg8[%c160_126, %c0_127] : memref<432x1024xbf16, #tpu.memory_space<vmem>>, vector<16x1024xbf16>
    tpu.vector_store %arg8[%c160_126, %c0_127], %119 {strides = array<i32>} : memref<432x1024xbf16, #tpu.memory_space<vmem>>, vector<16x1024xbf16>,
    %c0_128 = arith.constant 0 : index
    %c119_129 = arith.constant 119 : index
    %121 = vector.load %arg7[%c0_128, %c119_129] : memref<16x1280xbf16, #tpu.memory_space<vmem>>, vector<16x1024xbf16>
    %c176_130 = arith.constant 176 : index
    %c0_131 = arith.constant 0 : index
    %122 = vector.load %arg8[%c176_130, %c0_131] : memref<432x1024xbf16, #tpu.memory_space<vmem>>, vector<16x1024xbf16>
    tpu.vector_store %arg8[%c176_130, %c0_131], %121 {strides = array<i32>} : memref<432x1024xbf16, #tpu.memory_space<vmem>>, vector<16x1024xbf16>,
    %c0_132 = arith.constant 0 : index
    %c127_133 = arith.constant 127 : index
    %123 = vector.load %arg7[%c0_132, %c127_133] : memref<16x1280xbf16, #tpu.memory_space<vmem>>, vector<16x1024xbf16>
    %c192_134 = arith.constant 192 : index
    %c0_135 = arith.constant 0 : index
    %124 = vector.load %arg8[%c192_134, %c0_135] : memref<432x1024xbf16, #tpu.memory_space<vmem>>, vector<16x1024xbf16>
    tpu.vector_store %arg8[%c192_134, %c0_135], %123 {strides = array<i32>} : memref<432x1024xbf16, #tpu.memory_space<vmem>>, vector<16x1024xbf16>,
    %c0_136 = arith.constant 0 : index
    %c128_137 = arith.constant 128 : index
    %125 = vector.load %arg7[%c0_136, %c128_137] : memref<16x1280xbf16, #tpu.memory_space<vmem>>, vector<16x1024xbf16>
    %c208_138 = arith.constant 208 : index
    %c0_139 = arith.constant 0 : index
    %126 = vector.load %arg8[%c208_138, %c0_139] : memref<432x1024xbf16, #tpu.memory_space<vmem>>, vector<16x1024xbf16>
    tpu.vector_store %arg8[%c208_138, %c0_139], %125 {strides = array<i32>} : memref<432x1024xbf16, #tpu.memory_space<vmem>>, vector<16x1024xbf16>,
    %c0_140 = arith.constant 0 : index
    %c129_141 = arith.constant 129 : index
    %127 = vector.load %arg7[%c0_140, %c129_141] : memref<16x1280xbf16, #tpu.memory_space<vmem>>, vector<16x1024xbf16>
    %c224_142 = arith.constant 224 : index
    %c0_143 = arith.constant 0 : index
    %128 = vector.load %arg8[%c224_142, %c0_143] : memref<432x1024xbf16, #tpu.memory_space<vmem>>, vector<16x1024xbf16>
    tpu.vector_store %arg8[%c224_142, %c0_143], %127 {strides = array<i32>} : memref<432x1024xbf16, #tpu.memory_space<vmem>>, vector<16x1024xbf16>,
    %c0_144 = arith.constant 0 : index
    %c137_145 = arith.constant 137 : index
    %129 = vector.load %arg7[%c0_144, %c137_145] : memref<16x1280xbf16, #tpu.memory_space<vmem>>, vector<16x1024xbf16>
    %c240_146 = arith.constant 240 : index
    %c0_147 = arith.constant 0 : index
    %130 = vector.load %arg8[%c240_146, %c0_147] : memref<432x1024xbf16, #tpu.memory_space<vmem>>, vector<16x1024xbf16>
    tpu.vector_store %arg8[%c240_146, %c0_147], %129 {strides = array<i32>} : memref<432x1024xbf16, #tpu.memory_space<vmem>>, vector<16x1024xbf16>,
    %c0_148 = arith.constant 0 : index
    %c138_149 = arith.constant 138 : index
    %131 = vector.load %arg7[%c0_148, %c138_149] : memref<16x1280xbf16, #tpu.memory_space<vmem>>, vector<16x1024xbf16>
    %c256_150 = arith.constant 256 : index
    %c0_151 = arith.constant 0 : index
    %132 = vector.load %arg8[%c256_150, %c0_151] : memref<432x1024xbf16, #tpu.memory_space<vmem>>, vector<16x1024xbf16>
    tpu.vector_store %arg8[%c256_150, %c0_151], %131 {strides = array<i32>} : memref<432x1024xbf16, #tpu.memory_space<vmem>>, vector<16x1024xbf16>,
    %c0_152 = arith.constant 0 : index
    %c139_153 = arith.constant 139 : index
    %133 = vector.load %arg7[%c0_152, %c139_153] : memref<16x1280xbf16, #tpu.memory_space<vmem>>, vector<16x1024xbf16>
    %c272_154 = arith.constant 272 : index
    %c0_155 = arith.constant 0 : index
    %134 = vector.load %arg8[%c272_154, %c0_155] : memref<432x1024xbf16, #tpu.memory_space<vmem>>, vector<16x1024xbf16>
    tpu.vector_store %arg8[%c272_154, %c0_155], %133 {strides = array<i32>} : memref<432x1024xbf16, #tpu.memory_space<vmem>>, vector<16x1024xbf16>,
    %c0_156 = arith.constant 0 : index
    %c217_157 = arith.constant 217 : index
    %135 = vector.load %arg7[%c0_156, %c217_157] : memref<16x1280xbf16, #tpu.memory_space<vmem>>, vector<16x1024xbf16>
    %c288_158 = arith.constant 288 : index
    %c0_159 = arith.constant 0 : index
    %136 = vector.load %arg8[%c288_158, %c0_159] : memref<432x1024xbf16, #tpu.memory_space<vmem>>, vector<16x1024xbf16>
    tpu.vector_store %arg8[%c288_158, %c0_159], %135 {strides = array<i32>} : memref<432x1024xbf16, #tpu.memory_space<vmem>>, vector<16x1024xbf16>,
    %c0_160 = arith.constant 0 : index
    %c218_161 = arith.constant 218 : index
    %137 = vector.load %arg7[%c0_160, %c218_161] : memref<16x1280xbf16, #tpu.memory_space<vmem>>, vector<16x1024xbf16>
    %c304_162 = arith.constant 304 : index
    %c0_163 = arith.constant 0 : index
    %138 = vector.load %arg8[%c304_162, %c0_163] : memref<432x1024xbf16, #tpu.memory_space<vmem>>, vector<16x1024xbf16>
    tpu.vector_store %arg8[%c304_162, %c0_163], %137 {strides = array<i32>} : memref<432x1024xbf16, #tpu.memory_space<vmem>>, vector<16x1024xbf16>,
    %c0_164 = arith.constant 0 : index
    %c219_165 = arith.constant 219 : index
    %139 = vector.load %arg7[%c0_164, %c219_165] : memref<16x1280xbf16, #tpu.memory_space<vmem>>, vector<16x1024xbf16>
    %c320_166 = arith.constant 320 : index
    %c0_167 = arith.constant 0 : index
    %140 = vector.load %arg8[%c320_166, %c0_167] : memref<432x1024xbf16, #tpu.memory_space<vmem>>, vector<16x1024xbf16>
    tpu.vector_store %arg8[%c320_166, %c0_167], %139 {strides = array<i32>} : memref<432x1024xbf16, #tpu.memory_space<vmem>>, vector<16x1024xbf16>,
    %c0_168 = arith.constant 0 : index
    %c227_169 = arith.constant 227 : index
    %141 = vector.load %arg7[%c0_168, %c227_169] : memref<16x1280xbf16, #tpu.memory_space<vmem>>, vector<16x1024xbf16>
    %c336_170 = arith.constant 336 : index
    %c0_171 = arith.constant 0 : index
    %142 = vector.load %arg8[%c336_170, %c0_171] : memref<432x1024xbf16, #tpu.memory_space<vmem>>, vector<16x1024xbf16>
    tpu.vector_store %arg8[%c336_170, %c0_171], %141 {strides = array<i32>} : memref<432x1024xbf16, #tpu.memory_space<vmem>>, vector<16x1024xbf16>,
    %c0_172 = arith.constant 0 : index
    %c228_173 = arith.constant 228 : index
    %143 = vector.load %arg7[%c0_172, %c228_173] : memref<16x1280xbf16, #tpu.memory_space<vmem>>, vector<16x1024xbf16>
    %c352_174 = arith.constant 352 : index
    %c0_175 = arith.constant 0 : index
    %144 = vector.load %arg8[%c352_174, %c0_175] : memref<432x1024xbf16, #tpu.memory_space<vmem>>, vector<16x1024xbf16>
    tpu.vector_store %arg8[%c352_174, %c0_175], %143 {strides = array<i32>} : memref<432x1024xbf16, #tpu.memory_space<vmem>>, vector<16x1024xbf16>,
    %c0_176 = arith.constant 0 : index
    %c229_177 = arith.constant 229 : index
    %145 = vector.load %arg7[%c0_176, %c229_177] : memref<16x1280xbf16, #tpu.memory_space<vmem>>, vector<16x1024xbf16>
    %c368_178 = arith.constant 368 : index
    %c0_179 = arith.constant 0 : index
    %146 = vector.load %arg8[%c368_178, %c0_179] : memref<432x1024xbf16, #tpu.memory_space<vmem>>, vector<16x1024xbf16>
    tpu.vector_store %arg8[%c368_178, %c0_179], %145 {strides = array<i32>} : memref<432x1024xbf16, #tpu.memory_space<vmem>>, vector<16x1024xbf16>,
    %c0_180 = arith.constant 0 : index
    %c237_181 = arith.constant 237 : index
    %147 = vector.load %arg7[%c0_180, %c237_181] : memref<16x1280xbf16, #tpu.memory_space<vmem>>, vector<16x1024xbf16>
    %c384_182 = arith.constant 384 : index
    %c0_183 = arith.constant 0 : index
    %148 = vector.load %arg8[%c384_182, %c0_183] : memref<432x1024xbf16, #tpu.memory_space<vmem>>, vector<16x1024xbf16>
    tpu.vector_store %arg8[%c384_182, %c0_183], %147 {strides = array<i32>} : memref<432x1024xbf16, #tpu.memory_space<vmem>>, vector<16x1024xbf16>,
    %c0_184 = arith.constant 0 : index
    %c238_185 = arith.constant 238 : index
    %149 = vector.load %arg7[%c0_184, %c238_185] : memref<16x1280xbf16, #tpu.memory_space<vmem>>, vector<16x1024xbf16>
    %c400_186 = arith.constant 400 : index
    %c0_187 = arith.constant 0 : index
    %150 = vector.load %arg8[%c400_186, %c0_187] : memref<432x1024xbf16, #tpu.memory_space<vmem>>, vector<16x1024xbf16>
    tpu.vector_store %arg8[%c400_186, %c0_187], %149 {strides = array<i32>} : memref<432x1024xbf16, #tpu.memory_space<vmem>>, vector<16x1024xbf16>,
    %c0_188 = arith.constant 0 : index
    %c239_189 = arith.constant 239 : index
    %151 = vector.load %arg7[%c0_188, %c239_189] : memref<16x1280xbf16, #tpu.memory_space<vmem>>, vector<16x1024xbf16>
    %c416_190 = arith.constant 416 : index
    %c0_191 = arith.constant 0 : index
    %152 = vector.load %arg8[%c416_190, %c0_191] : memref<432x1024xbf16, #tpu.memory_space<vmem>>, vector<16x1024xbf16>
    tpu.vector_store %arg8[%c416_190, %c0_191], %151 {strides = array<i32>} : memref<432x1024xbf16, #tpu.memory_space<vmem>>, vector<16x1024xbf16>,
    %c0_192 = arith.constant 0 : index
    %c0_193 = arith.constant 0 : index
    %153 = vector.load %arg3[%c0_192, %c0_193] : memref<2x432xbf16, #tpu.memory_space<vmem>>, vector<2x432xbf16>
    %c0_194 = arith.constant 0 : index
    %c0_195 = arith.constant 0 : index
    %154 = vector.load %arg8[%c0_194, %c0_195] : memref<432x1024xbf16, #tpu.memory_space<vmem>>, vector<432x1024xbf16>
    %cst_196 = arith.constant dense<0.000000e+00> : vector<2x1024xf32>
    %155 = tpu.matmul %153, %154, %cst_196 {dimension_numbers = #tpu.dot_dimension_numbers<[1], [0], [0], [1], [0, 0, 1, 1], [], []>} : vector<2x432xbf16>, vector<432x1024xbf16>, vector<2x1024xf32> -> vector<2x1024xf32>
    %156 = vector.broadcast %4 : vector<1x1024xf32> to vector<2x1024xf32>
    %157 = arith.mulf %155, %156 : vector<2x1024xf32>
    %cst_197 = arith.constant dense<0.000000e+00> : vector<2xf32>
    %158 = vector.multi_reduction <add>, %157, %cst_197 [1] : vector<2x1024xf32> to vector<2xf32>
    %159 = vector.shape_cast %158 : vector<2xf32> to vector<2x1xf32>
    %160 = arith.mulf %157, %157 : vector<2x1024xf32>
    %cst_198 = arith.constant dense<0.000000e+00> : vector<2xf32>
    %161 = vector.multi_reduction <add>, %160, %cst_198 [1] : vector<2x1024xf32> to vector<2xf32>
    %162 = vector.shape_cast %161 : vector<2xf32> to vector<2x1xf32>
    %cst_199 = arith.constant 0.001953125 : f32
    %163 = vector.broadcast %cst_199 : f32 to vector<2x1xf32>
    %164 = arith.mulf %159, %163 : vector<2x1xf32>
    %cst_200 = arith.constant 0.001953125 : f32
    %165 = vector.broadcast %cst_200 : f32 to vector<2x1xf32>
    %166 = arith.mulf %162, %165 : vector<2x1xf32>
    %167 = arith.mulf %164, %164 : vector<2x1xf32>
    %168 = arith.subf %166, %167 : vector<2x1xf32>
    %169 = vector.broadcast %164 : vector<2x1xf32> to vector<2x1024xf32>
    %170 = arith.subf %155, %169 : vector<2x1024xf32>
    %cst_201 = arith.constant 9.99999974E-6 : f32
    %171 = vector.broadcast %cst_201 : f32 to vector<2x1xf32>
    %172 = arith.addf %168, %171 : vector<2x1xf32>
    %173 = math.rsqrt %172 : vector<2x1xf32>
    %174 = vector.broadcast %173 : vector<2x1xf32> to vector<2x1024xf32>
    %175 = arith.mulf %170, %174 : vector<2x1024xf32>
    %cst_202 = arith.constant 0.000000e+00 : f32
    %176 = vector.broadcast %cst_202 : f32 to vector<2x1024xf32>
    %177 = arith.cmpf oge, %175, %176 : vector<2x1024xf32>
    %cst_203 = arith.constant 5.000000e-02 : f32
    %178 = vector.broadcast %cst_203 : f32 to vector<2x1024xf32>
    %179 = arith.mulf %178, %175 : vector<2x1024xf32>
    %180 = arith.select %177, %175, %179 : vector<2x1024xi1>, vector<2x1024xf32>
    %181 = vector.broadcast %4 : vector<1x1024xf32> to vector<2x1024xf32>
    %182 = arith.mulf %180, %181 : vector<2x1024xf32>
    %183 = arith.truncf %182 : vector<2x1024xf32> to vector<2x1024xbf16>
    %c0_204 = arith.constant 0 : index
    %c128_205 = arith.constant 128 : index
    %184 = vector.load %arg7[%c0_204, %c128_205] : memref<16x1280xbf16, #tpu.memory_space<vmem>>, vector<2x1024xbf16>
    tpu.vector_store %arg7[%c0_204, %c128_205], %183 {strides = array<i32>} : memref<16x1280xbf16, #tpu.memory_space<vmem>>, vector<2x1024xbf16>,
    %cst_206 = arith.constant 0.000000e+00 : bf16
    %185 = vector.broadcast %cst_206 : bf16 to vector<14x1024xbf16>
    %c2_207 = arith.constant 2 : index
    %c128_208 = arith.constant 128 : index
    %186 = vector.load %arg7[%c2_207, %c128_208] : memref<16x1280xbf16, #tpu.memory_space<vmem>>, vector<14x1024xbf16>
    tpu.vector_store %arg7[%c2_207, %c128_208], %185 {strides = array<i32>} : memref<16x1280xbf16, #tpu.memory_space<vmem>>, vector<14x1024xbf16>,
    %c0_209 = arith.constant 0 : index
    %c17_210 = arith.constant 17 : index
    %187 = vector.load %arg7[%c0_209, %c17_210] : memref<16x1280xbf16, #tpu.memory_space<vmem>>, vector<16x1024xbf16>
    %c0_211 = arith.constant 0 : index
    %c0_212 = arith.constant 0 : index
    %188 = vector.load %arg8[%c0_211, %c0_212] : memref<432x1024xbf16, #tpu.memory_space<vmem>>, vector<16x1024xbf16>
    tpu.vector_store %arg8[%c0_211, %c0_212], %187 {strides = array<i32>} : memref<432x1024xbf16, #tpu.memory_space<vmem>>, vector<16x1024xbf16>,
    %c0_213 = arith.constant 0 : index
    %c18_214 = arith.constant 18 : index
    %189 = vector.load %arg7[%c0_213, %c18_214] : memref<16x1280xbf16, #tpu.memory_space<vmem>>, vector<16x1024xbf16>
    %c16_215 = arith.constant 16 : index
    %c0_216 = arith.constant 0 : index
    %190 = vector.load %arg8[%c16_215, %c0_216] : memref<432x1024xbf16, #tpu.memory_space<vmem>>, vector<16x1024xbf16>
    tpu.vector_store %arg8[%c16_215, %c0_216], %189 {strides = array<i32>} : memref<432x1024xbf16, #tpu.memory_space<vmem>>, vector<16x1024xbf16>,
    %c0_217 = arith.constant 0 : index
    %c19_218 = arith.constant 19 : index
    %191 = vector.load %arg7[%c0_217, %c19_218] : memref<16x1280xbf16, #tpu.memory_space<vmem>>, vector<16x1024xbf16>
    %c32_219 = arith.constant 32 : index
    %c0_220 = arith.constant 0 : index
    %192 = vector.load %arg8[%c32_219, %c0_220] : memref<432x1024xbf16, #tpu.memory_space<vmem>>, vector<16x1024xbf16>
    tpu.vector_store %arg8[%c32_219, %c0_220], %191 {strides = array<i32>} : memref<432x1024xbf16, #tpu.memory_space<vmem>>, vector<16x1024xbf16>,
    %c0_221 = arith.constant 0 : index
    %c27_222 = arith.constant 27 : index
    %193 = vector.load %arg7[%c0_221, %c27_222] : memref<16x1280xbf16, #tpu.memory_space<vmem>>, vector<16x1024xbf16>
    %c48_223 = arith.constant 48 : index
    %c0_224 = arith.constant 0 : index
    %194 = vector.load %arg8[%c48_223, %c0_224] : memref<432x1024xbf16, #tpu.memory_space<vmem>>, vector<16x1024xbf16>
    tpu.vector_store %arg8[%c48_223, %c0_224], %193 {strides = array<i32>} : memref<432x1024xbf16, #tpu.memory_space<vmem>>, vector<16x1024xbf16>,
    %c0_225 = arith.constant 0 : index
    %c28_226 = arith.constant 28 : index
    %195 = vector.load %arg7[%c0_225, %c28_226] : memref<16x1280xbf16, #tpu.memory_space<vmem>>, vector<16x1024xbf16>
    %c64_227 = arith.constant 64 : index
    %c0_228 = arith.constant 0 : index
    %196 = vector.load %arg8[%c64_227, %c0_228] : memref<432x1024xbf16, #tpu.memory_space<vmem>>, vector<16x1024xbf16>
    tpu.vector_store %arg8[%c64_227, %c0_228], %195 {strides = array<i32>} : memref<432x1024xbf16, #tpu.memory_space<vmem>>, vector<16x1024xbf16>,
    %c0_229 = arith.constant 0 : index
    %c29_230 = arith.constant 29 : index
    %197 = vector.load %arg7[%c0_229, %c29_230] : memref<16x1280xbf16, #tpu.memory_space<vmem>>, vector<16x1024xbf16>
    %c80_231 = arith.constant 80 : index
    %c0_232 = arith.constant 0 : index
    %198 = vector.load %arg8[%c80_231, %c0_232] : memref<432x1024xbf16, #tpu.memory_space<vmem>>, vector<16x1024xbf16>
    tpu.vector_store %arg8[%c80_231, %c0_232], %197 {strides = array<i32>} : memref<432x1024xbf16, #tpu.memory_space<vmem>>, vector<16x1024xbf16>,
    %c0_233 = arith.constant 0 : index
    %c37_234 = arith.constant 37 : index
    %199 = vector.load %arg7[%c0_233, %c37_234] : memref<16x1280xbf16, #tpu.memory_space<vmem>>, vector<16x1024xbf16>
    %c96_235 = arith.constant 96 : index
    %c0_236 = arith.constant 0 : index
    %200 = vector.load %arg8[%c96_235, %c0_236] : memref<432x1024xbf16, #tpu.memory_space<vmem>>, vector<16x1024xbf16>
    tpu.vector_store %arg8[%c96_235, %c0_236], %199 {strides = array<i32>} : memref<432x1024xbf16, #tpu.memory_space<vmem>>, vector<16x1024xbf16>,
    %c0_237 = arith.constant 0 : index
    %c38_238 = arith.constant 38 : index
    %201 = vector.load %arg7[%c0_237, %c38_238] : memref<16x1280xbf16, #tpu.memory_space<vmem>>, vector<16x1024xbf16>
    %c112_239 = arith.constant 112 : index
    %c0_240 = arith.constant 0 : index
    %202 = vector.load %arg8[%c112_239, %c0_240] : memref<432x1024xbf16, #tpu.memory_space<vmem>>, vector<16x1024xbf16>
    tpu.vector_store %arg8[%c112_239, %c0_240], %201 {strides = array<i32>} : memref<432x1024xbf16, #tpu.memory_space<vmem>>, vector<16x1024xbf16>,
    %c0_241 = arith.constant 0 : index
    %c39_242 = arith.constant 39 : index
    %203 = vector.load %arg7[%c0_241, %c39_242] : memref<16x1280xbf16, #tpu.memory_space<vmem>>, vector<16x1024xbf16>
    %c128_243 = arith.constant 128 : index
    %c0_244 = arith.constant 0 : index
    %204 = vector.load %arg8[%c128_243, %c0_244] : memref<432x1024xbf16, #tpu.memory_space<vmem>>, vector<16x1024xbf16>
    tpu.vector_store %arg8[%c128_243, %c0_244], %203 {strides = array<i32>} : memref<432x1024xbf16, #tpu.memory_space<vmem>>, vector<16x1024xbf16>,
    %c0_245 = arith.constant 0 : index
    %c117_246 = arith.constant 117 : index
    %205 = vector.load %arg7[%c0_245, %c117_246] : memref<16x1280xbf16, #tpu.memory_space<vmem>>, vector<16x1024xbf16>
    %c144_247 = arith.constant 144 : index
    %c0_248 = arith.constant 0 : index
    %206 = vector.load %arg8[%c144_247, %c0_248] : memref<432x1024xbf16, #tpu.memory_space<vmem>>, vector<16x1024xbf16>
    tpu.vector_store %arg8[%c144_247, %c0_248], %205 {strides = array<i32>} : memref<432x1024xbf16, #tpu.memory_space<vmem>>, vector<16x1024xbf16>,
    %c0_249 = arith.constant 0 : index
    %c118_250 = arith.constant 118 : index
    %207 = vector.load %arg7[%c0_249, %c118_250] : memref<16x1280xbf16, #tpu.memory_space<vmem>>, vector<16x1024xbf16>
    %c160_251 = arith.constant 160 : index
    %c0_252 = arith.constant 0 : index
    %208 = vector.load %arg8[%c160_251, %c0_252] : memref<432x1024xbf16, #tpu.memory_space<vmem>>, vector<16x1024xbf16>
    tpu.vector_store %arg8[%c160_251, %c0_252], %207 {strides = array<i32>} : memref<432x1024xbf16, #tpu.memory_space<vmem>>, vector<16x1024xbf16>,
    %c0_253 = arith.constant 0 : index
    %c119_254 = arith.constant 119 : index
    %209 = vector.load %arg7[%c0_253, %c119_254] : memref<16x1280xbf16, #tpu.memory_space<vmem>>, vector<16x1024xbf16>
    %c176_255 = arith.constant 176 : index
    %c0_256 = arith.constant 0 : index
    %210 = vector.load %arg8[%c176_255, %c0_256] : memref<432x1024xbf16, #tpu.memory_space<vmem>>, vector<16x1024xbf16>
    tpu.vector_store %arg8[%c176_255, %c0_256], %209 {strides = array<i32>} : memref<432x1024xbf16, #tpu.memory_space<vmem>>, vector<16x1024xbf16>,
    %c0_257 = arith.constant 0 : index
    %c127_258 = arith.constant 127 : index
    %211 = vector.load %arg7[%c0_257, %c127_258] : memref<16x1280xbf16, #tpu.memory_space<vmem>>, vector<16x1024xbf16>
    %c192_259 = arith.constant 192 : index
    %c0_260 = arith.constant 0 : index
    %212 = vector.load %arg8[%c192_259, %c0_260] : memref<432x1024xbf16, #tpu.memory_space<vmem>>, vector<16x1024xbf16>
    tpu.vector_store %arg8[%c192_259, %c0_260], %211 {strides = array<i32>} : memref<432x1024xbf16, #tpu.memory_space<vmem>>, vector<16x1024xbf16>,
    %c0_261 = arith.constant 0 : index
    %c128_262 = arith.constant 128 : index
    %213 = vector.load %arg7[%c0_261, %c128_262] : memref<16x1280xbf16, #tpu.memory_space<vmem>>, vector<16x1024xbf16>
    %c208_263 = arith.constant 208 : index
    %c0_264 = arith.constant 0 : index
    %214 = vector.load %arg8[%c208_263, %c0_264] : memref<432x1024xbf16, #tpu.memory_space<vmem>>, vector<16x1024xbf16>
    tpu.vector_store %arg8[%c208_263, %c0_264], %213 {strides = array<i32>} : memref<432x1024xbf16, #tpu.memory_space<vmem>>, vector<16x1024xbf16>,
    %c0_265 = arith.constant 0 : index
    %c129_266 = arith.constant 129 : index
    %215 = vector.load %arg7[%c0_265, %c129_266] : memref<16x1280xbf16, #tpu.memory_space<vmem>>, vector<16x1024xbf16>
    %c224_267 = arith.constant 224 : index
    %c0_268 = arith.constant 0 : index
    %216 = vector.load %arg8[%c224_267, %c0_268] : memref<432x1024xbf16, #tpu.memory_space<vmem>>, vector<16x1024xbf16>
    tpu.vector_store %arg8[%c224_267, %c0_268], %215 {strides = array<i32>} : memref<432x1024xbf16, #tpu.memory_space<vmem>>, vector<16x1024xbf16>,
    %c0_269 = arith.constant 0 : index
    %c137_270 = arith.constant 137 : index
    %217 = vector.load %arg7[%c0_269, %c137_270] : memref<16x1280xbf16, #tpu.memory_space<vmem>>, vector<16x1024xbf16>
    %c240_271 = arith.constant 240 : index
    %c0_272 = arith.constant 0 : index
    %218 = vector.load %arg8[%c240_271, %c0_272] : memref<432x1024xbf16, #tpu.memory_space<vmem>>, vector<16x1024xbf16>
    tpu.vector_store %arg8[%c240_271, %c0_272], %217 {strides = array<i32>} : memref<432x1024xbf16, #tpu.memory_space<vmem>>, vector<16x1024xbf16>,
    %c0_273 = arith.constant 0 : index
    %c138_274 = arith.constant 138 : index
    %219 = vector.load %arg7[%c0_273, %c138_274] : memref<16x1280xbf16, #tpu.memory_space<vmem>>, vector<16x1024xbf16>
    %c256_275 = arith.constant 256 : index
    %c0_276 = arith.constant 0 : index
    %220 = vector.load %arg8[%c256_275, %c0_276] : memref<432x1024xbf16, #tpu.memory_space<vmem>>, vector<16x1024xbf16>
    tpu.vector_store %arg8[%c256_275, %c0_276], %219 {strides = array<i32>} : memref<432x1024xbf16, #tpu.memory_space<vmem>>, vector<16x1024xbf16>,
    %c0_277 = arith.constant 0 : index
    %c139_278 = arith.constant 139 : index
    %221 = vector.load %arg7[%c0_277, %c139_278] : memref<16x1280xbf16, #tpu.memory_space<vmem>>, vector<16x1024xbf16>
    %c272_279 = arith.constant 272 : index
    %c0_280 = arith.constant 0 : index
    %222 = vector.load %arg8[%c272_279, %c0_280] : memref<432x1024xbf16, #tpu.memory_space<vmem>>, vector<16x1024xbf16>
    tpu.vector_store %arg8[%c272_279, %c0_280], %221 {strides = array<i32>} : memref<432x1024xbf16, #tpu.memory_space<vmem>>, vector<16x1024xbf16>,
    %c0_281 = arith.constant 0 : index
    %c217_282 = arith.constant 217 : index
    %223 = vector.load %arg7[%c0_281, %c217_282] : memref<16x1280xbf16, #tpu.memory_space<vmem>>, vector<16x1024xbf16>
    %c288_283 = arith.constant 288 : index
    %c0_284 = arith.constant 0 : index
    %224 = vector.load %arg8[%c288_283, %c0_284] : memref<432x1024xbf16, #tpu.memory_space<vmem>>, vector<16x1024xbf16>
    tpu.vector_store %arg8[%c288_283, %c0_284], %223 {strides = array<i32>} : memref<432x1024xbf16, #tpu.memory_space<vmem>>, vector<16x1024xbf16>,
    %c0_285 = arith.constant 0 : index
    %c218_286 = arith.constant 218 : index
    %225 = vector.load %arg7[%c0_285, %c218_286] : memref<16x1280xbf16, #tpu.memory_space<vmem>>, vector<16x1024xbf16>
    %c304_287 = arith.constant 304 : index
    %c0_288 = arith.constant 0 : index
    %226 = vector.load %arg8[%c304_287, %c0_288] : memref<432x1024xbf16, #tpu.memory_space<vmem>>, vector<16x1024xbf16>
    tpu.vector_store %arg8[%c304_287, %c0_288], %225 {strides = array<i32>} : memref<432x1024xbf16, #tpu.memory_space<vmem>>, vector<16x1024xbf16>,
    %c0_289 = arith.constant 0 : index
    %c219_290 = arith.constant 219 : index
    %227 = vector.load %arg7[%c0_289, %c219_290] : memref<16x1280xbf16, #tpu.memory_space<vmem>>, vector<16x1024xbf16>
    %c320_291 = arith.constant 320 : index
    %c0_292 = arith.constant 0 : index
    %228 = vector.load %arg8[%c320_291, %c0_292] : memref<432x1024xbf16, #tpu.memory_space<vmem>>, vector<16x1024xbf16>
    tpu.vector_store %arg8[%c320_291, %c0_292], %227 {strides = array<i32>} : memref<432x1024xbf16, #tpu.memory_space<vmem>>, vector<16x1024xbf16>,
    %c0_293 = arith.constant 0 : index
    %c227_294 = arith.constant 227 : index
    %229 = vector.load %arg7[%c0_293, %c227_294] : memref<16x1280xbf16, #tpu.memory_space<vmem>>, vector<16x1024xbf16>
    %c336_295 = arith.constant 336 : index
    %c0_296 = arith.constant 0 : index
    %230 = vector.load %arg8[%c336_295, %c0_296] : memref<432x1024xbf16, #tpu.memory_space<vmem>>, vector<16x1024xbf16>
    tpu.vector_store %arg8[%c336_295, %c0_296], %229 {strides = array<i32>} : memref<432x1024xbf16, #tpu.memory_space<vmem>>, vector<16x1024xbf16>,
    %c0_297 = arith.constant 0 : index
    %c228_298 = arith.constant 228 : index
    %231 = vector.load %arg7[%c0_297, %c228_298] : memref<16x1280xbf16, #tpu.memory_space<vmem>>, vector<16x1024xbf16>
    %c352_299 = arith.constant 352 : index
    %c0_300 = arith.constant 0 : index
    %232 = vector.load %arg8[%c352_299, %c0_300] : memref<432x1024xbf16, #tpu.memory_space<vmem>>, vector<16x1024xbf16>
    tpu.vector_store %arg8[%c352_299, %c0_300], %231 {strides = array<i32>} : memref<432x1024xbf16, #tpu.memory_space<vmem>>, vector<16x1024xbf16>,
    %c0_301 = arith.constant 0 : index
    %c229_302 = arith.constant 229 : index
    %233 = vector.load %arg7[%c0_301, %c229_302] : memref<16x1280xbf16, #tpu.memory_space<vmem>>, vector<16x1024xbf16>
    %c368_303 = arith.constant 368 : index
    %c0_304 = arith.constant 0 : index
    %234 = vector.load %arg8[%c368_303, %c0_304] : memref<432x1024xbf16, #tpu.memory_space<vmem>>, vector<16x1024xbf16>
    tpu.vector_store %arg8[%c368_303, %c0_304], %233 {strides = array<i32>} : memref<432x1024xbf16, #tpu.memory_space<vmem>>, vector<16x1024xbf16>,
    %c0_305 = arith.constant 0 : index
    %c237_306 = arith.constant 237 : index
    %235 = vector.load %arg7[%c0_305, %c237_306] : memref<16x1280xbf16, #tpu.memory_space<vmem>>, vector<16x1024xbf16>
    %c384_307 = arith.constant 384 : index
    %c0_308 = arith.constant 0 : index
    %236 = vector.load %arg8[%c384_307, %c0_308] : memref<432x1024xbf16, #tpu.memory_space<vmem>>, vector<16x1024xbf16>
    tpu.vector_store %arg8[%c384_307, %c0_308], %235 {strides = array<i32>} : memref<432x1024xbf16, #tpu.memory_space<vmem>>, vector<16x1024xbf16>,
    %c0_309 = arith.constant 0 : index
    %c238_310 = arith.constant 238 : index
    %237 = vector.load %arg7[%c0_309, %c238_310] : memref<16x1280xbf16, #tpu.memory_space<vmem>>, vector<16x1024xbf16>
    %c400_311 = arith.constant 400 : index
    %c0_312 = arith.constant 0 : index
    %238 = vector.load %arg8[%c400_311, %c0_312] : memref<432x1024xbf16, #tpu.memory_space<vmem>>, vector<16x1024xbf16>
    tpu.vector_store %arg8[%c400_311, %c0_312], %237 {strides = array<i32>} : memref<432x1024xbf16, #tpu.memory_space<vmem>>, vector<16x1024xbf16>,
    %c0_313 = arith.constant 0 : index
    %c239_314 = arith.constant 239 : index
    %239 = vector.load %arg7[%c0_313, %c239_314] : memref<16x1280xbf16, #tpu.memory_space<vmem>>, vector<16x1024xbf16>
    %c416_315 = arith.constant 416 : index
    %c0_316 = arith.constant 0 : index
    %240 = vector.load %arg8[%c416_315, %c0_316] : memref<432x1024xbf16, #tpu.memory_space<vmem>>, vector<16x1024xbf16>
    tpu.vector_store %arg8[%c416_315, %c0_316], %239 {strides = array<i32>} : memref<432x1024xbf16, #tpu.memory_space<vmem>>, vector<16x1024xbf16>,
    %c0_317 = arith.constant 0 : index
    %c0_318 = arith.constant 0 : index
    %241 = vector.load %arg4[%c0_317, %c0_318] : memref<4x432xbf16, #tpu.memory_space<vmem>>, vector<4x432xbf16>
    %c0_319 = arith.constant 0 : index
    %c0_320 = arith.constant 0 : index
    %242 = vector.load %arg8[%c0_319, %c0_320] : memref<432x1024xbf16, #tpu.memory_space<vmem>>, vector<432x1024xbf16>
    %cst_321 = arith.constant dense<0.000000e+00> : vector<4x1024xf32>
    %243 = tpu.matmul %241, %242, %cst_321 {dimension_numbers = #tpu.dot_dimension_numbers<[1], [0], [0], [1], [0, 0, 1, 1], [], []>} : vector<4x432xbf16>, vector<432x1024xbf16>, vector<4x1024xf32> -> vector<4x1024xf32>
    %244 = vector.broadcast %4 : vector<1x1024xf32> to vector<4x1024xf32>
    %245 = arith.mulf %243, %244 : vector<4x1024xf32>
    %cst_322 = arith.constant dense<0.000000e+00> : vector<4xf32>
    %246 = vector.multi_reduction <add>, %245, %cst_322 [1] : vector<4x1024xf32> to vector<4xf32>
    %247 = vector.shape_cast %246 : vector<4xf32> to vector<4x1xf32>
    %248 = arith.mulf %245, %245 : vector<4x1024xf32>
    %cst_323 = arith.constant dense<0.000000e+00> : vector<4xf32>
    %249 = vector.multi_reduction <add>, %248, %cst_323 [1] : vector<4x1024xf32> to vector<4xf32>
    %250 = vector.shape_cast %249 : vector<4xf32> to vector<4x1xf32>
    %cst_324 = arith.constant 0.001953125 : f32
    %251 = vector.broadcast %cst_324 : f32 to vector<4x1xf32>
    %252 = arith.mulf %247, %251 : vector<4x1xf32>
    %cst_325 = arith.constant 0.001953125 : f32
    %253 = vector.broadcast %cst_325 : f32 to vector<4x1xf32>
    %254 = arith.mulf %250, %253 : vector<4x1xf32>
    %255 = arith.mulf %252, %252 : vector<4x1xf32>
    %256 = arith.subf %254, %255 : vector<4x1xf32>
    %257 = vector.broadcast %252 : vector<4x1xf32> to vector<4x1024xf32>
    %258 = arith.subf %243, %257 : vector<4x1024xf32>
    %cst_326 = arith.constant 9.99999974E-6 : f32
    %259 = vector.broadcast %cst_326 : f32 to vector<4x1xf32>
    %260 = arith.addf %256, %259 : vector<4x1xf32>
    %261 = math.rsqrt %260 : vector<4x1xf32>
    %262 = vector.broadcast %261 : vector<4x1xf32> to vector<4x1024xf32>
    %263 = arith.mulf %258, %262 : vector<4x1024xf32>
    %cst_327 = arith.constant 0.000000e+00 : f32
    %264 = vector.broadcast %cst_327 : f32 to vector<4x1024xf32>
    %265 = arith.cmpf oge, %263, %264 : vector<4x1024xf32>
    %cst_328 = arith.constant 5.000000e-02 : f32
    %266 = vector.broadcast %cst_328 : f32 to vector<4x1024xf32>
    %267 = arith.mulf %266, %263 : vector<4x1024xf32>
    %268 = arith.select %265, %263, %267 : vector<4x1024xi1>, vector<4x1024xf32>
    %269 = vector.broadcast %4 : vector<1x1024xf32> to vector<4x1024xf32>
    %270 = arith.mulf %268, %269 : vector<4x1024xf32>
    %c0_329 = arith.constant 0 : index
    %c0_330 = arith.constant 0 : index
    %c0_331 = arith.constant 0 : index
    %271 = vector.load %arg6[%c0_329, %c0_330, %c0_331] : memref<1x4x1024xf32, #tpu.memory_space<vmem>>, vector<1x4x1024xf32>
    %272 = vector.shape_cast %271 : vector<1x4x1024xf32> to vector<4x1024xf32>
    %273 = vector.shape_cast %270 : vector<4x1024xf32> to vector<1x4x1024xf32>
    tpu.vector_store %arg6[%c0_329, %c0_330, %c0_331], %273 {strides = array<i32>} : memref<1x4x1024xf32, #tpu.memory_space<vmem>>, vector<1x4x1024xf32>,
    return
  }
  func.func @transform_0(%arg0: i32) -> (i32, i32, i32) {
    %c0_i32 = arith.constant 0 : i32
    %c0_i32_0 = arith.constant 0 : i32
    %c0_i32_1 = arith.constant 0 : i32
    return %arg0, %c0_i32, %c0_i32_0 : i32, i32, i32
  }
  func.func @transform_1(%arg0: i32) -> (i32, i32) {
    %c0_i32 = arith.constant 0 : i32
    %c0_i32_0 = arith.constant 0 : i32
    %c0_i32_1 = arith.constant 0 : i32
    return %c0_i32, %c0_i32_0 : i32, i32
  }
  func.func @transform_2(%arg0: i32) -> (i32, i32) {
    %c0_i32 = arith.constant 0 : i32
    %c0_i32_0 = arith.constant 0 : i32
    %c0_i32_1 = arith.constant 0 : i32
    return %c0_i32, %c0_i32_0 : i32, i32
  }
  func.func @transform_3(%arg0: i32) -> (i32, i32) {
    %c0_i32 = arith.constant 0 : i32
    %c0_i32_0 = arith.constant 0 : i32
    %c0_i32_1 = arith.constant 0 : i32
    return %c0_i32, %c0_i32_0 : i32, i32
  }
  func.func @transform_4(%arg0: i32) -> (i32, i32) {
    %c0_i32 = arith.constant 0 : i32
    %c0_i32_0 = arith.constant 0 : i32
    %c0_i32_1 = arith.constant 0 : i32
    return %c0_i32, %c0_i32_0 : i32, i32
  }
  func.func @transform_5(%arg0: i32) -> (i32, i32, i32) {
    %c0_i32 = arith.constant 0 : i32
    %c0_i32_0 = arith.constant 0 : i32
    %c0_i32_1 = arith.constant 0 : i32
    return %arg0, %c0_i32, %c0_i32_0 : i32, i32, i32
  }
}

</mosaic_0001>

<llo_original>
// kernel: upconv_block.1
$region0: #{upconv_block.1}
  #allocation0 [shape = 'u32[]', space=smem, size = 0x4, offset = 0x4, fixed_abs, tag = 'smem constant byte address 0x4 - core index']
  #allocation1 [shape = 'u32[144,128]{1,0:T(1,128)}', space=vmem, size = 0x12000, scoped, tag = 'internal scratch']
  #allocation2 [shape = 'bf16[16,1280]{1,0:T(16,128)(2,1)}', space=vmem, size = 0xa000, scoped, tag = 'scratch operand']
  #allocation3 [shape = 'bf16[432,1024]{1,0:T(16,128)(2,1)}', space=vmem, size = 0xd8000, scoped, tag = 'scratch operand']
  %s0 = inlined_call_operand.vmem [shape: f32[2,4,1024], index: 0, kind: input, shape index: {}]
  %s1 = inlined_call_operand.vmem [shape: bf16[2,432], index: 1, kind: input, shape index: {}]
  %s2 = inlined_call_operand.vmem [shape: bf16[2,432], index: 2, kind: input, shape index: {}]
  %s3 = inlined_call_operand.vmem [shape: bf16[4,432], index: 3, kind: input, shape index: {}]
  %s4 = inlined_call_operand.vmem [shape: f32[1,1024], index: 4, kind: input, shape index: {}]
  %s5 = inlined_call_operand.vmem [shape: f32[2,4,1024], index: 5, kind: output, shape index: {}]
  %s6 = sld [smem:[#allocation0]]
  $region53: #{upconv_block.1} parent=0
    _
  %s8 = ssub.s32 1, %s6
  %s9 = scalar_select 0, %s8, %s6
  loop: start=0, step=1, limit=4
  $region2: #{upconv_block.1} parent=0 // loop_pre_header
    _
  $region3: #{upconv_block.1} parent=0 // loop_header
    %s11 = sphi 0, %s15
    %p12 = scmp.ge.s32.totalorder %s11, 4
    %s21 = sphi 0, %s23
    %s24 = sphi 0, %s21
    %s25 = sphi 0, %s24
    %s41 = sphi 0, %s25
    %s45 = sphi 0, %s45
    %s47 = sphi 0, %s45
    %s48 = sphi 0, %s47
    %s62 = sphi 0, %s48
    %s66 = sphi 0, %s66
    %s68 = sphi 0, %s66
    %s69 = sphi 0, %s68
    %s83 = sphi 0, %s69
    %s87 = sphi 0, %s87
    %s89 = sphi 0, %s87
    %s90 = sphi 0, %s89
    %s104 = sphi 0, %s90
    %s108 = sphi 0, %s108
    %s110 = sphi 0, %s108
    %s111 = sphi 0, %s110
    %s125 = sphi 0, %s111
    %s131 = sphi 0, %s133
    %s134 = sphi 0, %s131
    %s135 = sphi 0, %s134
    %s151 = sphi 0, %s135
  $region4: #{upconv_block.1} parent=0 // loop_header_branch
    %14 = sbr.rel (%p12) target = $region8
  $region5: #{upconv_block.1} parent=0 // loop_body
    %s16 = ssub.s32 %s11, 1
    %s17 = ssub.s32 %s11, 2
    %s18 = sadd.s32 %s11, 1
    %s19 = ssub.s32 %s11, %s18
    %p20 = scmp.eq.s32.totalorder %s19, 0
    %s22 = sadd.s32 %s21, 1
    %s23 = scalar_select %p20, %s21, %s22
    %p26 = pneg %p20
    %p27 = scmp.eq.s32.totalorder %s11, 1
    %p28 = por %p26, %p27
    %p29 = scmp.ne.s32.totalorder %s21, %s24
    %p30 = scmp.eq.s32.totalorder %s11, 0
    %p31 = por %p29, %p30
    %p32 = scmp.ne.s32.totalorder %s21, %s24
    %p33 = scmp.eq.s32.totalorder %s16, 1
    %p34 = por %p32, %p33
    %p35 = scmp.ne.s32.totalorder %s24, %s25
    %p36 = scmp.eq.s32.totalorder %s16, 0
    %p37 = por %p35, %p36
    %p38 = scmp.ne.s32.totalorder %s24, %s25
    %p39 = scmp.eq.s32.totalorder %s17, 1
    %p40 = por %p38, %p39
    %p42 = scmp.ne.s32.totalorder %s25, %s41
    %p43 = scmp.eq.s32.totalorder %s17, 0
    %p44 = por %p42, %p43
    %s46 = sadd.s32 %s45, 1
    %p49 = scmp.eq.s32.totalorder %s11, 1
    %p50 = scmp.ne.s32.totalorder %s45, %s47
    %p51 = scmp.eq.s32.totalorder %s11, 0
    %p52 = por %p50, %p51
    %p53 = scmp.ne.s32.totalorder %s45, %s47
    %p54 = scmp.eq.s32.totalorder %s16, 1
    %p55 = por %p53, %p54
    %p56 = scmp.ne.s32.totalorder %s47, %s48
    %p57 = scmp.eq.s32.totalorder %s16, 0
    %p58 = por %p56, %p57
    %p59 = scmp.ne.s32.totalorder %s47, %s48
    %p60 = scmp.eq.s32.totalorder %s17, 1
    %p61 = por %p59, %p60
    %p63 = scmp.ne.s32.totalorder %s48, %s62
    %p64 = scmp.eq.s32.totalorder %s17, 0
    %p65 = por %p63, %p64
    %s67 = sadd.s32 %s66, 1
    %p70 = scmp.eq.s32.totalorder %s11, 1
    %p71 = scmp.ne.s32.totalorder %s66, %s68
    %p72 = scmp.eq.s32.totalorder %s11, 0
    %p73 = por %p71, %p72
    %p74 = scmp.ne.s32.totalorder %s66, %s68
    %p75 = scmp.eq.s32.totalorder %s16, 1
    %p76 = por %p74, %p75
    %p77 = scmp.ne.s32.totalorder %s68, %s69
    %p78 = scmp.eq.s32.totalorder %s16, 0
    %p79 = por %p77, %p78
    %p80 = scmp.ne.s32.totalorder %s68, %s69
    %p81 = scmp.eq.s32.totalorder %s17, 1
    %p82 = por %p80, %p81
    %p84 = scmp.ne.s32.totalorder %s69, %s83
    %p85 = scmp.eq.s32.totalorder %s17, 0
    %p86 = por %p84, %p85
    %s88 = sadd.s32 %s87, 1
    %p91 = scmp.eq.s32.totalorder %s11, 1
    %p92 = scmp.ne.s32.totalorder %s87, %s89
    %p93 = scmp.eq.s32.totalorder %s11, 0
    %p94 = por %p92, %p93
    %p95 = scmp.ne.s32.totalorder %s87, %s89
    %p96 = scmp.eq.s32.totalorder %s16, 1
    %p97 = por %p95, %p96
    %p98 = scmp.ne.s32.totalorder %s89, %s90
    %p99 = scmp.eq.s32.totalorder %s16, 0
    %p100 = por %p98, %p99
    %p101 = scmp.ne.s32.totalorder %s89, %s90
    %p102 = scmp.eq.s32.totalorder %s17, 1
    %p103 = por %p101, %p102
    %p105 = scmp.ne.s32.totalorder %s90, %s104
    %p106 = scmp.eq.s32.totalorder %s17, 0
    %p107 = por %p105, %p106
    %s109 = sadd.s32 %s108, 1
    %p112 = scmp.eq.s32.totalorder %s11, 1
    %p113 = scmp.ne.s32.totalorder %s108, %s110
    %p114 = scmp.eq.s32.totalorder %s11, 0
    %p115 = por %p113, %p114
    %p116 = scmp.ne.s32.totalorder %s108, %s110
    %p117 = scmp.eq.s32.totalorder %s16, 1
    %p118 = por %p116, %p117
    %p119 = scmp.ne.s32.totalorder %s110, %s111
    %p120 = scmp.eq.s32.totalorder %s16, 0
    %p121 = por %p119, %p120
    %p122 = scmp.ne.s32.totalorder %s110, %s111
    %p123 = scmp.eq.s32.totalorder %s17, 1
    %p124 = por %p122, %p123
    %p126 = scmp.ne.s32.totalorder %s111, %s125
    %p127 = scmp.eq.s32.totalorder %s17, 0
    %p128 = por %p126, %p127
    %s129 = ssub.s32 %s11, %s18
    %p130 = scmp.eq.s32.totalorder %s129, 0
    %s132 = sadd.s32 %s131, 1
    %s133 = scalar_select %p130, %s131, %s132
    %p136 = pneg %p130
    %p137 = scmp.eq.s32.totalorder %s11, 1
    %p138 = por %p136, %p137
    %p139 = scmp.ne.s32.totalorder %s131, %s134
    %p140 = scmp.eq.s32.totalorder %s11, 0
    %p141 = por %p139, %p140
    %p142 = scmp.ne.s32.totalorder %s131, %s134
    %p143 = scmp.eq.s32.totalorder %s16, 1
    %p144 = por %p142, %p143
    %p145 = scmp.ne.s32.totalorder %s134, %s135
    %p146 = scmp.eq.s32.totalorder %s16, 0
    %p147 = por %p145, %p146
    %p148 = scmp.ne.s32.totalorder %s134, %s135
    %p149 = scmp.eq.s32.totalorder %s17, 1
    %p150 = por %p148, %p149
    %p152 = scmp.ne.s32.totalorder %s135, %s151
    %p153 = scmp.eq.s32.totalorder %s17, 0
    %p154 = por %p152, %p153
    %p155 = scmp.le.s32.totalorder 1, %s11
    %p156 = scmp.lt.s32.totalorder %s11, 3
    %p157 = pnand %p155, %p156
    %p158 = pneg %p157
    // Predicated region
    $region9: #{upconv_block.1} parent=5 // pred_check
      _
    $region10: #{upconv_block.1} parent=5 // pred_check_branch
      %160 = sbr.rel (%p157) target = $region12
    $region11: #{upconv_block.1} parent=5 // pred_region
      %s161 = ssub.s32 %s11, 1
      // Predicated region
      $region13: #{upconv_block.1} parent=11 // pred_check
        %p162 = pneg %p58
      $region14: #{upconv_block.1} parent=11 // pred_check_branch
        %164 = sbr.rel (%p162) target = $region16
      $region15: #{upconv_block.1} parent=11 // pred_region
        _
      $region16: #{upconv_block.1} parent=11 // pred_fallthru
        _
      // Predicated region
      $region17: #{upconv_block.1} parent=11 // pred_check
        %p165 = pneg %p79
      $region18: #{upconv_block.1} parent=11 // pred_check_branch
        %167 = sbr.rel (%p165) target = $region20
      $region19: #{upconv_block.1} parent=11 // pred_region
        _
      $region20: #{upconv_block.1} parent=11 // pred_fallthru
        _
      // Predicated region
      $region21: #{upconv_block.1} parent=11 // pred_check
        %p168 = pneg %p100
      $region22: #{upconv_block.1} parent=11 // pred_check_branch
        %170 = sbr.rel (%p168) target = $region24
      $region23: #{upconv_block.1} parent=11 // pred_region
        _
      $region24: #{upconv_block.1} parent=11 // pred_fallthru
        _
      // Predicated region
      $region25: #{upconv_block.1} parent=11 // pred_check
        %p171 = pneg %p121
      $region26: #{upconv_block.1} parent=11 // pred_check_branch
        %173 = sbr.rel (%p171) target = $region28
      $region27: #{upconv_block.1} parent=11 // pred_region
        _
      $region28: #{upconv_block.1} parent=11 // pred_fallthru
        _
    $region12: #{upconv_block.1} parent=5 // pred_fallthru
      _
    %p174 = scmp.lt.s32.totalorder %s11, 2
    // Predicated region
    $region29: #{upconv_block.1} parent=5 // pred_check
      %p175 = pneg %p174
    $region30: #{upconv_block.1} parent=5 // pred_check_branch
      %177 = sbr.rel (%p175) target = $region32
    $region31: #{upconv_block.1} parent=5 // pred_region
      // Predicated region
      $region33: #{upconv_block.1} parent=31 // pred_check
        %p178 = pneg %p31
      $region34: #{upconv_block.1} parent=31 // pred_check_branch
        %180 = sbr.rel (%p178) target = $region36
      $region35: #{upconv_block.1} parent=31 // pred_region
        %p181 = scmp.lt.s32.totalorder %s11, 1
        %s182 = scalar_select %p181, %s11, 1
        %s183 = smul.addr %s182, 8
        %s184 = smul.addr %s183, 4
        %s185 = scalar_lea.vmem %s0, %s184
      $region36: #{upconv_block.1} parent=31 // pred_fallthru
        _
    $region32: #{upconv_block.1} parent=5 // pred_fallthru
      _
    %p186 = scmp.le.s32.totalorder 1, %s11
    %p187 = scmp.lt.s32.totalorder %s11, 3
    %p188 = pnand %p186, %p187
    %p189 = pneg %p188
    // Predicated region
    $region37: #{upconv_block.1} parent=5 // pred_check
      _
    $region38: #{upconv_block.1} parent=5 // pred_check_branch
      %191 = sbr.rel (%p188) target = $region40
    $region39: #{upconv_block.1} parent=5 // pred_region
      %s192 = ssub.s32 %s11, 1
      %p193 = scmp.lt.s32.totalorder %s16, 1
      %s194 = scalar_select %p193, %s16, 1
      %s195 = smul.addr %s194, 8
      %s196 = smul.addr %s195, 4
      %s197 = scalar_lea.vmem %s0, %s196
      %p198 = pneg %p37
      %p199 = pneg %p34
      %p200 = pneg %p58
      %p201 = pneg %p55
      %p202 = pneg %p79
      %p203 = pneg %p76
      %p204 = pneg %p100
      %p205 = pneg %p97
      %p206 = pneg %p121
      %p207 = pneg %p118
      %p208 = pneg %p147
      %p209 = pneg %p144
      %p210 = scmp.lt.s32.totalorder %s16, 1
      %s211 = scalar_select %p210, %s16, 1
      %s212 = smul.addr %s211, 8
      %s213 = smul.addr %s212, 4
      %s214 = scalar_lea.vmem %s5, %s213
      %p215 = scmp.lt.s32.totalorder %s16, 1
      %s216 = scalar_select %p215, %s16, 1
      %s217 = smul.addr %s216, 8
      %s218 = smul.addr %s217, 4
      %s219 = scalar_lea.vmem %s0, %s218
      %p220 = scmp.lt.s32.totalorder %s16, 1
      %s221 = scalar_select %p220, %s16, 1
      %s222 = smul.addr %s221, 8
      %s223 = smul.addr %s222, 4
      %s224 = scalar_lea.vmem %s5, %s223
      %226 = vst [vmem:[#allocation2] sm:$0xff] 0
      %227 = vst [vmem:[#allocation2 + $0x48] sm:$0xff] 0
      %v228 = vld [vmem:[%s4] sm:$0xff]
      %v229 = vld [vmem:[%s219] sm:$0xff]
      %v230 = vld [vmem:[%s219 + $0x8] sm:$0xff]
      %v231 = vld [vmem:[%s219 + $0x10] sm:$0xff]
      %v232 = vld [vmem:[%s219 + $0x18] sm:$0xff]
      %v237 = vcombine.high %v229, %v229
      %v238 = vcombine.high %v230, %v230
      %v239 = vcombine.high %v231, %v231
      %v240 = vcombine.high %v232, %v232
      %v245 = vpack.c.bf16 %v229, %v229
      %v246 = vpack.c.bf16 %v237, %v237
      %v247 = vpack.c.bf16 %v230, %v230
      %v248 = vpack.c.bf16 %v238, %v238
      %v249 = vpack.c.bf16 %v231, %v231
      %v250 = vpack.c.bf16 %v239, %v239
      %v251 = vpack.c.bf16 %v232, %v232
      %v252 = vpack.c.bf16 %v240, %v240
      %253 = vst [vmem:[#allocation2 + $0x8] sm:$0x3] %v245
      %254 = vst [vmem:[#allocation2 + $0x10] sm:$0x3] %v246
      %255 = vst [vmem:[#allocation2 + $0x18] sm:$0x3] %v247
      %256 = vst [vmem:[#allocation2 + $0x20] sm:$0x3] %v248
      %257 = vst [vmem:[#allocation2 + $0x28] sm:$0x3] %v249
      %258 = vst [vmem:[#allocation2 + $0x30] sm:$0x3] %v250
      %259 = vst [vmem:[#allocation2 + $0x38] sm:$0x3] %v251
      %260 = vst [vmem:[#allocation2 + $0x40] sm:$0x3] %v252
      %261 = vst [vmem:[#allocation2 + $0x8] sm:$0xfc] 0
      %262 = vst [vmem:[#allocation2 + $0x10] sm:$0xfc] 0
      %263 = vst [vmem:[#allocation2 + $0x18] sm:$0xfc] 0
      %264 = vst [vmem:[#allocation2 + $0x20] sm:$0xfc] 0
      %265 = vst [vmem:[#allocation2 + $0x28] sm:$0xfc] 0
      %266 = vst [vmem:[#allocation2 + $0x30] sm:$0xfc] 0
      %267 = vst [vmem:[#allocation2 + $0x38] sm:$0xfc] 0
      %268 = vst [vmem:[#allocation2 + $0x40] sm:$0xfc] 0
      %v269 = vld [vmem:[#allocation2] sm:$0xff]
      %v270 = vld [vmem:[#allocation2 + $0x8] sm:$0xff]
      %v271 = vld [vmem:[#allocation2 + $0x10] sm:$0xff]
      %v272 = vld [vmem:[#allocation2 + $0x18] sm:$0xff]
      %v273 = vld [vmem:[#allocation2 + $0x20] sm:$0xff]
      %v274 = vld [vmem:[#allocation2 + $0x28] sm:$0xff]
      %v275 = vld [vmem:[#allocation2 + $0x30] sm:$0xff]
      %v276 = vld [vmem:[#allocation2 + $0x38] sm:$0xff]
      %v277 = vld [vmem:[#allocation2 + $0x40] sm:$0xff]
      %287 = vrot.lane.b32.xlu0 %v269, 111
      %v288 = vpop.permute.xlu0 %287
      %289 = vrot.lane.b32.xlu0 %v270, 111
      %v290 = vpop.permute.xlu0 %289
      %291 = vrot.lane.b32.xlu0 %v271, 111
      %v292 = vpop.permute.xlu0 %291
      %293 = vrot.lane.b32.xlu0 %v272, 111
      %v294 = vpop.permute.xlu0 %293
      %295 = vrot.lane.b32.xlu0 %v273, 111
      %v296 = vpop.permute.xlu0 %295
      %297 = vrot.lane.b32.xlu0 %v274, 111
      %v298 = vpop.permute.xlu0 %297
      %299 = vrot.lane.b32.xlu0 %v275, 111
      %v300 = vpop.permute.xlu0 %299
      %301 = vrot.lane.b32.xlu0 %v276, 111
      %v302 = vpop.permute.xlu0 %301
      %303 = vrot.lane.b32.xlu0 %v277, 111
      %v304 = vpop.permute.xlu0 %303
      %vm305 = vcmask 908288
      %v306 = vsel %vm305, %v288, %v290
      %v307 = vsel %vm305, %v290, %v292
      %v308 = vsel %vm305, %v292, %v294
      %v309 = vsel %vm305, %v294, %v296
      %v310 = vsel %vm305, %v296, %v298
      %v311 = vsel %vm305, %v298, %v300
      %v312 = vsel %vm305, %v300, %v302
      %v313 = vsel %vm305, %v302, %v304
      %322 = vst [vmem:[#allocation3] sm:$0xff] %v306
      %323 = vst [vmem:[#allocation3 + $0x8] sm:$0xff] %v307
      %324 = vst [vmem:[#allocation3 + $0x10] sm:$0xff] %v308
      %325 = vst [vmem:[#allocation3 + $0x18] sm:$0xff] %v309
      %326 = vst [vmem:[#allocation3 + $0x20] sm:$0xff] %v310
      %327 = vst [vmem:[#allocation3 + $0x28] sm:$0xff] %v311
      %328 = vst [vmem:[#allocation3 + $0x30] sm:$0xff] %v312
      %329 = vst [vmem:[#allocation3 + $0x38] sm:$0xff] %v313
      %v330 = vld [vmem:[#allocation2] sm:$0xff]
      %v331 = vld [vmem:[#allocation2 + $0x8] sm:$0xff]
      %v332 = vld [vmem:[#allocation2 + $0x10] sm:$0xff]
      %v333 = vld [vmem:[#allocation2 + $0x18] sm:$0xff]
      %v334 = vld [vmem:[#allocation2 + $0x20] sm:$0xff]
      %v335 = vld [vmem:[#allocation2 + $0x28] sm:$0xff]
      %v336 = vld [vmem:[#allocation2 + $0x30] sm:$0xff]
      %v337 = vld [vmem:[#allocation2 + $0x38] sm:$0xff]
      %v338 = vld [vmem:[#allocation2 + $0x40] sm:$0xff]
      %348 = vrot.lane.b32.xlu0 %v330, 110
      %v349 = vpop.permute.xlu0 %348
      %350 = vrot.lane.b32.xlu0 %v331, 110
      %v351 = vpop.permute.xlu0 %350
      %352 = vrot.lane.b32.xlu0 %v332, 110
      %v353 = vpop.permute.xlu0 %352
      %354 = vrot.lane.b32.xlu0 %v333, 110
      %v355 = vpop.permute.xlu0 %354
      %356 = vrot.lane.b32.xlu0 %v334, 110
      %v357 = vpop.permute.xlu0 %356
      %358 = vrot.lane.b32.xlu0 %v335, 110
      %v359 = vpop.permute.xlu0 %358
      %360 = vrot.lane.b32.xlu0 %v336, 110
      %v361 = vpop.permute.xlu0 %360
      %362 = vrot.lane.b32.xlu0 %v337, 110
      %v363 = vpop.permute.xlu0 %362
      %364 = vrot.lane.b32.xlu0 %v338, 110
      %v365 = vpop.permute.xlu0 %364
      %vm366 = vcmask 900096
      %v367 = vsel %vm366, %v349, %v351
      %v368 = vsel %vm366, %v351, %v353
      %v369 = vsel %vm366, %v353, %v355
      %v370 = vsel %vm366, %v355, %v357
      %v371 = vsel %vm366, %v357, %v359
      %v372 = vsel %vm366, %v359, %v361
      %v373 = vsel %vm366, %v361, %v363
      %v374 = vsel %vm366, %v363, %v365
      %383 = vst [vmem:[#allocation3 + $0x40] sm:$0xff] %v367
      %384 = vst [vmem:[#allocation3 + $0x48] sm:$0xff] %v368
      %385 = vst [vmem:[#allocation3 + $0x50] sm:$0xff] %v369
      %386 = vst [vmem:[#allocation3 + $0x58] sm:$0xff] %v370
      %387 = vst [vmem:[#allocation3 + $0x60] sm:$0xff] %v371
      %388 = vst [vmem:[#allocation3 + $0x68] sm:$0xff] %v372
      %389 = vst [vmem:[#allocation3 + $0x70] sm:$0xff] %v373
      %390 = vst [vmem:[#allocation3 + $0x78] sm:$0xff] %v374
      %v391 = vld [vmem:[#allocation2] sm:$0xff]
      %v392 = vld [vmem:[#allocation2 + $0x8] sm:$0xff]
      %v393 = vld [vmem:[#allocation2 + $0x10] sm:$0xff]
      %v394 = vld [vmem:[#allocation2 + $0x18] sm:$0xff]
      %v395 = vld [vmem:[#allocation2 + $0x20] sm:$0xff]
      %v396 = vld [vmem:[#allocation2 + $0x28] sm:$0xff]
      %v397 = vld [vmem:[#allocation2 + $0x30] sm:$0xff]
      %v398 = vld [vmem:[#allocation2 + $0x38] sm:$0xff]
      %v399 = vld [vmem:[#allocation2 + $0x40] sm:$0xff]
      %409 = vrot.lane.b32.xlu0 %v391, 109
      %v410 = vpop.permute.xlu0 %409
      %411 = vrot.lane.b32.xlu0 %v392, 109
      %v412 = vpop.permute.xlu0 %411
      %413 = vrot.lane.b32.xlu0 %v393, 109
      %v414 = vpop.permute.xlu0 %413
      %415 = vrot.lane.b32.xlu0 %v394, 109
      %v416 = vpop.permute.xlu0 %415
      %417 = vrot.lane.b32.xlu0 %v395, 109
      %v418 = vpop.permute.xlu0 %417
      %419 = vrot.lane.b32.xlu0 %v396, 109
      %v420 = vpop.permute.xlu0 %419
      %421 = vrot.lane.b32.xlu0 %v397, 109
      %v422 = vpop.permute.xlu0 %421
      %423 = vrot.lane.b32.xlu0 %v398, 109
      %v424 = vpop.permute.xlu0 %423
      %425 = vrot.lane.b32.xlu0 %v399, 109
      %v426 = vpop.permute.xlu0 %425
      %vm427 = vcmask 891904
      %v428 = vsel %vm427, %v410, %v412
      %v429 = vsel %vm427, %v412, %v414
      %v430 = vsel %vm427, %v414, %v416
      %v431 = vsel %vm427, %v416, %v418
      %v432 = vsel %vm427, %v418, %v420
      %v433 = vsel %vm427, %v420, %v422
      %v434 = vsel %vm427, %v422, %v424
      %v435 = vsel %vm427, %v424, %v426
      %444 = vst [vmem:[#allocation3 + $0x80] sm:$0xff] %v428
      %445 = vst [vmem:[#allocation3 + $0x88] sm:$0xff] %v429
      %446 = vst [vmem:[#allocation3 + $0x90] sm:$0xff] %v430
      %447 = vst [vmem:[#allocation3 + $0x98] sm:$0xff] %v431
      %448 = vst [vmem:[#allocation3 + $0xa0] sm:$0xff] %v432
      %449 = vst [vmem:[#allocation3 + $0xa8] sm:$0xff] %v433
      %450 = vst [vmem:[#allocation3 + $0xb0] sm:$0xff] %v434
      %451 = vst [vmem:[#allocation3 + $0xb8] sm:$0xff] %v435
      %v452 = vld [vmem:[#allocation2] sm:$0xff]
      %v453 = vld [vmem:[#allocation2 + $0x8] sm:$0xff]
      %v454 = vld [vmem:[#allocation2 + $0x10] sm:$0xff]
      %v455 = vld [vmem:[#allocation2 + $0x18] sm:$0xff]
      %v456 = vld [vmem:[#allocation2 + $0x20] sm:$0xff]
      %v457 = vld [vmem:[#allocation2 + $0x28] sm:$0xff]
      %v458 = vld [vmem:[#allocation2 + $0x30] sm:$0xff]
      %v459 = vld [vmem:[#allocation2 + $0x38] sm:$0xff]
      %v460 = vld [vmem:[#allocation2 + $0x40] sm:$0xff]
      %470 = vrot.lane.b32.xlu0 %v452, 101
      %v471 = vpop.permute.xlu0 %470
      %472 = vrot.lane.b32.xlu0 %v453, 101
      %v473 = vpop.permute.xlu0 %472
      %474 = vrot.lane.b32.xlu0 %v454, 101
      %v475 = vpop.permute.xlu0 %474
      %476 = vrot.lane.b32.xlu0 %v455, 101
      %v477 = vpop.permute.xlu0 %476
      %478 = vrot.lane.b32.xlu0 %v456, 101
      %v479 = vpop.permute.xlu0 %478
      %480 = vrot.lane.b32.xlu0 %v457, 101
      %v481 = vpop.permute.xlu0 %480
      %482 = vrot.lane.b32.xlu0 %v458, 101
      %v483 = vpop.permute.xlu0 %482
      %484 = vrot.lane.b32.xlu0 %v459, 101
      %v485 = vpop.permute.xlu0 %484
      %486 = vrot.lane.b32.xlu0 %v460, 101
      %v487 = vpop.permute.xlu0 %486
      %vm488 = vcmask 826368
      %v489 = vsel %vm488, %v471, %v473
      %v490 = vsel %vm488, %v473, %v475
      %v491 = vsel %vm488, %v475, %v477
      %v492 = vsel %vm488, %v477, %v479
      %v493 = vsel %vm488, %v479, %v481
      %v494 = vsel %vm488, %v481, %v483
      %v495 = vsel %vm488, %v483, %v485
      %v496 = vsel %vm488, %v485, %v487
      %505 = vst [vmem:[#allocation3 + $0xc0] sm:$0xff] %v489
      %506 = vst [vmem:[#allocation3 + $0xc8] sm:$0xff] %v490
      %507 = vst [vmem:[#allocation3 + $0xd0] sm:$0xff] %v491
      %508 = vst [vmem:[#allocation3 + $0xd8] sm:$0xff] %v492
      %509 = vst [vmem:[#allocation3 + $0xe0] sm:$0xff] %v493
      %510 = vst [vmem:[#allocation3 + $0xe8] sm:$0xff] %v494
      %511 = vst [vmem:[#allocation3 + $0xf0] sm:$0xff] %v495
      %512 = vst [vmem:[#allocation3 + $0xf8] sm:$0xff] %v496
      %v513 = vld [vmem:[#allocation2] sm:$0xff]
      %v514 = vld [vmem:[#allocation2 + $0x8] sm:$0xff]
      %v515 = vld [vmem:[#allocation2 + $0x10] sm:$0xff]
      %v516 = vld [vmem:[#allocation2 + $0x18] sm:$0xff]
      %v517 = vld [vmem:[#allocation2 + $0x20] sm:$0xff]
      %v518 = vld [vmem:[#allocation2 + $0x28] sm:$0xff]
      %v519 = vld [vmem:[#allocation2 + $0x30] sm:$0xff]
      %v520 = vld [vmem:[#allocation2 + $0x38] sm:$0xff]
      %v521 = vld [vmem:[#allocation2 + $0x40] sm:$0xff]
      %531 = vrot.lane.b32.xlu0 %v513, 100
      %v532 = vpop.permute.xlu0 %531
      %533 = vrot.lane.b32.xlu0 %v514, 100
      %v534 = vpop.permute.xlu0 %533
      %535 = vrot.lane.b32.xlu0 %v515, 100
      %v536 = vpop.permute.xlu0 %535
      %537 = vrot.lane.b32.xlu0 %v516, 100
      %v538 = vpop.permute.xlu0 %537
      %539 = vrot.lane.b32.xlu0 %v517, 100
      %v540 = vpop.permute.xlu0 %539
      %541 = vrot.lane.b32.xlu0 %v518, 100
      %v542 = vpop.permute.xlu0 %541
      %543 = vrot.lane.b32.xlu0 %v519, 100
      %v544 = vpop.permute.xlu0 %543
      %545 = vrot.lane.b32.xlu0 %v520, 100
      %v546 = vpop.permute.xlu0 %545
      %547 = vrot.lane.b32.xlu0 %v521, 100
      %v548 = vpop.permute.xlu0 %547
      %vm549 = vcmask 818176
      %v550 = vsel %vm549, %v532, %v534
      %v551 = vsel %vm549, %v534, %v536
      %v552 = vsel %vm549, %v536, %v538
      %v553 = vsel %vm549, %v538, %v540
      %v554 = vsel %vm549, %v540, %v542
      %v555 = vsel %vm549, %v542, %v544
      %v556 = vsel %vm549, %v544, %v546
      %v557 = vsel %vm549, %v546, %v548
      %566 = vst [vmem:[#allocation3 + $0x100] sm:$0xff] %v550
      %567 = vst [vmem:[#allocation3 + $0x108] sm:$0xff] %v551
      %568 = vst [vmem:[#allocation3 + $0x110] sm:$0xff] %v552
      %569 = vst [vmem:[#allocation3 + $0x118] sm:$0xff] %v553
      %570 = vst [vmem:[#allocation3 + $0x120] sm:$0xff] %v554
      %571 = vst [vmem:[#allocation3 + $0x128] sm:$0xff] %v555
      %572 = vst [vmem:[#allocation3 + $0x130] sm:$0xff] %v556
      %573 = vst [vmem:[#allocation3 + $0x138] sm:$0xff] %v557
      %v574 = vld [vmem:[#allocation2] sm:$0xff]
      %v575 = vld [vmem:[#allocation2 + $0x8] sm:$0xff]
      %v576 = vld [vmem:[#allocation2 + $0x10] sm:$0xff]
      %v577 = vld [vmem:[#allocation2 + $0x18] sm:$0xff]
      %v578 = vld [vmem:[#allocation2 + $0x20] sm:$0xff]
      %v579 = vld [vmem:[#allocation2 + $0x28] sm:$0xff]
      %v580 = vld [vmem:[#allocation2 + $0x30] sm:$0xff]
      %v581 = vld [vmem:[#allocation2 + $0x38] sm:$0xff]
      %v582 = vld [vmem:[#allocation2 + $0x40] sm:$0xff]
      %592 = vrot.lane.b32.xlu0 %v574, 99
      %v593 = vpop.permute.xlu0 %592
      %594 = vrot.lane.b32.xlu0 %v575, 99
      %v595 = vpop.permute.xlu0 %594
      %596 = vrot.lane.b32.xlu0 %v576, 99
      %v597 = vpop.permute.xlu0 %596
      %598 = vrot.lane.b32.xlu0 %v577, 99
      %v599 = vpop.permute.xlu0 %598
      %600 = vrot.lane.b32.xlu0 %v578, 99
      %v601 = vpop.permute.xlu0 %600
      %602 = vrot.lane.b32.xlu0 %v579, 99
      %v603 = vpop.permute.xlu0 %602
      %604 = vrot.lane.b32.xlu0 %v580, 99
      %v605 = vpop.permute.xlu0 %604
      %606 = vrot.lane.b32.xlu0 %v581, 99
      %v607 = vpop.permute.xlu0 %606
      %608 = vrot.lane.b32.xlu0 %v582, 99
      %v609 = vpop.permute.xlu0 %608
      %vm610 = vcmask 809984
      %v611 = vsel %vm610, %v593, %v595
      %v612 = vsel %vm610, %v595, %v597
      %v613 = vsel %vm610, %v597, %v599
      %v614 = vsel %vm610, %v599, %v601
      %v615 = vsel %vm610, %v601, %v603
      %v616 = vsel %vm610, %v603, %v605
      %v617 = vsel %vm610, %v605, %v607
      %v618 = vsel %vm610, %v607, %v609
      %627 = vst [vmem:[#allocation3 + $0x140] sm:$0xff] %v611
      %628 = vst [vmem:[#allocation3 + $0x148] sm:$0xff] %v612
      %629 = vst [vmem:[#allocation3 + $0x150] sm:$0xff] %v613
      %630 = vst [vmem:[#allocation3 + $0x158] sm:$0xff] %v614
      %631 = vst [vmem:[#allocation3 + $0x160] sm:$0xff] %v615
      %632 = vst [vmem:[#allocation3 + $0x168] sm:$0xff] %v616
      %633 = vst [vmem:[#allocation3 + $0x170] sm:$0xff] %v617
      %634 = vst [vmem:[#allocation3 + $0x178] sm:$0xff] %v618
      %v635 = vld [vmem:[#allocation2] sm:$0xff]
      %v636 = vld [vmem:[#allocation2 + $0x8] sm:$0xff]
      %v637 = vld [vmem:[#allocation2 + $0x10] sm:$0xff]
      %v638 = vld [vmem:[#allocation2 + $0x18] sm:$0xff]
      %v639 = vld [vmem:[#allocation2 + $0x20] sm:$0xff]
      %v640 = vld [vmem:[#allocation2 + $0x28] sm:$0xff]
      %v641 = vld [vmem:[#allocation2 + $0x30] sm:$0xff]
      %v642 = vld [vmem:[#allocation2 + $0x38] sm:$0xff]
      %v643 = vld [vmem:[#allocation2 + $0x40] sm:$0xff]
      %653 = vrot.lane.b32.xlu0 %v635, 91
      %v654 = vpop.permute.xlu0 %653
      %655 = vrot.lane.b32.xlu0 %v636, 91
      %v656 = vpop.permute.xlu0 %655
      %657 = vrot.lane.b32.xlu0 %v637, 91
      %v658 = vpop.permute.xlu0 %657
      %659 = vrot.lane.b32.xlu0 %v638, 91
      %v660 = vpop.permute.xlu0 %659
      %661 = vrot.lane.b32.xlu0 %v639, 91
      %v662 = vpop.permute.xlu0 %661
      %663 = vrot.lane.b32.xlu0 %v640, 91
      %v664 = vpop.permute.xlu0 %663
      %665 = vrot.lane.b32.xlu0 %v641, 91
      %v666 = vpop.permute.xlu0 %665
      %667 = vrot.lane.b32.xlu0 %v642, 91
      %v668 = vpop.permute.xlu0 %667
      %669 = vrot.lane.b32.xlu0 %v643, 91
      %v670 = vpop.permute.xlu0 %669
      %vm671 = vcmask 744448
      %v672 = vsel %vm671, %v654, %v656
      %v673 = vsel %vm671, %v656, %v658
      %v674 = vsel %vm671, %v658, %v660
      %v675 = vsel %vm671, %v660, %v662
      %v676 = vsel %vm671, %v662, %v664
      %v677 = vsel %vm671, %v664, %v666
      %v678 = vsel %vm671, %v666, %v668
      %v679 = vsel %vm671, %v668, %v670
      %688 = vst [vmem:[#allocation3 + $0x180] sm:$0xff] %v672
      %689 = vst [vmem:[#allocation3 + $0x188] sm:$0xff] %v673
      %690 = vst [vmem:[#allocation3 + $0x190] sm:$0xff] %v674
      %691 = vst [vmem:[#allocation3 + $0x198] sm:$0xff] %v675
      %692 = vst [vmem:[#allocation3 + $0x1a0] sm:$0xff] %v676
      %693 = vst [vmem:[#allocation3 + $0x1a8] sm:$0xff] %v677
      %694 = vst [vmem:[#allocation3 + $0x1b0] sm:$0xff] %v678
      %695 = vst [vmem:[#allocation3 + $0x1b8] sm:$0xff] %v679
      %v696 = vld [vmem:[#allocation2] sm:$0xff]
      %v697 = vld [vmem:[#allocation2 + $0x8] sm:$0xff]
      %v698 = vld [vmem:[#allocation2 + $0x10] sm:$0xff]
      %v699 = vld [vmem:[#allocation2 + $0x18] sm:$0xff]
      %v700 = vld [vmem:[#allocation2 + $0x20] sm:$0xff]
      %v701 = vld [vmem:[#allocation2 + $0x28] sm:$0xff]
      %v702 = vld [vmem:[#allocation2 + $0x30] sm:$0xff]
      %v703 = vld [vmem:[#allocation2 + $0x38] sm:$0xff]
      %v704 = vld [vmem:[#allocation2 + $0x40] sm:$0xff]
      %714 = vrot.lane.b32.xlu0 %v696, 90
      %v715 = vpop.permute.xlu0 %714
      %716 = vrot.lane.b32.xlu0 %v697, 90
      %v717 = vpop.permute.xlu0 %716
      %718 = vrot.lane.b32.xlu0 %v698, 90
      %v719 = vpop.permute.xlu0 %718
      %720 = vrot.lane.b32.xlu0 %v699, 90
      %v721 = vpop.permute.xlu0 %720
      %722 = vrot.lane.b32.xlu0 %v700, 90
      %v723 = vpop.permute.xlu0 %722
      %724 = vrot.lane.b32.xlu0 %v701, 90
      %v725 = vpop.permute.xlu0 %724
      %726 = vrot.lane.b32.xlu0 %v702, 90
      %v727 = vpop.permute.xlu0 %726
      %728 = vrot.lane.b32.xlu0 %v703, 90
      %v729 = vpop.permute.xlu0 %728
      %730 = vrot.lane.b32.xlu0 %v704, 90
      %v731 = vpop.permute.xlu0 %730
      %vm732 = vcmask 736256
      %v733 = vsel %vm732, %v715, %v717
      %v734 = vsel %vm732, %v717, %v719
      %v735 = vsel %vm732, %v719, %v721
      %v736 = vsel %vm732, %v721, %v723
      %v737 = vsel %vm732, %v723, %v725
      %v738 = vsel %vm732, %v725, %v727
      %v739 = vsel %vm732, %v727, %v729
      %v740 = vsel %vm732, %v729, %v731
      %749 = vst [vmem:[#allocation3 + $0x1c0] sm:$0xff] %v733
      %750 = vst [vmem:[#allocation3 + $0x1c8] sm:$0xff] %v734
      %751 = vst [vmem:[#allocation3 + $0x1d0] sm:$0xff] %v735
      %752 = vst [vmem:[#allocation3 + $0x1d8] sm:$0xff] %v736
      %753 = vst [vmem:[#allocation3 + $0x1e0] sm:$0xff] %v737
      %754 = vst [vmem:[#allocation3 + $0x1e8] sm:$0xff] %v738
      %755 = vst [vmem:[#allocation3 + $0x1f0] sm:$0xff] %v739
      %756 = vst [vmem:[#allocation3 + $0x1f8] sm:$0xff] %v740
      %v757 = vld [vmem:[#allocation2] sm:$0xff]
      %v758 = vld [vmem:[#allocation2 + $0x8] sm:$0xff]
      %v759 = vld [vmem:[#allocation2 + $0x10] sm:$0xff]
      %v760 = vld [vmem:[#allocation2 + $0x18] sm:$0xff]
      %v761 = vld [vmem:[#allocation2 + $0x20] sm:$0xff]
      %v762 = vld [vmem:[#allocation2 + $0x28] sm:$0xff]
      %v763 = vld [vmem:[#allocation2 + $0x30] sm:$0xff]
      %v764 = vld [vmem:[#allocation2 + $0x38] sm:$0xff]
      %v765 = vld [vmem:[#allocation2 + $0x40] sm:$0xff]
      %775 = vrot.lane.b32.xlu0 %v757, 89
      %v776 = vpop.permute.xlu0 %775
      %777 = vrot.lane.b32.xlu0 %v758, 89
      %v778 = vpop.permute.xlu0 %777
      %779 = vrot.lane.b32.xlu0 %v759, 89
      %v780 = vpop.permute.xlu0 %779
      %781 = vrot.lane.b32.xlu0 %v760, 89
      %v782 = vpop.permute.xlu0 %781
      %783 = vrot.lane.b32.xlu0 %v761, 89
      %v784 = vpop.permute.xlu0 %783
      %785 = vrot.lane.b32.xlu0 %v762, 89
      %v786 = vpop.permute.xlu0 %785
      %787 = vrot.lane.b32.xlu0 %v763, 89
      %v788 = vpop.permute.xlu0 %787
      %789 = vrot.lane.b32.xlu0 %v764, 89
      %v790 = vpop.permute.xlu0 %789
      %791 = vrot.lane.b32.xlu0 %v765, 89
      %v792 = vpop.permute.xlu0 %791
      %vm793 = vcmask 728064
      %v794 = vsel %vm793, %v776, %v778
      %v795 = vsel %vm793, %v778, %v780
      %v796 = vsel %vm793, %v780, %v782
      %v797 = vsel %vm793, %v782, %v784
      %v798 = vsel %vm793, %v784, %v786
      %v799 = vsel %vm793, %v786, %v788
      %v800 = vsel %vm793, %v788, %v790
      %v801 = vsel %vm793, %v790, %v792
      %810 = vst [vmem:[#allocation3 + $0x200] sm:$0xff] %v794
      %811 = vst [vmem:[#allocation3 + $0x208] sm:$0xff] %v795
      %812 = vst [vmem:[#allocation3 + $0x210] sm:$0xff] %v796
      %813 = vst [vmem:[#allocation3 + $0x218] sm:$0xff] %v797
      %814 = vst [vmem:[#allocation3 + $0x220] sm:$0xff] %v798
      %815 = vst [vmem:[#allocation3 + $0x228] sm:$0xff] %v799
      %816 = vst [vmem:[#allocation3 + $0x230] sm:$0xff] %v800
      %817 = vst [vmem:[#allocation3 + $0x238] sm:$0xff] %v801
      %v818 = vld [vmem:[#allocation2] sm:$0xff]
      %v819 = vld [vmem:[#allocation2 + $0x8] sm:$0xff]
      %v820 = vld [vmem:[#allocation2 + $0x10] sm:$0xff]
      %v821 = vld [vmem:[#allocation2 + $0x18] sm:$0xff]
      %v822 = vld [vmem:[#allocation2 + $0x20] sm:$0xff]
      %v823 = vld [vmem:[#allocation2 + $0x28] sm:$0xff]
      %v824 = vld [vmem:[#allocation2 + $0x30] sm:$0xff]
      %v825 = vld [vmem:[#allocation2 + $0x38] sm:$0xff]
      %v826 = vld [vmem:[#allocation2 + $0x40] sm:$0xff]
      %836 = vrot.lane.b32.xlu0 %v818, 11
      %v837 = vpop.permute.xlu0 %836
      %838 = vrot.lane.b32.xlu0 %v819, 11
      %v839 = vpop.permute.xlu0 %838
      %840 = vrot.lane.b32.xlu0 %v820, 11
      %v841 = vpop.permute.xlu0 %840
      %842 = vrot.lane.b32.xlu0 %v821, 11
      %v843 = vpop.permute.xlu0 %842
      %844 = vrot.lane.b32.xlu0 %v822, 11
      %v845 = vpop.permute.xlu0 %844
      %846 = vrot.lane.b32.xlu0 %v823, 11
      %v847 = vpop.permute.xlu0 %846
      %848 = vrot.lane.b32.xlu0 %v824, 11
      %v849 = vpop.permute.xlu0 %848
      %850 = vrot.lane.b32.xlu0 %v825, 11
      %v851 = vpop.permute.xlu0 %850
      %852 = vrot.lane.b32.xlu0 %v826, 11
      %v853 = vpop.permute.xlu0 %852
      %vm854 = vcmask 89088
      %v855 = vsel %vm854, %v837, %v839
      %v856 = vsel %vm854, %v839, %v841
      %v857 = vsel %vm854, %v841, %v843
      %v858 = vsel %vm854, %v843, %v845
      %v859 = vsel %vm854, %v845, %v847
      %v860 = vsel %vm854, %v847, %v849
      %v861 = vsel %vm854, %v849, %v851
      %v862 = vsel %vm854, %v851, %v853
      %871 = vst [vmem:[#allocation3 + $0x240] sm:$0xff] %v855
      %872 = vst [vmem:[#allocation3 + $0x248] sm:$0xff] %v856
      %873 = vst [vmem:[#allocation3 + $0x250] sm:$0xff] %v857
      %874 = vst [vmem:[#allocation3 + $0x258] sm:$0xff] %v858
      %875 = vst [vmem:[#allocation3 + $0x260] sm:$0xff] %v859
      %876 = vst [vmem:[#allocation3 + $0x268] sm:$0xff] %v860
      %877 = vst [vmem:[#allocation3 + $0x270] sm:$0xff] %v861
      %878 = vst [vmem:[#allocation3 + $0x278] sm:$0xff] %v862
      %v879 = vld [vmem:[#allocation2] sm:$0xff]
      %v880 = vld [vmem:[#allocation2 + $0x8] sm:$0xff]
      %v881 = vld [vmem:[#allocation2 + $0x10] sm:$0xff]
      %v882 = vld [vmem:[#allocation2 + $0x18] sm:$0xff]
      %v883 = vld [vmem:[#allocation2 + $0x20] sm:$0xff]
      %v884 = vld [vmem:[#allocation2 + $0x28] sm:$0xff]
      %v885 = vld [vmem:[#allocation2 + $0x30] sm:$0xff]
      %v886 = vld [vmem:[#allocation2 + $0x38] sm:$0xff]
      %v887 = vld [vmem:[#allocation2 + $0x40] sm:$0xff]
      %897 = vrot.lane.b32.xlu0 %v879, 10
      %v898 = vpop.permute.xlu0 %897
      %899 = vrot.lane.b32.xlu0 %v880, 10
      %v900 = vpop.permute.xlu0 %899
      %901 = vrot.lane.b32.xlu0 %v881, 10
      %v902 = vpop.permute.xlu0 %901
      %903 = vrot.lane.b32.xlu0 %v882, 10
      %v904 = vpop.permute.xlu0 %903
      %905 = vrot.lane.b32.xlu0 %v883, 10
      %v906 = vpop.permute.xlu0 %905
      %907 = vrot.lane.b32.xlu0 %v884, 10
      %v908 = vpop.permute.xlu0 %907
      %909 = vrot.lane.b32.xlu0 %v885, 10
      %v910 = vpop.permute.xlu0 %909
      %911 = vrot.lane.b32.xlu0 %v886, 10
      %v912 = vpop.permute.xlu0 %911
      %913 = vrot.lane.b32.xlu0 %v887, 10
      %v914 = vpop.permute.xlu0 %913
      %vm915 = vcmask 80896
      %v916 = vsel %vm915, %v898, %v900
      %v917 = vsel %vm915, %v900, %v902
      %v918 = vsel %vm915, %v902, %v904
      %v919 = vsel %vm915, %v904, %v906
      %v920 = vsel %vm915, %v906, %v908
      %v921 = vsel %vm915, %v908, %v910
      %v922 = vsel %vm915, %v910, %v912
      %v923 = vsel %vm915, %v912, %v914
      %932 = vst [vmem:[#allocation3 + $0x280] sm:$0xff] %v916
      %933 = vst [vmem:[#allocation3 + $0x288] sm:$0xff] %v917
      %934 = vst [vmem:[#allocation3 + $0x290] sm:$0xff] %v918
      %935 = vst [vmem:[#allocation3 + $0x298] sm:$0xff] %v919
      %936 = vst [vmem:[#allocation3 + $0x2a0] sm:$0xff] %v920
      %937 = vst [vmem:[#allocation3 + $0x2a8] sm:$0xff] %v921
      %938 = vst [vmem:[#allocation3 + $0x2b0] sm:$0xff] %v922
      %939 = vst [vmem:[#allocation3 + $0x2b8] sm:$0xff] %v923
      %v940 = vld [vmem:[#allocation2] sm:$0xff]
      %v941 = vld [vmem:[#allocation2 + $0x8] sm:$0xff]
      %v942 = vld [vmem:[#allocation2 + $0x10] sm:$0xff]
      %v943 = vld [vmem:[#allocation2 + $0x18] sm:$0xff]
      %v944 = vld [vmem:[#allocation2 + $0x20] sm:$0xff]
      %v945 = vld [vmem:[#allocation2 + $0x28] sm:$0xff]
      %v946 = vld [vmem:[#allocation2 + $0x30] sm:$0xff]
      %v947 = vld [vmem:[#allocation2 + $0x38] sm:$0xff]
      %v948 = vld [vmem:[#allocation2 + $0x40] sm:$0xff]
      %958 = vrot.lane.b32.xlu0 %v940, 9
      %v959 = vpop.permute.xlu0 %958
      %960 = vrot.lane.b32.xlu0 %v941, 9
      %v961 = vpop.permute.xlu0 %960
      %962 = vrot.lane.b32.xlu0 %v942, 9
      %v963 = vpop.permute.xlu0 %962
      %964 = vrot.lane.b32.xlu0 %v943, 9
      %v965 = vpop.permute.xlu0 %964
      %966 = vrot.lane.b32.xlu0 %v944, 9
      %v967 = vpop.permute.xlu0 %966
      %968 = vrot.lane.b32.xlu0 %v945, 9
      %v969 = vpop.permute.xlu0 %968
      %970 = vrot.lane.b32.xlu0 %v946, 9
      %v971 = vpop.permute.xlu0 %970
      %972 = vrot.lane.b32.xlu0 %v947, 9
      %v973 = vpop.permute.xlu0 %972
      %974 = vrot.lane.b32.xlu0 %v948, 9
      %v975 = vpop.permute.xlu0 %974
      %vm976 = vcmask 72704
      %v977 = vsel %vm976, %v959, %v961
      %v978 = vsel %vm976, %v961, %v963
      %v979 = vsel %vm976, %v963, %v965
      %v980 = vsel %vm976, %v965, %v967
      %v981 = vsel %vm976, %v967, %v969
      %v982 = vsel %vm976, %v969, %v971
      %v983 = vsel %vm976, %v971, %v973
      %v984 = vsel %vm976, %v973, %v975
      %993 = vst [vmem:[#allocation3 + $0x2c0] sm:$0xff] %v977
      %994 = vst [vmem:[#allocation3 + $0x2c8] sm:$0xff] %v978
      %995 = vst [vmem:[#allocation3 + $0x2d0] sm:$0xff] %v979
      %996 = vst [vmem:[#allocation3 + $0x2d8] sm:$0xff] %v980
      %997 = vst [vmem:[#allocation3 + $0x2e0] sm:$0xff] %v981
      %998 = vst [vmem:[#allocation3 + $0x2e8] sm:$0xff] %v982
      %999 = vst [vmem:[#allocation3 + $0x2f0] sm:$0xff] %v983
      %1000 = vst [vmem:[#allocation3 + $0x2f8] sm:$0xff] %v984
      %v1001 = vld [vmem:[#allocation2] sm:$0xff]
      %v1002 = vld [vmem:[#allocation2 + $0x8] sm:$0xff]
      %v1003 = vld [vmem:[#allocation2 + $0x10] sm:$0xff]
      %v1004 = vld [vmem:[#allocation2 + $0x18] sm:$0xff]
      %v1005 = vld [vmem:[#allocation2 + $0x20] sm:$0xff]
      %v1006 = vld [vmem:[#allocation2 + $0x28] sm:$0xff]
      %v1007 = vld [vmem:[#allocation2 + $0x30] sm:$0xff]
      %v1008 = vld [vmem:[#allocation2 + $0x38] sm:$0xff]
      %v1009 = vld [vmem:[#allocation2 + $0x40] sm:$0xff]
      %1019 = vrot.lane.b32.xlu0 %v1001, 1
      %v1020 = vpop.permute.xlu0 %1019
      %1021 = vrot.lane.b32.xlu0 %v1002, 1
      %v1022 = vpop.permute.xlu0 %1021
      %1023 = vrot.lane.b32.xlu0 %v1003, 1
      %v1024 = vpop.permute.xlu0 %1023
      %1025 = vrot.lane.b32.xlu0 %v1004, 1
      %v1026 = vpop.permute.xlu0 %1025
      %1027 = vrot.lane.b32.xlu0 %v1005, 1
      %v1028 = vpop.permute.xlu0 %1027
      %1029 = vrot.lane.b32.xlu0 %v1006, 1
      %v1030 = vpop.permute.xlu0 %1029
      %1031 = vrot.lane.b32.xlu0 %v1007, 1
      %v1032 = vpop.permute.xlu0 %1031
      %1033 = vrot.lane.b32.xlu0 %v1008, 1
      %v1034 = vpop.permute.xlu0 %1033
      %1035 = vrot.lane.b32.xlu0 %v1009, 1
      %v1036 = vpop.permute.xlu0 %1035
      %vm1037 = vcmask 7168
      %v1038 = vsel %vm1037, %v1020, %v1022
      %v1039 = vsel %vm1037, %v1022, %v1024
      %v1040 = vsel %vm1037, %v1024, %v1026
      %v1041 = vsel %vm1037, %v1026, %v1028
      %v1042 = vsel %vm1037, %v1028, %v1030
      %v1043 = vsel %vm1037, %v1030, %v1032
      %v1044 = vsel %vm1037, %v1032, %v1034
      %v1045 = vsel %vm1037, %v1034, %v1036
      %1054 = vst [vmem:[#allocation3 + $0x300] sm:$0xff] %v1038
      %1055 = vst [vmem:[#allocation3 + $0x308] sm:$0xff] %v1039
      %1056 = vst [vmem:[#allocation3 + $0x310] sm:$0xff] %v1040
      %1057 = vst [vmem:[#allocation3 + $0x318] sm:$0xff] %v1041
      %1058 = vst [vmem:[#allocation3 + $0x320] sm:$0xff] %v1042
      %1059 = vst [vmem:[#allocation3 + $0x328] sm:$0xff] %v1043
      %1060 = vst [vmem:[#allocation3 + $0x330] sm:$0xff] %v1044
      %1061 = vst [vmem:[#allocation3 + $0x338] sm:$0xff] %v1045
      %v1062 = vld [vmem:[#allocation2 + $0x8] sm:$0xff]
      %v1063 = vld [vmem:[#allocation2 + $0x10] sm:$0xff]
      %v1064 = vld [vmem:[#allocation2 + $0x18] sm:$0xff]
      %v1065 = vld [vmem:[#allocation2 + $0x20] sm:$0xff]
      %v1066 = vld [vmem:[#allocation2 + $0x28] sm:$0xff]
      %v1067 = vld [vmem:[#allocation2 + $0x30] sm:$0xff]
      %v1068 = vld [vmem:[#allocation2 + $0x38] sm:$0xff]
      %v1069 = vld [vmem:[#allocation2 + $0x40] sm:$0xff]
      %1070 = vst [vmem:[#allocation3 + $0x340] sm:$0xff] %v1062
      %1071 = vst [vmem:[#allocation3 + $0x348] sm:$0xff] %v1063
      %1072 = vst [vmem:[#allocation3 + $0x350] sm:$0xff] %v1064
      %1073 = vst [vmem:[#allocation3 + $0x358] sm:$0xff] %v1065
      %1074 = vst [vmem:[#allocation3 + $0x360] sm:$0xff] %v1066
      %1075 = vst [vmem:[#allocation3 + $0x368] sm:$0xff] %v1067
      %1076 = vst [vmem:[#allocation3 + $0x370] sm:$0xff] %v1068
      %1077 = vst [vmem:[#allocation3 + $0x378] sm:$0xff] %v1069
      %v1078 = vld [vmem:[#allocation2 + $0x8] sm:$0xff]
      %v1079 = vld [vmem:[#allocation2 + $0x10] sm:$0xff]
      %v1080 = vld [vmem:[#allocation2 + $0x18] sm:$0xff]
      %v1081 = vld [vmem:[#allocation2 + $0x20] sm:$0xff]
      %v1082 = vld [vmem:[#allocation2 + $0x28] sm:$0xff]
      %v1083 = vld [vmem:[#allocation2 + $0x30] sm:$0xff]
      %v1084 = vld [vmem:[#allocation2 + $0x38] sm:$0xff]
      %v1085 = vld [vmem:[#allocation2 + $0x40] sm:$0xff]
      %v1086 = vld [vmem:[#allocation2 + $0x48] sm:$0xff]
      %1096 = vrot.lane.b32.xlu0 %v1078, 127
      %v1097 = vpop.permute.xlu0 %1096
      %1098 = vrot.lane.b32.xlu0 %v1079, 127
      %v1099 = vpop.permute.xlu0 %1098
      %1100 = vrot.lane.b32.xlu0 %v1080, 127
      %v1101 = vpop.permute.xlu0 %1100
      %1102 = vrot.lane.b32.xlu0 %v1081, 127
      %v1103 = vpop.permute.xlu0 %1102
      %1104 = vrot.lane.b32.xlu0 %v1082, 127
      %v1105 = vpop.permute.xlu0 %1104
      %1106 = vrot.lane.b32.xlu0 %v1083, 127
      %v1107 = vpop.permute.xlu0 %1106
      %1108 = vrot.lane.b32.xlu0 %v1084, 127
      %v1109 = vpop.permute.xlu0 %1108
      %1110 = vrot.lane.b32.xlu0 %v1085, 127
      %v1111 = vpop.permute.xlu0 %1110
      %1112 = vrot.lane.b32.xlu0 %v1086, 127
      %v1113 = vpop.permute.xlu0 %1112
      %vm1114 = vcmask 1039360
      %v1115 = vsel %vm1114, %v1097, %v1099
      %v1116 = vsel %vm1114, %v1099, %v1101
      %v1117 = vsel %vm1114, %v1101, %v1103
      %v1118 = vsel %vm1114, %v1103, %v1105
      %v1119 = vsel %vm1114, %v1105, %v1107
      %v1120 = vsel %vm1114, %v1107, %v1109
      %v1121 = vsel %vm1114, %v1109, %v1111
      %v1122 = vsel %vm1114, %v1111, %v1113
      %1131 = vst [vmem:[#allocation3 + $0x380] sm:$0xff] %v1115
      %1132 = vst [vmem:[#allocation3 + $0x388] sm:$0xff] %v1116
      %1133 = vst [vmem:[#allocation3 + $0x390] sm:$0xff] %v1117
      %1134 = vst [vmem:[#allocation3 + $0x398] sm:$0xff] %v1118
      %1135 = vst [vmem:[#allocation3 + $0x3a0] sm:$0xff] %v1119
      %1136 = vst [vmem:[#allocation3 + $0x3a8] sm:$0xff] %v1120
      %1137 = vst [vmem:[#allocation3 + $0x3b0] sm:$0xff] %v1121
      %1138 = vst [vmem:[#allocation3 + $0x3b8] sm:$0xff] %v1122
      %v1139 = vld [vmem:[#allocation2 + $0x8] sm:$0xff]
      %v1140 = vld [vmem:[#allocation2 + $0x10] sm:$0xff]
      %v1141 = vld [vmem:[#allocation2 + $0x18] sm:$0xff]
      %v1142 = vld [vmem:[#allocation2 + $0x20] sm:$0xff]
      %v1143 = vld [vmem:[#allocation2 + $0x28] sm:$0xff]
      %v1144 = vld [vmem:[#allocation2 + $0x30] sm:$0xff]
      %v1145 = vld [vmem:[#allocation2 + $0x38] sm:$0xff]
      %v1146 = vld [vmem:[#allocation2 + $0x40] sm:$0xff]
      %v1147 = vld [vmem:[#allocation2 + $0x48] sm:$0xff]
      %1157 = vrot.lane.b32.xlu0 %v1139, 119
      %v1158 = vpop.permute.xlu0 %1157
      %1159 = vrot.lane.b32.xlu0 %v1140, 119
      %v1160 = vpop.permute.xlu0 %1159
      %1161 = vrot.lane.b32.xlu0 %v1141, 119
      %v1162 = vpop.permute.xlu0 %1161
      %1163 = vrot.lane.b32.xlu0 %v1142, 119
      %v1164 = vpop.permute.xlu0 %1163
      %1165 = vrot.lane.b32.xlu0 %v1143, 119
      %v1166 = vpop.permute.xlu0 %1165
      %1167 = vrot.lane.b32.xlu0 %v1144, 119
      %v1168 = vpop.permute.xlu0 %1167
      %1169 = vrot.lane.b32.xlu0 %v1145, 119
      %v1170 = vpop.permute.xlu0 %1169
      %1171 = vrot.lane.b32.xlu0 %v1146, 119
      %v1172 = vpop.permute.xlu0 %1171
      %1173 = vrot.lane.b32.xlu0 %v1147, 119
      %v1174 = vpop.permute.xlu0 %1173
      %vm1175 = vcmask 973824
      %v1176 = vsel %vm1175, %v1158, %v1160
      %v1177 = vsel %vm1175, %v1160, %v1162
      %v1178 = vsel %vm1175, %v1162, %v1164
      %v1179 = vsel %vm1175, %v1164, %v1166
      %v1180 = vsel %vm1175, %v1166, %v1168
      %v1181 = vsel %vm1175, %v1168, %v1170
      %v1182 = vsel %vm1175, %v1170, %v1172
      %v1183 = vsel %vm1175, %v1172, %v1174
      %1192 = vst [vmem:[#allocation3 + $0x3c0] sm:$0xff] %v1176
      %1193 = vst [vmem:[#allocation3 + $0x3c8] sm:$0xff] %v1177
      %1194 = vst [vmem:[#allocation3 + $0x3d0] sm:$0xff] %v1178
      %1195 = vst [vmem:[#allocation3 + $0x3d8] sm:$0xff] %v1179
      %1196 = vst [vmem:[#allocation3 + $0x3e0] sm:$0xff] %v1180
      %1197 = vst [vmem:[#allocation3 + $0x3e8] sm:$0xff] %v1181
      %1198 = vst [vmem:[#allocation3 + $0x3f0] sm:$0xff] %v1182
      %1199 = vst [vmem:[#allocation3 + $0x3f8] sm:$0xff] %v1183
      %v1200 = vld [vmem:[#allocation2 + $0x8] sm:$0xff]
      %v1201 = vld [vmem:[#allocation2 + $0x10] sm:$0xff]
      %v1202 = vld [vmem:[#allocation2 + $0x18] sm:$0xff]
      %v1203 = vld [vmem:[#allocation2 + $0x20] sm:$0xff]
      %v1204 = vld [vmem:[#allocation2 + $0x28] sm:$0xff]
      %v1205 = vld [vmem:[#allocation2 + $0x30] sm:$0xff]
      %v1206 = vld [vmem:[#allocation2 + $0x38] sm:$0xff]
      %v1207 = vld [vmem:[#allocation2 + $0x40] sm:$0xff]
      %v1208 = vld [vmem:[#allocation2 + $0x48] sm:$0xff]
      %1218 = vrot.lane.b32.xlu0 %v1200, 118
      %v1219 = vpop.permute.xlu0 %1218
      %1220 = vrot.lane.b32.xlu0 %v1201, 118
      %v1221 = vpop.permute.xlu0 %1220
      %1222 = vrot.lane.b32.xlu0 %v1202, 118
      %v1223 = vpop.permute.xlu0 %1222
      %1224 = vrot.lane.b32.xlu0 %v1203, 118
      %v1225 = vpop.permute.xlu0 %1224
      %1226 = vrot.lane.b32.xlu0 %v1204, 118
      %v1227 = vpop.permute.xlu0 %1226
      %1228 = vrot.lane.b32.xlu0 %v1205, 118
      %v1229 = vpop.permute.xlu0 %1228
      %1230 = vrot.lane.b32.xlu0 %v1206, 118
      %v1231 = vpop.permute.xlu0 %1230
      %1232 = vrot.lane.b32.xlu0 %v1207, 118
      %v1233 = vpop.permute.xlu0 %1232
      %1234 = vrot.lane.b32.xlu0 %v1208, 118
      %v1235 = vpop.permute.xlu0 %1234
      %vm1236 = vcmask 965632
      %v1237 = vsel %vm1236, %v1219, %v1221
      %v1238 = vsel %vm1236, %v1221, %v1223
      %v1239 = vsel %vm1236, %v1223, %v1225
      %v1240 = vsel %vm1236, %v1225, %v1227
      %v1241 = vsel %vm1236, %v1227, %v1229
      %v1242 = vsel %vm1236, %v1229, %v1231
      %v1243 = vsel %vm1236, %v1231, %v1233
      %v1244 = vsel %vm1236, %v1233, %v1235
      %1253 = vst [vmem:[#allocation3 + $0x400] sm:$0xff] %v1237
      %1254 = vst [vmem:[#allocation3 + $0x408] sm:$0xff] %v1238
      %1255 = vst [vmem:[#allocation3 + $0x410] sm:$0xff] %v1239
      %1256 = vst [vmem:[#allocation3 + $0x418] sm:$0xff] %v1240
      %1257 = vst [vmem:[#allocation3 + $0x420] sm:$0xff] %v1241
      %1258 = vst [vmem:[#allocation3 + $0x428] sm:$0xff] %v1242
      %1259 = vst [vmem:[#allocation3 + $0x430] sm:$0xff] %v1243
      %1260 = vst [vmem:[#allocation3 + $0x438] sm:$0xff] %v1244
      %v1261 = vld [vmem:[#allocation2 + $0x8] sm:$0xff]
      %v1262 = vld [vmem:[#allocation2 + $0x10] sm:$0xff]
      %v1263 = vld [vmem:[#allocation2 + $0x18] sm:$0xff]
      %v1264 = vld [vmem:[#allocation2 + $0x20] sm:$0xff]
      %v1265 = vld [vmem:[#allocation2 + $0x28] sm:$0xff]
      %v1266 = vld [vmem:[#allocation2 + $0x30] sm:$0xff]
      %v1267 = vld [vmem:[#allocation2 + $0x38] sm:$0xff]
      %v1268 = vld [vmem:[#allocation2 + $0x40] sm:$0xff]
      %v1269 = vld [vmem:[#allocation2 + $0x48] sm:$0xff]
      %1279 = vrot.lane.b32.xlu0 %v1261, 117
      %v1280 = vpop.permute.xlu0 %1279
      %1281 = vrot.lane.b32.xlu0 %v1262, 117
      %v1282 = vpop.permute.xlu0 %1281
      %1283 = vrot.lane.b32.xlu0 %v1263, 117
      %v1284 = vpop.permute.xlu0 %1283
      %1285 = vrot.lane.b32.xlu0 %v1264, 117
      %v1286 = vpop.permute.xlu0 %1285
      %1287 = vrot.lane.b32.xlu0 %v1265, 117
      %v1288 = vpop.permute.xlu0 %1287
      %1289 = vrot.lane.b32.xlu0 %v1266, 117
      %v1290 = vpop.permute.xlu0 %1289
      %1291 = vrot.lane.b32.xlu0 %v1267, 117
      %v1292 = vpop.permute.xlu0 %1291
      %1293 = vrot.lane.b32.xlu0 %v1268, 117
      %v1294 = vpop.permute.xlu0 %1293
      %1295 = vrot.lane.b32.xlu0 %v1269, 117
      %v1296 = vpop.permute.xlu0 %1295
      %vm1297 = vcmask 957440
      %v1298 = vsel %vm1297, %v1280, %v1282
      %v1299 = vsel %vm1297, %v1282, %v1284
      %v1300 = vsel %vm1297, %v1284, %v1286
      %v1301 = vsel %vm1297, %v1286, %v1288
      %v1302 = vsel %vm1297, %v1288, %v1290
      %v1303 = vsel %vm1297, %v1290, %v1292
      %v1304 = vsel %vm1297, %v1292, %v1294
      %v1305 = vsel %vm1297, %v1294, %v1296
      %1314 = vst [vmem:[#allocation3 + $0x440] sm:$0xff] %v1298
      %1315 = vst [vmem:[#allocation3 + $0x448] sm:$0xff] %v1299
      %1316 = vst [vmem:[#allocation3 + $0x450] sm:$0xff] %v1300
      %1317 = vst [vmem:[#allocation3 + $0x458] sm:$0xff] %v1301
      %1318 = vst [vmem:[#allocation3 + $0x460] sm:$0xff] %v1302
      %1319 = vst [vmem:[#allocation3 + $0x468] sm:$0xff] %v1303
      %1320 = vst [vmem:[#allocation3 + $0x470] sm:$0xff] %v1304
      %1321 = vst [vmem:[#allocation3 + $0x478] sm:$0xff] %v1305
      %v1322 = vld [vmem:[#allocation2 + $0x8] sm:$0xff]
      %v1323 = vld [vmem:[#allocation2 + $0x10] sm:$0xff]
      %v1324 = vld [vmem:[#allocation2 + $0x18] sm:$0xff]
      %v1325 = vld [vmem:[#allocation2 + $0x20] sm:$0xff]
      %v1326 = vld [vmem:[#allocation2 + $0x28] sm:$0xff]
      %v1327 = vld [vmem:[#allocation2 + $0x30] sm:$0xff]
      %v1328 = vld [vmem:[#allocation2 + $0x38] sm:$0xff]
      %v1329 = vld [vmem:[#allocation2 + $0x40] sm:$0xff]
      %v1330 = vld [vmem:[#allocation2 + $0x48] sm:$0xff]
      %1340 = vrot.lane.b32.xlu0 %v1322, 39
      %v1341 = vpop.permute.xlu0 %1340
      %1342 = vrot.lane.b32.xlu0 %v1323, 39
      %v1343 = vpop.permute.xlu0 %1342
      %1344 = vrot.lane.b32.xlu0 %v1324, 39
      %v1345 = vpop.permute.xlu0 %1344
      %1346 = vrot.lane.b32.xlu0 %v1325, 39
      %v1347 = vpop.permute.xlu0 %1346
      %1348 = vrot.lane.b32.xlu0 %v1326, 39
      %v1349 = vpop.permute.xlu0 %1348
      %1350 = vrot.lane.b32.xlu0 %v1327, 39
      %v1351 = vpop.permute.xlu0 %1350
      %1352 = vrot.lane.b32.xlu0 %v1328, 39
      %v1353 = vpop.permute.xlu0 %1352
      %1354 = vrot.lane.b32.xlu0 %v1329, 39
      %v1355 = vpop.permute.xlu0 %1354
      %1356 = vrot.lane.b32.xlu0 %v1330, 39
      %v1357 = vpop.permute.xlu0 %1356
      %vm1358 = vcmask 318464
      %v1359 = vsel %vm1358, %v1341, %v1343
      %v1360 = vsel %vm1358, %v1343, %v1345
      %v1361 = vsel %vm1358, %v1345, %v1347
      %v1362 = vsel %vm1358, %v1347, %v1349
      %v1363 = vsel %vm1358, %v1349, %v1351
      %v1364 = vsel %vm1358, %v1351, %v1353
      %v1365 = vsel %vm1358, %v1353, %v1355
      %v1366 = vsel %vm1358, %v1355, %v1357
      %1375 = vst [vmem:[#allocation3 + $0x480] sm:$0xff] %v1359
      %1376 = vst [vmem:[#allocation3 + $0x488] sm:$0xff] %v1360
      %1377 = vst [vmem:[#allocation3 + $0x490] sm:$0xff] %v1361
      %1378 = vst [vmem:[#allocation3 + $0x498] sm:$0xff] %v1362
      %1379 = vst [vmem:[#allocation3 + $0x4a0] sm:$0xff] %v1363
      %1380 = vst [vmem:[#allocation3 + $0x4a8] sm:$0xff] %v1364
      %1381 = vst [vmem:[#allocation3 + $0x4b0] sm:$0xff] %v1365
      %1382 = vst [vmem:[#allocation3 + $0x4b8] sm:$0xff] %v1366
      %v1383 = vld [vmem:[#allocation2 + $0x8] sm:$0xff]
      %v1384 = vld [vmem:[#allocation2 + $0x10] sm:$0xff]
      %v1385 = vld [vmem:[#allocation2 + $0x18] sm:$0xff]
      %v1386 = vld [vmem:[#allocation2 + $0x20] sm:$0xff]
      %v1387 = vld [vmem:[#allocation2 + $0x28] sm:$0xff]
      %v1388 = vld [vmem:[#allocation2 + $0x30] sm:$0xff]
      %v1389 = vld [vmem:[#allocation2 + $0x38] sm:$0xff]
      %v1390 = vld [vmem:[#allocation2 + $0x40] sm:$0xff]
      %v1391 = vld [vmem:[#allocation2 + $0x48] sm:$0xff]
      %1401 = vrot.lane.b32.xlu0 %v1383, 38
      %v1402 = vpop.permute.xlu0 %1401
      %1403 = vrot.lane.b32.xlu0 %v1384, 38
      %v1404 = vpop.permute.xlu0 %1403
      %1405 = vrot.lane.b32.xlu0 %v1385, 38
      %v1406 = vpop.permute.xlu0 %1405
      %1407 = vrot.lane.b32.xlu0 %v1386, 38
      %v1408 = vpop.permute.xlu0 %1407
      %1409 = vrot.lane.b32.xlu0 %v1387, 38
      %v1410 = vpop.permute.xlu0 %1409
      %1411 = vrot.lane.b32.xlu0 %v1388, 38
      %v1412 = vpop.permute.xlu0 %1411
      %1413 = vrot.lane.b32.xlu0 %v1389, 38
      %v1414 = vpop.permute.xlu0 %1413
      %1415 = vrot.lane.b32.xlu0 %v1390, 38
      %v1416 = vpop.permute.xlu0 %1415
      %1417 = vrot.lane.b32.xlu0 %v1391, 38
      %v1418 = vpop.permute.xlu0 %1417
      %vm1419 = vcmask 310272
      %v1420 = vsel %vm1419, %v1402, %v1404
      %v1421 = vsel %vm1419, %v1404, %v1406
      %v1422 = vsel %vm1419, %v1406, %v1408
      %v1423 = vsel %vm1419, %v1408, %v1410
      %v1424 = vsel %vm1419, %v1410, %v1412
      %v1425 = vsel %vm1419, %v1412, %v1414
      %v1426 = vsel %vm1419, %v1414, %v1416
      %v1427 = vsel %vm1419, %v1416, %v1418
      %1436 = vst [vmem:[#allocation3 + $0x4c0] sm:$0xff] %v1420
      %1437 = vst [vmem:[#allocation3 + $0x4c8] sm:$0xff] %v1421
      %1438 = vst [vmem:[#allocation3 + $0x4d0] sm:$0xff] %v1422
      %1439 = vst [vmem:[#allocation3 + $0x4d8] sm:$0xff] %v1423
      %1440 = vst [vmem:[#allocation3 + $0x4e0] sm:$0xff] %v1424
      %1441 = vst [vmem:[#allocation3 + $0x4e8] sm:$0xff] %v1425
      %1442 = vst [vmem:[#allocation3 + $0x4f0] sm:$0xff] %v1426
      %1443 = vst [vmem:[#allocation3 + $0x4f8] sm:$0xff] %v1427
      %v1444 = vld [vmem:[#allocation2 + $0x8] sm:$0xff]
      %v1445 = vld [vmem:[#allocation2 + $0x10] sm:$0xff]
      %v1446 = vld [vmem:[#allocation2 + $0x18] sm:$0xff]
      %v1447 = vld [vmem:[#allocation2 + $0x20] sm:$0xff]
      %v1448 = vld [vmem:[#allocation2 + $0x28] sm:$0xff]
      %v1449 = vld [vmem:[#allocation2 + $0x30] sm:$0xff]
      %v1450 = vld [vmem:[#allocation2 + $0x38] sm:$0xff]
      %v1451 = vld [vmem:[#allocation2 + $0x40] sm:$0xff]
      %v1452 = vld [vmem:[#allocation2 + $0x48] sm:$0xff]
      %1462 = vrot.lane.b32.xlu0 %v1444, 37
      %v1463 = vpop.permute.xlu0 %1462
      %1464 = vrot.lane.b32.xlu0 %v1445, 37
      %v1465 = vpop.permute.xlu0 %1464
      %1466 = vrot.lane.b32.xlu0 %v1446, 37
      %v1467 = vpop.permute.xlu0 %1466
      %1468 = vrot.lane.b32.xlu0 %v1447, 37
      %v1469 = vpop.permute.xlu0 %1468
      %1470 = vrot.lane.b32.xlu0 %v1448, 37
      %v1471 = vpop.permute.xlu0 %1470
      %1472 = vrot.lane.b32.xlu0 %v1449, 37
      %v1473 = vpop.permute.xlu0 %1472
      %1474 = vrot.lane.b32.xlu0 %v1450, 37
      %v1475 = vpop.permute.xlu0 %1474
      %1476 = vrot.lane.b32.xlu0 %v1451, 37
      %v1477 = vpop.permute.xlu0 %1476
      %1478 = vrot.lane.b32.xlu0 %v1452, 37
      %v1479 = vpop.permute.xlu0 %1478
      %vm1480 = vcmask 302080
      %v1481 = vsel %vm1480, %v1463, %v1465
      %v1482 = vsel %vm1480, %v1465, %v1467
      %v1483 = vsel %vm1480, %v1467, %v1469
      %v1484 = vsel %vm1480, %v1469, %v1471
      %v1485 = vsel %vm1480, %v1471, %v1473
      %v1486 = vsel %vm1480, %v1473, %v1475
      %v1487 = vsel %vm1480, %v1475, %v1477
      %v1488 = vsel %vm1480, %v1477, %v1479
      %1497 = vst [vmem:[#allocation3 + $0x500] sm:$0xff] %v1481
      %1498 = vst [vmem:[#allocation3 + $0x508] sm:$0xff] %v1482
      %1499 = vst [vmem:[#allocation3 + $0x510] sm:$0xff] %v1483
      %1500 = vst [vmem:[#allocation3 + $0x518] sm:$0xff] %v1484
      %1501 = vst [vmem:[#allocation3 + $0x520] sm:$0xff] %v1485
      %1502 = vst [vmem:[#allocation3 + $0x528] sm:$0xff] %v1486
      %1503 = vst [vmem:[#allocation3 + $0x530] sm:$0xff] %v1487
      %1504 = vst [vmem:[#allocation3 + $0x538] sm:$0xff] %v1488
      %v1505 = vld [vmem:[#allocation2 + $0x8] sm:$0xff]
      %v1506 = vld [vmem:[#allocation2 + $0x10] sm:$0xff]
      %v1507 = vld [vmem:[#allocation2 + $0x18] sm:$0xff]
      %v1508 = vld [vmem:[#allocation2 + $0x20] sm:$0xff]
      %v1509 = vld [vmem:[#allocation2 + $0x28] sm:$0xff]
      %v1510 = vld [vmem:[#allocation2 + $0x30] sm:$0xff]
      %v1511 = vld [vmem:[#allocation2 + $0x38] sm:$0xff]
      %v1512 = vld [vmem:[#allocation2 + $0x40] sm:$0xff]
      %v1513 = vld [vmem:[#allocation2 + $0x48] sm:$0xff]
      %1523 = vrot.lane.b32.xlu0 %v1505, 29
      %v1524 = vpop.permute.xlu0 %1523
      %1525 = vrot.lane.b32.xlu0 %v1506, 29
      %v1526 = vpop.permute.xlu0 %1525
      %1527 = vrot.lane.b32.xlu0 %v1507, 29
      %v1528 = vpop.permute.xlu0 %1527
      %1529 = vrot.lane.b32.xlu0 %v1508, 29
      %v1530 = vpop.permute.xlu0 %1529
      %1531 = vrot.lane.b32.xlu0 %v1509, 29
      %v1532 = vpop.permute.xlu0 %1531
      %1533 = vrot.lane.b32.xlu0 %v1510, 29
      %v1534 = vpop.permute.xlu0 %1533
      %1535 = vrot.lane.b32.xlu0 %v1511, 29
      %v1536 = vpop.permute.xlu0 %1535
      %1537 = vrot.lane.b32.xlu0 %v1512, 29
      %v1538 = vpop.permute.xlu0 %1537
      %1539 = vrot.lane.b32.xlu0 %v1513, 29
      %v1540 = vpop.permute.xlu0 %1539
      %vm1541 = vcmask 236544
      %v1542 = vsel %vm1541, %v1524, %v1526
      %v1543 = vsel %vm1541, %v1526, %v1528
      %v1544 = vsel %vm1541, %v1528, %v1530
      %v1545 = vsel %vm1541, %v1530, %v1532
      %v1546 = vsel %vm1541, %v1532, %v1534
      %v1547 = vsel %vm1541, %v1534, %v1536
      %v1548 = vsel %vm1541, %v1536, %v1538
      %v1549 = vsel %vm1541, %v1538, %v1540
      %1558 = vst [vmem:[#allocation3 + $0x540] sm:$0xff] %v1542
      %1559 = vst [vmem:[#allocation3 + $0x548] sm:$0xff] %v1543
      %1560 = vst [vmem:[#allocation3 + $0x550] sm:$0xff] %v1544
      %1561 = vst [vmem:[#allocation3 + $0x558] sm:$0xff] %v1545
      %1562 = vst [vmem:[#allocation3 + $0x560] sm:$0xff] %v1546
      %1563 = vst [vmem:[#allocation3 + $0x568] sm:$0xff] %v1547
      %1564 = vst [vmem:[#allocation3 + $0x570] sm:$0xff] %v1548
      %1565 = vst [vmem:[#allocation3 + $0x578] sm:$0xff] %v1549
      %v1566 = vld [vmem:[#allocation2 + $0x8] sm:$0xff]
      %v1567 = vld [vmem:[#allocation2 + $0x10] sm:$0xff]
      %v1568 = vld [vmem:[#allocation2 + $0x18] sm:$0xff]
      %v1569 = vld [vmem:[#allocation2 + $0x20] sm:$0xff]
      %v1570 = vld [vmem:[#allocation2 + $0x28] sm:$0xff]
      %v1571 = vld [vmem:[#allocation2 + $0x30] sm:$0xff]
      %v1572 = vld [vmem:[#allocation2 + $0x38] sm:$0xff]
      %v1573 = vld [vmem:[#allocation2 + $0x40] sm:$0xff]
      %v1574 = vld [vmem:[#allocation2 + $0x48] sm:$0xff]
      %1584 = vrot.lane.b32.xlu0 %v1566, 28
      %v1585 = vpop.permute.xlu0 %1584
      %1586 = vrot.lane.b32.xlu0 %v1567, 28
      %v1587 = vpop.permute.xlu0 %1586
      %1588 = vrot.lane.b32.xlu0 %v1568, 28
      %v1589 = vpop.permute.xlu0 %1588
      %1590 = vrot.lane.b32.xlu0 %v1569, 28
      %v1591 = vpop.permute.xlu0 %1590
      %1592 = vrot.lane.b32.xlu0 %v1570, 28
      %v1593 = vpop.permute.xlu0 %1592
      %1594 = vrot.lane.b32.xlu0 %v1571, 28
      %v1595 = vpop.permute.xlu0 %1594
      %1596 = vrot.lane.b32.xlu0 %v1572, 28
      %v1597 = vpop.permute.xlu0 %1596
      %1598 = vrot.lane.b32.xlu0 %v1573, 28
      %v1599 = vpop.permute.xlu0 %1598
      %1600 = vrot.lane.b32.xlu0 %v1574, 28
      %v1601 = vpop.permute.xlu0 %1600
      %vm1602 = vcmask 228352
      %v1603 = vsel %vm1602, %v1585, %v1587
      %v1604 = vsel %vm1602, %v1587, %v1589
      %v1605 = vsel %vm1602, %v1589, %v1591
      %v1606 = vsel %vm1602, %v1591, %v1593
      %v1607 = vsel %vm1602, %v1593, %v1595
      %v1608 = vsel %vm1602, %v1595, %v1597
      %v1609 = vsel %vm1602, %v1597, %v1599
      %v1610 = vsel %vm1602, %v1599, %v1601
      %1619 = vst [vmem:[#allocation3 + $0x580] sm:$0xff] %v1603
      %1620 = vst [vmem:[#allocation3 + $0x588] sm:$0xff] %v1604
      %1621 = vst [vmem:[#allocation3 + $0x590] sm:$0xff] %v1605
      %1622 = vst [vmem:[#allocation3 + $0x598] sm:$0xff] %v1606
      %1623 = vst [vmem:[#allocation3 + $0x5a0] sm:$0xff] %v1607
      %1624 = vst [vmem:[#allocation3 + $0x5a8] sm:$0xff] %v1608
      %1625 = vst [vmem:[#allocation3 + $0x5b0] sm:$0xff] %v1609
      %1626 = vst [vmem:[#allocation3 + $0x5b8] sm:$0xff] %v1610
      %v1627 = vld [vmem:[#allocation2 + $0x8] sm:$0xff]
      %v1628 = vld [vmem:[#allocation2 + $0x10] sm:$0xff]
      %v1629 = vld [vmem:[#allocation2 + $0x18] sm:$0xff]
      %v1630 = vld [vmem:[#allocation2 + $0x20] sm:$0xff]
      %v1631 = vld [vmem:[#allocation2 + $0x28] sm:$0xff]
      %v1632 = vld [vmem:[#allocation2 + $0x30] sm:$0xff]
      %v1633 = vld [vmem:[#allocation2 + $0x38] sm:$0xff]
      %v1634 = vld [vmem:[#allocation2 + $0x40] sm:$0xff]
      %v1635 = vld [vmem:[#allocation2 + $0x48] sm:$0xff]
      %1645 = vrot.lane.b32.xlu0 %v1627, 27
      %v1646 = vpop.permute.xlu0 %1645
      %1647 = vrot.lane.b32.xlu0 %v1628, 27
      %v1648 = vpop.permute.xlu0 %1647
      %1649 = vrot.lane.b32.xlu0 %v1629, 27
      %v1650 = vpop.permute.xlu0 %1649
      %1651 = vrot.lane.b32.xlu0 %v1630, 27
      %v1652 = vpop.permute.xlu0 %1651
      %1653 = vrot.lane.b32.xlu0 %v1631, 27
      %v1654 = vpop.permute.xlu0 %1653
      %1655 = vrot.lane.b32.xlu0 %v1632, 27
      %v1656 = vpop.permute.xlu0 %1655
      %1657 = vrot.lane.b32.xlu0 %v1633, 27
      %v1658 = vpop.permute.xlu0 %1657
      %1659 = vrot.lane.b32.xlu0 %v1634, 27
      %v1660 = vpop.permute.xlu0 %1659
      %1661 = vrot.lane.b32.xlu0 %v1635, 27
      %v1662 = vpop.permute.xlu0 %1661
      %vm1663 = vcmask 220160
      %v1664 = vsel %vm1663, %v1646, %v1648
      %v1665 = vsel %vm1663, %v1648, %v1650
      %v1666 = vsel %vm1663, %v1650, %v1652
      %v1667 = vsel %vm1663, %v1652, %v1654
      %v1668 = vsel %vm1663, %v1654, %v1656
      %v1669 = vsel %vm1663, %v1656, %v1658
      %v1670 = vsel %vm1663, %v1658, %v1660
      %v1671 = vsel %vm1663, %v1660, %v1662
      %1680 = vst [vmem:[#allocation3 + $0x5c0] sm:$0xff] %v1664
      %1681 = vst [vmem:[#allocation3 + $0x5c8] sm:$0xff] %v1665
      %1682 = vst [vmem:[#allocation3 + $0x5d0] sm:$0xff] %v1666
      %1683 = vst [vmem:[#allocation3 + $0x5d8] sm:$0xff] %v1667
      %1684 = vst [vmem:[#allocation3 + $0x5e0] sm:$0xff] %v1668
      %1685 = vst [vmem:[#allocation3 + $0x5e8] sm:$0xff] %v1669
      %1686 = vst [vmem:[#allocation3 + $0x5f0] sm:$0xff] %v1670
      %1687 = vst [vmem:[#allocation3 + $0x5f8] sm:$0xff] %v1671
      %v1688 = vld [vmem:[#allocation2 + $0x8] sm:$0xff]
      %v1689 = vld [vmem:[#allocation2 + $0x10] sm:$0xff]
      %v1690 = vld [vmem:[#allocation2 + $0x18] sm:$0xff]
      %v1691 = vld [vmem:[#allocation2 + $0x20] sm:$0xff]
      %v1692 = vld [vmem:[#allocation2 + $0x28] sm:$0xff]
      %v1693 = vld [vmem:[#allocation2 + $0x30] sm:$0xff]
      %v1694 = vld [vmem:[#allocation2 + $0x38] sm:$0xff]
      %v1695 = vld [vmem:[#allocation2 + $0x40] sm:$0xff]
      %v1696 = vld [vmem:[#allocation2 + $0x48] sm:$0xff]
      %1706 = vrot.lane.b32.xlu0 %v1688, 19
      %v1707 = vpop.permute.xlu0 %1706
      %1708 = vrot.lane.b32.xlu0 %v1689, 19
      %v1709 = vpop.permute.xlu0 %1708
      %1710 = vrot.lane.b32.xlu0 %v1690, 19
      %v1711 = vpop.permute.xlu0 %1710
      %1712 = vrot.lane.b32.xlu0 %v1691, 19
      %v1713 = vpop.permute.xlu0 %1712
      %1714 = vrot.lane.b32.xlu0 %v1692, 19
      %v1715 = vpop.permute.xlu0 %1714
      %1716 = vrot.lane.b32.xlu0 %v1693, 19
      %v1717 = vpop.permute.xlu0 %1716
      %1718 = vrot.lane.b32.xlu0 %v1694, 19
      %v1719 = vpop.permute.xlu0 %1718
      %1720 = vrot.lane.b32.xlu0 %v1695, 19
      %v1721 = vpop.permute.xlu0 %1720
      %1722 = vrot.lane.b32.xlu0 %v1696, 19
      %v1723 = vpop.permute.xlu0 %1722
      %vm1724 = vcmask 154624
      %v1725 = vsel %vm1724, %v1707, %v1709
      %v1726 = vsel %vm1724, %v1709, %v1711
      %v1727 = vsel %vm1724, %v1711, %v1713
      %v1728 = vsel %vm1724, %v1713, %v1715
      %v1729 = vsel %vm1724, %v1715, %v1717
      %v1730 = vsel %vm1724, %v1717, %v1719
      %v1731 = vsel %vm1724, %v1719, %v1721
      %v1732 = vsel %vm1724, %v1721, %v1723
      %1741 = vst [vmem:[#allocation3 + $0x600] sm:$0xff] %v1725
      %1742 = vst [vmem:[#allocation3 + $0x608] sm:$0xff] %v1726
      %1743 = vst [vmem:[#allocation3 + $0x610] sm:$0xff] %v1727
      %1744 = vst [vmem:[#allocation3 + $0x618] sm:$0xff] %v1728
      %1745 = vst [vmem:[#allocation3 + $0x620] sm:$0xff] %v1729
      %1746 = vst [vmem:[#allocation3 + $0x628] sm:$0xff] %v1730
      %1747 = vst [vmem:[#allocation3 + $0x630] sm:$0xff] %v1731
      %1748 = vst [vmem:[#allocation3 + $0x638] sm:$0xff] %v1732
      %v1749 = vld [vmem:[#allocation2 + $0x8] sm:$0xff]
      %v1750 = vld [vmem:[#allocation2 + $0x10] sm:$0xff]
      %v1751 = vld [vmem:[#allocation2 + $0x18] sm:$0xff]
      %v1752 = vld [vmem:[#allocation2 + $0x20] sm:$0xff]
      %v1753 = vld [vmem:[#allocation2 + $0x28] sm:$0xff]
      %v1754 = vld [vmem:[#allocation2 + $0x30] sm:$0xff]
      %v1755 = vld [vmem:[#allocation2 + $0x38] sm:$0xff]
      %v1756 = vld [vmem:[#allocation2 + $0x40] sm:$0xff]
      %v1757 = vld [vmem:[#allocation2 + $0x48] sm:$0xff]
      %1767 = vrot.lane.b32.xlu0 %v1749, 18
      %v1768 = vpop.permute.xlu0 %1767
      %1769 = vrot.lane.b32.xlu0 %v1750, 18
      %v1770 = vpop.permute.xlu0 %1769
      %1771 = vrot.lane.b32.xlu0 %v1751, 18
      %v1772 = vpop.permute.xlu0 %1771
      %1773 = vrot.lane.b32.xlu0 %v1752, 18
      %v1774 = vpop.permute.xlu0 %1773
      %1775 = vrot.lane.b32.xlu0 %v1753, 18
      %v1776 = vpop.permute.xlu0 %1775
      %1777 = vrot.lane.b32.xlu0 %v1754, 18
      %v1778 = vpop.permute.xlu0 %1777
      %1779 = vrot.lane.b32.xlu0 %v1755, 18
      %v1780 = vpop.permute.xlu0 %1779
      %1781 = vrot.lane.b32.xlu0 %v1756, 18
      %v1782 = vpop.permute.xlu0 %1781
      %1783 = vrot.lane.b32.xlu0 %v1757, 18
      %v1784 = vpop.permute.xlu0 %1783
      %vm1785 = vcmask 146432
      %v1786 = vsel %vm1785, %v1768, %v1770
      %v1787 = vsel %vm1785, %v1770, %v1772
      %v1788 = vsel %vm1785, %v1772, %v1774
      %v1789 = vsel %vm1785, %v1774, %v1776
      %v1790 = vsel %vm1785, %v1776, %v1778
      %v1791 = vsel %vm1785, %v1778, %v1780
      %v1792 = vsel %vm1785, %v1780, %v1782
      %v1793 = vsel %vm1785, %v1782, %v1784
      %1802 = vst [vmem:[#allocation3 + $0x640] sm:$0xff] %v1786
      %1803 = vst [vmem:[#allocation3 + $0x648] sm:$0xff] %v1787
      %1804 = vst [vmem:[#allocation3 + $0x650] sm:$0xff] %v1788
      %1805 = vst [vmem:[#allocation3 + $0x658] sm:$0xff] %v1789
      %1806 = vst [vmem:[#allocation3 + $0x660] sm:$0xff] %v1790
      %1807 = vst [vmem:[#allocation3 + $0x668] sm:$0xff] %v1791
      %1808 = vst [vmem:[#allocation3 + $0x670] sm:$0xff] %v1792
      %1809 = vst [vmem:[#allocation3 + $0x678] sm:$0xff] %v1793
      %v1810 = vld [vmem:[#allocation2 + $0x8] sm:$0xff]
      %v1811 = vld [vmem:[#allocation2 + $0x10] sm:$0xff]
      %v1812 = vld [vmem:[#allocation2 + $0x18] sm:$0xff]
      %v1813 = vld [vmem:[#allocation2 + $0x20] sm:$0xff]
      %v1814 = vld [vmem:[#allocation2 + $0x28] sm:$0xff]
      %v1815 = vld [vmem:[#allocation2 + $0x30] sm:$0xff]
      %v1816 = vld [vmem:[#allocation2 + $0x38] sm:$0xff]
      %v1817 = vld [vmem:[#allocation2 + $0x40] sm:$0xff]
      %v1818 = vld [vmem:[#allocation2 + $0x48] sm:$0xff]
      %1828 = vrot.lane.b32.xlu0 %v1810, 17
      %v1829 = vpop.permute.xlu0 %1828
      %1830 = vrot.lane.b32.xlu0 %v1811, 17
      %v1831 = vpop.permute.xlu0 %1830
      %1832 = vrot.lane.b32.xlu0 %v1812, 17
      %v1833 = vpop.permute.xlu0 %1832
      %1834 = vrot.lane.b32.xlu0 %v1813, 17
      %v1835 = vpop.permute.xlu0 %1834
      %1836 = vrot.lane.b32.xlu0 %v1814, 17
      %v1837 = vpop.permute.xlu0 %1836
      %1838 = vrot.lane.b32.xlu0 %v1815, 17
      %v1839 = vpop.permute.xlu0 %1838
      %1840 = vrot.lane.b32.xlu0 %v1816, 17
      %v1841 = vpop.permute.xlu0 %1840
      %1842 = vrot.lane.b32.xlu0 %v1817, 17
      %v1843 = vpop.permute.xlu0 %1842
      %1844 = vrot.lane.b32.xlu0 %v1818, 17
      %v1845 = vpop.permute.xlu0 %1844
      %vm1846 = vcmask 138240
      %v1847 = vsel %vm1846, %v1829, %v1831
      %v1848 = vsel %vm1846, %v1831, %v1833
      %v1849 = vsel %vm1846, %v1833, %v1835
      %v1850 = vsel %vm1846, %v1835, %v1837
      %v1851 = vsel %vm1846, %v1837, %v1839
      %v1852 = vsel %vm1846, %v1839, %v1841
      %v1853 = vsel %vm1846, %v1841, %v1843
      %v1854 = vsel %vm1846, %v1843, %v1845
      %1863 = vst [vmem:[#allocation3 + $0x680] sm:$0xff] %v1847
      %1864 = vst [vmem:[#allocation3 + $0x688] sm:$0xff] %v1848
      %1865 = vst [vmem:[#allocation3 + $0x690] sm:$0xff] %v1849
      %1866 = vst [vmem:[#allocation3 + $0x698] sm:$0xff] %v1850
      %1867 = vst [vmem:[#allocation3 + $0x6a0] sm:$0xff] %v1851
      %1868 = vst [vmem:[#allocation3 + $0x6a8] sm:$0xff] %v1852
      %1869 = vst [vmem:[#allocation3 + $0x6b0] sm:$0xff] %v1853
      %1870 = vst [vmem:[#allocation3 + $0x6b8] sm:$0xff] %v1854
      %v1871 = vld [vmem:[%s1] sm:$0xf]
      %v1872 = vld [vmem:[#allocation3] sm:$0xff]
      %v1873 = vld [vmem:[#allocation3 + $0x8] sm:$0xff]
      %v1874 = vld [vmem:[#allocation3 + $0x10] sm:$0xff]
      %v1875 = vld [vmem:[#allocation3 + $0x18] sm:$0xff]
      %v1876 = vld [vmem:[#allocation3 + $0x20] sm:$0xff]
      %v1877 = vld [vmem:[#allocation3 + $0x28] sm:$0xff]
      %v1878 = vld [vmem:[#allocation3 + $0x30] sm:$0xff]
      %v1879 = vld [vmem:[#allocation3 + $0x38] sm:$0xff]
      %v1880 = vld [vmem:[#allocation3 + $0x40] sm:$0xff]
      %v1881 = vld [vmem:[#allocation3 + $0x48] sm:$0xff]
      %v1882 = vld [vmem:[#allocation3 + $0x50] sm:$0xff]
      %v1883 = vld [vmem:[#allocation3 + $0x58] sm:$0xff]
      %v1884 = vld [vmem:[#allocation3 + $0x60] sm:$0xff]
      %v1885 = vld [vmem:[#allocation3 + $0x68] sm:$0xff]
      %v1886 = vld [vmem:[#allocation3 + $0x70] sm:$0xff]
      %v1887 = vld [vmem:[#allocation3 + $0x78] sm:$0xff]
      %v1888 = vld [vmem:[#allocation3 + $0x80] sm:$0xff]
      %v1889 = vld [vmem:[#allocation3 + $0x88] sm:$0xff]
      %v1890 = vld [vmem:[#allocation3 + $0x90] sm:$0xff]
      %v1891 = vld [vmem:[#allocation3 + $0x98] sm:$0xff]
      %v1892 = vld [vmem:[#allocation3 + $0xa0] sm:$0xff]
      %v1893 = vld [vmem:[#allocation3 + $0xa8] sm:$0xff]
      %v1894 = vld [vmem:[#allocation3 + $0xb0] sm:$0xff]
      %v1895 = vld [vmem:[#allocation3 + $0xb8] sm:$0xff]
      %v1896 = vld [vmem:[#allocation3 + $0xc0] sm:$0xff]
      %v1897 = vld [vmem:[#allocation3 + $0xc8] sm:$0xff]
      %v1898 = vld [vmem:[#allocation3 + $0xd0] sm:$0xff]
      %v1899 = vld [vmem:[#allocation3 + $0xd8] sm:$0xff]
      %v1900 = vld [vmem:[#allocation3 + $0xe0] sm:$0xff]
      %v1901 = vld [vmem:[#allocation3 + $0xe8] sm:$0xff]
      %v1902 = vld [vmem:[#allocation3 + $0xf0] sm:$0xff]
      %v1903 = vld [vmem:[#allocation3 + $0xf8] sm:$0xff]
      %v1904 = vld [vmem:[#allocation3 + $0x100] sm:$0xff]
      %v1905 = vld [vmem:[#allocation3 + $0x108] sm:$0xff]
      %v1906 = vld [vmem:[#allocation3 + $0x110] sm:$0xff]
      %v1907 = vld [vmem:[#allocation3 + $0x118] sm:$0xff]
      %v1908 = vld [vmem:[#allocation3 + $0x120] sm:$0xff]
      %v1909 = vld [vmem:[#allocation3 + $0x128] sm:$0xff]
      %v1910 = vld [vmem:[#allocation3 + $0x130] sm:$0xff]
      %v1911 = vld [vmem:[#allocation3 + $0x138] sm:$0xff]
      %v1912 = vld [vmem:[#allocation3 + $0x140] sm:$0xff]
      %v1913 = vld [vmem:[#allocation3 + $0x148] sm:$0xff]
      %v1914 = vld [vmem:[#allocation3 + $0x150] sm:$0xff]
      %v1915 = vld [vmem:[#allocation3 + $0x158] sm:$0xff]
      %v1916 = vld [vmem:[#allocation3 + $0x160] sm:$0xff]
      %v1917 = vld [vmem:[#allocation3 + $0x168] sm:$0xff]
      %v1918 = vld [vmem:[#allocation3 + $0x170] sm:$0xff]
      %v1919 = vld [vmem:[#allocation3 + $0x178] sm:$0xff]
      %v1920 = vld [vmem:[#allocation3 + $0x180] sm:$0xff]
      %v1921 = vld [vmem:[#allocation3 + $0x188] sm:$0xff]
      %v1922 = vld [vmem:[#allocation3 + $0x190] sm:$0xff]
      %v1923 = vld [vmem:[#allocation3 + $0x198] sm:$0xff]
      %v1924 = vld [vmem:[#allocation3 + $0x1a0] sm:$0xff]
      %v1925 = vld [vmem:[#allocation3 + $0x1a8] sm:$0xff]
      %v1926 = vld [vmem:[#allocation3 + $0x1b0] sm:$0xff]
      %v1927 = vld [vmem:[#allocation3 + $0x1b8] sm:$0xff]
      %v1928 = vld [vmem:[#allocation3 + $0x1c0] sm:$0xff]
      %v1929 = vld [vmem:[#allocation3 + $0x1c8] sm:$0xff]
      %v1930 = vld [vmem:[#allocation3 + $0x1d0] sm:$0xff]
      %v1931 = vld [vmem:[#allocation3 + $0x1d8] sm:$0xff]
      %v1932 = vld [vmem:[#allocation3 + $0x1e0] sm:$0xff]
      %v1933 = vld [vmem:[#allocation3 + $0x1e8] sm:$0xff]
      %v1934 = vld [vmem:[#allocation3 + $0x1f0] sm:$0xff]
      %v1935 = vld [vmem:[#allocation3 + $0x1f8] sm:$0xff]
      %v1936 = vld [vmem:[#allocation3 + $0x200] sm:$0xff]
      %v1937 = vld [vmem:[#allocation3 + $0x208] sm:$0xff]
      %v1938 = vld [vmem:[#allocation3 + $0x210] sm:$0xff]
      %v1939 = vld [vmem:[#allocation3 + $0x218] sm:$0xff]
      %v1940 = vld [vmem:[#allocation3 + $0x220] sm:$0xff]
      %v1941 = vld [vmem:[#allocation3 + $0x228] sm:$0xff]
      %v1942 = vld [vmem:[#allocation3 + $0x230] sm:$0xff]
      %v1943 = vld [vmem:[#allocation3 + $0x238] sm:$0xff]
      %v1944 = vld [vmem:[#allocation3 + $0x240] sm:$0xff]
      %v1945 = vld [vmem:[#allocation3 + $0x248] sm:$0xff]
      %v1946 = vld [vmem:[#allocation3 + $0x250] sm:$0xff]
      %v1947 = vld [vmem:[#allocation3 + $0x258] sm:$0xff]
      %v1948 = vld [vmem:[#allocation3 + $0x260] sm:$0xff]
      %v1949 = vld [vmem:[#allocation3 + $0x268] sm:$0xff]
      %v1950 = vld [vmem:[#allocation3 + $0x270] sm:$0xff]
      %v1951 = vld [vmem:[#allocation3 + $0x278] sm:$0xff]
      %v1952 = vld [vmem:[#allocation3 + $0x280] sm:$0xff]
      %v1953 = vld [vmem:[#allocation3 + $0x288] sm:$0xff]
      %v1954 = vld [vmem:[#allocation3 + $0x290] sm:$0xff]
      %v1955 = vld [vmem:[#allocation3 + $0x298] sm:$0xff]
      %v1956 = vld [vmem:[#allocation3 + $0x2a0] sm:$0xff]
      %v1957 = vld [vmem:[#allocation3 + $0x2a8] sm:$0xff]
      %v1958 = vld [vmem:[#allocation3 + $0x2b0] sm:$0xff]
      %v1959 = vld [vmem:[#allocation3 + $0x2b8] sm:$0xff]
      %v1960 = vld [vmem:[#allocation3 + $0x2c0] sm:$0xff]
      %v1961 = vld [vmem:[#allocation3 + $0x2c8] sm:$0xff]
      %v1962 = vld [vmem:[#allocation3 + $0x2d0] sm:$0xff]
      %v1963 = vld [vmem:[#allocation3 + $0x2d8] sm:$0xff]
      %v1964 = vld [vmem:[#allocation3 + $0x2e0] sm:$0xff]
      %v1965 = vld [vmem:[#allocation3 + $0x2e8] sm:$0xff]
      %v1966 = vld [vmem:[#allocation3 + $0x2f0] sm:$0xff]
      %v1967 = vld [vmem:[#allocation3 + $0x2f8] sm:$0xff]
      %v1968 = vld [vmem:[#allocation3 + $0x300] sm:$0xff]
      %v1969 = vld [vmem:[#allocation3 + $0x308] sm:$0xff]
      %v1970 = vld [vmem:[#allocation3 + $0x310] sm:$0xff]
      %v1971 = vld [vmem:[#allocation3 + $0x318] sm:$0xff]
      %v1972 = vld [vmem:[#allocation3 + $0x320] sm:$0xff]
      %v1973 = vld [vmem:[#allocation3 + $0x328] sm:$0xff]
      %v1974 = vld [vmem:[#allocation3 + $0x330] sm:$0xff]
      %v1975 = vld [vmem:[#allocation3 + $0x338] sm:$0xff]
      %v1976 = vld [vmem:[#allocation3 + $0x340] sm:$0xff]
      %v1977 = vld [vmem:[#allocation3 + $0x348] sm:$0xff]
      %v1978 = vld [vmem:[#allocation3 + $0x350] sm:$0xff]
      %v1979 = vld [vmem:[#allocation3 + $0x358] sm:$0xff]
      %v1980 = vld [vmem:[#allocation3 + $0x360] sm:$0xff]
      %v1981 = vld [vmem:[#allocation3 + $0x368] sm:$0xff]
      %v1982 = vld [vmem:[#allocation3 + $0x370] sm:$0xff]
      %v1983 = vld [vmem:[#allocation3 + $0x378] sm:$0xff]
      %v1984 = vld [vmem:[#allocation3 + $0x380] sm:$0xff]
      %v1985 = vld [vmem:[#allocation3 + $0x388] sm:$0xff]
      %v1986 = vld [vmem:[#allocation3 + $0x390] sm:$0xff]
      %v1987 = vld [vmem:[#allocation3 + $0x398] sm:$0xff]
      %v1988 = vld [vmem:[#allocation3 + $0x3a0] sm:$0xff]
      %v1989 = vld [vmem:[#allocation3 + $0x3a8] sm:$0xff]
      %v1990 = vld [vmem:[#allocation3 + $0x3b0] sm:$0xff]
      %v1991 = vld [vmem:[#allocation3 + $0x3b8] sm:$0xff]
      %v1992 = vld [vmem:[#allocation3 + $0x3c0] sm:$0xff]
      %v1993 = vld [vmem:[#allocation3 + $0x3c8] sm:$0xff]
      %v1994 = vld [vmem:[#allocation3 + $0x3d0] sm:$0xff]
      %v1995 = vld [vmem:[#allocation3 + $0x3d8] sm:$0xff]
      %v1996 = vld [vmem:[#allocation3 + $0x3e0] sm:$0xff]
      %v1997 = vld [vmem:[#allocation3 + $0x3e8] sm:$0xff]
      %v1998 = vld [vmem:[#allocation3 + $0x3f0] sm:$0xff]
      %v1999 = vld [vmem:[#allocation3 + $0x3f8] sm:$0xff]
      %v2000 = vld [vmem:[#allocation3 + $0x400] sm:$0xff]
      %v2001 = vld [vmem:[#allocation3 + $0x408] sm:$0xff]
      %v2002 = vld [vmem:[#allocation3 + $0x410] sm:$0xff]
      %v2003 = vld [vmem:[#allocation3 + $0x418] sm:$0xff]
      %v2004 = vld [vmem:[#allocation3 + $0x420] sm:$0xff]
      %v2005 = vld [vmem:[#allocation3 + $0x428] sm:$0xff]
      %v2006 = vld [vmem:[#allocation3 + $0x430] sm:$0xff]
      %v2007 = vld [vmem:[#allocation3 + $0x438] sm:$0xff]
      %v2008 = vld [vmem:[#allocation3 + $0x440] sm:$0xff]
      %v2009 = vld [vmem:[#allocation3 + $0x448] sm:$0xff]
      %v2010 = vld [vmem:[#allocation3 + $0x450] sm:$0xff]
      %v2011 = vld [vmem:[#allocation3 + $0x458] sm:$0xff]
      %v2012 = vld [vmem:[#allocation3 + $0x460] sm:$0xff]
      %v2013 = vld [vmem:[#allocation3 + $0x468] sm:$0xff]
      %v2014 = vld [vmem:[#allocation3 + $0x470] sm:$0xff]
      %v2015 = vld [vmem:[#allocation3 + $0x478] sm:$0xff]
      %v2016 = vld [vmem:[#allocation3 + $0x480] sm:$0xff]
      %v2017 = vld [vmem:[#allocation3 + $0x488] sm:$0xff]
      %v2018 = vld [vmem:[#allocation3 + $0x490] sm:$0xff]
      %v2019 = vld [vmem:[#allocation3 + $0x498] sm:$0xff]
      %v2020 = vld [vmem:[#allocation3 + $0x4a0] sm:$0xff]
      %v2021 = vld [vmem:[#allocation3 + $0x4a8] sm:$0xff]
      %v2022 = vld [vmem:[#allocation3 + $0x4b0] sm:$0xff]
      %v2023 = vld [vmem:[#allocation3 + $0x4b8] sm:$0xff]
      %v2024 = vld [vmem:[#allocation3 + $0x4c0] sm:$0xff]
      %v2025 = vld [vmem:[#allocation3 + $0x4c8] sm:$0xff]
      %v2026 = vld [vmem:[#allocation3 + $0x4d0] sm:$0xff]
      %v2027 = vld [vmem:[#allocation3 + $0x4d8] sm:$0xff]
      %v2028 = vld [vmem:[#allocation3 + $0x4e0] sm:$0xff]
      %v2029 = vld [vmem:[#allocation3 + $0x4e8] sm:$0xff]
      %v2030 = vld [vmem:[#allocation3 + $0x4f0] sm:$0xff]
      %v2031 = vld [vmem:[#allocation3 + $0x4f8] sm:$0xff]
      %v2032 = vld [vmem:[#allocation3 + $0x500] sm:$0xff]
      %v2033 = vld [vmem:[#allocation3 + $0x508] sm:$0xff]
      %v2034 = vld [vmem:[#allocation3 + $0x510] sm:$0xff]
      %v2035 = vld [vmem:[#allocation3 + $0x518] sm:$0xff]
      %v2036 = vld [vmem:[#allocation3 + $0x520] sm:$0xff]
      %v2037 = vld [vmem:[#allocation3 + $0x528] sm:$0xff]
      %v2038 = vld [vmem:[#allocation3 + $0x530] sm:$0xff]
      %v2039 = vld [vmem:[#allocation3 + $0x538] sm:$0xff]
      %v2040 = vld [vmem:[#allocation3 + $0x540] sm:$0xff]
      %v2041 = vld [vmem:[#allocation3 + $0x548] sm:$0xff]
      %v2042 = vld [vmem:[#allocation3 + $0x550] sm:$0xff]
      %v2043 = vld [vmem:[#allocation3 + $0x558] sm:$0xff]
      %v2044 = vld [vmem:[#allocation3 + $0x560] sm:$0xff]
      %v2045 = vld [vmem:[#allocation3 + $0x568] sm:$0xff]
      %v2046 = vld [vmem:[#allocation3 + $0x570] sm:$0xff]
      %v2047 = vld [vmem:[#allocation3 + $0x578] sm:$0xff]
      %v2048 = vld [vmem:[#allocation3 + $0x580] sm:$0xff]
      %v2049 = vld [vmem:[#allocation3 + $0x588] sm:$0xff]
      %v2050 = vld [vmem:[#allocation3 + $0x590] sm:$0xff]
      %v2051 = vld [vmem:[#allocation3 + $0x598] sm:$0xff]
      %v2052 = vld [vmem:[#allocation3 + $0x5a0] sm:$0xff]
      %v2053 = vld [vmem:[#allocation3 + $0x5a8] sm:$0xff]
      %v2054 = vld [vmem:[#allocation3 + $0x5b0] sm:$0xff]
      %v2055 = vld [vmem:[#allocation3 + $0x5b8] sm:$0xff]
      %v2056 = vld [vmem:[#allocation3 + $0x5c0] sm:$0xff]
      %v2057 = vld [vmem:[#allocation3 + $0x5c8] sm:$0xff]
      %v2058 = vld [vmem:[#allocation3 + $0x5d0] sm:$0xff]
      %v2059 = vld [vmem:[#allocation3 + $0x5d8] sm:$0xff]
      %v2060 = vld [vmem:[#allocation3 + $0x5e0] sm:$0xff]
      %v2061 = vld [vmem:[#allocation3 + $0x5e8] sm:$0xff]
      %v2062 = vld [vmem:[#allocation3 + $0x5f0] sm:$0xff]
      %v2063 = vld [vmem:[#allocation3 + $0x5f8] sm:$0xff]
      %v2064 = vld [vmem:[#allocation3 + $0x600] sm:$0xff]
      %v2065 = vld [vmem:[#allocation3 + $0x608] sm:$0xff]
      %v2066 = vld [vmem:[#allocation3 + $0x610] sm:$0xff]
      %v2067 = vld [vmem:[#allocation3 + $0x618] sm:$0xff]
      %v2068 = vld [vmem:[#allocation3 + $0x620] sm:$0xff]
      %v2069 = vld [vmem:[#allocation3 + $0x628] sm:$0xff]
      %v2070 = vld [vmem:[#allocation3 + $0x630] sm:$0xff]
      %v2071 = vld [vmem:[#allocation3 + $0x638] sm:$0xff]
      %v2072 = vld [vmem:[#allocation3 + $0x640] sm:$0xff]
      %v2073 = vld [vmem:[#allocation3 + $0x648] sm:$0xff]
      %v2074 = vld [vmem:[#allocation3 + $0x650] sm:$0xff]
      %v2075 = vld [vmem:[#allocation3 + $0x658] sm:$0xff]
      %v2076 = vld [vmem:[#allocation3 + $0x660] sm:$0xff]
      %v2077 = vld [vmem:[#allocation3 + $0x668] sm:$0xff]
      %v2078 = vld [vmem:[#allocation3 + $0x670] sm:$0xff]
      %v2079 = vld [vmem:[#allocation3 + $0x678] sm:$0xff]
      %v2080 = vld [vmem:[#allocation3 + $0x680] sm:$0xff]
      %v2081 = vld [vmem:[#allocation3 + $0x688] sm:$0xff]
      %v2082 = vld [vmem:[#allocation3 + $0x690] sm:$0xff]
      %v2083 = vld [vmem:[#allocation3 + $0x698] sm:$0xff]
      %v2084 = vld [vmem:[#allocation3 + $0x6a0] sm:$0xff]
      %v2085 = vld [vmem:[#allocation3 + $0x6a8] sm:$0xff]
      %v2086 = vld [vmem:[#allocation3 + $0x6b0] sm:$0xff]
      %v2087 = vld [vmem:[#allocation3 + $0x6b8] sm:$0xff]
      %v2090 = vunpack.c.l.s4 1966171168
      %v2091 = vunpack.c.0.s8 %v2090
      %v2092 = vlaneseq
      %v2093 = vshrl.u32 %v2092, 7
      %v2094 = vsub.s32 %v2091, %v2093
      %v2095 = vrot.slane %v1871, %v2094
      %v2096 = vcombine.high %v2095, %v2095
      %v2098 = vunpack.c.l.s4 1966171168
      %v2099 = vunpack.c.0.s8 %v2098
      %v2100 = vlaneseq
      %v2101 = vshrl.u32 %v2100, 7
      %v2102 = vsub.s32 %v2099, %v2101
      %v2103 = vrot.slane %v2095, %v2102
      %v2105 = vunpack.c.l.s4 1966171168
      %v2106 = vunpack.c.0.s8 %v2105
      %v2107 = vlaneseq
      %v2108 = vshrl.u32 %v2107, 7
      %v2109 = vsub.s32 %v2106, %v2108
      %v2110 = vrot.slane %v2096, %v2109
      %v2111 = vcombine.high %v2103, %v2103
      %v2112 = vcombine.high %v2110, %v2110
      %vm2116 = vcmask 392192
      %v2118 = vsel %vm2116, %v2112, 0
      %2120 = vmatprep.subr.bf16.mxu0 %v1873
      %2121 = vmatpush1.bf16.msra.mxu0 %v1872
      %2122 = vmatprep.subr.bf16.mxu0 %v1881
      %2123 = vmatpush1.bf16.msra.mxu0 %v1880
      %2124 = vmatprep.subr.bf16.mxu0 %v1889
      %2125 = vmatpush1.bf16.msra.mxu0 %v1888
      %2126 = vmatprep.subr.bf16.mxu0 %v1897
      %2127 = vmatpush1.bf16.msra.mxu0 %v1896
      %2128 = vmatprep.subr.bf16.mxu0 %v1905
      %2129 = vmatpush1.bf16.msra.mxu0 %v1904
      %2130 = vmatprep.subr.bf16.mxu0 %v1913
      %2131 = vmatpush1.bf16.msra.mxu0 %v1912
      %2132 = vmatprep.subr.bf16.mxu0 %v1921
      %2133 = vmatpush1.bf16.msra.mxu0 %v1920
      %2134 = vmatprep.subr.bf16.mxu0 %v1929
      %2135 = vmatpush1.bf16.msra.mxu0 %v1928
      %2136 = vmatprep.subr.bf16.mxu0 %v1937
      %2137 = vmatpush1.bf16.msra.mxu0 %v1936
      %2138 = vmatprep.subr.bf16.mxu0 %v1945
      %2139 = vmatpush1.bf16.msra.mxu0 %v1944
      %2140 = vmatprep.subr.bf16.mxu0 %v1953
      %2141 = vmatpush1.bf16.msra.mxu0 %v1952
      %2142 = vmatprep.subr.bf16.mxu0 %v1961
      %2143 = vmatpush1.bf16.msra.mxu0 %v1960
      %2144 = vmatprep.subr.bf16.mxu0 %v1969
      %2145 = vmatpush1.bf16.msra.mxu0 %v1968
      %2146 = vmatprep.subr.bf16.mxu0 %v1977
      %2147 = vmatpush1.bf16.msra.mxu0 %v1976
      %2148 = vmatprep.subr.bf16.mxu0 %v1985
      %2149 = vmatpush1.bf16.msra.mxu0 %v1984
      %2150 = vmatprep.subr.bf16.mxu0 %v1993
      %2151 = vmatpush1.bf16.msra.mxu0 %v1992
      %2152 = vmatprep.mubr.bf16.mxu0 %v2110
      %2153 = vmatmul.mubr.bf16.gmra.mrb[0].mxu0 %v2103
      %v2154 = vpop.f32.mrb[0].mxu0
      %v2155 = vadd.f32 0.0, %v2154
      %v2156 = vpop.f32.mrb[0].mxu0
      %v2157 = vadd.f32 0.0, %v2156
      %v2158 = vpop.f32.mrb[0].mxu0
      %v2159 = vpop.f32.mrb[0].mxu0
      %2160 = vdwg.mxu0
      %2161 = vmatprep.subr.bf16.mxu0 %v2001
      %2162 = vmatpush1.bf16.msra.mxu0 %v2000
      %2163 = vmatprep.subr.bf16.mxu0 %v2009
      %2164 = vmatpush1.bf16.msra.mxu0 %v2008
      %2165 = vmatprep.subr.bf16.mxu0 %v2017
      %2166 = vmatpush1.bf16.msra.mxu0 %v2016
      %2167 = vmatprep.subr.bf16.mxu0 %v2025
      %2168 = vmatpush1.bf16.msra.mxu0 %v2024
      %2169 = vmatprep.subr.bf16.mxu0 %v2033
      %2170 = vmatpush1.bf16.msra.mxu0 %v2032
      %2171 = vmatprep.subr.bf16.mxu0 %v2041
      %2172 = vmatpush1.bf16.msra.mxu0 %v2040
      %2173 = vmatprep.subr.bf16.mxu0 %v2049
      %2174 = vmatpush1.bf16.msra.mxu0 %v2048
      %2175 = vmatprep.subr.bf16.mxu0 %v2057
      %2176 = vmatpush1.bf16.msra.mxu0 %v2056
      %2177 = vmatprep.subr.bf16.mxu0 %v2065
      %2178 = vmatpush1.bf16.msra.mxu0 %v2064
      %2179 = vmatprep.subr.bf16.mxu0 %v2073
      %2180 = vmatpush1.bf16.msra.mxu0 %v2072
      %2181 = vmatprep.subr.bf16.mxu0 %v2081
      %2182 = vmatpush1.bf16.msra.mxu0 %v2080
      %2183 = vmatprep.subr.bf16.mxu0 0
      %2184 = vmatpush1.bf16.msra.mxu0 0
      %2185 = vmatprep.subr.bf16.mxu0 0
      %2186 = vmatpush1.bf16.msra.mxu0 0
      %2187 = vmatprep.subr.bf16.mxu0 0
      %2188 = vmatpush1.bf16.msra.mxu0 0
      %2189 = vmatprep.subr.bf16.mxu0 0
      %2190 = vmatpush1.bf16.msra.mxu0 0
      %2191 = vmatprep.subr.bf16.mxu0 0
      %2192 = vmatpush1.bf16.msra.mxu0 0
      %2193 = vmatprep.mubr.bf16.mxu0 %v2118
      %2194 = vmatmul.mubr.bf16.gmra.mrb[0].mxu0 %v2111
      %v2195 = vpop.f32.mrb[0].mxu0
      %v2196 = vadd.f32 %v2155, %v2195
      %v2197 = vpop.f32.mrb[0].mxu0
      %v2198 = vadd.f32 %v2157, %v2197
      %v2199 = vpop.f32.mrb[0].mxu0
      %v2200 = vpop.f32.mrb[0].mxu0
      %2201 = vdwg.mxu0
      %2202 = vmatprep.subr.bf16.mxu0 %v1875
      %2203 = vmatpush1.bf16.msra.mxu0 %v1874
      %2204 = vmatprep.subr.bf16.mxu0 %v1883
      %2205 = vmatpush1.bf16.msra.mxu0 %v1882
      %2206 = vmatprep.subr.bf16.mxu0 %v1891
      %2207 = vmatpush1.bf16.msra.mxu0 %v1890
      %2208 = vmatprep.subr.bf16.mxu0 %v1899
      %2209 = vmatpush1.bf16.msra.mxu0 %v1898
      %2210 = vmatprep.subr.bf16.mxu0 %v1907
      %2211 = vmatpush1.bf16.msra.mxu0 %v1906
      %2212 = vmatprep.subr.bf16.mxu0 %v1915
      %2213 = vmatpush1.bf16.msra.mxu0 %v1914
      %2214 = vmatprep.subr.bf16.mxu0 %v1923
      %2215 = vmatpush1.bf16.msra.mxu0 %v1922
      %2216 = vmatprep.subr.bf16.mxu0 %v1931
      %2217 = vmatpush1.bf16.msra.mxu0 %v1930
      %2218 = vmatprep.subr.bf16.mxu0 %v1939
      %2219 = vmatpush1.bf16.msra.mxu0 %v1938
      %2220 = vmatprep.subr.bf16.mxu0 %v1947
      %2221 = vmatpush1.bf16.msra.mxu0 %v1946
      %2222 = vmatprep.subr.bf16.mxu0 %v1955
      %2223 = vmatpush1.bf16.msra.mxu0 %v1954
      %2224 = vmatprep.subr.bf16.mxu0 %v1963
      %2225 = vmatpush1.bf16.msra.mxu0 %v1962
      %2226 = vmatprep.subr.bf16.mxu0 %v1971
      %2227 = vmatpush1.bf16.msra.mxu0 %v1970
      %2228 = vmatprep.subr.bf16.mxu0 %v1979
      %2229 = vmatpush1.bf16.msra.mxu0 %v1978
      %2230 = vmatprep.subr.bf16.mxu0 %v1987
      %2231 = vmatpush1.bf16.msra.mxu0 %v1986
      %2232 = vmatprep.subr.bf16.mxu0 %v1995
      %2233 = vmatpush1.bf16.msra.mxu0 %v1994
      %2234 = vmatprep.mubr.bf16.mxu0 %v2110
      %2235 = vmatmul.mubr.bf16.gmra.mrb[0].mxu0 %v2103
      %v2236 = vpop.f32.mrb[0].mxu0
      %v2237 = vadd.f32 0.0, %v2236
      %v2238 = vpop.f32.mrb[0].mxu0
      %v2239 = vadd.f32 0.0, %v2238
      %v2240 = vpop.f32.mrb[0].mxu0
      %v2241 = vpop.f32.mrb[0].mxu0
      %2242 = vdwg.mxu0
      %2243 = vmatprep.subr.bf16.mxu0 %v2003
      %2244 = vmatpush1.bf16.msra.mxu0 %v2002
      %2245 = vmatprep.subr.bf16.mxu0 %v2011
      %2246 = vmatpush1.bf16.msra.mxu0 %v2010
      %2247 = vmatprep.subr.bf16.mxu0 %v2019
      %2248 = vmatpush1.bf16.msra.mxu0 %v2018
      %2249 = vmatprep.subr.bf16.mxu0 %v2027
      %2250 = vmatpush1.bf16.msra.mxu0 %v2026
      %2251 = vmatprep.subr.bf16.mxu0 %v2035
      %2252 = vmatpush1.bf16.msra.mxu0 %v2034
      %2253 = vmatprep.subr.bf16.mxu0 %v2043
      %2254 = vmatpush1.bf16.msra.mxu0 %v2042
      %2255 = vmatprep.subr.bf16.mxu0 %v2051
      %2256 = vmatpush1.bf16.msra.mxu0 %v2050
      %2257 = vmatprep.subr.bf16.mxu0 %v2059
      %2258 = vmatpush1.bf16.msra.mxu0 %v2058
      %2259 = vmatprep.subr.bf16.mxu0 %v2067
      %2260 = vmatpush1.bf16.msra.mxu0 %v2066
      %2261 = vmatprep.subr.bf16.mxu0 %v2075
      %2262 = vmatpush1.bf16.msra.mxu0 %v2074
      %2263 = vmatprep.subr.bf16.mxu0 %v2083
      %2264 = vmatpush1.bf16.msra.mxu0 %v2082
      %2265 = vmatprep.subr.bf16.mxu0 0
      %2266 = vmatpush1.bf16.msra.mxu0 0
      %2267 = vmatprep.subr.bf16.mxu0 0
      %2268 = vmatpush1.bf16.msra.mxu0 0
      %2269 = vmatprep.subr.bf16.mxu0 0
      %2270 = vmatpush1.bf16.msra.mxu0 0
      %2271 = vmatprep.subr.bf16.mxu0 0
      %2272 = vmatpush1.bf16.msra.mxu0 0
      %2273 = vmatprep.subr.bf16.mxu0 0
      %2274 = vmatpush1.bf16.msra.mxu0 0
      %2275 = vmatprep.mubr.bf16.mxu0 %v2118
      %2276 = vmatmul.mubr.bf16.gmra.mrb[0].mxu0 %v2111
      %v2277 = vpop.f32.mrb[0].mxu0
      %v2278 = vadd.f32 %v2237, %v2277
      %v2279 = vpop.f32.mrb[0].mxu0
      %v2280 = vadd.f32 %v2239, %v2279
      %v2281 = vpop.f32.mrb[0].mxu0
      %v2282 = vpop.f32.mrb[0].mxu0
      %2283 = vdwg.mxu0
      %2284 = vmatprep.subr.bf16.mxu0 %v1877
      %2285 = vmatpush1.bf16.msra.mxu0 %v1876
      %2286 = vmatprep.subr.bf16.mxu0 %v1885
      %2287 = vmatpush1.bf16.msra.mxu0 %v1884
      %2288 = vmatprep.subr.bf16.mxu0 %v1893
      %2289 = vmatpush1.bf16.msra.mxu0 %v1892
      %2290 = vmatprep.subr.bf16.mxu0 %v1901
      %2291 = vmatpush1.bf16.msra.mxu0 %v1900
      %2292 = vmatprep.subr.bf16.mxu0 %v1909
      %2293 = vmatpush1.bf16.msra.mxu0 %v1908
      %2294 = vmatprep.subr.bf16.mxu0 %v1917
      %2295 = vmatpush1.bf16.msra.mxu0 %v1916
      %2296 = vmatprep.subr.bf16.mxu0 %v1925
      %2297 = vmatpush1.bf16.msra.mxu0 %v1924
      %2298 = vmatprep.subr.bf16.mxu0 %v1933
      %2299 = vmatpush1.bf16.msra.mxu0 %v1932
      %2300 = vmatprep.subr.bf16.mxu0 %v1941
      %2301 = vmatpush1.bf16.msra.mxu0 %v1940
      %2302 = vmatprep.subr.bf16.mxu0 %v1949
      %2303 = vmatpush1.bf16.msra.mxu0 %v1948
      %2304 = vmatprep.subr.bf16.mxu0 %v1957
      %2305 = vmatpush1.bf16.msra.mxu0 %v1956
      %2306 = vmatprep.subr.bf16.mxu0 %v1965
      %2307 = vmatpush1.bf16.msra.mxu0 %v1964
      %2308 = vmatprep.subr.bf16.mxu0 %v1973
      %2309 = vmatpush1.bf16.msra.mxu0 %v1972
      %2310 = vmatprep.subr.bf16.mxu0 %v1981
      %2311 = vmatpush1.bf16.msra.mxu0 %v1980
      %2312 = vmatprep.subr.bf16.mxu0 %v1989
      %2313 = vmatpush1.bf16.msra.mxu0 %v1988
      %2314 = vmatprep.subr.bf16.mxu0 %v1997
      %2315 = vmatpush1.bf16.msra.mxu0 %v1996
      %2316 = vmatprep.mubr.bf16.mxu0 %v2110
      %2317 = vmatmul.mubr.bf16.gmra.mrb[0].mxu0 %v2103
      %v2318 = vpop.f32.mrb[0].mxu0
      %v2319 = vadd.f32 0.0, %v2318
      %v2320 = vpop.f32.mrb[0].mxu0
      %v2321 = vadd.f32 0.0, %v2320
      %v2322 = vpop.f32.mrb[0].mxu0
      %v2323 = vpop.f32.mrb[0].mxu0
      %2324 = vdwg.mxu0
      %2325 = vmatprep.subr.bf16.mxu0 %v2005
      %2326 = vmatpush1.bf16.msra.mxu0 %v2004
      %2327 = vmatprep.subr.bf16.mxu0 %v2013
      %2328 = vmatpush1.bf16.msra.mxu0 %v2012
      %2329 = vmatprep.subr.bf16.mxu0 %v2021
      %2330 = vmatpush1.bf16.msra.mxu0 %v2020
      %2331 = vmatprep.subr.bf16.mxu0 %v2029
      %2332 = vmatpush1.bf16.msra.mxu0 %v2028
      %2333 = vmatprep.subr.bf16.mxu0 %v2037
      %2334 = vmatpush1.bf16.msra.mxu0 %v2036
      %2335 = vmatprep.subr.bf16.mxu0 %v2045
      %2336 = vmatpush1.bf16.msra.mxu0 %v2044
      %2337 = vmatprep.subr.bf16.mxu0 %v2053
      %2338 = vmatpush1.bf16.msra.mxu0 %v2052
      %2339 = vmatprep.subr.bf16.mxu0 %v2061
      %2340 = vmatpush1.bf16.msra.mxu0 %v2060
      %2341 = vmatprep.subr.bf16.mxu0 %v2069
      %2342 = vmatpush1.bf16.msra.mxu0 %v2068
      %2343 = vmatprep.subr.bf16.mxu0 %v2077
      %2344 = vmatpush1.bf16.msra.mxu0 %v2076
      %2345 = vmatprep.subr.bf16.mxu0 %v2085
      %2346 = vmatpush1.bf16.msra.mxu0 %v2084
      %2347 = vmatprep.subr.bf16.mxu0 0
      %2348 = vmatpush1.bf16.msra.mxu0 0
      %2349 = vmatprep.subr.bf16.mxu0 0
      %2350 = vmatpush1.bf16.msra.mxu0 0
      %2351 = vmatprep.subr.bf16.mxu0 0
      %2352 = vmatpush1.bf16.msra.mxu0 0
      %2353 = vmatprep.subr.bf16.mxu0 0
      %2354 = vmatpush1.bf16.msra.mxu0 0
      %2355 = vmatprep.subr.bf16.mxu0 0
      %2356 = vmatpush1.bf16.msra.mxu0 0
      %2357 = vmatprep.mubr.bf16.mxu0 %v2118
      %2358 = vmatmul.mubr.bf16.gmra.mrb[0].mxu0 %v2111
      %v2359 = vpop.f32.mrb[0].mxu0
      %v2360 = vadd.f32 %v2319, %v2359
      %v2361 = vpop.f32.mrb[0].mxu0
      %v2362 = vadd.f32 %v2321, %v2361
      %v2363 = vpop.f32.mrb[0].mxu0
      %v2364 = vpop.f32.mrb[0].mxu0
      %2365 = vdwg.mxu0
      %2366 = vmatprep.subr.bf16.mxu0 %v1879
      %2367 = vmatpush1.bf16.msra.mxu0 %v1878
      %2368 = vmatprep.subr.bf16.mxu0 %v1887
      %2369 = vmatpush1.bf16.msra.mxu0 %v1886
      %2370 = vmatprep.subr.bf16.mxu0 %v1895
      %2371 = vmatpush1.bf16.msra.mxu0 %v1894
      %2372 = vmatprep.subr.bf16.mxu0 %v1903
      %2373 = vmatpush1.bf16.msra.mxu0 %v1902
      %2374 = vmatprep.subr.bf16.mxu0 %v1911
      %2375 = vmatpush1.bf16.msra.mxu0 %v1910
      %2376 = vmatprep.subr.bf16.mxu0 %v1919
      %2377 = vmatpush1.bf16.msra.mxu0 %v1918
      %2378 = vmatprep.subr.bf16.mxu0 %v1927
      %2379 = vmatpush1.bf16.msra.mxu0 %v1926
      %2380 = vmatprep.subr.bf16.mxu0 %v1935
      %2381 = vmatpush1.bf16.msra.mxu0 %v1934
      %2382 = vmatprep.subr.bf16.mxu0 %v1943
      %2383 = vmatpush1.bf16.msra.mxu0 %v1942
      %2384 = vmatprep.subr.bf16.mxu0 %v1951
      %2385 = vmatpush1.bf16.msra.mxu0 %v1950
      %2386 = vmatprep.subr.bf16.mxu0 %v1959
      %2387 = vmatpush1.bf16.msra.mxu0 %v1958
      %2388 = vmatprep.subr.bf16.mxu0 %v1967
      %2389 = vmatpush1.bf16.msra.mxu0 %v1966
      %2390 = vmatprep.subr.bf16.mxu0 %v1975
      %2391 = vmatpush1.bf16.msra.mxu0 %v1974
      %2392 = vmatprep.subr.bf16.mxu0 %v1983
      %2393 = vmatpush1.bf16.msra.mxu0 %v1982
      %2394 = vmatprep.subr.bf16.mxu0 %v1991
      %2395 = vmatpush1.bf16.msra.mxu0 %v1990
      %2396 = vmatprep.subr.bf16.mxu0 %v1999
      %2397 = vmatpush1.bf16.msra.mxu0 %v1998
      %2398 = vmatprep.mubr.bf16.mxu0 %v2110
      %2399 = vmatmul.mubr.bf16.gmra.mrb[0].mxu0 %v2103
      %v2400 = vpop.f32.mrb[0].mxu0
      %v2401 = vadd.f32 0.0, %v2400
      %v2402 = vpop.f32.mrb[0].mxu0
      %v2403 = vadd.f32 0.0, %v2402
      %v2404 = vpop.f32.mrb[0].mxu0
      %v2405 = vpop.f32.mrb[0].mxu0
      %2406 = vdwg.mxu0
      %2407 = vmatprep.subr.bf16.mxu0 %v2007
      %2408 = vmatpush1.bf16.msra.mxu0 %v2006
      %2409 = vmatprep.subr.bf16.mxu0 %v2015
      %2410 = vmatpush1.bf16.msra.mxu0 %v2014
      %2411 = vmatprep.subr.bf16.mxu0 %v2023
      %2412 = vmatpush1.bf16.msra.mxu0 %v2022
      %2413 = vmatprep.subr.bf16.mxu0 %v2031
      %2414 = vmatpush1.bf16.msra.mxu0 %v2030
      %2415 = vmatprep.subr.bf16.mxu0 %v2039
      %2416 = vmatpush1.bf16.msra.mxu0 %v2038
      %2417 = vmatprep.subr.bf16.mxu0 %v2047
      %2418 = vmatpush1.bf16.msra.mxu0 %v2046
      %2419 = vmatprep.subr.bf16.mxu0 %v2055
      %2420 = vmatpush1.bf16.msra.mxu0 %v2054
      %2421 = vmatprep.subr.bf16.mxu0 %v2063
      %2422 = vmatpush1.bf16.msra.mxu0 %v2062
      %2423 = vmatprep.subr.bf16.mxu0 %v2071
      %2424 = vmatpush1.bf16.msra.mxu0 %v2070
      %2425 = vmatprep.subr.bf16.mxu0 %v2079
      %2426 = vmatpush1.bf16.msra.mxu0 %v2078
      %2427 = vmatprep.subr.bf16.mxu0 %v2087
      %2428 = vmatpush1.bf16.msra.mxu0 %v2086
      %2429 = vmatprep.subr.bf16.mxu0 0
      %2430 = vmatpush1.bf16.msra.mxu0 0
      %2431 = vmatprep.subr.bf16.mxu0 0
      %2432 = vmatpush1.bf16.msra.mxu0 0
      %2433 = vmatprep.subr.bf16.mxu0 0
      %2434 = vmatpush1.bf16.msra.mxu0 0
      %2435 = vmatprep.subr.bf16.mxu0 0
      %2436 = vmatpush1.bf16.msra.mxu0 0
      %2437 = vmatprep.subr.bf16.mxu0 0
      %2438 = vmatpush1.bf16.msra.mxu0 0
      %2439 = vmatprep.mubr.bf16.mxu0 %v2118
      %2440 = vmatmul.mubr.bf16.gmra.mrb[0].mxu0 %v2111
      %v2441 = vpop.f32.mrb[0].mxu0
      %v2442 = vadd.f32 %v2401, %v2441
      %v2443 = vpop.f32.mrb[0].mxu0
      %v2444 = vadd.f32 %v2403, %v2443
      %v2445 = vpop.f32.mrb[0].mxu0
      %v2446 = vpop.f32.mrb[0].mxu0
      %2447 = vdwg.mxu0
      %v2449 = vlaneseq
      %v2450 = vshrl.u32 %v2449, 7
      %v2451 = vsub.s32 0, %v2450
      %v2452 = vrot.slane %v228, %v2451
      %v2453 = vlaneseq
      %v2454 = vshrl.u32 %v2453, 7
      %v2455 = vsub.s32 1, %v2454
      %v2456 = vrot.slane %v228, %v2455
      %v2457 = vlaneseq
      %v2458 = vshrl.u32 %v2457, 7
      %v2459 = vsub.s32 2, %v2458
      %v2460 = vrot.slane %v228, %v2459
      %v2461 = vlaneseq
      %v2462 = vshrl.u32 %v2461, 7
      %v2463 = vsub.s32 3, %v2462
      %v2464 = vrot.slane %v228, %v2463
      %v2465 = vlaneseq
      %v2466 = vshrl.u32 %v2465, 7
      %v2467 = vsub.s32 4, %v2466
      %v2468 = vrot.slane %v228, %v2467
      %v2469 = vlaneseq
      %v2470 = vshrl.u32 %v2469, 7
      %v2471 = vsub.s32 5, %v2470
      %v2472 = vrot.slane %v228, %v2471
      %v2473 = vlaneseq
      %v2474 = vshrl.u32 %v2473, 7
      %v2475 = vsub.s32 6, %v2474
      %v2476 = vrot.slane %v228, %v2475
      %v2477 = vlaneseq
      %v2478 = vshrl.u32 %v2477, 7
      %v2479 = vsub.s32 7, %v2478
      %v2480 = vrot.slane %v228, %v2479
      %v2489 = vmul.f32 %v2196, %v2452
      %v2490 = vmul.f32 %v2198, %v2456
      %v2491 = vmul.f32 %v2278, %v2460
      %v2492 = vmul.f32 %v2280, %v2464
      %v2493 = vmul.f32 %v2360, %v2468
      %v2494 = vmul.f32 %v2362, %v2472
      %v2495 = vmul.f32 %v2442, %v2476
      %v2496 = vmul.f32 %v2444, %v2480
      %vm2497 = vcmask 1041408
      %v2498 = vsel %vm2497, %v2489, 0.0
      %v2499 = vsel %vm2497, %v2490, 0.0
      %v2500 = vadd.f32 %v2498, %v2499
      %v2501 = vsel %vm2497, %v2491, 0.0
      %v2502 = vadd.f32 %v2500, %v2501
      %v2503 = vsel %vm2497, %v2492, 0.0
      %v2504 = vadd.f32 %v2502, %v2503
      %v2505 = vsel %vm2497, %v2493, 0.0
      %v2506 = vadd.f32 %v2504, %v2505
      %v2507 = vsel %vm2497, %v2494, 0.0
      %v2508 = vadd.f32 %v2506, %v2507
      %v2509 = vsel %vm2497, %v2495, 0.0
      %v2510 = vadd.f32 %v2508, %v2509
      %v2511 = vsel %vm2497, %v2496, 0.0
      %v2512 = vadd.f32 %v2510, %v2511
      %2513 = vadd.xlane.f32.xlu0 %v2512
      %v2514 = vpop.xlane.xlu0 %2513
      %v2515 = vmul.f32 %v2489, %v2489
      %v2516 = vmul.f32 %v2490, %v2490
      %v2517 = vmul.f32 %v2491, %v2491
      %v2518 = vmul.f32 %v2492, %v2492
      %v2519 = vmul.f32 %v2493, %v2493
      %v2520 = vmul.f32 %v2494, %v2494
      %v2521 = vmul.f32 %v2495, %v2495
      %v2522 = vmul.f32 %v2496, %v2496
      %v2523 = vsel %vm2497, %v2515, 0.0
      %v2524 = vsel %vm2497, %v2516, 0.0
      %v2525 = vadd.f32 %v2523, %v2524
      %v2526 = vsel %vm2497, %v2517, 0.0
      %v2527 = vadd.f32 %v2525, %v2526
      %v2528 = vsel %vm2497, %v2518, 0.0
      %v2529 = vadd.f32 %v2527, %v2528
      %v2530 = vsel %vm2497, %v2519, 0.0
      %v2531 = vadd.f32 %v2529, %v2530
      %v2532 = vsel %vm2497, %v2520, 0.0
      %v2533 = vadd.f32 %v2531, %v2532
      %v2534 = vsel %vm2497, %v2521, 0.0
      %v2535 = vadd.f32 %v2533, %v2534
      %v2536 = vsel %vm2497, %v2522, 0.0
      %v2537 = vadd.f32 %v2535, %v2536
      %2538 = vadd.xlane.f32.xlu0 %v2537
      %v2539 = vpop.xlane.xlu0 %2538
      %v2540 = vmul.f32 %v2514, 0.001953125
      %v2541 = vmul.f32 %v2539, 0.001953125
      %v2542 = vmul.f32 %v2540, %v2540
      %v2543 = vsub.f32 %v2541, %v2542
      %v2544 = vsub.f32 %v2196, %v2540
      %v2545 = vsub.f32 %v2198, %v2540
      %v2546 = vsub.f32 %v2278, %v2540
      %v2547 = vsub.f32 %v2280, %v2540
      %v2548 = vsub.f32 %v2360, %v2540
      %v2549 = vsub.f32 %v2362, %v2540
      %v2550 = vsub.f32 %v2442, %v2540
      %v2551 = vsub.f32 %v2444, %v2540
      %v2552 = vadd.f32 %v2543, 1e-05
      %v2553 = vrsqrt.pop %v2552
      %v2554 = vmul.f32 %v2544, %v2553
      %v2555 = vmul.f32 %v2545, %v2553
      %v2556 = vmul.f32 %v2546, %v2553
      %v2557 = vmul.f32 %v2547, %v2553
      %v2558 = vmul.f32 %v2548, %v2553
      %v2559 = vmul.f32 %v2549, %v2553
      %v2560 = vmul.f32 %v2550, %v2553
      %v2561 = vmul.f32 %v2551, %v2553
      %vm2562 = vcmp.ge.f32.partialorder %v2554, 0.0
      %vm2563 = vcmp.ge.f32.partialorder %v2555, 0.0
      %vm2564 = vcmp.ge.f32.partialorder %v2556, 0.0
      %vm2565 = vcmp.ge.f32.partialorder %v2557, 0.0
      %vm2566 = vcmp.ge.f32.partialorder %v2558, 0.0
      %vm2567 = vcmp.ge.f32.partialorder %v2559, 0.0
      %vm2568 = vcmp.ge.f32.partialorder %v2560, 0.0
      %vm2569 = vcmp.ge.f32.partialorder %v2561, 0.0
      %v2570 = vmul.f32 %v2554, 0.05
      %v2571 = vmul.f32 %v2555, 0.05
      %v2572 = vmul.f32 %v2556, 0.05
      %v2573 = vmul.f32 %v2557, 0.05
      %v2574 = vmul.f32 %v2558, 0.05
      %v2575 = vmul.f32 %v2559, 0.05
      %v2576 = vmul.f32 %v2560, 0.05
      %v2577 = vmul.f32 %v2561, 0.05
      %v2578 = vsel %vm2562, %v2554, %v2570
      %v2579 = vsel %vm2563, %v2555, %v2571
      %v2580 = vsel %vm2564, %v2556, %v2572
      %v2581 = vsel %vm2565, %v2557, %v2573
      %v2582 = vsel %vm2566, %v2558, %v2574
      %v2583 = vsel %vm2567, %v2559, %v2575
      %v2584 = vsel %vm2568, %v2560, %v2576
      %v2585 = vsel %vm2569, %v2561, %v2577
      %v2586 = vmul.f32 %v2578, %v2452
      %v2587 = vmul.f32 %v2579, %v2456
      %v2588 = vmul.f32 %v2580, %v2460
      %v2589 = vmul.f32 %v2581, %v2464
      %v2590 = vmul.f32 %v2582, %v2468
      %v2591 = vmul.f32 %v2583, %v2472
      %v2592 = vmul.f32 %v2584, %v2476
      %v2593 = vmul.f32 %v2585, %v2480
      %v2594 = vpack.c.bf16 %v2586, %v2586
      %v2595 = vpack.c.bf16 %v2587, %v2587
      %v2596 = vpack.c.bf16 %v2588, %v2588
      %v2597 = vpack.c.bf16 %v2589, %v2589
      %v2598 = vpack.c.bf16 %v2590, %v2590
      %v2599 = vpack.c.bf16 %v2591, %v2591
      %v2600 = vpack.c.bf16 %v2592, %v2592
      %v2601 = vpack.c.bf16 %v2593, %v2593
      %2602 = vst [vmem:[#allocation2 + $0x8] sm:$0x1] %v2594
      %2603 = vst [vmem:[#allocation2 + $0x10] sm:$0x1] %v2595
      %2604 = vst [vmem:[#allocation2 + $0x18] sm:$0x1] %v2596
      %2605 = vst [vmem:[#allocation2 + $0x20] sm:$0x1] %v2597
      %2606 = vst [vmem:[#allocation2 + $0x28] sm:$0x1] %v2598
      %2607 = vst [vmem:[#allocation2 + $0x30] sm:$0x1] %v2599
      %2608 = vst [vmem:[#allocation2 + $0x38] sm:$0x1] %v2600
      %2609 = vst [vmem:[#allocation2 + $0x40] sm:$0x1] %v2601
      %2610 = vst [vmem:[#allocation2 + $0x8] sm:$0xfe] 0
      %2611 = vst [vmem:[#allocation2 + $0x10] sm:$0xfe] 0
      %2612 = vst [vmem:[#allocation2 + $0x18] sm:$0xfe] 0
      %2613 = vst [vmem:[#allocation2 + $0x20] sm:$0xfe] 0
      %2614 = vst [vmem:[#allocation2 + $0x28] sm:$0xfe] 0
      %2615 = vst [vmem:[#allocation2 + $0x30] sm:$0xfe] 0
      %2616 = vst [vmem:[#allocation2 + $0x38] sm:$0xfe] 0
      %2617 = vst [vmem:[#allocation2 + $0x40] sm:$0xfe] 0
      %v2618 = vld [vmem:[#allocation2] sm:$0xff]
      %v2619 = vld [vmem:[#allocation2 + $0x8] sm:$0xff]
      %v2620 = vld [vmem:[#allocation2 + $0x10] sm:$0xff]
      %v2621 = vld [vmem:[#allocation2 + $0x18] sm:$0xff]
      %v2622 = vld [vmem:[#allocation2 + $0x20] sm:$0xff]
      %v2623 = vld [vmem:[#allocation2 + $0x28] sm:$0xff]
      %v2624 = vld [vmem:[#allocation2 + $0x30] sm:$0xff]
      %v2625 = vld [vmem:[#allocation2 + $0x38] sm:$0xff]
      %v2626 = vld [vmem:[#allocation2 + $0x40] sm:$0xff]
      %2636 = vrot.lane.b32.xlu0 %v2618, 111
      %v2637 = vpop.permute.xlu0 %2636
      %2638 = vrot.lane.b32.xlu0 %v2619, 111
      %v2639 = vpop.permute.xlu0 %2638
      %2640 = vrot.lane.b32.xlu0 %v2620, 111
      %v2641 = vpop.permute.xlu0 %2640
      %2642 = vrot.lane.b32.xlu0 %v2621, 111
      %v2643 = vpop.permute.xlu0 %2642
      %2644 = vrot.lane.b32.xlu0 %v2622, 111
      %v2645 = vpop.permute.xlu0 %2644
      %2646 = vrot.lane.b32.xlu0 %v2623, 111
      %v2647 = vpop.permute.xlu0 %2646
      %2648 = vrot.lane.b32.xlu0 %v2624, 111
      %v2649 = vpop.permute.xlu0 %2648
      %2650 = vrot.lane.b32.xlu0 %v2625, 111
      %v2651 = vpop.permute.xlu0 %2650
      %2652 = vrot.lane.b32.xlu0 %v2626, 111
      %v2653 = vpop.permute.xlu0 %2652
      %v2654 = vsel %vm305, %v2637, %v2639
      %v2655 = vsel %vm305, %v2639, %v2641
      %v2656 = vsel %vm305, %v2641, %v2643
      %v2657 = vsel %vm305, %v2643, %v2645
      %v2658 = vsel %vm305, %v2645, %v2647
      %v2659 = vsel %vm305, %v2647, %v2649
      %v2660 = vsel %vm305, %v2649, %v2651
      %v2661 = vsel %vm305, %v2651, %v2653
      %2670 = vst [vmem:[#allocation3] sm:$0xff] %v2654
      %2671 = vst [vmem:[#allocation3 + $0x8] sm:$0xff] %v2655
      %2672 = vst [vmem:[#allocation3 + $0x10] sm:$0xff] %v2656
      %2673 = vst [vmem:[#allocation3 + $0x18] sm:$0xff] %v2657
      %2674 = vst [vmem:[#allocation3 + $0x20] sm:$0xff] %v2658
      %2675 = vst [vmem:[#allocation3 + $0x28] sm:$0xff] %v2659
      %2676 = vst [vmem:[#allocation3 + $0x30] sm:$0xff] %v2660
      %2677 = vst [vmem:[#allocation3 + $0x38] sm:$0xff] %v2661
      %v2678 = vld [vmem:[#allocation2] sm:$0xff]
      %v2679 = vld [vmem:[#allocation2 + $0x8] sm:$0xff]
      %v2680 = vld [vmem:[#allocation2 + $0x10] sm:$0xff]
      %v2681 = vld [vmem:[#allocation2 + $0x18] sm:$0xff]
      %v2682 = vld [vmem:[#allocation2 + $0x20] sm:$0xff]
      %v2683 = vld [vmem:[#allocation2 + $0x28] sm:$0xff]
      %v2684 = vld [vmem:[#allocation2 + $0x30] sm:$0xff]
      %v2685 = vld [vmem:[#allocation2 + $0x38] sm:$0xff]
      %v2686 = vld [vmem:[#allocation2 + $0x40] sm:$0xff]
      %2696 = vrot.lane.b32.xlu0 %v2678, 110
      %v2697 = vpop.permute.xlu0 %2696
      %2698 = vrot.lane.b32.xlu0 %v2679, 110
      %v2699 = vpop.permute.xlu0 %2698
      %2700 = vrot.lane.b32.xlu0 %v2680, 110
      %v2701 = vpop.permute.xlu0 %2700
      %2702 = vrot.lane.b32.xlu0 %v2681, 110
      %v2703 = vpop.permute.xlu0 %2702
      %2704 = vrot.lane.b32.xlu0 %v2682, 110
      %v2705 = vpop.permute.xlu0 %2704
      %2706 = vrot.lane.b32.xlu0 %v2683, 110
      %v2707 = vpop.permute.xlu0 %2706
      %2708 = vrot.lane.b32.xlu0 %v2684, 110
      %v2709 = vpop.permute.xlu0 %2708
      %2710 = vrot.lane.b32.xlu0 %v2685, 110
      %v2711 = vpop.permute.xlu0 %2710
      %2712 = vrot.lane.b32.xlu0 %v2686, 110
      %v2713 = vpop.permute.xlu0 %2712
      %v2714 = vsel %vm366, %v2697, %v2699
      %v2715 = vsel %vm366, %v2699, %v2701
      %v2716 = vsel %vm366, %v2701, %v2703
      %v2717 = vsel %vm366, %v2703, %v2705
      %v2718 = vsel %vm366, %v2705, %v2707
      %v2719 = vsel %vm366, %v2707, %v2709
      %v2720 = vsel %vm366, %v2709, %v2711
      %v2721 = vsel %vm366, %v2711, %v2713
      %2730 = vst [vmem:[#allocation3 + $0x40] sm:$0xff] %v2714
      %2731 = vst [vmem:[#allocation3 + $0x48] sm:$0xff] %v2715
      %2732 = vst [vmem:[#allocation3 + $0x50] sm:$0xff] %v2716
      %2733 = vst [vmem:[#allocation3 + $0x58] sm:$0xff] %v2717
      %2734 = vst [vmem:[#allocation3 + $0x60] sm:$0xff] %v2718
      %2735 = vst [vmem:[#allocation3 + $0x68] sm:$0xff] %v2719
      %2736 = vst [vmem:[#allocation3 + $0x70] sm:$0xff] %v2720
      %2737 = vst [vmem:[#allocation3 + $0x78] sm:$0xff] %v2721
      %v2738 = vld [vmem:[#allocation2] sm:$0xff]
      %v2739 = vld [vmem:[#allocation2 + $0x8] sm:$0xff]
      %v2740 = vld [vmem:[#allocation2 + $0x10] sm:$0xff]
      %v2741 = vld [vmem:[#allocation2 + $0x18] sm:$0xff]
      %v2742 = vld [vmem:[#allocation2 + $0x20] sm:$0xff]
      %v2743 = vld [vmem:[#allocation2 + $0x28] sm:$0xff]
      %v2744 = vld [vmem:[#allocation2 + $0x30] sm:$0xff]
      %v2745 = vld [vmem:[#allocation2 + $0x38] sm:$0xff]
      %v2746 = vld [vmem:[#allocation2 + $0x40] sm:$0xff]
      %2756 = vrot.lane.b32.xlu0 %v2738, 109
      %v2757 = vpop.permute.xlu0 %2756
      %2758 = vrot.lane.b32.xlu0 %v2739, 109
      %v2759 = vpop.permute.xlu0 %2758
      %2760 = vrot.lane.b32.xlu0 %v2740, 109
      %v2761 = vpop.permute.xlu0 %2760
      %2762 = vrot.lane.b32.xlu0 %v2741, 109
      %v2763 = vpop.permute.xlu0 %2762
      %2764 = vrot.lane.b32.xlu0 %v2742, 109
      %v2765 = vpop.permute.xlu0 %2764
      %2766 = vrot.lane.b32.xlu0 %v2743, 109
      %v2767 = vpop.permute.xlu0 %2766
      %2768 = vrot.lane.b32.xlu0 %v2744, 109
      %v2769 = vpop.permute.xlu0 %2768
      %2770 = vrot.lane.b32.xlu0 %v2745, 109
      %v2771 = vpop.permute.xlu0 %2770
      %2772 = vrot.lane.b32.xlu0 %v2746, 109
      %v2773 = vpop.permute.xlu0 %2772
      %v2774 = vsel %vm427, %v2757, %v2759
      %v2775 = vsel %vm427, %v2759, %v2761
      %v2776 = vsel %vm427, %v2761, %v2763
      %v2777 = vsel %vm427, %v2763, %v2765
      %v2778 = vsel %vm427, %v2765, %v2767
      %v2779 = vsel %vm427, %v2767, %v2769
      %v2780 = vsel %vm427, %v2769, %v2771
      %v2781 = vsel %vm427, %v2771, %v2773
      %2790 = vst [vmem:[#allocation3 + $0x80] sm:$0xff] %v2774
      %2791 = vst [vmem:[#allocation3 + $0x88] sm:$0xff] %v2775
      %2792 = vst [vmem:[#allocation3 + $0x90] sm:$0xff] %v2776
      %2793 = vst [vmem:[#allocation3 + $0x98] sm:$0xff] %v2777
      %2794 = vst [vmem:[#allocation3 + $0xa0] sm:$0xff] %v2778
      %2795 = vst [vmem:[#allocation3 + $0xa8] sm:$0xff] %v2779
      %2796 = vst [vmem:[#allocation3 + $0xb0] sm:$0xff] %v2780
      %2797 = vst [vmem:[#allocation3 + $0xb8] sm:$0xff] %v2781
      %v2798 = vld [vmem:[#allocation2] sm:$0xff]
      %v2799 = vld [vmem:[#allocation2 + $0x8] sm:$0xff]
      %v2800 = vld [vmem:[#allocation2 + $0x10] sm:$0xff]
      %v2801 = vld [vmem:[#allocation2 + $0x18] sm:$0xff]
      %v2802 = vld [vmem:[#allocation2 + $0x20] sm:$0xff]
      %v2803 = vld [vmem:[#allocation2 + $0x28] sm:$0xff]
      %v2804 = vld [vmem:[#allocation2 + $0x30] sm:$0xff]
      %v2805 = vld [vmem:[#allocation2 + $0x38] sm:$0xff]
      %v2806 = vld [vmem:[#allocation2 + $0x40] sm:$0xff]
      %2816 = vrot.lane.b32.xlu0 %v2798, 101
      %v2817 = vpop.permute.xlu0 %2816
      %2818 = vrot.lane.b32.xlu0 %v2799, 101
      %v2819 = vpop.permute.xlu0 %2818
      %2820 = vrot.lane.b32.xlu0 %v2800, 101
      %v2821 = vpop.permute.xlu0 %2820
      %2822 = vrot.lane.b32.xlu0 %v2801, 101
      %v2823 = vpop.permute.xlu0 %2822
      %2824 = vrot.lane.b32.xlu0 %v2802, 101
      %v2825 = vpop.permute.xlu0 %2824
      %2826 = vrot.lane.b32.xlu0 %v2803, 101
      %v2827 = vpop.permute.xlu0 %2826
      %2828 = vrot.lane.b32.xlu0 %v2804, 101
      %v2829 = vpop.permute.xlu0 %2828
      %2830 = vrot.lane.b32.xlu0 %v2805, 101
      %v2831 = vpop.permute.xlu0 %2830
      %2832 = vrot.lane.b32.xlu0 %v2806, 101
      %v2833 = vpop.permute.xlu0 %2832
      %v2834 = vsel %vm488, %v2817, %v2819
      %v2835 = vsel %vm488, %v2819, %v2821
      %v2836 = vsel %vm488, %v2821, %v2823
      %v2837 = vsel %vm488, %v2823, %v2825
      %v2838 = vsel %vm488, %v2825, %v2827
      %v2839 = vsel %vm488, %v2827, %v2829
      %v2840 = vsel %vm488, %v2829, %v2831
      %v2841 = vsel %vm488, %v2831, %v2833
      %2850 = vst [vmem:[#allocation3 + $0xc0] sm:$0xff] %v2834
      %2851 = vst [vmem:[#allocation3 + $0xc8] sm:$0xff] %v2835
      %2852 = vst [vmem:[#allocation3 + $0xd0] sm:$0xff] %v2836
      %2853 = vst [vmem:[#allocation3 + $0xd8] sm:$0xff] %v2837
      %2854 = vst [vmem:[#allocation3 + $0xe0] sm:$0xff] %v2838
      %2855 = vst [vmem:[#allocation3 + $0xe8] sm:$0xff] %v2839
      %2856 = vst [vmem:[#allocation3 + $0xf0] sm:$0xff] %v2840
      %2857 = vst [vmem:[#allocation3 + $0xf8] sm:$0xff] %v2841
      %v2858 = vld [vmem:[#allocation2] sm:$0xff]
      %v2859 = vld [vmem:[#allocation2 + $0x8] sm:$0xff]
      %v2860 = vld [vmem:[#allocation2 + $0x10] sm:$0xff]
      %v2861 = vld [vmem:[#allocation2 + $0x18] sm:$0xff]
      %v2862 = vld [vmem:[#allocation2 + $0x20] sm:$0xff]
      %v2863 = vld [vmem:[#allocation2 + $0x28] sm:$0xff]
      %v2864 = vld [vmem:[#allocation2 + $0x30] sm:$0xff]
      %v2865 = vld [vmem:[#allocation2 + $0x38] sm:$0xff]
      %v2866 = vld [vmem:[#allocation2 + $0x40] sm:$0xff]
      %2876 = vrot.lane.b32.xlu0 %v2858, 100
      %v2877 = vpop.permute.xlu0 %2876
      %2878 = vrot.lane.b32.xlu0 %v2859, 100
      %v2879 = vpop.permute.xlu0 %2878
      %2880 = vrot.lane.b32.xlu0 %v2860, 100
      %v2881 = vpop.permute.xlu0 %2880
      %2882 = vrot.lane.b32.xlu0 %v2861, 100
      %v2883 = vpop.permute.xlu0 %2882
      %2884 = vrot.lane.b32.xlu0 %v2862, 100
      %v2885 = vpop.permute.xlu0 %2884
      %2886 = vrot.lane.b32.xlu0 %v2863, 100
      %v2887 = vpop.permute.xlu0 %2886
      %2888 = vrot.lane.b32.xlu0 %v2864, 100
      %v2889 = vpop.permute.xlu0 %2888
      %2890 = vrot.lane.b32.xlu0 %v2865, 100
      %v2891 = vpop.permute.xlu0 %2890
      %2892 = vrot.lane.b32.xlu0 %v2866, 100
      %v2893 = vpop.permute.xlu0 %2892
      %v2894 = vsel %vm549, %v2877, %v2879
      %v2895 = vsel %vm549, %v2879, %v2881
      %v2896 = vsel %vm549, %v2881, %v2883
      %v2897 = vsel %vm549, %v2883, %v2885
      %v2898 = vsel %vm549, %v2885, %v2887
      %v2899 = vsel %vm549, %v2887, %v2889
      %v2900 = vsel %vm549, %v2889, %v2891
      %v2901 = vsel %vm549, %v2891, %v2893
      %2910 = vst [vmem:[#allocation3 + $0x100] sm:$0xff] %v2894
      %2911 = vst [vmem:[#allocation3 + $0x108] sm:$0xff] %v2895
      %2912 = vst [vmem:[#allocation3 + $0x110] sm:$0xff] %v2896
      %2913 = vst [vmem:[#allocation3 + $0x118] sm:$0xff] %v2897
      %2914 = vst [vmem:[#allocation3 + $0x120] sm:$0xff] %v2898
      %2915 = vst [vmem:[#allocation3 + $0x128] sm:$0xff] %v2899
      %2916 = vst [vmem:[#allocation3 + $0x130] sm:$0xff] %v2900
      %2917 = vst [vmem:[#allocation3 + $0x138] sm:$0xff] %v2901
      %v2918 = vld [vmem:[#allocation2] sm:$0xff]
      %v2919 = vld [vmem:[#allocation2 + $0x8] sm:$0xff]
      %v2920 = vld [vmem:[#allocation2 + $0x10] sm:$0xff]
      %v2921 = vld [vmem:[#allocation2 + $0x18] sm:$0xff]
      %v2922 = vld [vmem:[#allocation2 + $0x20] sm:$0xff]
      %v2923 = vld [vmem:[#allocation2 + $0x28] sm:$0xff]
      %v2924 = vld [vmem:[#allocation2 + $0x30] sm:$0xff]
      %v2925 = vld [vmem:[#allocation2 + $0x38] sm:$0xff]
      %v2926 = vld [vmem:[#allocation2 + $0x40] sm:$0xff]
      %2936 = vrot.lane.b32.xlu0 %v2918, 99
      %v2937 = vpop.permute.xlu0 %2936
      %2938 = vrot.lane.b32.xlu0 %v2919, 99
      %v2939 = vpop.permute.xlu0 %2938
      %2940 = vrot.lane.b32.xlu0 %v2920, 99
      %v2941 = vpop.permute.xlu0 %2940
      %2942 = vrot.lane.b32.xlu0 %v2921, 99
      %v2943 = vpop.permute.xlu0 %2942
      %2944 = vrot.lane.b32.xlu0 %v2922, 99
      %v2945 = vpop.permute.xlu0 %2944
      %2946 = vrot.lane.b32.xlu0 %v2923, 99
      %v2947 = vpop.permute.xlu0 %2946
      %2948 = vrot.lane.b32.xlu0 %v2924, 99
      %v2949 = vpop.permute.xlu0 %2948
      %2950 = vrot.lane.b32.xlu0 %v2925, 99
      %v2951 = vpop.permute.xlu0 %2950
      %2952 = vrot.lane.b32.xlu0 %v2926, 99
      %v2953 = vpop.permute.xlu0 %2952
      %v2954 = vsel %vm610, %v2937, %v2939
      %v2955 = vsel %vm610, %v2939, %v2941
      %v2956 = vsel %vm610, %v2941, %v2943
      %v2957 = vsel %vm610, %v2943, %v2945
      %v2958 = vsel %vm610, %v2945, %v2947
      %v2959 = vsel %vm610, %v2947, %v2949
      %v2960 = vsel %vm610, %v2949, %v2951
      %v2961 = vsel %vm610, %v2951, %v2953
      %2970 = vst [vmem:[#allocation3 + $0x140] sm:$0xff] %v2954
      %2971 = vst [vmem:[#allocation3 + $0x148] sm:$0xff] %v2955
      %2972 = vst [vmem:[#allocation3 + $0x150] sm:$0xff] %v2956
      %2973 = vst [vmem:[#allocation3 + $0x158] sm:$0xff] %v2957
      %2974 = vst [vmem:[#allocation3 + $0x160] sm:$0xff] %v2958
      %2975 = vst [vmem:[#allocation3 + $0x168] sm:$0xff] %v2959
      %2976 = vst [vmem:[#allocation3 + $0x170] sm:$0xff] %v2960
      %2977 = vst [vmem:[#allocation3 + $0x178] sm:$0xff] %v2961
      %v2978 = vld [vmem:[#allocation2] sm:$0xff]
      %v2979 = vld [vmem:[#allocation2 + $0x8] sm:$0xff]
      %v2980 = vld [vmem:[#allocation2 + $0x10] sm:$0xff]
      %v2981 = vld [vmem:[#allocation2 + $0x18] sm:$0xff]
      %v2982 = vld [vmem:[#allocation2 + $0x20] sm:$0xff]
      %v2983 = vld [vmem:[#allocation2 + $0x28] sm:$0xff]
      %v2984 = vld [vmem:[#allocation2 + $0x30] sm:$0xff]
      %v2985 = vld [vmem:[#allocation2 + $0x38] sm:$0xff]
      %v2986 = vld [vmem:[#allocation2 + $0x40] sm:$0xff]
      %2996 = vrot.lane.b32.xlu0 %v2978, 91
      %v2997 = vpop.permute.xlu0 %2996
      %2998 = vrot.lane.b32.xlu0 %v2979, 91
      %v2999 = vpop.permute.xlu0 %2998
      %3000 = vrot.lane.b32.xlu0 %v2980, 91
      %v3001 = vpop.permute.xlu0 %3000
      %3002 = vrot.lane.b32.xlu0 %v2981, 91
      %v3003 = vpop.permute.xlu0 %3002
      %3004 = vrot.lane.b32.xlu0 %v2982, 91
      %v3005 = vpop.permute.xlu0 %3004
      %3006 = vrot.lane.b32.xlu0 %v2983, 91
      %v3007 = vpop.permute.xlu0 %3006
      %3008 = vrot.lane.b32.xlu0 %v2984, 91
      %v3009 = vpop.permute.xlu0 %3008
      %3010 = vrot.lane.b32.xlu0 %v2985, 91
      %v3011 = vpop.permute.xlu0 %3010
      %3012 = vrot.lane.b32.xlu0 %v2986, 91
      %v3013 = vpop.permute.xlu0 %3012
      %v3014 = vsel %vm671, %v2997, %v2999
      %v3015 = vsel %vm671, %v2999, %v3001
      %v3016 = vsel %vm671, %v3001, %v3003
      %v3017 = vsel %vm671, %v3003, %v3005
      %v3018 = vsel %vm671, %v3005, %v3007
      %v3019 = vsel %vm671, %v3007, %v3009
      %v3020 = vsel %vm671, %v3009, %v3011
      %v3021 = vsel %vm671, %v3011, %v3013
      %3030 = vst [vmem:[#allocation3 + $0x180] sm:$0xff] %v3014
      %3031 = vst [vmem:[#allocation3 + $0x188] sm:$0xff] %v3015
      %3032 = vst [vmem:[#allocation3 + $0x190] sm:$0xff] %v3016
      %3033 = vst [vmem:[#allocation3 + $0x198] sm:$0xff] %v3017
      %3034 = vst [vmem:[#allocation3 + $0x1a0] sm:$0xff] %v3018
      %3035 = vst [vmem:[#allocation3 + $0x1a8] sm:$0xff] %v3019
      %3036 = vst [vmem:[#allocation3 + $0x1b0] sm:$0xff] %v3020
      %3037 = vst [vmem:[#allocation3 + $0x1b8] sm:$0xff] %v3021
      %v3038 = vld [vmem:[#allocation2] sm:$0xff]
      %v3039 = vld [vmem:[#allocation2 + $0x8] sm:$0xff]
      %v3040 = vld [vmem:[#allocation2 + $0x10] sm:$0xff]
      %v3041 = vld [vmem:[#allocation2 + $0x18] sm:$0xff]
      %v3042 = vld [vmem:[#allocation2 + $0x20] sm:$0xff]
      %v3043 = vld [vmem:[#allocation2 + $0x28] sm:$0xff]
      %v3044 = vld [vmem:[#allocation2 + $0x30] sm:$0xff]
      %v3045 = vld [vmem:[#allocation2 + $0x38] sm:$0xff]
      %v3046 = vld [vmem:[#allocation2 + $0x40] sm:$0xff]
      %3056 = vrot.lane.b32.xlu0 %v3038, 90
      %v3057 = vpop.permute.xlu0 %3056
      %3058 = vrot.lane.b32.xlu0 %v3039, 90
      %v3059 = vpop.permute.xlu0 %3058
      %3060 = vrot.lane.b32.xlu0 %v3040, 90
      %v3061 = vpop.permute.xlu0 %3060
      %3062 = vrot.lane.b32.xlu0 %v3041, 90
      %v3063 = vpop.permute.xlu0 %3062
      %3064 = vrot.lane.b32.xlu0 %v3042, 90
      %v3065 = vpop.permute.xlu0 %3064
      %3066 = vrot.lane.b32.xlu0 %v3043, 90
      %v3067 = vpop.permute.xlu0 %3066
      %3068 = vrot.lane.b32.xlu0 %v3044, 90
      %v3069 = vpop.permute.xlu0 %3068
      %3070 = vrot.lane.b32.xlu0 %v3045, 90
      %v3071 = vpop.permute.xlu0 %3070
      %3072 = vrot.lane.b32.xlu0 %v3046, 90
      %v3073 = vpop.permute.xlu0 %3072
      %v3074 = vsel %vm732, %v3057, %v3059
      %v3075 = vsel %vm732, %v3059, %v3061
      %v3076 = vsel %vm732, %v3061, %v3063
      %v3077 = vsel %vm732, %v3063, %v3065
      %v3078 = vsel %vm732, %v3065, %v3067
      %v3079 = vsel %vm732, %v3067, %v3069
      %v3080 = vsel %vm732, %v3069, %v3071
      %v3081 = vsel %vm732, %v3071, %v3073
      %3090 = vst [vmem:[#allocation3 + $0x1c0] sm:$0xff] %v3074
      %3091 = vst [vmem:[#allocation3 + $0x1c8] sm:$0xff] %v3075
      %3092 = vst [vmem:[#allocation3 + $0x1d0] sm:$0xff] %v3076
      %3093 = vst [vmem:[#allocation3 + $0x1d8] sm:$0xff] %v3077
      %3094 = vst [vmem:[#allocation3 + $0x1e0] sm:$0xff] %v3078
      %3095 = vst [vmem:[#allocation3 + $0x1e8] sm:$0xff] %v3079
      %3096 = vst [vmem:[#allocation3 + $0x1f0] sm:$0xff] %v3080
      %3097 = vst [vmem:[#allocation3 + $0x1f8] sm:$0xff] %v3081
      %v3098 = vld [vmem:[#allocation2] sm:$0xff]
      %v3099 = vld [vmem:[#allocation2 + $0x8] sm:$0xff]
      %v3100 = vld [vmem:[#allocation2 + $0x10] sm:$0xff]
      %v3101 = vld [vmem:[#allocation2 + $0x18] sm:$0xff]
      %v3102 = vld [vmem:[#allocation2 + $0x20] sm:$0xff]
      %v3103 = vld [vmem:[#allocation2 + $0x28] sm:$0xff]
      %v3104 = vld [vmem:[#allocation2 + $0x30] sm:$0xff]
      %v3105 = vld [vmem:[#allocation2 + $0x38] sm:$0xff]
      %v3106 = vld [vmem:[#allocation2 + $0x40] sm:$0xff]
      %3116 = vrot.lane.b32.xlu0 %v3098, 89
      %v3117 = vpop.permute.xlu0 %3116
      %3118 = vrot.lane.b32.xlu0 %v3099, 89
      %v3119 = vpop.permute.xlu0 %3118
      %3120 = vrot.lane.b32.xlu0 %v3100, 89
      %v3121 = vpop.permute.xlu0 %3120
      %3122 = vrot.lane.b32.xlu0 %v3101, 89
      %v3123 = vpop.permute.xlu0 %3122
      %3124 = vrot.lane.b32.xlu0 %v3102, 89
      %v3125 = vpop.permute.xlu0 %3124
      %3126 = vrot.lane.b32.xlu0 %v3103, 89
      %v3127 = vpop.permute.xlu0 %3126
      %3128 = vrot.lane.b32.xlu0 %v3104, 89
      %v3129 = vpop.permute.xlu0 %3128
      %3130 = vrot.lane.b32.xlu0 %v3105, 89
      %v3131 = vpop.permute.xlu0 %3130
      %3132 = vrot.lane.b32.xlu0 %v3106, 89
      %v3133 = vpop.permute.xlu0 %3132
      %v3134 = vsel %vm793, %v3117, %v3119
      %v3135 = vsel %vm793, %v3119, %v3121
      %v3136 = vsel %vm793, %v3121, %v3123
      %v3137 = vsel %vm793, %v3123, %v3125
      %v3138 = vsel %vm793, %v3125, %v3127
      %v3139 = vsel %vm793, %v3127, %v3129
      %v3140 = vsel %vm793, %v3129, %v3131
      %v3141 = vsel %vm793, %v3131, %v3133
      %3150 = vst [vmem:[#allocation3 + $0x200] sm:$0xff] %v3134
      %3151 = vst [vmem:[#allocation3 + $0x208] sm:$0xff] %v3135
      %3152 = vst [vmem:[#allocation3 + $0x210] sm:$0xff] %v3136
      %3153 = vst [vmem:[#allocation3 + $0x218] sm:$0xff] %v3137
      %3154 = vst [vmem:[#allocation3 + $0x220] sm:$0xff] %v3138
      %3155 = vst [vmem:[#allocation3 + $0x228] sm:$0xff] %v3139
      %3156 = vst [vmem:[#allocation3 + $0x230] sm:$0xff] %v3140
      %3157 = vst [vmem:[#allocation3 + $0x238] sm:$0xff] %v3141
      %v3158 = vld [vmem:[#allocation2] sm:$0xff]
      %v3159 = vld [vmem:[#allocation2 + $0x8] sm:$0xff]
      %v3160 = vld [vmem:[#allocation2 + $0x10] sm:$0xff]
      %v3161 = vld [vmem:[#allocation2 + $0x18] sm:$0xff]
      %v3162 = vld [vmem:[#allocation2 + $0x20] sm:$0xff]
      %v3163 = vld [vmem:[#allocation2 + $0x28] sm:$0xff]
      %v3164 = vld [vmem:[#allocation2 + $0x30] sm:$0xff]
      %v3165 = vld [vmem:[#allocation2 + $0x38] sm:$0xff]
      %v3166 = vld [vmem:[#allocation2 + $0x40] sm:$0xff]
      %3176 = vrot.lane.b32.xlu0 %v3158, 11
      %v3177 = vpop.permute.xlu0 %3176
      %3178 = vrot.lane.b32.xlu0 %v3159, 11
      %v3179 = vpop.permute.xlu0 %3178
      %3180 = vrot.lane.b32.xlu0 %v3160, 11
      %v3181 = vpop.permute.xlu0 %3180
      %3182 = vrot.lane.b32.xlu0 %v3161, 11
      %v3183 = vpop.permute.xlu0 %3182
      %3184 = vrot.lane.b32.xlu0 %v3162, 11
      %v3185 = vpop.permute.xlu0 %3184
      %3186 = vrot.lane.b32.xlu0 %v3163, 11
      %v3187 = vpop.permute.xlu0 %3186
      %3188 = vrot.lane.b32.xlu0 %v3164, 11
      %v3189 = vpop.permute.xlu0 %3188
      %3190 = vrot.lane.b32.xlu0 %v3165, 11
      %v3191 = vpop.permute.xlu0 %3190
      %3192 = vrot.lane.b32.xlu0 %v3166, 11
      %v3193 = vpop.permute.xlu0 %3192
      %v3194 = vsel %vm854, %v3177, %v3179
      %v3195 = vsel %vm854, %v3179, %v3181
      %v3196 = vsel %vm854, %v3181, %v3183
      %v3197 = vsel %vm854, %v3183, %v3185
      %v3198 = vsel %vm854, %v3185, %v3187
      %v3199 = vsel %vm854, %v3187, %v3189
      %v3200 = vsel %vm854, %v3189, %v3191
      %v3201 = vsel %vm854, %v3191, %v3193
      %3210 = vst [vmem:[#allocation3 + $0x240] sm:$0xff] %v3194
      %3211 = vst [vmem:[#allocation3 + $0x248] sm:$0xff] %v3195
      %3212 = vst [vmem:[#allocation3 + $0x250] sm:$0xff] %v3196
      %3213 = vst [vmem:[#allocation3 + $0x258] sm:$0xff] %v3197
      %3214 = vst [vmem:[#allocation3 + $0x260] sm:$0xff] %v3198
      %3215 = vst [vmem:[#allocation3 + $0x268] sm:$0xff] %v3199
      %3216 = vst [vmem:[#allocation3 + $0x270] sm:$0xff] %v3200
      %3217 = vst [vmem:[#allocation3 + $0x278] sm:$0xff] %v3201
      %v3218 = vld [vmem:[#allocation2] sm:$0xff]
      %v3219 = vld [vmem:[#allocation2 + $0x8] sm:$0xff]
      %v3220 = vld [vmem:[#allocation2 + $0x10] sm:$0xff]
      %v3221 = vld [vmem:[#allocation2 + $0x18] sm:$0xff]
      %v3222 = vld [vmem:[#allocation2 + $0x20] sm:$0xff]
      %v3223 = vld [vmem:[#allocation2 + $0x28] sm:$0xff]
      %v3224 = vld [vmem:[#allocation2 + $0x30] sm:$0xff]
      %v3225 = vld [vmem:[#allocation2 + $0x38] sm:$0xff]
      %v3226 = vld [vmem:[#allocation2 + $0x40] sm:$0xff]
      %3236 = vrot.lane.b32.xlu0 %v3218, 10
      %v3237 = vpop.permute.xlu0 %3236
      %3238 = vrot.lane.b32.xlu0 %v3219, 10
      %v3239 = vpop.permute.xlu0 %3238
      %3240 = vrot.lane.b32.xlu0 %v3220, 10
      %v3241 = vpop.permute.xlu0 %3240
      %3242 = vrot.lane.b32.xlu0 %v3221, 10
      %v3243 = vpop.permute.xlu0 %3242
      %3244 = vrot.lane.b32.xlu0 %v3222, 10
      %v3245 = vpop.permute.xlu0 %3244
      %3246 = vrot.lane.b32.xlu0 %v3223, 10
      %v3247 = vpop.permute.xlu0 %3246
      %3248 = vrot.lane.b32.xlu0 %v3224, 10
      %v3249 = vpop.permute.xlu0 %3248
      %3250 = vrot.lane.b32.xlu0 %v3225, 10
      %v3251 = vpop.permute.xlu0 %3250
      %3252 = vrot.lane.b32.xlu0 %v3226, 10
      %v3253 = vpop.permute.xlu0 %3252
      %v3254 = vsel %vm915, %v3237, %v3239
      %v3255 = vsel %vm915, %v3239, %v3241
      %v3256 = vsel %vm915, %v3241, %v3243
      %v3257 = vsel %vm915, %v3243, %v3245
      %v3258 = vsel %vm915, %v3245, %v3247
      %v3259 = vsel %vm915, %v3247, %v3249
      %v3260 = vsel %vm915, %v3249, %v3251
      %v3261 = vsel %vm915, %v3251, %v3253
      %3270 = vst [vmem:[#allocation3 + $0x280] sm:$0xff] %v3254
      %3271 = vst [vmem:[#allocation3 + $0x288] sm:$0xff] %v3255
      %3272 = vst [vmem:[#allocation3 + $0x290] sm:$0xff] %v3256
      %3273 = vst [vmem:[#allocation3 + $0x298] sm:$0xff] %v3257
      %3274 = vst [vmem:[#allocation3 + $0x2a0] sm:$0xff] %v3258
      %3275 = vst [vmem:[#allocation3 + $0x2a8] sm:$0xff] %v3259
      %3276 = vst [vmem:[#allocation3 + $0x2b0] sm:$0xff] %v3260
      %3277 = vst [vmem:[#allocation3 + $0x2b8] sm:$0xff] %v3261
      %v3278 = vld [vmem:[#allocation2] sm:$0xff]
      %v3279 = vld [vmem:[#allocation2 + $0x8] sm:$0xff]
      %v3280 = vld [vmem:[#allocation2 + $0x10] sm:$0xff]
      %v3281 = vld [vmem:[#allocation2 + $0x18] sm:$0xff]
      %v3282 = vld [vmem:[#allocation2 + $0x20] sm:$0xff]
      %v3283 = vld [vmem:[#allocation2 + $0x28] sm:$0xff]
      %v3284 = vld [vmem:[#allocation2 + $0x30] sm:$0xff]
      %v3285 = vld [vmem:[#allocation2 + $0x38] sm:$0xff]
      %v3286 = vld [vmem:[#allocation2 + $0x40] sm:$0xff]
      %3296 = vrot.lane.b32.xlu0 %v3278, 9
      %v3297 = vpop.permute.xlu0 %3296
      %3298 = vrot.lane.b32.xlu0 %v3279, 9
      %v3299 = vpop.permute.xlu0 %3298
      %3300 = vrot.lane.b32.xlu0 %v3280, 9
      %v3301 = vpop.permute.xlu0 %3300
      %3302 = vrot.lane.b32.xlu0 %v3281, 9
      %v3303 = vpop.permute.xlu0 %3302
      %3304 = vrot.lane.b32.xlu0 %v3282, 9
      %v3305 = vpop.permute.xlu0 %3304
      %3306 = vrot.lane.b32.xlu0 %v3283, 9
      %v3307 = vpop.permute.xlu0 %3306
      %3308 = vrot.lane.b32.xlu0 %v3284, 9
      %v3309 = vpop.permute.xlu0 %3308
      %3310 = vrot.lane.b32.xlu0 %v3285, 9
      %v3311 = vpop.permute.xlu0 %3310
      %3312 = vrot.lane.b32.xlu0 %v3286, 9
      %v3313 = vpop.permute.xlu0 %3312
      %v3314 = vsel %vm976, %v3297, %v3299
      %v3315 = vsel %vm976, %v3299, %v3301
      %v3316 = vsel %vm976, %v3301, %v3303
      %v3317 = vsel %vm976, %v3303, %v3305
      %v3318 = vsel %vm976, %v3305, %v3307
      %v3319 = vsel %vm976, %v3307, %v3309
      %v3320 = vsel %vm976, %v3309, %v3311
      %v3321 = vsel %vm976, %v3311, %v3313
      %3330 = vst [vmem:[#allocation3 + $0x2c0] sm:$0xff] %v3314
      %3331 = vst [vmem:[#allocation3 + $0x2c8] sm:$0xff] %v3315
      %3332 = vst [vmem:[#allocation3 + $0x2d0] sm:$0xff] %v3316
      %3333 = vst [vmem:[#allocation3 + $0x2d8] sm:$0xff] %v3317
      %3334 = vst [vmem:[#allocation3 + $0x2e0] sm:$0xff] %v3318
      %3335 = vst [vmem:[#allocation3 + $0x2e8] sm:$0xff] %v3319
      %3336 = vst [vmem:[#allocation3 + $0x2f0] sm:$0xff] %v3320
      %3337 = vst [vmem:[#allocation3 + $0x2f8] sm:$0xff] %v3321
      %v3338 = vld [vmem:[#allocation2] sm:$0xff]
      %v3339 = vld [vmem:[#allocation2 + $0x8] sm:$0xff]
      %v3340 = vld [vmem:[#allocation2 + $0x10] sm:$0xff]
      %v3341 = vld [vmem:[#allocation2 + $0x18] sm:$0xff]
      %v3342 = vld [vmem:[#allocation2 + $0x20] sm:$0xff]
      %v3343 = vld [vmem:[#allocation2 + $0x28] sm:$0xff]
      %v3344 = vld [vmem:[#allocation2 + $0x30] sm:$0xff]
      %v3345 = vld [vmem:[#allocation2 + $0x38] sm:$0xff]
      %v3346 = vld [vmem:[#allocation2 + $0x40] sm:$0xff]
      %3356 = vrot.lane.b32.xlu0 %v3338, 1
      %v3357 = vpop.permute.xlu0 %3356
      %3358 = vrot.lane.b32.xlu0 %v3339, 1
      %v3359 = vpop.permute.xlu0 %3358
      %3360 = vrot.lane.b32.xlu0 %v3340, 1
      %v3361 = vpop.permute.xlu0 %3360
      %3362 = vrot.lane.b32.xlu0 %v3341, 1
      %v3363 = vpop.permute.xlu0 %3362
      %3364 = vrot.lane.b32.xlu0 %v3342, 1
      %v3365 = vpop.permute.xlu0 %3364
      %3366 = vrot.lane.b32.xlu0 %v3343, 1
      %v3367 = vpop.permute.xlu0 %3366
      %3368 = vrot.lane.b32.xlu0 %v3344, 1
      %v3369 = vpop.permute.xlu0 %3368
      %3370 = vrot.lane.b32.xlu0 %v3345, 1
      %v3371 = vpop.permute.xlu0 %3370
      %3372 = vrot.lane.b32.xlu0 %v3346, 1
      %v3373 = vpop.permute.xlu0 %3372
      %v3374 = vsel %vm1037, %v3357, %v3359
      %v3375 = vsel %vm1037, %v3359, %v3361
      %v3376 = vsel %vm1037, %v3361, %v3363
      %v3377 = vsel %vm1037, %v3363, %v3365
      %v3378 = vsel %vm1037, %v3365, %v3367
      %v3379 = vsel %vm1037, %v3367, %v3369
      %v3380 = vsel %vm1037, %v3369, %v3371
      %v3381 = vsel %vm1037, %v3371, %v3373
      %3390 = vst [vmem:[#allocation3 + $0x300] sm:$0xff] %v3374
      %3391 = vst [vmem:[#allocation3 + $0x308] sm:$0xff] %v3375
      %3392 = vst [vmem:[#allocation3 + $0x310] sm:$0xff] %v3376
      %3393 = vst [vmem:[#allocation3 + $0x318] sm:$0xff] %v3377
      %3394 = vst [vmem:[#allocation3 + $0x320] sm:$0xff] %v3378
      %3395 = vst [vmem:[#allocation3 + $0x328] sm:$0xff] %v3379
      %3396 = vst [vmem:[#allocation3 + $0x330] sm:$0xff] %v3380
      %3397 = vst [vmem:[#allocation3 + $0x338] sm:$0xff] %v3381
      %v3398 = vld [vmem:[#allocation2 + $0x8] sm:$0xff]
      %v3399 = vld [vmem:[#allocation2 + $0x10] sm:$0xff]
      %v3400 = vld [vmem:[#allocation2 + $0x18] sm:$0xff]
      %v3401 = vld [vmem:[#allocation2 + $0x20] sm:$0xff]
      %v3402 = vld [vmem:[#allocation2 + $0x28] sm:$0xff]
      %v3403 = vld [vmem:[#allocation2 + $0x30] sm:$0xff]
      %v3404 = vld [vmem:[#allocation2 + $0x38] sm:$0xff]
      %v3405 = vld [vmem:[#allocation2 + $0x40] sm:$0xff]
      %3406 = vst [vmem:[#allocation3 + $0x340] sm:$0xff] %v3398
      %3407 = vst [vmem:[#allocation3 + $0x348] sm:$0xff] %v3399
      %3408 = vst [vmem:[#allocation3 + $0x350] sm:$0xff] %v3400
      %3409 = vst [vmem:[#allocation3 + $0x358] sm:$0xff] %v3401
      %3410 = vst [vmem:[#allocation3 + $0x360] sm:$0xff] %v3402
      %3411 = vst [vmem:[#allocation3 + $0x368] sm:$0xff] %v3403
      %3412 = vst [vmem:[#allocation3 + $0x370] sm:$0xff] %v3404
      %3413 = vst [vmem:[#allocation3 + $0x378] sm:$0xff] %v3405
      %v3414 = vld [vmem:[#allocation2 + $0x8] sm:$0xff]
      %v3415 = vld [vmem:[#allocation2 + $0x10] sm:$0xff]
      %v3416 = vld [vmem:[#allocation2 + $0x18] sm:$0xff]
      %v3417 = vld [vmem:[#allocation2 + $0x20] sm:$0xff]
      %v3418 = vld [vmem:[#allocation2 + $0x28] sm:$0xff]
      %v3419 = vld [vmem:[#allocation2 + $0x30] sm:$0xff]
      %v3420 = vld [vmem:[#allocation2 + $0x38] sm:$0xff]
      %v3421 = vld [vmem:[#allocation2 + $0x40] sm:$0xff]
      %v3422 = vld [vmem:[#allocation2 + $0x48] sm:$0xff]
      %3432 = vrot.lane.b32.xlu0 %v3414, 127
      %v3433 = vpop.permute.xlu0 %3432
      %3434 = vrot.lane.b32.xlu0 %v3415, 127
      %v3435 = vpop.permute.xlu0 %3434
      %3436 = vrot.lane.b32.xlu0 %v3416, 127
      %v3437 = vpop.permute.xlu0 %3436
      %3438 = vrot.lane.b32.xlu0 %v3417, 127
      %v3439 = vpop.permute.xlu0 %3438
      %3440 = vrot.lane.b32.xlu0 %v3418, 127
      %v3441 = vpop.permute.xlu0 %3440
      %3442 = vrot.lane.b32.xlu0 %v3419, 127
      %v3443 = vpop.permute.xlu0 %3442
      %3444 = vrot.lane.b32.xlu0 %v3420, 127
      %v3445 = vpop.permute.xlu0 %3444
      %3446 = vrot.lane.b32.xlu0 %v3421, 127
      %v3447 = vpop.permute.xlu0 %3446
      %3448 = vrot.lane.b32.xlu0 %v3422, 127
      %v3449 = vpop.permute.xlu0 %3448
      %v3450 = vsel %vm1114, %v3433, %v3435
      %v3451 = vsel %vm1114, %v3435, %v3437
      %v3452 = vsel %vm1114, %v3437, %v3439
      %v3453 = vsel %vm1114, %v3439, %v3441
      %v3454 = vsel %vm1114, %v3441, %v3443
      %v3455 = vsel %vm1114, %v3443, %v3445
      %v3456 = vsel %vm1114, %v3445, %v3447
      %v3457 = vsel %vm1114, %v3447, %v3449
      %3466 = vst [vmem:[#allocation3 + $0x380] sm:$0xff] %v3450
      %3467 = vst [vmem:[#allocation3 + $0x388] sm:$0xff] %v3451
      %3468 = vst [vmem:[#allocation3 + $0x390] sm:$0xff] %v3452
      %3469 = vst [vmem:[#allocation3 + $0x398] sm:$0xff] %v3453
      %3470 = vst [vmem:[#allocation3 + $0x3a0] sm:$0xff] %v3454
      %3471 = vst [vmem:[#allocation3 + $0x3a8] sm:$0xff] %v3455
      %3472 = vst [vmem:[#allocation3 + $0x3b0] sm:$0xff] %v3456
      %3473 = vst [vmem:[#allocation3 + $0x3b8] sm:$0xff] %v3457
      %v3474 = vld [vmem:[#allocation2 + $0x8] sm:$0xff]
      %v3475 = vld [vmem:[#allocation2 + $0x10] sm:$0xff]
      %v3476 = vld [vmem:[#allocation2 + $0x18] sm:$0xff]
      %v3477 = vld [vmem:[#allocation2 + $0x20] sm:$0xff]
      %v3478 = vld [vmem:[#allocation2 + $0x28] sm:$0xff]
      %v3479 = vld [vmem:[#allocation2 + $0x30] sm:$0xff]
      %v3480 = vld [vmem:[#allocation2 + $0x38] sm:$0xff]
      %v3481 = vld [vmem:[#allocation2 + $0x40] sm:$0xff]
      %v3482 = vld [vmem:[#allocation2 + $0x48] sm:$0xff]
      %3492 = vrot.lane.b32.xlu0 %v3474, 119
      %v3493 = vpop.permute.xlu0 %3492
      %3494 = vrot.lane.b32.xlu0 %v3475, 119
      %v3495 = vpop.permute.xlu0 %3494
      %3496 = vrot.lane.b32.xlu0 %v3476, 119
      %v3497 = vpop.permute.xlu0 %3496
      %3498 = vrot.lane.b32.xlu0 %v3477, 119
      %v3499 = vpop.permute.xlu0 %3498
      %3500 = vrot.lane.b32.xlu0 %v3478, 119
      %v3501 = vpop.permute.xlu0 %3500
      %3502 = vrot.lane.b32.xlu0 %v3479, 119
      %v3503 = vpop.permute.xlu0 %3502
      %3504 = vrot.lane.b32.xlu0 %v3480, 119
      %v3505 = vpop.permute.xlu0 %3504
      %3506 = vrot.lane.b32.xlu0 %v3481, 119
      %v3507 = vpop.permute.xlu0 %3506
      %3508 = vrot.lane.b32.xlu0 %v3482, 119
      %v3509 = vpop.permute.xlu0 %3508
      %v3510 = vsel %vm1175, %v3493, %v3495
      %v3511 = vsel %vm1175, %v3495, %v3497
      %v3512 = vsel %vm1175, %v3497, %v3499
      %v3513 = vsel %vm1175, %v3499, %v3501
      %v3514 = vsel %vm1175, %v3501, %v3503
      %v3515 = vsel %vm1175, %v3503, %v3505
      %v3516 = vsel %vm1175, %v3505, %v3507
      %v3517 = vsel %vm1175, %v3507, %v3509
      %3526 = vst [vmem:[#allocation3 + $0x3c0] sm:$0xff] %v3510
      %3527 = vst [vmem:[#allocation3 + $0x3c8] sm:$0xff] %v3511
      %3528 = vst [vmem:[#allocation3 + $0x3d0] sm:$0xff] %v3512
      %3529 = vst [vmem:[#allocation3 + $0x3d8] sm:$0xff] %v3513
      %3530 = vst [vmem:[#allocation3 + $0x3e0] sm:$0xff] %v3514
      %3531 = vst [vmem:[#allocation3 + $0x3e8] sm:$0xff] %v3515
      %3532 = vst [vmem:[#allocation3 + $0x3f0] sm:$0xff] %v3516
      %3533 = vst [vmem:[#allocation3 + $0x3f8] sm:$0xff] %v3517
      %v3534 = vld [vmem:[#allocation2 + $0x8] sm:$0xff]
      %v3535 = vld [vmem:[#allocation2 + $0x10] sm:$0xff]
      %v3536 = vld [vmem:[#allocation2 + $0x18] sm:$0xff]
      %v3537 = vld [vmem:[#allocation2 + $0x20] sm:$0xff]
      %v3538 = vld [vmem:[#allocation2 + $0x28] sm:$0xff]
      %v3539 = vld [vmem:[#allocation2 + $0x30] sm:$0xff]
      %v3540 = vld [vmem:[#allocation2 + $0x38] sm:$0xff]
      %v3541 = vld [vmem:[#allocation2 + $0x40] sm:$0xff]
      %v3542 = vld [vmem:[#allocation2 + $0x48] sm:$0xff]
      %3552 = vrot.lane.b32.xlu0 %v3534, 118
      %v3553 = vpop.permute.xlu0 %3552
      %3554 = vrot.lane.b32.xlu0 %v3535, 118
      %v3555 = vpop.permute.xlu0 %3554
      %3556 = vrot.lane.b32.xlu0 %v3536, 118
      %v3557 = vpop.permute.xlu0 %3556
      %3558 = vrot.lane.b32.xlu0 %v3537, 118
      %v3559 = vpop.permute.xlu0 %3558
      %3560 = vrot.lane.b32.xlu0 %v3538, 118
      %v3561 = vpop.permute.xlu0 %3560
      %3562 = vrot.lane.b32.xlu0 %v3539, 118
      %v3563 = vpop.permute.xlu0 %3562
      %3564 = vrot.lane.b32.xlu0 %v3540, 118
      %v3565 = vpop.permute.xlu0 %3564
      %3566 = vrot.lane.b32.xlu0 %v3541, 118
      %v3567 = vpop.permute.xlu0 %3566
      %3568 = vrot.lane.b32.xlu0 %v3542, 118
      %v3569 = vpop.permute.xlu0 %3568
      %v3570 = vsel %vm1236, %v3553, %v3555
      %v3571 = vsel %vm1236, %v3555, %v3557
      %v3572 = vsel %vm1236, %v3557, %v3559
      %v3573 = vsel %vm1236, %v3559, %v3561
      %v3574 = vsel %vm1236, %v3561, %v3563
      %v3575 = vsel %vm1236, %v3563, %v3565
      %v3576 = vsel %vm1236, %v3565, %v3567
      %v3577 = vsel %vm1236, %v3567, %v3569
      %3586 = vst [vmem:[#allocation3 + $0x400] sm:$0xff] %v3570
      %3587 = vst [vmem:[#allocation3 + $0x408] sm:$0xff] %v3571
      %3588 = vst [vmem:[#allocation3 + $0x410] sm:$0xff] %v3572
      %3589 = vst [vmem:[#allocation3 + $0x418] sm:$0xff] %v3573
      %3590 = vst [vmem:[#allocation3 + $0x420] sm:$0xff] %v3574
      %3591 = vst [vmem:[#allocation3 + $0x428] sm:$0xff] %v3575
      %3592 = vst [vmem:[#allocation3 + $0x430] sm:$0xff] %v3576
      %3593 = vst [vmem:[#allocation3 + $0x438] sm:$0xff] %v3577
      %v3594 = vld [vmem:[#allocation2 + $0x8] sm:$0xff]
      %v3595 = vld [vmem:[#allocation2 + $0x10] sm:$0xff]
      %v3596 = vld [vmem:[#allocation2 + $0x18] sm:$0xff]
      %v3597 = vld [vmem:[#allocation2 + $0x20] sm:$0xff]
      %v3598 = vld [vmem:[#allocation2 + $0x28] sm:$0xff]
      %v3599 = vld [vmem:[#allocation2 + $0x30] sm:$0xff]
      %v3600 = vld [vmem:[#allocation2 + $0x38] sm:$0xff]
      %v3601 = vld [vmem:[#allocation2 + $0x40] sm:$0xff]
      %v3602 = vld [vmem:[#allocation2 + $0x48] sm:$0xff]
      %3612 = vrot.lane.b32.xlu0 %v3594, 117
      %v3613 = vpop.permute.xlu0 %3612
      %3614 = vrot.lane.b32.xlu0 %v3595, 117
      %v3615 = vpop.permute.xlu0 %3614
      %3616 = vrot.lane.b32.xlu0 %v3596, 117
      %v3617 = vpop.permute.xlu0 %3616
      %3618 = vrot.lane.b32.xlu0 %v3597, 117
      %v3619 = vpop.permute.xlu0 %3618
      %3620 = vrot.lane.b32.xlu0 %v3598, 117
      %v3621 = vpop.permute.xlu0 %3620
      %3622 = vrot.lane.b32.xlu0 %v3599, 117
      %v3623 = vpop.permute.xlu0 %3622
      %3624 = vrot.lane.b32.xlu0 %v3600, 117
      %v3625 = vpop.permute.xlu0 %3624
      %3626 = vrot.lane.b32.xlu0 %v3601, 117
      %v3627 = vpop.permute.xlu0 %3626
      %3628 = vrot.lane.b32.xlu0 %v3602, 117
      %v3629 = vpop.permute.xlu0 %3628
      %v3630 = vsel %vm1297, %v3613, %v3615
      %v3631 = vsel %vm1297, %v3615, %v3617
      %v3632 = vsel %vm1297, %v3617, %v3619
      %v3633 = vsel %vm1297, %v3619, %v3621
      %v3634 = vsel %vm1297, %v3621, %v3623
      %v3635 = vsel %vm1297, %v3623, %v3625
      %v3636 = vsel %vm1297, %v3625, %v3627
      %v3637 = vsel %vm1297, %v3627, %v3629
      %3646 = vst [vmem:[#allocation3 + $0x440] sm:$0xff] %v3630
      %3647 = vst [vmem:[#allocation3 + $0x448] sm:$0xff] %v3631
      %3648 = vst [vmem:[#allocation3 + $0x450] sm:$0xff] %v3632
      %3649 = vst [vmem:[#allocation3 + $0x458] sm:$0xff] %v3633
      %3650 = vst [vmem:[#allocation3 + $0x460] sm:$0xff] %v3634
      %3651 = vst [vmem:[#allocation3 + $0x468] sm:$0xff] %v3635
      %3652 = vst [vmem:[#allocation3 + $0x470] sm:$0xff] %v3636
      %3653 = vst [vmem:[#allocation3 + $0x478] sm:$0xff] %v3637
      %v3654 = vld [vmem:[#allocation2 + $0x8] sm:$0xff]
      %v3655 = vld [vmem:[#allocation2 + $0x10] sm:$0xff]
      %v3656 = vld [vmem:[#allocation2 + $0x18] sm:$0xff]
      %v3657 = vld [vmem:[#allocation2 + $0x20] sm:$0xff]
      %v3658 = vld [vmem:[#allocation2 + $0x28] sm:$0xff]
      %v3659 = vld [vmem:[#allocation2 + $0x30] sm:$0xff]
      %v3660 = vld [vmem:[#allocation2 + $0x38] sm:$0xff]
      %v3661 = vld [vmem:[#allocation2 + $0x40] sm:$0xff]
      %v3662 = vld [vmem:[#allocation2 + $0x48] sm:$0xff]
      %3672 = vrot.lane.b32.xlu0 %v3654, 39
      %v3673 = vpop.permute.xlu0 %3672
      %3674 = vrot.lane.b32.xlu0 %v3655, 39
      %v3675 = vpop.permute.xlu0 %3674
      %3676 = vrot.lane.b32.xlu0 %v3656, 39
      %v3677 = vpop.permute.xlu0 %3676
      %3678 = vrot.lane.b32.xlu0 %v3657, 39
      %v3679 = vpop.permute.xlu0 %3678
      %3680 = vrot.lane.b32.xlu0 %v3658, 39
      %v3681 = vpop.permute.xlu0 %3680
      %3682 = vrot.lane.b32.xlu0 %v3659, 39
      %v3683 = vpop.permute.xlu0 %3682
      %3684 = vrot.lane.b32.xlu0 %v3660, 39
      %v3685 = vpop.permute.xlu0 %3684
      %3686 = vrot.lane.b32.xlu0 %v3661, 39
      %v3687 = vpop.permute.xlu0 %3686
      %3688 = vrot.lane.b32.xlu0 %v3662, 39
      %v3689 = vpop.permute.xlu0 %3688
      %v3690 = vsel %vm1358, %v3673, %v3675
      %v3691 = vsel %vm1358, %v3675, %v3677
      %v3692 = vsel %vm1358, %v3677, %v3679
      %v3693 = vsel %vm1358, %v3679, %v3681
      %v3694 = vsel %vm1358, %v3681, %v3683
      %v3695 = vsel %vm1358, %v3683, %v3685
      %v3696 = vsel %vm1358, %v3685, %v3687
      %v3697 = vsel %vm1358, %v3687, %v3689
      %3706 = vst [vmem:[#allocation3 + $0x480] sm:$0xff] %v3690
      %3707 = vst [vmem:[#allocation3 + $0x488] sm:$0xff] %v3691
      %3708 = vst [vmem:[#allocation3 + $0x490] sm:$0xff] %v3692
      %3709 = vst [vmem:[#allocation3 + $0x498] sm:$0xff] %v3693
      %3710 = vst [vmem:[#allocation3 + $0x4a0] sm:$0xff] %v3694
      %3711 = vst [vmem:[#allocation3 + $0x4a8] sm:$0xff] %v3695
      %3712 = vst [vmem:[#allocation3 + $0x4b0] sm:$0xff] %v3696
      %3713 = vst [vmem:[#allocation3 + $0x4b8] sm:$0xff] %v3697
      %v3714 = vld [vmem:[#allocation2 + $0x8] sm:$0xff]
      %v3715 = vld [vmem:[#allocation2 + $0x10] sm:$0xff]
      %v3716 = vld [vmem:[#allocation2 + $0x18] sm:$0xff]
      %v3717 = vld [vmem:[#allocation2 + $0x20] sm:$0xff]
      %v3718 = vld [vmem:[#allocation2 + $0x28] sm:$0xff]
      %v3719 = vld [vmem:[#allocation2 + $0x30] sm:$0xff]
      %v3720 = vld [vmem:[#allocation2 + $0x38] sm:$0xff]
      %v3721 = vld [vmem:[#allocation2 + $0x40] sm:$0xff]
      %v3722 = vld [vmem:[#allocation2 + $0x48] sm:$0xff]
      %3732 = vrot.lane.b32.xlu0 %v3714, 38
      %v3733 = vpop.permute.xlu0 %3732
      %3734 = vrot.lane.b32.xlu0 %v3715, 38
      %v3735 = vpop.permute.xlu0 %3734
      %3736 = vrot.lane.b32.xlu0 %v3716, 38
      %v3737 = vpop.permute.xlu0 %3736
      %3738 = vrot.lane.b32.xlu0 %v3717, 38
      %v3739 = vpop.permute.xlu0 %3738
      %3740 = vrot.lane.b32.xlu0 %v3718, 38
      %v3741 = vpop.permute.xlu0 %3740
      %3742 = vrot.lane.b32.xlu0 %v3719, 38
      %v3743 = vpop.permute.xlu0 %3742
      %3744 = vrot.lane.b32.xlu0 %v3720, 38
      %v3745 = vpop.permute.xlu0 %3744
      %3746 = vrot.lane.b32.xlu0 %v3721, 38
      %v3747 = vpop.permute.xlu0 %3746
      %3748 = vrot.lane.b32.xlu0 %v3722, 38
      %v3749 = vpop.permute.xlu0 %3748
      %v3750 = vsel %vm1419, %v3733, %v3735
      %v3751 = vsel %vm1419, %v3735, %v3737
      %v3752 = vsel %vm1419, %v3737, %v3739
      %v3753 = vsel %vm1419, %v3739, %v3741
      %v3754 = vsel %vm1419, %v3741, %v3743
      %v3755 = vsel %vm1419, %v3743, %v3745
      %v3756 = vsel %vm1419, %v3745, %v3747
      %v3757 = vsel %vm1419, %v3747, %v3749
      %3766 = vst [vmem:[#allocation3 + $0x4c0] sm:$0xff] %v3750
      %3767 = vst [vmem:[#allocation3 + $0x4c8] sm:$0xff] %v3751
      %3768 = vst [vmem:[#allocation3 + $0x4d0] sm:$0xff] %v3752
      %3769 = vst [vmem:[#allocation3 + $0x4d8] sm:$0xff] %v3753
      %3770 = vst [vmem:[#allocation3 + $0x4e0] sm:$0xff] %v3754
      %3771 = vst [vmem:[#allocation3 + $0x4e8] sm:$0xff] %v3755
      %3772 = vst [vmem:[#allocation3 + $0x4f0] sm:$0xff] %v3756
      %3773 = vst [vmem:[#allocation3 + $0x4f8] sm:$0xff] %v3757
      %v3774 = vld [vmem:[#allocation2 + $0x8] sm:$0xff]
      %v3775 = vld [vmem:[#allocation2 + $0x10] sm:$0xff]
      %v3776 = vld [vmem:[#allocation2 + $0x18] sm:$0xff]
      %v3777 = vld [vmem:[#allocation2 + $0x20] sm:$0xff]
      %v3778 = vld [vmem:[#allocation2 + $0x28] sm:$0xff]
      %v3779 = vld [vmem:[#allocation2 + $0x30] sm:$0xff]
      %v3780 = vld [vmem:[#allocation2 + $0x38] sm:$0xff]
      %v3781 = vld [vmem:[#allocation2 + $0x40] sm:$0xff]
      %v3782 = vld [vmem:[#allocation2 + $0x48] sm:$0xff]
      %3792 = vrot.lane.b32.xlu0 %v3774, 37
      %v3793 = vpop.permute.xlu0 %3792
      %3794 = vrot.lane.b32.xlu0 %v3775, 37
      %v3795 = vpop.permute.xlu0 %3794
      %3796 = vrot.lane.b32.xlu0 %v3776, 37
      %v3797 = vpop.permute.xlu0 %3796
      %3798 = vrot.lane.b32.xlu0 %v3777, 37
      %v3799 = vpop.permute.xlu0 %3798
      %3800 = vrot.lane.b32.xlu0 %v3778, 37
      %v3801 = vpop.permute.xlu0 %3800
      %3802 = vrot.lane.b32.xlu0 %v3779, 37
      %v3803 = vpop.permute.xlu0 %3802
      %3804 = vrot.lane.b32.xlu0 %v3780, 37
      %v3805 = vpop.permute.xlu0 %3804
      %3806 = vrot.lane.b32.xlu0 %v3781, 37
      %v3807 = vpop.permute.xlu0 %3806
      %3808 = vrot.lane.b32.xlu0 %v3782, 37
      %v3809 = vpop.permute.xlu0 %3808
      %v3810 = vsel %vm1480, %v3793, %v3795
      %v3811 = vsel %vm1480, %v3795, %v3797
      %v3812 = vsel %vm1480, %v3797, %v3799
      %v3813 = vsel %vm1480, %v3799, %v3801
      %v3814 = vsel %vm1480, %v3801, %v3803
      %v3815 = vsel %vm1480, %v3803, %v3805
      %v3816 = vsel %vm1480, %v3805, %v3807
      %v3817 = vsel %vm1480, %v3807, %v3809
      %3826 = vst [vmem:[#allocation3 + $0x500] sm:$0xff] %v3810
      %3827 = vst [vmem:[#allocation3 + $0x508] sm:$0xff] %v3811
      %3828 = vst [vmem:[#allocation3 + $0x510] sm:$0xff] %v3812
      %3829 = vst [vmem:[#allocation3 + $0x518] sm:$0xff] %v3813
      %3830 = vst [vmem:[#allocation3 + $0x520] sm:$0xff] %v3814
      %3831 = vst [vmem:[#allocation3 + $0x528] sm:$0xff] %v3815
      %3832 = vst [vmem:[#allocation3 + $0x530] sm:$0xff] %v3816
      %3833 = vst [vmem:[#allocation3 + $0x538] sm:$0xff] %v3817
      %v3834 = vld [vmem:[#allocation2 + $0x8] sm:$0xff]
      %v3835 = vld [vmem:[#allocation2 + $0x10] sm:$0xff]
      %v3836 = vld [vmem:[#allocation2 + $0x18] sm:$0xff]
      %v3837 = vld [vmem:[#allocation2 + $0x20] sm:$0xff]
      %v3838 = vld [vmem:[#allocation2 + $0x28] sm:$0xff]
      %v3839 = vld [vmem:[#allocation2 + $0x30] sm:$0xff]
      %v3840 = vld [vmem:[#allocation2 + $0x38] sm:$0xff]
      %v3841 = vld [vmem:[#allocation2 + $0x40] sm:$0xff]
      %v3842 = vld [vmem:[#allocation2 + $0x48] sm:$0xff]
      %3852 = vrot.lane.b32.xlu0 %v3834, 29
      %v3853 = vpop.permute.xlu0 %3852
      %3854 = vrot.lane.b32.xlu0 %v3835, 29
      %v3855 = vpop.permute.xlu0 %3854
      %3856 = vrot.lane.b32.xlu0 %v3836, 29
      %v3857 = vpop.permute.xlu0 %3856
      %3858 = vrot.lane.b32.xlu0 %v3837, 29
      %v3859 = vpop.permute.xlu0 %3858
      %3860 = vrot.lane.b32.xlu0 %v3838, 29
      %v3861 = vpop.permute.xlu0 %3860
      %3862 = vrot.lane.b32.xlu0 %v3839, 29
      %v3863 = vpop.permute.xlu0 %3862
      %3864 = vrot.lane.b32.xlu0 %v3840, 29
      %v3865 = vpop.permute.xlu0 %3864
      %3866 = vrot.lane.b32.xlu0 %v3841, 29
      %v3867 = vpop.permute.xlu0 %3866
      %3868 = vrot.lane.b32.xlu0 %v3842, 29
      %v3869 = vpop.permute.xlu0 %3868
      %v3870 = vsel %vm1541, %v3853, %v3855
      %v3871 = vsel %vm1541, %v3855, %v3857
      %v3872 = vsel %vm1541, %v3857, %v3859
      %v3873 = vsel %vm1541, %v3859, %v3861
      %v3874 = vsel %vm1541, %v3861, %v3863
      %v3875 = vsel %vm1541, %v3863, %v3865
      %v3876 = vsel %vm1541, %v3865, %v3867
      %v3877 = vsel %vm1541, %v3867, %v3869
      %3886 = vst [vmem:[#allocation3 + $0x540] sm:$0xff] %v3870
      %3887 = vst [vmem:[#allocation3 + $0x548] sm:$0xff] %v3871
      %3888 = vst [vmem:[#allocation3 + $0x550] sm:$0xff] %v3872
      %3889 = vst [vmem:[#allocation3 + $0x558] sm:$0xff] %v3873
      %3890 = vst [vmem:[#allocation3 + $0x560] sm:$0xff] %v3874
      %3891 = vst [vmem:[#allocation3 + $0x568] sm:$0xff] %v3875
      %3892 = vst [vmem:[#allocation3 + $0x570] sm:$0xff] %v3876
      %3893 = vst [vmem:[#allocation3 + $0x578] sm:$0xff] %v3877
      %v3894 = vld [vmem:[#allocation2 + $0x8] sm:$0xff]
      %v3895 = vld [vmem:[#allocation2 + $0x10] sm:$0xff]
      %v3896 = vld [vmem:[#allocation2 + $0x18] sm:$0xff]
      %v3897 = vld [vmem:[#allocation2 + $0x20] sm:$0xff]
      %v3898 = vld [vmem:[#allocation2 + $0x28] sm:$0xff]
      %v3899 = vld [vmem:[#allocation2 + $0x30] sm:$0xff]
      %v3900 = vld [vmem:[#allocation2 + $0x38] sm:$0xff]
      %v3901 = vld [vmem:[#allocation2 + $0x40] sm:$0xff]
      %v3902 = vld [vmem:[#allocation2 + $0x48] sm:$0xff]
      %3912 = vrot.lane.b32.xlu0 %v3894, 28
      %v3913 = vpop.permute.xlu0 %3912
      %3914 = vrot.lane.b32.xlu0 %v3895, 28
      %v3915 = vpop.permute.xlu0 %3914
      %3916 = vrot.lane.b32.xlu0 %v3896, 28
      %v3917 = vpop.permute.xlu0 %3916
      %3918 = vrot.lane.b32.xlu0 %v3897, 28
      %v3919 = vpop.permute.xlu0 %3918
      %3920 = vrot.lane.b32.xlu0 %v3898, 28
      %v3921 = vpop.permute.xlu0 %3920
      %3922 = vrot.lane.b32.xlu0 %v3899, 28
      %v3923 = vpop.permute.xlu0 %3922
      %3924 = vrot.lane.b32.xlu0 %v3900, 28
      %v3925 = vpop.permute.xlu0 %3924
      %3926 = vrot.lane.b32.xlu0 %v3901, 28
      %v3927 = vpop.permute.xlu0 %3926
      %3928 = vrot.lane.b32.xlu0 %v3902, 28
      %v3929 = vpop.permute.xlu0 %3928
      %v3930 = vsel %vm1602, %v3913, %v3915
      %v3931 = vsel %vm1602, %v3915, %v3917
      %v3932 = vsel %vm1602, %v3917, %v3919
      %v3933 = vsel %vm1602, %v3919, %v3921
      %v3934 = vsel %vm1602, %v3921, %v3923
      %v3935 = vsel %vm1602, %v3923, %v3925
      %v3936 = vsel %vm1602, %v3925, %v3927
      %v3937 = vsel %vm1602, %v3927, %v3929
      %3946 = vst [vmem:[#allocation3 + $0x580] sm:$0xff] %v3930
      %3947 = vst [vmem:[#allocation3 + $0x588] sm:$0xff] %v3931
      %3948 = vst [vmem:[#allocation3 + $0x590] sm:$0xff] %v3932
      %3949 = vst [vmem:[#allocation3 + $0x598] sm:$0xff] %v3933
      %3950 = vst [vmem:[#allocation3 + $0x5a0] sm:$0xff] %v3934
      %3951 = vst [vmem:[#allocation3 + $0x5a8] sm:$0xff] %v3935
      %3952 = vst [vmem:[#allocation3 + $0x5b0] sm:$0xff] %v3936
      %3953 = vst [vmem:[#allocation3 + $0x5b8] sm:$0xff] %v3937
      %v3954 = vld [vmem:[#allocation2 + $0x8] sm:$0xff]
      %v3955 = vld [vmem:[#allocation2 + $0x10] sm:$0xff]
      %v3956 = vld [vmem:[#allocation2 + $0x18] sm:$0xff]
      %v3957 = vld [vmem:[#allocation2 + $0x20] sm:$0xff]
      %v3958 = vld [vmem:[#allocation2 + $0x28] sm:$0xff]
      %v3959 = vld [vmem:[#allocation2 + $0x30] sm:$0xff]
      %v3960 = vld [vmem:[#allocation2 + $0x38] sm:$0xff]
      %v3961 = vld [vmem:[#allocation2 + $0x40] sm:$0xff]
      %v3962 = vld [vmem:[#allocation2 + $0x48] sm:$0xff]
      %3972 = vrot.lane.b32.xlu0 %v3954, 27
      %v3973 = vpop.permute.xlu0 %3972
      %3974 = vrot.lane.b32.xlu0 %v3955, 27
      %v3975 = vpop.permute.xlu0 %3974
      %3976 = vrot.lane.b32.xlu0 %v3956, 27
      %v3977 = vpop.permute.xlu0 %3976
      %3978 = vrot.lane.b32.xlu0 %v3957, 27
      %v3979 = vpop.permute.xlu0 %3978
      %3980 = vrot.lane.b32.xlu0 %v3958, 27
      %v3981 = vpop.permute.xlu0 %3980
      %3982 = vrot.lane.b32.xlu0 %v3959, 27
      %v3983 = vpop.permute.xlu0 %3982
      %3984 = vrot.lane.b32.xlu0 %v3960, 27
      %v3985 = vpop.permute.xlu0 %3984
      %3986 = vrot.lane.b32.xlu0 %v3961, 27
      %v3987 = vpop.permute.xlu0 %3986
      %3988 = vrot.lane.b32.xlu0 %v3962, 27
      %v3989 = vpop.permute.xlu0 %3988
      %v3990 = vsel %vm1663, %v3973, %v3975
      %v3991 = vsel %vm1663, %v3975, %v3977
      %v3992 = vsel %vm1663, %v3977, %v3979
      %v3993 = vsel %vm1663, %v3979, %v3981
      %v3994 = vsel %vm1663, %v3981, %v3983
      %v3995 = vsel %vm1663, %v3983, %v3985
      %v3996 = vsel %vm1663, %v3985, %v3987
      %v3997 = vsel %vm1663, %v3987, %v3989
      %4006 = vst [vmem:[#allocation3 + $0x5c0] sm:$0xff] %v3990
      %4007 = vst [vmem:[#allocation3 + $0x5c8] sm:$0xff] %v3991
      %4008 = vst [vmem:[#allocation3 + $0x5d0] sm:$0xff] %v3992
      %4009 = vst [vmem:[#allocation3 + $0x5d8] sm:$0xff] %v3993
      %4010 = vst [vmem:[#allocation3 + $0x5e0] sm:$0xff] %v3994
      %4011 = vst [vmem:[#allocation3 + $0x5e8] sm:$0xff] %v3995
      %4012 = vst [vmem:[#allocation3 + $0x5f0] sm:$0xff] %v3996
      %4013 = vst [vmem:[#allocation3 + $0x5f8] sm:$0xff] %v3997
      %v4014 = vld [vmem:[#allocation2 + $0x8] sm:$0xff]
      %v4015 = vld [vmem:[#allocation2 + $0x10] sm:$0xff]
      %v4016 = vld [vmem:[#allocation2 + $0x18] sm:$0xff]
      %v4017 = vld [vmem:[#allocation2 + $0x20] sm:$0xff]
      %v4018 = vld [vmem:[#allocation2 + $0x28] sm:$0xff]
      %v4019 = vld [vmem:[#allocation2 + $0x30] sm:$0xff]
      %v4020 = vld [vmem:[#allocation2 + $0x38] sm:$0xff]
      %v4021 = vld [vmem:[#allocation2 + $0x40] sm:$0xff]
      %v4022 = vld [vmem:[#allocation2 + $0x48] sm:$0xff]
      %4032 = vrot.lane.b32.xlu0 %v4014, 19
      %v4033 = vpop.permute.xlu0 %4032
      %4034 = vrot.lane.b32.xlu0 %v4015, 19
      %v4035 = vpop.permute.xlu0 %4034
      %4036 = vrot.lane.b32.xlu0 %v4016, 19
      %v4037 = vpop.permute.xlu0 %4036
      %4038 = vrot.lane.b32.xlu0 %v4017, 19
      %v4039 = vpop.permute.xlu0 %4038
      %4040 = vrot.lane.b32.xlu0 %v4018, 19
      %v4041 = vpop.permute.xlu0 %4040
      %4042 = vrot.lane.b32.xlu0 %v4019, 19
      %v4043 = vpop.permute.xlu0 %4042
      %4044 = vrot.lane.b32.xlu0 %v4020, 19
      %v4045 = vpop.permute.xlu0 %4044
      %4046 = vrot.lane.b32.xlu0 %v4021, 19
      %v4047 = vpop.permute.xlu0 %4046
      %4048 = vrot.lane.b32.xlu0 %v4022, 19
      %v4049 = vpop.permute.xlu0 %4048
      %v4050 = vsel %vm1724, %v4033, %v4035
      %v4051 = vsel %vm1724, %v4035, %v4037
      %v4052 = vsel %vm1724, %v4037, %v4039
      %v4053 = vsel %vm1724, %v4039, %v4041
      %v4054 = vsel %vm1724, %v4041, %v4043
      %v4055 = vsel %vm1724, %v4043, %v4045
      %v4056 = vsel %vm1724, %v4045, %v4047
      %v4057 = vsel %vm1724, %v4047, %v4049
      %4066 = vst [vmem:[#allocation3 + $0x600] sm:$0xff] %v4050
      %4067 = vst [vmem:[#allocation3 + $0x608] sm:$0xff] %v4051
      %4068 = vst [vmem:[#allocation3 + $0x610] sm:$0xff] %v4052
      %4069 = vst [vmem:[#allocation3 + $0x618] sm:$0xff] %v4053
      %4070 = vst [vmem:[#allocation3 + $0x620] sm:$0xff] %v4054
      %4071 = vst [vmem:[#allocation3 + $0x628] sm:$0xff] %v4055
      %4072 = vst [vmem:[#allocation3 + $0x630] sm:$0xff] %v4056
      %4073 = vst [vmem:[#allocation3 + $0x638] sm:$0xff] %v4057
      %v4074 = vld [vmem:[#allocation2 + $0x8] sm:$0xff]
      %v4075 = vld [vmem:[#allocation2 + $0x10] sm:$0xff]
      %v4076 = vld [vmem:[#allocation2 + $0x18] sm:$0xff]
      %v4077 = vld [vmem:[#allocation2 + $0x20] sm:$0xff]
      %v4078 = vld [vmem:[#allocation2 + $0x28] sm:$0xff]
      %v4079 = vld [vmem:[#allocation2 + $0x30] sm:$0xff]
      %v4080 = vld [vmem:[#allocation2 + $0x38] sm:$0xff]
      %v4081 = vld [vmem:[#allocation2 + $0x40] sm:$0xff]
      %v4082 = vld [vmem:[#allocation2 + $0x48] sm:$0xff]
      %4092 = vrot.lane.b32.xlu0 %v4074, 18
      %v4093 = vpop.permute.xlu0 %4092
      %4094 = vrot.lane.b32.xlu0 %v4075, 18
      %v4095 = vpop.permute.xlu0 %4094
      %4096 = vrot.lane.b32.xlu0 %v4076, 18
      %v4097 = vpop.permute.xlu0 %4096
      %4098 = vrot.lane.b32.xlu0 %v4077, 18
      %v4099 = vpop.permute.xlu0 %4098
      %4100 = vrot.lane.b32.xlu0 %v4078, 18
      %v4101 = vpop.permute.xlu0 %4100
      %4102 = vrot.lane.b32.xlu0 %v4079, 18
      %v4103 = vpop.permute.xlu0 %4102
      %4104 = vrot.lane.b32.xlu0 %v4080, 18
      %v4105 = vpop.permute.xlu0 %4104
      %4106 = vrot.lane.b32.xlu0 %v4081, 18
      %v4107 = vpop.permute.xlu0 %4106
      %4108 = vrot.lane.b32.xlu0 %v4082, 18
      %v4109 = vpop.permute.xlu0 %4108
      %v4110 = vsel %vm1785, %v4093, %v4095
      %v4111 = vsel %vm1785, %v4095, %v4097
      %v4112 = vsel %vm1785, %v4097, %v4099
      %v4113 = vsel %vm1785, %v4099, %v4101
      %v4114 = vsel %vm1785, %v4101, %v4103
      %v4115 = vsel %vm1785, %v4103, %v4105
      %v4116 = vsel %vm1785, %v4105, %v4107
      %v4117 = vsel %vm1785, %v4107, %v4109
      %4126 = vst [vmem:[#allocation3 + $0x640] sm:$0xff] %v4110
      %4127 = vst [vmem:[#allocation3 + $0x648] sm:$0xff] %v4111
      %4128 = vst [vmem:[#allocation3 + $0x650] sm:$0xff] %v4112
      %4129 = vst [vmem:[#allocation3 + $0x658] sm:$0xff] %v4113
      %4130 = vst [vmem:[#allocation3 + $0x660] sm:$0xff] %v4114
      %4131 = vst [vmem:[#allocation3 + $0x668] sm:$0xff] %v4115
      %4132 = vst [vmem:[#allocation3 + $0x670] sm:$0xff] %v4116
      %4133 = vst [vmem:[#allocation3 + $0x678] sm:$0xff] %v4117
      %v4134 = vld [vmem:[#allocation2 + $0x8] sm:$0xff]
      %v4135 = vld [vmem:[#allocation2 + $0x10] sm:$0xff]
      %v4136 = vld [vmem:[#allocation2 + $0x18] sm:$0xff]
      %v4137 = vld [vmem:[#allocation2 + $0x20] sm:$0xff]
      %v4138 = vld [vmem:[#allocation2 + $0x28] sm:$0xff]
      %v4139 = vld [vmem:[#allocation2 + $0x30] sm:$0xff]
      %v4140 = vld [vmem:[#allocation2 + $0x38] sm:$0xff]
      %v4141 = vld [vmem:[#allocation2 + $0x40] sm:$0xff]
      %v4142 = vld [vmem:[#allocation2 + $0x48] sm:$0xff]
      %4152 = vrot.lane.b32.xlu0 %v4134, 17
      %v4153 = vpop.permute.xlu0 %4152
      %4154 = vrot.lane.b32.xlu0 %v4135, 17
      %v4155 = vpop.permute.xlu0 %4154
      %4156 = vrot.lane.b32.xlu0 %v4136, 17
      %v4157 = vpop.permute.xlu0 %4156
      %4158 = vrot.lane.b32.xlu0 %v4137, 17
      %v4159 = vpop.permute.xlu0 %4158
      %4160 = vrot.lane.b32.xlu0 %v4138, 17
      %v4161 = vpop.permute.xlu0 %4160
      %4162 = vrot.lane.b32.xlu0 %v4139, 17
      %v4163 = vpop.permute.xlu0 %4162
      %4164 = vrot.lane.b32.xlu0 %v4140, 17
      %v4165 = vpop.permute.xlu0 %4164
      %4166 = vrot.lane.b32.xlu0 %v4141, 17
      %v4167 = vpop.permute.xlu0 %4166
      %4168 = vrot.lane.b32.xlu0 %v4142, 17
      %v4169 = vpop.permute.xlu0 %4168
      %v4170 = vsel %vm1846, %v4153, %v4155
      %v4171 = vsel %vm1846, %v4155, %v4157
      %v4172 = vsel %vm1846, %v4157, %v4159
      %v4173 = vsel %vm1846, %v4159, %v4161
      %v4174 = vsel %vm1846, %v4161, %v4163
      %v4175 = vsel %vm1846, %v4163, %v4165
      %v4176 = vsel %vm1846, %v4165, %v4167
      %v4177 = vsel %vm1846, %v4167, %v4169
      %4186 = vst [vmem:[#allocation3 + $0x680] sm:$0xff] %v4170
      %4187 = vst [vmem:[#allocation3 + $0x688] sm:$0xff] %v4171
      %4188 = vst [vmem:[#allocation3 + $0x690] sm:$0xff] %v4172
      %4189 = vst [vmem:[#allocation3 + $0x698] sm:$0xff] %v4173
      %4190 = vst [vmem:[#allocation3 + $0x6a0] sm:$0xff] %v4174
      %4191 = vst [vmem:[#allocation3 + $0x6a8] sm:$0xff] %v4175
      %4192 = vst [vmem:[#allocation3 + $0x6b0] sm:$0xff] %v4176
      %4193 = vst [vmem:[#allocation3 + $0x6b8] sm:$0xff] %v4177
      %v4194 = vld [vmem:[%s2] sm:$0xf]
      %v4195 = vld [vmem:[#allocation3] sm:$0xff]
      %v4196 = vld [vmem:[#allocation3 + $0x8] sm:$0xff]
      %v4197 = vld [vmem:[#allocation3 + $0x10] sm:$0xff]
      %v4198 = vld [vmem:[#allocation3 + $0x18] sm:$0xff]
      %v4199 = vld [vmem:[#allocation3 + $0x20] sm:$0xff]
      %v4200 = vld [vmem:[#allocation3 + $0x28] sm:$0xff]
      %v4201 = vld [vmem:[#allocation3 + $0x30] sm:$0xff]
      %v4202 = vld [vmem:[#allocation3 + $0x38] sm:$0xff]
      %v4203 = vld [vmem:[#allocation3 + $0x40] sm:$0xff]
      %v4204 = vld [vmem:[#allocation3 + $0x48] sm:$0xff]
      %v4205 = vld [vmem:[#allocation3 + $0x50] sm:$0xff]
      %v4206 = vld [vmem:[#allocation3 + $0x58] sm:$0xff]
      %v4207 = vld [vmem:[#allocation3 + $0x60] sm:$0xff]
      %v4208 = vld [vmem:[#allocation3 + $0x68] sm:$0xff]
      %v4209 = vld [vmem:[#allocation3 + $0x70] sm:$0xff]
      %v4210 = vld [vmem:[#allocation3 + $0x78] sm:$0xff]
      %v4211 = vld [vmem:[#allocation3 + $0x80] sm:$0xff]
      %v4212 = vld [vmem:[#allocation3 + $0x88] sm:$0xff]
      %v4213 = vld [vmem:[#allocation3 + $0x90] sm:$0xff]
      %v4214 = vld [vmem:[#allocation3 + $0x98] sm:$0xff]
      %v4215 = vld [vmem:[#allocation3 + $0xa0] sm:$0xff]
      %v4216 = vld [vmem:[#allocation3 + $0xa8] sm:$0xff]
      %v4217 = vld [vmem:[#allocation3 + $0xb0] sm:$0xff]
      %v4218 = vld [vmem:[#allocation3 + $0xb8] sm:$0xff]
      %v4219 = vld [vmem:[#allocation3 + $0xc0] sm:$0xff]
      %v4220 = vld [vmem:[#allocation3 + $0xc8] sm:$0xff]
      %v4221 = vld [vmem:[#allocation3 + $0xd0] sm:$0xff]
      %v4222 = vld [vmem:[#allocation3 + $0xd8] sm:$0xff]
      %v4223 = vld [vmem:[#allocation3 + $0xe0] sm:$0xff]
      %v4224 = vld [vmem:[#allocation3 + $0xe8] sm:$0xff]
      %v4225 = vld [vmem:[#allocation3 + $0xf0] sm:$0xff]
      %v4226 = vld [vmem:[#allocation3 + $0xf8] sm:$0xff]
      %v4227 = vld [vmem:[#allocation3 + $0x100] sm:$0xff]
      %v4228 = vld [vmem:[#allocation3 + $0x108] sm:$0xff]
      %v4229 = vld [vmem:[#allocation3 + $0x110] sm:$0xff]
      %v4230 = vld [vmem:[#allocation3 + $0x118] sm:$0xff]
      %v4231 = vld [vmem:[#allocation3 + $0x120] sm:$0xff]
      %v4232 = vld [vmem:[#allocation3 + $0x128] sm:$0xff]
      %v4233 = vld [vmem:[#allocation3 + $0x130] sm:$0xff]
      %v4234 = vld [vmem:[#allocation3 + $0x138] sm:$0xff]
      %v4235 = vld [vmem:[#allocation3 + $0x140] sm:$0xff]
      %v4236 = vld [vmem:[#allocation3 + $0x148] sm:$0xff]
      %v4237 = vld [vmem:[#allocation3 + $0x150] sm:$0xff]
      %v4238 = vld [vmem:[#allocation3 + $0x158] sm:$0xff]
      %v4239 = vld [vmem:[#allocation3 + $0x160] sm:$0xff]
      %v4240 = vld [vmem:[#allocation3 + $0x168] sm:$0xff]
      %v4241 = vld [vmem:[#allocation3 + $0x170] sm:$0xff]
      %v4242 = vld [vmem:[#allocation3 + $0x178] sm:$0xff]
      %v4243 = vld [vmem:[#allocation3 + $0x180] sm:$0xff]
      %v4244 = vld [vmem:[#allocation3 + $0x188] sm:$0xff]
      %v4245 = vld [vmem:[#allocation3 + $0x190] sm:$0xff]
      %v4246 = vld [vmem:[#allocation3 + $0x198] sm:$0xff]
      %v4247 = vld [vmem:[#allocation3 + $0x1a0] sm:$0xff]
      %v4248 = vld [vmem:[#allocation3 + $0x1a8] sm:$0xff]
      %v4249 = vld [vmem:[#allocation3 + $0x1b0] sm:$0xff]
      %v4250 = vld [vmem:[#allocation3 + $0x1b8] sm:$0xff]
      %v4251 = vld [vmem:[#allocation3 + $0x1c0] sm:$0xff]
      %v4252 = vld [vmem:[#allocation3 + $0x1c8] sm:$0xff]
      %v4253 = vld [vmem:[#allocation3 + $0x1d0] sm:$0xff]
      %v4254 = vld [vmem:[#allocation3 + $0x1d8] sm:$0xff]
      %v4255 = vld [vmem:[#allocation3 + $0x1e0] sm:$0xff]
      %v4256 = vld [vmem:[#allocation3 + $0x1e8] sm:$0xff]
      %v4257 = vld [vmem:[#allocation3 + $0x1f0] sm:$0xff]
      %v4258 = vld [vmem:[#allocation3 + $0x1f8] sm:$0xff]
      %v4259 = vld [vmem:[#allocation3 + $0x200] sm:$0xff]
      %v4260 = vld [vmem:[#allocation3 + $0x208] sm:$0xff]
      %v4261 = vld [vmem:[#allocation3 + $0x210] sm:$0xff]
      %v4262 = vld [vmem:[#allocation3 + $0x218] sm:$0xff]
      %v4263 = vld [vmem:[#allocation3 + $0x220] sm:$0xff]
      %v4264 = vld [vmem:[#allocation3 + $0x228] sm:$0xff]
      %v4265 = vld [vmem:[#allocation3 + $0x230] sm:$0xff]
      %v4266 = vld [vmem:[#allocation3 + $0x238] sm:$0xff]
      %v4267 = vld [vmem:[#allocation3 + $0x240] sm:$0xff]
      %v4268 = vld [vmem:[#allocation3 + $0x248] sm:$0xff]
      %v4269 = vld [vmem:[#allocation3 + $0x250] sm:$0xff]
      %v4270 = vld [vmem:[#allocation3 + $0x258] sm:$0xff]
      %v4271 = vld [vmem:[#allocation3 + $0x260] sm:$0xff]
      %v4272 = vld [vmem:[#allocation3 + $0x268] sm:$0xff]
      %v4273 = vld [vmem:[#allocation3 + $0x270] sm:$0xff]
      %v4274 = vld [vmem:[#allocation3 + $0x278] sm:$0xff]
      %v4275 = vld [vmem:[#allocation3 + $0x280] sm:$0xff]
      %v4276 = vld [vmem:[#allocation3 + $0x288] sm:$0xff]
      %v4277 = vld [vmem:[#allocation3 + $0x290] sm:$0xff]
      %v4278 = vld [vmem:[#allocation3 + $0x298] sm:$0xff]
      %v4279 = vld [vmem:[#allocation3 + $0x2a0] sm:$0xff]
      %v4280 = vld [vmem:[#allocation3 + $0x2a8] sm:$0xff]
      %v4281 = vld [vmem:[#allocation3 + $0x2b0] sm:$0xff]
      %v4282 = vld [vmem:[#allocation3 + $0x2b8] sm:$0xff]
      %v4283 = vld [vmem:[#allocation3 + $0x2c0] sm:$0xff]
      %v4284 = vld [vmem:[#allocation3 + $0x2c8] sm:$0xff]
      %v4285 = vld [vmem:[#allocation3 + $0x2d0] sm:$0xff]
      %v4286 = vld [vmem:[#allocation3 + $0x2d8] sm:$0xff]
      %v4287 = vld [vmem:[#allocation3 + $0x2e0] sm:$0xff]
      %v4288 = vld [vmem:[#allocation3 + $0x2e8] sm:$0xff]
      %v4289 = vld [vmem:[#allocation3 + $0x2f0] sm:$0xff]
      %v4290 = vld [vmem:[#allocation3 + $0x2f8] sm:$0xff]
      %v4291 = vld [vmem:[#allocation3 + $0x300] sm:$0xff]
      %v4292 = vld [vmem:[#allocation3 + $0x308] sm:$0xff]
      %v4293 = vld [vmem:[#allocation3 + $0x310] sm:$0xff]
      %v4294 = vld [vmem:[#allocation3 + $0x318] sm:$0xff]
      %v4295 = vld [vmem:[#allocation3 + $0x320] sm:$0xff]
      %v4296 = vld [vmem:[#allocation3 + $0x328] sm:$0xff]
      %v4297 = vld [vmem:[#allocation3 + $0x330] sm:$0xff]
      %v4298 = vld [vmem:[#allocation3 + $0x338] sm:$0xff]
      %v4299 = vld [vmem:[#allocation3 + $0x340] sm:$0xff]
      %v4300 = vld [vmem:[#allocation3 + $0x348] sm:$0xff]
      %v4301 = vld [vmem:[#allocation3 + $0x350] sm:$0xff]
      %v4302 = vld [vmem:[#allocation3 + $0x358] sm:$0xff]
      %v4303 = vld [vmem:[#allocation3 + $0x360] sm:$0xff]
      %v4304 = vld [vmem:[#allocation3 + $0x368] sm:$0xff]
      %v4305 = vld [vmem:[#allocation3 + $0x370] sm:$0xff]
      %v4306 = vld [vmem:[#allocation3 + $0x378] sm:$0xff]
      %v4307 = vld [vmem:[#allocation3 + $0x380] sm:$0xff]
      %v4308 = vld [vmem:[#allocation3 + $0x388] sm:$0xff]
      %v4309 = vld [vmem:[#allocation3 + $0x390] sm:$0xff]
      %v4310 = vld [vmem:[#allocation3 + $0x398] sm:$0xff]
      %v4311 = vld [vmem:[#allocation3 + $0x3a0] sm:$0xff]
      %v4312 = vld [vmem:[#allocation3 + $0x3a8] sm:$0xff]
      %v4313 = vld [vmem:[#allocation3 + $0x3b0] sm:$0xff]
      %v4314 = vld [vmem:[#allocation3 + $0x3b8] sm:$0xff]
      %v4315 = vld [vmem:[#allocation3 + $0x3c0] sm:$0xff]
      %v4316 = vld [vmem:[#allocation3 + $0x3c8] sm:$0xff]
      %v4317 = vld [vmem:[#allocation3 + $0x3d0] sm:$0xff]
      %v4318 = vld [vmem:[#allocation3 + $0x3d8] sm:$0xff]
      %v4319 = vld [vmem:[#allocation3 + $0x3e0] sm:$0xff]
      %v4320 = vld [vmem:[#allocation3 + $0x3e8] sm:$0xff]
      %v4321 = vld [vmem:[#allocation3 + $0x3f0] sm:$0xff]
      %v4322 = vld [vmem:[#allocation3 + $0x3f8] sm:$0xff]
      %v4323 = vld [vmem:[#allocation3 + $0x400] sm:$0xff]
      %v4324 = vld [vmem:[#allocation3 + $0x408] sm:$0xff]
      %v4325 = vld [vmem:[#allocation3 + $0x410] sm:$0xff]
      %v4326 = vld [vmem:[#allocation3 + $0x418] sm:$0xff]
      %v4327 = vld [vmem:[#allocation3 + $0x420] sm:$0xff]
      %v4328 = vld [vmem:[#allocation3 + $0x428] sm:$0xff]
      %v4329 = vld [vmem:[#allocation3 + $0x430] sm:$0xff]
      %v4330 = vld [vmem:[#allocation3 + $0x438] sm:$0xff]
      %v4331 = vld [vmem:[#allocation3 + $0x440] sm:$0xff]
      %v4332 = vld [vmem:[#allocation3 + $0x448] sm:$0xff]
      %v4333 = vld [vmem:[#allocation3 + $0x450] sm:$0xff]
      %v4334 = vld [vmem:[#allocation3 + $0x458] sm:$0xff]
      %v4335 = vld [vmem:[#allocation3 + $0x460] sm:$0xff]
      %v4336 = vld [vmem:[#allocation3 + $0x468] sm:$0xff]
      %v4337 = vld [vmem:[#allocation3 + $0x470] sm:$0xff]
      %v4338 = vld [vmem:[#allocation3 + $0x478] sm:$0xff]
      %v4339 = vld [vmem:[#allocation3 + $0x480] sm:$0xff]
      %v4340 = vld [vmem:[#allocation3 + $0x488] sm:$0xff]
      %v4341 = vld [vmem:[#allocation3 + $0x490] sm:$0xff]
      %v4342 = vld [vmem:[#allocation3 + $0x498] sm:$0xff]
      %v4343 = vld [vmem:[#allocation3 + $0x4a0] sm:$0xff]
      %v4344 = vld [vmem:[#allocation3 + $0x4a8] sm:$0xff]
      %v4345 = vld [vmem:[#allocation3 + $0x4b0] sm:$0xff]
      %v4346 = vld [vmem:[#allocation3 + $0x4b8] sm:$0xff]
      %v4347 = vld [vmem:[#allocation3 + $0x4c0] sm:$0xff]
      %v4348 = vld [vmem:[#allocation3 + $0x4c8] sm:$0xff]
      %v4349 = vld [vmem:[#allocation3 + $0x4d0] sm:$0xff]
      %v4350 = vld [vmem:[#allocation3 + $0x4d8] sm:$0xff]
      %v4351 = vld [vmem:[#allocation3 + $0x4e0] sm:$0xff]
      %v4352 = vld [vmem:[#allocation3 + $0x4e8] sm:$0xff]
      %v4353 = vld [vmem:[#allocation3 + $0x4f0] sm:$0xff]
      %v4354 = vld [vmem:[#allocation3 + $0x4f8] sm:$0xff]
      %v4355 = vld [vmem:[#allocation3 + $0x500] sm:$0xff]
      %v4356 = vld [vmem:[#allocation3 + $0x508] sm:$0xff]
      %v4357 = vld [vmem:[#allocation3 + $0x510] sm:$0xff]
      %v4358 = vld [vmem:[#allocation3 + $0x518] sm:$0xff]
      %v4359 = vld [vmem:[#allocation3 + $0x520] sm:$0xff]
      %v4360 = vld [vmem:[#allocation3 + $0x528] sm:$0xff]
      %v4361 = vld [vmem:[#allocation3 + $0x530] sm:$0xff]
      %v4362 = vld [vmem:[#allocation3 + $0x538] sm:$0xff]
      %v4363 = vld [vmem:[#allocation3 + $0x540] sm:$0xff]
      %v4364 = vld [vmem:[#allocation3 + $0x548] sm:$0xff]
      %v4365 = vld [vmem:[#allocation3 + $0x550] sm:$0xff]
      %v4366 = vld [vmem:[#allocation3 + $0x558] sm:$0xff]
      %v4367 = vld [vmem:[#allocation3 + $0x560] sm:$0xff]
      %v4368 = vld [vmem:[#allocation3 + $0x568] sm:$0xff]
      %v4369 = vld [vmem:[#allocation3 + $0x570] sm:$0xff]
      %v4370 = vld [vmem:[#allocation3 + $0x578] sm:$0xff]
      %v4371 = vld [vmem:[#allocation3 + $0x580] sm:$0xff]
      %v4372 = vld [vmem:[#allocation3 + $0x588] sm:$0xff]
      %v4373 = vld [vmem:[#allocation3 + $0x590] sm:$0xff]
      %v4374 = vld [vmem:[#allocation3 + $0x598] sm:$0xff]
      %v4375 = vld [vmem:[#allocation3 + $0x5a0] sm:$0xff]
      %v4376 = vld [vmem:[#allocation3 + $0x5a8] sm:$0xff]
      %v4377 = vld [vmem:[#allocation3 + $0x5b0] sm:$0xff]
      %v4378 = vld [vmem:[#allocation3 + $0x5b8] sm:$0xff]
      %v4379 = vld [vmem:[#allocation3 + $0x5c0] sm:$0xff]
      %v4380 = vld [vmem:[#allocation3 + $0x5c8] sm:$0xff]
      %v4381 = vld [vmem:[#allocation3 + $0x5d0] sm:$0xff]
      %v4382 = vld [vmem:[#allocation3 + $0x5d8] sm:$0xff]
      %v4383 = vld [vmem:[#allocation3 + $0x5e0] sm:$0xff]
      %v4384 = vld [vmem:[#allocation3 + $0x5e8] sm:$0xff]
      %v4385 = vld [vmem:[#allocation3 + $0x5f0] sm:$0xff]
      %v4386 = vld [vmem:[#allocation3 + $0x5f8] sm:$0xff]
      %v4387 = vld [vmem:[#allocation3 + $0x600] sm:$0xff]
      %v4388 = vld [vmem:[#allocation3 + $0x608] sm:$0xff]
      %v4389 = vld [vmem:[#allocation3 + $0x610] sm:$0xff]
      %v4390 = vld [vmem:[#allocation3 + $0x618] sm:$0xff]
      %v4391 = vld [vmem:[#allocation3 + $0x620] sm:$0xff]
      %v4392 = vld [vmem:[#allocation3 + $0x628] sm:$0xff]
      %v4393 = vld [vmem:[#allocation3 + $0x630] sm:$0xff]
      %v4394 = vld [vmem:[#allocation3 + $0x638] sm:$0xff]
      %v4395 = vld [vmem:[#allocation3 + $0x640] sm:$0xff]
      %v4396 = vld [vmem:[#allocation3 + $0x648] sm:$0xff]
      %v4397 = vld [vmem:[#allocation3 + $0x650] sm:$0xff]
      %v4398 = vld [vmem:[#allocation3 + $0x658] sm:$0xff]
      %v4399 = vld [vmem:[#allocation3 + $0x660] sm:$0xff]
      %v4400 = vld [vmem:[#allocation3 + $0x668] sm:$0xff]
      %v4401 = vld [vmem:[#allocation3 + $0x670] sm:$0xff]
      %v4402 = vld [vmem:[#allocation3 + $0x678] sm:$0xff]
      %v4403 = vld [vmem:[#allocation3 + $0x680] sm:$0xff]
      %v4404 = vld [vmem:[#allocation3 + $0x688] sm:$0xff]
      %v4405 = vld [vmem:[#allocation3 + $0x690] sm:$0xff]
      %v4406 = vld [vmem:[#allocation3 + $0x698] sm:$0xff]
      %v4407 = vld [vmem:[#allocation3 + $0x6a0] sm:$0xff]
      %v4408 = vld [vmem:[#allocation3 + $0x6a8] sm:$0xff]
      %v4409 = vld [vmem:[#allocation3 + $0x6b0] sm:$0xff]
      %v4410 = vld [vmem:[#allocation3 + $0x6b8] sm:$0xff]
      %v4413 = vunpack.c.l.s4 1966171168
      %v4414 = vunpack.c.0.s8 %v4413
      %v4415 = vlaneseq
      %v4416 = vshrl.u32 %v4415, 7
      %v4417 = vsub.s32 %v4414, %v4416
      %v4418 = vrot.slane %v4194, %v4417
      %v4419 = vcombine.high %v4418, %v4418
      %v4421 = vunpack.c.l.s4 1966171168
      %v4422 = vunpack.c.0.s8 %v4421
      %v4423 = vlaneseq
      %v4424 = vshrl.u32 %v4423, 7
      %v4425 = vsub.s32 %v4422, %v4424
      %v4426 = vrot.slane %v4418, %v4425
      %v4428 = vunpack.c.l.s4 1966171168
      %v4429 = vunpack.c.0.s8 %v4428
      %v4430 = vlaneseq
      %v4431 = vshrl.u32 %v4430, 7
      %v4432 = vsub.s32 %v4429, %v4431
      %v4433 = vrot.slane %v4419, %v4432
      %v4434 = vcombine.high %v4426, %v4426
      %v4435 = vcombine.high %v4433, %v4433
      %v4440 = vsel %vm2116, %v4435, 0
      %4442 = vmatprep.subr.bf16.mxu0 %v4196
      %4443 = vmatpush1.bf16.msra.mxu0 %v4195
      %4444 = vmatprep.subr.bf16.mxu0 %v4204
      %4445 = vmatpush1.bf16.msra.mxu0 %v4203
      %4446 = vmatprep.subr.bf16.mxu0 %v4212
      %4447 = vmatpush1.bf16.msra.mxu0 %v4211
      %4448 = vmatprep.subr.bf16.mxu0 %v4220
      %4449 = vmatpush1.bf16.msra.mxu0 %v4219
      %4450 = vmatprep.subr.bf16.mxu0 %v4228
      %4451 = vmatpush1.bf16.msra.mxu0 %v4227
      %4452 = vmatprep.subr.bf16.mxu0 %v4236
      %4453 = vmatpush1.bf16.msra.mxu0 %v4235
      %4454 = vmatprep.subr.bf16.mxu0 %v4244
      %4455 = vmatpush1.bf16.msra.mxu0 %v4243
      %4456 = vmatprep.subr.bf16.mxu0 %v4252
      %4457 = vmatpush1.bf16.msra.mxu0 %v4251
      %4458 = vmatprep.subr.bf16.mxu0 %v4260
      %4459 = vmatpush1.bf16.msra.mxu0 %v4259
      %4460 = vmatprep.subr.bf16.mxu0 %v4268
      %4461 = vmatpush1.bf16.msra.mxu0 %v4267
      %4462 = vmatprep.subr.bf16.mxu0 %v4276
      %4463 = vmatpush1.bf16.msra.mxu0 %v4275
      %4464 = vmatprep.subr.bf16.mxu0 %v4284
      %4465 = vmatpush1.bf16.msra.mxu0 %v4283
      %4466 = vmatprep.subr.bf16.mxu0 %v4292
      %4467 = vmatpush1.bf16.msra.mxu0 %v4291
      %4468 = vmatprep.subr.bf16.mxu0 %v4300
      %4469 = vmatpush1.bf16.msra.mxu0 %v4299
      %4470 = vmatprep.subr.bf16.mxu0 %v4308
      %4471 = vmatpush1.bf16.msra.mxu0 %v4307
      %4472 = vmatprep.subr.bf16.mxu0 %v4316
      %4473 = vmatpush1.bf16.msra.mxu0 %v4315
      %4474 = vmatprep.mubr.bf16.mxu0 %v4433
      %4475 = vmatmul.mubr.bf16.gmra.mrb[0].mxu0 %v4426
      %v4476 = vpop.f32.mrb[0].mxu0
      %v4477 = vadd.f32 0.0, %v4476
      %v4478 = vpop.f32.mrb[0].mxu0
      %v4479 = vadd.f32 0.0, %v4478
      %v4480 = vpop.f32.mrb[0].mxu0
      %v4481 = vpop.f32.mrb[0].mxu0
      %4482 = vdwg.mxu0
      %4483 = vmatprep.subr.bf16.mxu0 %v4324
      %4484 = vmatpush1.bf16.msra.mxu0 %v4323
      %4485 = vmatprep.subr.bf16.mxu0 %v4332
      %4486 = vmatpush1.bf16.msra.mxu0 %v4331
      %4487 = vmatprep.subr.bf16.mxu0 %v4340
      %4488 = vmatpush1.bf16.msra.mxu0 %v4339
      %4489 = vmatprep.subr.bf16.mxu0 %v4348
      %4490 = vmatpush1.bf16.msra.mxu0 %v4347
      %4491 = vmatprep.subr.bf16.mxu0 %v4356
      %4492 = vmatpush1.bf16.msra.mxu0 %v4355
      %4493 = vmatprep.subr.bf16.mxu0 %v4364
      %4494 = vmatpush1.bf16.msra.mxu0 %v4363
      %4495 = vmatprep.subr.bf16.mxu0 %v4372
      %4496 = vmatpush1.bf16.msra.mxu0 %v4371
      %4497 = vmatprep.subr.bf16.mxu0 %v4380
      %4498 = vmatpush1.bf16.msra.mxu0 %v4379
      %4499 = vmatprep.subr.bf16.mxu0 %v4388
      %4500 = vmatpush1.bf16.msra.mxu0 %v4387
      %4501 = vmatprep.subr.bf16.mxu0 %v4396
      %4502 = vmatpush1.bf16.msra.mxu0 %v4395
      %4503 = vmatprep.subr.bf16.mxu0 %v4404
      %4504 = vmatpush1.bf16.msra.mxu0 %v4403
      %4505 = vmatprep.subr.bf16.mxu0 0
      %4506 = vmatpush1.bf16.msra.mxu0 0
      %4507 = vmatprep.subr.bf16.mxu0 0
      %4508 = vmatpush1.bf16.msra.mxu0 0
      %4509 = vmatprep.subr.bf16.mxu0 0
      %4510 = vmatpush1.bf16.msra.mxu0 0
      %4511 = vmatprep.subr.bf16.mxu0 0
      %4512 = vmatpush1.bf16.msra.mxu0 0
      %4513 = vmatprep.subr.bf16.mxu0 0
      %4514 = vmatpush1.bf16.msra.mxu0 0
      %4515 = vmatprep.mubr.bf16.mxu0 %v4440
      %4516 = vmatmul.mubr.bf16.gmra.mrb[0].mxu0 %v4434
      %v4517 = vpop.f32.mrb[0].mxu0
      %v4518 = vadd.f32 %v4477, %v4517
      %v4519 = vpop.f32.mrb[0].mxu0
      %v4520 = vadd.f32 %v4479, %v4519
      %v4521 = vpop.f32.mrb[0].mxu0
      %v4522 = vpop.f32.mrb[0].mxu0
      %4523 = vdwg.mxu0
      %4524 = vmatprep.subr.bf16.mxu0 %v4198
      %4525 = vmatpush1.bf16.msra.mxu0 %v4197
      %4526 = vmatprep.subr.bf16.mxu0 %v4206
      %4527 = vmatpush1.bf16.msra.mxu0 %v4205
      %4528 = vmatprep.subr.bf16.mxu0 %v4214
      %4529 = vmatpush1.bf16.msra.mxu0 %v4213
      %4530 = vmatprep.subr.bf16.mxu0 %v4222
      %4531 = vmatpush1.bf16.msra.mxu0 %v4221
      %4532 = vmatprep.subr.bf16.mxu0 %v4230
      %4533 = vmatpush1.bf16.msra.mxu0 %v4229
      %4534 = vmatprep.subr.bf16.mxu0 %v4238
      %4535 = vmatpush1.bf16.msra.mxu0 %v4237
      %4536 = vmatprep.subr.bf16.mxu0 %v4246
      %4537 = vmatpush1.bf16.msra.mxu0 %v4245
      %4538 = vmatprep.subr.bf16.mxu0 %v4254
      %4539 = vmatpush1.bf16.msra.mxu0 %v4253
      %4540 = vmatprep.subr.bf16.mxu0 %v4262
      %4541 = vmatpush1.bf16.msra.mxu0 %v4261
      %4542 = vmatprep.subr.bf16.mxu0 %v4270
      %4543 = vmatpush1.bf16.msra.mxu0 %v4269
      %4544 = vmatprep.subr.bf16.mxu0 %v4278
      %4545 = vmatpush1.bf16.msra.mxu0 %v4277
      %4546 = vmatprep.subr.bf16.mxu0 %v4286
      %4547 = vmatpush1.bf16.msra.mxu0 %v4285
      %4548 = vmatprep.subr.bf16.mxu0 %v4294
      %4549 = vmatpush1.bf16.msra.mxu0 %v4293
      %4550 = vmatprep.subr.bf16.mxu0 %v4302
      %4551 = vmatpush1.bf16.msra.mxu0 %v4301
      %4552 = vmatprep.subr.bf16.mxu0 %v4310
      %4553 = vmatpush1.bf16.msra.mxu0 %v4309
      %4554 = vmatprep.subr.bf16.mxu0 %v4318
      %4555 = vmatpush1.bf16.msra.mxu0 %v4317
      %4556 = vmatprep.mubr.bf16.mxu0 %v4433
      %4557 = vmatmul.mubr.bf16.gmra.mrb[0].mxu0 %v4426
      %v4558 = vpop.f32.mrb[0].mxu0
      %v4559 = vadd.f32 0.0, %v4558
      %v4560 = vpop.f32.mrb[0].mxu0
      %v4561 = vadd.f32 0.0, %v4560
      %v4562 = vpop.f32.mrb[0].mxu0
      %v4563 = vpop.f32.mrb[0].mxu0
      %4564 = vdwg.mxu0
      %4565 = vmatprep.subr.bf16.mxu0 %v4326
      %4566 = vmatpush1.bf16.msra.mxu0 %v4325
      %4567 = vmatprep.subr.bf16.mxu0 %v4334
      %4568 = vmatpush1.bf16.msra.mxu0 %v4333
      %4569 = vmatprep.subr.bf16.mxu0 %v4342
      %4570 = vmatpush1.bf16.msra.mxu0 %v4341
      %4571 = vmatprep.subr.bf16.mxu0 %v4350
      %4572 = vmatpush1.bf16.msra.mxu0 %v4349
      %4573 = vmatprep.subr.bf16.mxu0 %v4358
      %4574 = vmatpush1.bf16.msra.mxu0 %v4357
      %4575 = vmatprep.subr.bf16.mxu0 %v4366
      %4576 = vmatpush1.bf16.msra.mxu0 %v4365
      %4577 = vmatprep.subr.bf16.mxu0 %v4374
      %4578 = vmatpush1.bf16.msra.mxu0 %v4373
      %4579 = vmatprep.subr.bf16.mxu0 %v4382
      %4580 = vmatpush1.bf16.msra.mxu0 %v4381
      %4581 = vmatprep.subr.bf16.mxu0 %v4390
      %4582 = vmatpush1.bf16.msra.mxu0 %v4389
      %4583 = vmatprep.subr.bf16.mxu0 %v4398
      %4584 = vmatpush1.bf16.msra.mxu0 %v4397
      %4585 = vmatprep.subr.bf16.mxu0 %v4406
      %4586 = vmatpush1.bf16.msra.mxu0 %v4405
      %4587 = vmatprep.subr.bf16.mxu0 0
      %4588 = vmatpush1.bf16.msra.mxu0 0
      %4589 = vmatprep.subr.bf16.mxu0 0
      %4590 = vmatpush1.bf16.msra.mxu0 0
      %4591 = vmatprep.subr.bf16.mxu0 0
      %4592 = vmatpush1.bf16.msra.mxu0 0
      %4593 = vmatprep.subr.bf16.mxu0 0
      %4594 = vmatpush1.bf16.msra.mxu0 0
      %4595 = vmatprep.subr.bf16.mxu0 0
      %4596 = vmatpush1.bf16.msra.mxu0 0
      %4597 = vmatprep.mubr.bf16.mxu0 %v4440
      %4598 = vmatmul.mubr.bf16.gmra.mrb[0].mxu0 %v4434
      %v4599 = vpop.f32.mrb[0].mxu0
      %v4600 = vadd.f32 %v4559, %v4599
      %v4601 = vpop.f32.mrb[0].mxu0
      %v4602 = vadd.f32 %v4561, %v4601
      %v4603 = vpop.f32.mrb[0].mxu0
      %v4604 = vpop.f32.mrb[0].mxu0
      %4605 = vdwg.mxu0
      %4606 = vmatprep.subr.bf16.mxu0 %v4200
      %4607 = vmatpush1.bf16.msra.mxu0 %v4199
      %4608 = vmatprep.subr.bf16.mxu0 %v4208
      %4609 = vmatpush1.bf16.msra.mxu0 %v4207
      %4610 = vmatprep.subr.bf16.mxu0 %v4216
      %4611 = vmatpush1.bf16.msra.mxu0 %v4215
      %4612 = vmatprep.subr.bf16.mxu0 %v4224
      %4613 = vmatpush1.bf16.msra.mxu0 %v4223
      %4614 = vmatprep.subr.bf16.mxu0 %v4232
      %4615 = vmatpush1.bf16.msra.mxu0 %v4231
      %4616 = vmatprep.subr.bf16.mxu0 %v4240
      %4617 = vmatpush1.bf16.msra.mxu0 %v4239
      %4618 = vmatprep.subr.bf16.mxu0 %v4248
      %4619 = vmatpush1.bf16.msra.mxu0 %v4247
      %4620 = vmatprep.subr.bf16.mxu0 %v4256
      %4621 = vmatpush1.bf16.msra.mxu0 %v4255
      %4622 = vmatprep.subr.bf16.mxu0 %v4264
      %4623 = vmatpush1.bf16.msra.mxu0 %v4263
      %4624 = vmatprep.subr.bf16.mxu0 %v4272
      %4625 = vmatpush1.bf16.msra.mxu0 %v4271
      %4626 = vmatprep.subr.bf16.mxu0 %v4280
      %4627 = vmatpush1.bf16.msra.mxu0 %v4279
      %4628 = vmatprep.subr.bf16.mxu0 %v4288
      %4629 = vmatpush1.bf16.msra.mxu0 %v4287
      %4630 = vmatprep.subr.bf16.mxu0 %v4296
      %4631 = vmatpush1.bf16.msra.mxu0 %v4295
      %4632 = vmatprep.subr.bf16.mxu0 %v4304
      %4633 = vmatpush1.bf16.msra.mxu0 %v4303
      %4634 = vmatprep.subr.bf16.mxu0 %v4312
      %4635 = vmatpush1.bf16.msra.mxu0 %v4311
      %4636 = vmatprep.subr.bf16.mxu0 %v4320
      %4637 = vmatpush1.bf16.msra.mxu0 %v4319
      %4638 = vmatprep.mubr.bf16.mxu0 %v4433
      %4639 = vmatmul.mubr.bf16.gmra.mrb[0].mxu0 %v4426
      %v4640 = vpop.f32.mrb[0].mxu0
      %v4641 = vadd.f32 0.0, %v4640
      %v4642 = vpop.f32.mrb[0].mxu0
      %v4643 = vadd.f32 0.0, %v4642
      %v4644 = vpop.f32.mrb[0].mxu0
      %v4645 = vpop.f32.mrb[0].mxu0
      %4646 = vdwg.mxu0
      %4647 = vmatprep.subr.bf16.mxu0 %v4328
      %4648 = vmatpush1.bf16.msra.mxu0 %v4327
      %4649 = vmatprep.subr.bf16.mxu0 %v4336
      %4650 = vmatpush1.bf16.msra.mxu0 %v4335
      %4651 = vmatprep.subr.bf16.mxu0 %v4344
      %4652 = vmatpush1.bf16.msra.mxu0 %v4343
      %4653 = vmatprep.subr.bf16.mxu0 %v4352
      %4654 = vmatpush1.bf16.msra.mxu0 %v4351
      %4655 = vmatprep.subr.bf16.mxu0 %v4360
      %4656 = vmatpush1.bf16.msra.mxu0 %v4359
      %4657 = vmatprep.subr.bf16.mxu0 %v4368
      %4658 = vmatpush1.bf16.msra.mxu0 %v4367
      %4659 = vmatprep.subr.bf16.mxu0 %v4376
      %4660 = vmatpush1.bf16.msra.mxu0 %v4375
      %4661 = vmatprep.subr.bf16.mxu0 %v4384
      %4662 = vmatpush1.bf16.msra.mxu0 %v4383
      %4663 = vmatprep.subr.bf16.mxu0 %v4392
      %4664 = vmatpush1.bf16.msra.mxu0 %v4391
      %4665 = vmatprep.subr.bf16.mxu0 %v4400
      %4666 = vmatpush1.bf16.msra.mxu0 %v4399
      %4667 = vmatprep.subr.bf16.mxu0 %v4408
      %4668 = vmatpush1.bf16.msra.mxu0 %v4407
      %4669 = vmatprep.subr.bf16.mxu0 0
      %4670 = vmatpush1.bf16.msra.mxu0 0
      %4671 = vmatprep.subr.bf16.mxu0 0
      %4672 = vmatpush1.bf16.msra.mxu0 0
      %4673 = vmatprep.subr.bf16.mxu0 0
      %4674 = vmatpush1.bf16.msra.mxu0 0
      %4675 = vmatprep.subr.bf16.mxu0 0
      %4676 = vmatpush1.bf16.msra.mxu0 0
      %4677 = vmatprep.subr.bf16.mxu0 0
      %4678 = vmatpush1.bf16.msra.mxu0 0
      %4679 = vmatprep.mubr.bf16.mxu0 %v4440
      %4680 = vmatmul.mubr.bf16.gmra.mrb[0].mxu0 %v4434
      %v4681 = vpop.f32.mrb[0].mxu0
      %v4682 = vadd.f32 %v4641, %v4681
      %v4683 = vpop.f32.mrb[0].mxu0
      %v4684 = vadd.f32 %v4643, %v4683
      %v4685 = vpop.f32.mrb[0].mxu0
      %v4686 = vpop.f32.mrb[0].mxu0
      %4687 = vdwg.mxu0
      %4688 = vmatprep.subr.bf16.mxu0 %v4202
      %4689 = vmatpush1.bf16.msra.mxu0 %v4201
      %4690 = vmatprep.subr.bf16.mxu0 %v4210
      %4691 = vmatpush1.bf16.msra.mxu0 %v4209
      %4692 = vmatprep.subr.bf16.mxu0 %v4218
      %4693 = vmatpush1.bf16.msra.mxu0 %v4217
      %4694 = vmatprep.subr.bf16.mxu0 %v4226
      %4695 = vmatpush1.bf16.msra.mxu0 %v4225
      %4696 = vmatprep.subr.bf16.mxu0 %v4234
      %4697 = vmatpush1.bf16.msra.mxu0 %v4233
      %4698 = vmatprep.subr.bf16.mxu0 %v4242
      %4699 = vmatpush1.bf16.msra.mxu0 %v4241
      %4700 = vmatprep.subr.bf16.mxu0 %v4250
      %4701 = vmatpush1.bf16.msra.mxu0 %v4249
      %4702 = vmatprep.subr.bf16.mxu0 %v4258
      %4703 = vmatpush1.bf16.msra.mxu0 %v4257
      %4704 = vmatprep.subr.bf16.mxu0 %v4266
      %4705 = vmatpush1.bf16.msra.mxu0 %v4265
      %4706 = vmatprep.subr.bf16.mxu0 %v4274
      %4707 = vmatpush1.bf16.msra.mxu0 %v4273
      %4708 = vmatprep.subr.bf16.mxu0 %v4282
      %4709 = vmatpush1.bf16.msra.mxu0 %v4281
      %4710 = vmatprep.subr.bf16.mxu0 %v4290
      %4711 = vmatpush1.bf16.msra.mxu0 %v4289
      %4712 = vmatprep.subr.bf16.mxu0 %v4298
      %4713 = vmatpush1.bf16.msra.mxu0 %v4297
      %4714 = vmatprep.subr.bf16.mxu0 %v4306
      %4715 = vmatpush1.bf16.msra.mxu0 %v4305
      %4716 = vmatprep.subr.bf16.mxu0 %v4314
      %4717 = vmatpush1.bf16.msra.mxu0 %v4313
      %4718 = vmatprep.subr.bf16.mxu0 %v4322
      %4719 = vmatpush1.bf16.msra.mxu0 %v4321
      %4720 = vmatprep.mubr.bf16.mxu0 %v4433
      %4721 = vmatmul.mubr.bf16.gmra.mrb[0].mxu0 %v4426
      %v4722 = vpop.f32.mrb[0].mxu0
      %v4723 = vadd.f32 0.0, %v4722
      %v4724 = vpop.f32.mrb[0].mxu0
      %v4725 = vadd.f32 0.0, %v4724
      %v4726 = vpop.f32.mrb[0].mxu0
      %v4727 = vpop.f32.mrb[0].mxu0
      %4728 = vdwg.mxu0
      %4729 = vmatprep.subr.bf16.mxu0 %v4330
      %4730 = vmatpush1.bf16.msra.mxu0 %v4329
      %4731 = vmatprep.subr.bf16.mxu0 %v4338
      %4732 = vmatpush1.bf16.msra.mxu0 %v4337
      %4733 = vmatprep.subr.bf16.mxu0 %v4346
      %4734 = vmatpush1.bf16.msra.mxu0 %v4345
      %4735 = vmatprep.subr.bf16.mxu0 %v4354
      %4736 = vmatpush1.bf16.msra.mxu0 %v4353
      %4737 = vmatprep.subr.bf16.mxu0 %v4362
      %4738 = vmatpush1.bf16.msra.mxu0 %v4361
      %4739 = vmatprep.subr.bf16.mxu0 %v4370
      %4740 = vmatpush1.bf16.msra.mxu0 %v4369
      %4741 = vmatprep.subr.bf16.mxu0 %v4378
      %4742 = vmatpush1.bf16.msra.mxu0 %v4377
      %4743 = vmatprep.subr.bf16.mxu0 %v4386
      %4744 = vmatpush1.bf16.msra.mxu0 %v4385
      %4745 = vmatprep.subr.bf16.mxu0 %v4394
      %4746 = vmatpush1.bf16.msra.mxu0 %v4393
      %4747 = vmatprep.subr.bf16.mxu0 %v4402
      %4748 = vmatpush1.bf16.msra.mxu0 %v4401
      %4749 = vmatprep.subr.bf16.mxu0 %v4410
      %4750 = vmatpush1.bf16.msra.mxu0 %v4409
      %4751 = vmatprep.subr.bf16.mxu0 0
      %4752 = vmatpush1.bf16.msra.mxu0 0
      %4753 = vmatprep.subr.bf16.mxu0 0
      %4754 = vmatpush1.bf16.msra.mxu0 0
      %4755 = vmatprep.subr.bf16.mxu0 0
      %4756 = vmatpush1.bf16.msra.mxu0 0
      %4757 = vmatprep.subr.bf16.mxu0 0
      %4758 = vmatpush1.bf16.msra.mxu0 0
      %4759 = vmatprep.subr.bf16.mxu0 0
      %4760 = vmatpush1.bf16.msra.mxu0 0
      %4761 = vmatprep.mubr.bf16.mxu0 %v4440
      %4762 = vmatmul.mubr.bf16.gmra.mrb[0].mxu0 %v4434
      %v4763 = vpop.f32.mrb[0].mxu0
      %v4764 = vadd.f32 %v4723, %v4763
      %v4765 = vpop.f32.mrb[0].mxu0
      %v4766 = vadd.f32 %v4725, %v4765
      %v4767 = vpop.f32.mrb[0].mxu0
      %v4768 = vpop.f32.mrb[0].mxu0
      %4769 = vdwg.mxu0
      %v4770 = vmul.f32 %v4518, %v2452
      %v4771 = vmul.f32 %v4520, %v2456
      %v4772 = vmul.f32 %v4600, %v2460
      %v4773 = vmul.f32 %v4602, %v2464
      %v4774 = vmul.f32 %v4682, %v2468
      %v4775 = vmul.f32 %v4684, %v2472
      %v4776 = vmul.f32 %v4764, %v2476
      %v4777 = vmul.f32 %v4766, %v2480
      %v4778 = vsel %vm2497, %v4770, 0.0
      %v4779 = vsel %vm2497, %v4771, 0.0
      %v4780 = vadd.f32 %v4778, %v4779
      %v4781 = vsel %vm2497, %v4772, 0.0
      %v4782 = vadd.f32 %v4780, %v4781
      %v4783 = vsel %vm2497, %v4773, 0.0
      %v4784 = vadd.f32 %v4782, %v4783
      %v4785 = vsel %vm2497, %v4774, 0.0
      %v4786 = vadd.f32 %v4784, %v4785
      %v4787 = vsel %vm2497, %v4775, 0.0
      %v4788 = vadd.f32 %v4786, %v4787
      %v4789 = vsel %vm2497, %v4776, 0.0
      %v4790 = vadd.f32 %v4788, %v4789
      %v4791 = vsel %vm2497, %v4777, 0.0
      %v4792 = vadd.f32 %v4790, %v4791
      %4793 = vadd.xlane.f32.xlu0 %v4792
      %v4794 = vpop.xlane.xlu0 %4793
      %v4795 = vmul.f32 %v4770, %v4770
      %v4796 = vmul.f32 %v4771, %v4771
      %v4797 = vmul.f32 %v4772, %v4772
      %v4798 = vmul.f32 %v4773, %v4773
      %v4799 = vmul.f32 %v4774, %v4774
      %v4800 = vmul.f32 %v4775, %v4775
      %v4801 = vmul.f32 %v4776, %v4776
      %v4802 = vmul.f32 %v4777, %v4777
      %v4803 = vsel %vm2497, %v4795, 0.0
      %v4804 = vsel %vm2497, %v4796, 0.0
      %v4805 = vadd.f32 %v4803, %v4804
      %v4806 = vsel %vm2497, %v4797, 0.0
      %v4807 = vadd.f32 %v4805, %v4806
      %v4808 = vsel %vm2497, %v4798, 0.0
      %v4809 = vadd.f32 %v4807, %v4808
      %v4810 = vsel %vm2497, %v4799, 0.0
      %v4811 = vadd.f32 %v4809, %v4810
      %v4812 = vsel %vm2497, %v4800, 0.0
      %v4813 = vadd.f32 %v4811, %v4812
      %v4814 = vsel %vm2497, %v4801, 0.0
      %v4815 = vadd.f32 %v4813, %v4814
      %v4816 = vsel %vm2497, %v4802, 0.0
      %v4817 = vadd.f32 %v4815, %v4816
      %4818 = vadd.xlane.f32.xlu0 %v4817
      %v4819 = vpop.xlane.xlu0 %4818
      %v4820 = vmul.f32 %v4794, 0.001953125
      %v4821 = vmul.f32 %v4819, 0.001953125
      %v4822 = vmul.f32 %v4820, %v4820
      %v4823 = vsub.f32 %v4821, %v4822
      %v4824 = vsub.f32 %v4518, %v4820
      %v4825 = vsub.f32 %v4520, %v4820
      %v4826 = vsub.f32 %v4600, %v4820
      %v4827 = vsub.f32 %v4602, %v4820
      %v4828 = vsub.f32 %v4682, %v4820
      %v4829 = vsub.f32 %v4684, %v4820
      %v4830 = vsub.f32 %v4764, %v4820
      %v4831 = vsub.f32 %v4766, %v4820
      %v4832 = vadd.f32 %v4823, 1e-05
      %v4833 = vrsqrt.pop %v4832
      %v4834 = vmul.f32 %v4824, %v4833
      %v4835 = vmul.f32 %v4825, %v4833
      %v4836 = vmul.f32 %v4826, %v4833
      %v4837 = vmul.f32 %v4827, %v4833
      %v4838 = vmul.f32 %v4828, %v4833
      %v4839 = vmul.f32 %v4829, %v4833
      %v4840 = vmul.f32 %v4830, %v4833
      %v4841 = vmul.f32 %v4831, %v4833
      %vm4842 = vcmp.ge.f32.partialorder %v4834, 0.0
      %vm4843 = vcmp.ge.f32.partialorder %v4835, 0.0
      %vm4844 = vcmp.ge.f32.partialorder %v4836, 0.0
      %vm4845 = vcmp.ge.f32.partialorder %v4837, 0.0
      %vm4846 = vcmp.ge.f32.partialorder %v4838, 0.0
      %vm4847 = vcmp.ge.f32.partialorder %v4839, 0.0
      %vm4848 = vcmp.ge.f32.partialorder %v4840, 0.0
      %vm4849 = vcmp.ge.f32.partialorder %v4841, 0.0
      %v4850 = vmul.f32 %v4834, 0.05
      %v4851 = vmul.f32 %v4835, 0.05
      %v4852 = vmul.f32 %v4836, 0.05
      %v4853 = vmul.f32 %v4837, 0.05
      %v4854 = vmul.f32 %v4838, 0.05
      %v4855 = vmul.f32 %v4839, 0.05
      %v4856 = vmul.f32 %v4840, 0.05
      %v4857 = vmul.f32 %v4841, 0.05
      %v4858 = vsel %vm4842, %v4834, %v4850
      %v4859 = vsel %vm4843, %v4835, %v4851
      %v4860 = vsel %vm4844, %v4836, %v4852
      %v4861 = vsel %vm4845, %v4837, %v4853
      %v4862 = vsel %vm4846, %v4838, %v4854
      %v4863 = vsel %vm4847, %v4839, %v4855
      %v4864 = vsel %vm4848, %v4840, %v4856
      %v4865 = vsel %vm4849, %v4841, %v4857
      %v4866 = vmul.f32 %v4858, %v2452
      %v4867 = vmul.f32 %v4859, %v2456
      %v4868 = vmul.f32 %v4860, %v2460
      %v4869 = vmul.f32 %v4861, %v2464
      %v4870 = vmul.f32 %v4862, %v2468
      %v4871 = vmul.f32 %v4863, %v2472
      %v4872 = vmul.f32 %v4864, %v2476
      %v4873 = vmul.f32 %v4865, %v2480
      %v4874 = vpack.c.bf16 %v4866, %v4866
      %v4875 = vpack.c.bf16 %v4867, %v4867
      %v4876 = vpack.c.bf16 %v4868, %v4868
      %v4877 = vpack.c.bf16 %v4869, %v4869
      %v4878 = vpack.c.bf16 %v4870, %v4870
      %v4879 = vpack.c.bf16 %v4871, %v4871
      %v4880 = vpack.c.bf16 %v4872, %v4872
      %v4881 = vpack.c.bf16 %v4873, %v4873
      %4882 = vst [vmem:[#allocation2 + $0x8] sm:$0x1] %v4874
      %4883 = vst [vmem:[#allocation2 + $0x10] sm:$0x1] %v4875
      %4884 = vst [vmem:[#allocation2 + $0x18] sm:$0x1] %v4876
      %4885 = vst [vmem:[#allocation2 + $0x20] sm:$0x1] %v4877
      %4886 = vst [vmem:[#allocation2 + $0x28] sm:$0x1] %v4878
      %4887 = vst [vmem:[#allocation2 + $0x30] sm:$0x1] %v4879
      %4888 = vst [vmem:[#allocation2 + $0x38] sm:$0x1] %v4880
      %4889 = vst [vmem:[#allocation2 + $0x40] sm:$0x1] %v4881
      %4890 = vst [vmem:[#allocation2 + $0x8] sm:$0xfe] 0
      %4891 = vst [vmem:[#allocation2 + $0x10] sm:$0xfe] 0
      %4892 = vst [vmem:[#allocation2 + $0x18] sm:$0xfe] 0
      %4893 = vst [vmem:[#allocation2 + $0x20] sm:$0xfe] 0
      %4894 = vst [vmem:[#allocation2 + $0x28] sm:$0xfe] 0
      %4895 = vst [vmem:[#allocation2 + $0x30] sm:$0xfe] 0
      %4896 = vst [vmem:[#allocation2 + $0x38] sm:$0xfe] 0
      %4897 = vst [vmem:[#allocation2 + $0x40] sm:$0xfe] 0
      %v4898 = vld [vmem:[#allocation2] sm:$0xff]
      %v4899 = vld [vmem:[#allocation2 + $0x8] sm:$0xff]
      %v4900 = vld [vmem:[#allocation2 + $0x10] sm:$0xff]
      %v4901 = vld [vmem:[#allocation2 + $0x18] sm:$0xff]
      %v4902 = vld [vmem:[#allocation2 + $0x20] sm:$0xff]
      %v4903 = vld [vmem:[#allocation2 + $0x28] sm:$0xff]
      %v4904 = vld [vmem:[#allocation2 + $0x30] sm:$0xff]
      %v4905 = vld [vmem:[#allocation2 + $0x38] sm:$0xff]
      %v4906 = vld [vmem:[#allocation2 + $0x40] sm:$0xff]
      %4916 = vrot.lane.b32.xlu0 %v4898, 111
      %v4917 = vpop.permute.xlu0 %4916
      %4918 = vrot.lane.b32.xlu0 %v4899, 111
      %v4919 = vpop.permute.xlu0 %4918
      %4920 = vrot.lane.b32.xlu0 %v4900, 111
      %v4921 = vpop.permute.xlu0 %4920
      %4922 = vrot.lane.b32.xlu0 %v4901, 111
      %v4923 = vpop.permute.xlu0 %4922
      %4924 = vrot.lane.b32.xlu0 %v4902, 111
      %v4925 = vpop.permute.xlu0 %4924
      %4926 = vrot.lane.b32.xlu0 %v4903, 111
      %v4927 = vpop.permute.xlu0 %4926
      %4928 = vrot.lane.b32.xlu0 %v4904, 111
      %v4929 = vpop.permute.xlu0 %4928
      %4930 = vrot.lane.b32.xlu0 %v4905, 111
      %v4931 = vpop.permute.xlu0 %4930
      %4932 = vrot.lane.b32.xlu0 %v4906, 111
      %v4933 = vpop.permute.xlu0 %4932
      %v4934 = vsel %vm305, %v4917, %v4919
      %v4935 = vsel %vm305, %v4919, %v4921
      %v4936 = vsel %vm305, %v4921, %v4923
      %v4937 = vsel %vm305, %v4923, %v4925
      %v4938 = vsel %vm305, %v4925, %v4927
      %v4939 = vsel %vm305, %v4927, %v4929
      %v4940 = vsel %vm305, %v4929, %v4931
      %v4941 = vsel %vm305, %v4931, %v4933
      %4950 = vst [vmem:[#allocation3] sm:$0xff] %v4934
      %4951 = vst [vmem:[#allocation3 + $0x8] sm:$0xff] %v4935
      %4952 = vst [vmem:[#allocation3 + $0x10] sm:$0xff] %v4936
      %4953 = vst [vmem:[#allocation3 + $0x18] sm:$0xff] %v4937
      %4954 = vst [vmem:[#allocation3 + $0x20] sm:$0xff] %v4938
      %4955 = vst [vmem:[#allocation3 + $0x28] sm:$0xff] %v4939
      %4956 = vst [vmem:[#allocation3 + $0x30] sm:$0xff] %v4940
      %4957 = vst [vmem:[#allocation3 + $0x38] sm:$0xff] %v4941
      %v4958 = vld [vmem:[#allocation2] sm:$0xff]
      %v4959 = vld [vmem:[#allocation2 + $0x8] sm:$0xff]
      %v4960 = vld [vmem:[#allocation2 + $0x10] sm:$0xff]
      %v4961 = vld [vmem:[#allocation2 + $0x18] sm:$0xff]
      %v4962 = vld [vmem:[#allocation2 + $0x20] sm:$0xff]
      %v4963 = vld [vmem:[#allocation2 + $0x28] sm:$0xff]
      %v4964 = vld [vmem:[#allocation2 + $0x30] sm:$0xff]
      %v4965 = vld [vmem:[#allocation2 + $0x38] sm:$0xff]
      %v4966 = vld [vmem:[#allocation2 + $0x40] sm:$0xff]
      %4976 = vrot.lane.b32.xlu0 %v4958, 110
      %v4977 = vpop.permute.xlu0 %4976
      %4978 = vrot.lane.b32.xlu0 %v4959, 110
      %v4979 = vpop.permute.xlu0 %4978
      %4980 = vrot.lane.b32.xlu0 %v4960, 110
      %v4981 = vpop.permute.xlu0 %4980
      %4982 = vrot.lane.b32.xlu0 %v4961, 110
      %v4983 = vpop.permute.xlu0 %4982
      %4984 = vrot.lane.b32.xlu0 %v4962, 110
      %v4985 = vpop.permute.xlu0 %4984
      %4986 = vrot.lane.b32.xlu0 %v4963, 110
      %v4987 = vpop.permute.xlu0 %4986
      %4988 = vrot.lane.b32.xlu0 %v4964, 110
      %v4989 = vpop.permute.xlu0 %4988
      %4990 = vrot.lane.b32.xlu0 %v4965, 110
      %v4991 = vpop.permute.xlu0 %4990
      %4992 = vrot.lane.b32.xlu0 %v4966, 110
      %v4993 = vpop.permute.xlu0 %4992
      %v4994 = vsel %vm366, %v4977, %v4979
      %v4995 = vsel %vm366, %v4979, %v4981
      %v4996 = vsel %vm366, %v4981, %v4983
      %v4997 = vsel %vm366, %v4983, %v4985
      %v4998 = vsel %vm366, %v4985, %v4987
      %v4999 = vsel %vm366, %v4987, %v4989
      %v5000 = vsel %vm366, %v4989, %v4991
      %v5001 = vsel %vm366, %v4991, %v4993
      %5010 = vst [vmem:[#allocation3 + $0x40] sm:$0xff] %v4994
      %5011 = vst [vmem:[#allocation3 + $0x48] sm:$0xff] %v4995
      %5012 = vst [vmem:[#allocation3 + $0x50] sm:$0xff] %v4996
      %5013 = vst [vmem:[#allocation3 + $0x58] sm:$0xff] %v4997
      %5014 = vst [vmem:[#allocation3 + $0x60] sm:$0xff] %v4998
      %5015 = vst [vmem:[#allocation3 + $0x68] sm:$0xff] %v4999
      %5016 = vst [vmem:[#allocation3 + $0x70] sm:$0xff] %v5000
      %5017 = vst [vmem:[#allocation3 + $0x78] sm:$0xff] %v5001
      %v5018 = vld [vmem:[#allocation2] sm:$0xff]
      %v5019 = vld [vmem:[#allocation2 + $0x8] sm:$0xff]
      %v5020 = vld [vmem:[#allocation2 + $0x10] sm:$0xff]
      %v5021 = vld [vmem:[#allocation2 + $0x18] sm:$0xff]
      %v5022 = vld [vmem:[#allocation2 + $0x20] sm:$0xff]
      %v5023 = vld [vmem:[#allocation2 + $0x28] sm:$0xff]
      %v5024 = vld [vmem:[#allocation2 + $0x30] sm:$0xff]
      %v5025 = vld [vmem:[#allocation2 + $0x38] sm:$0xff]
      %v5026 = vld [vmem:[#allocation2 + $0x40] sm:$0xff]
      %5036 = vrot.lane.b32.xlu0 %v5018, 109
      %v5037 = vpop.permute.xlu0 %5036
      %5038 = vrot.lane.b32.xlu0 %v5019, 109
      %v5039 = vpop.permute.xlu0 %5038
      %5040 = vrot.lane.b32.xlu0 %v5020, 109
      %v5041 = vpop.permute.xlu0 %5040
      %5042 = vrot.lane.b32.xlu0 %v5021, 109
      %v5043 = vpop.permute.xlu0 %5042
      %5044 = vrot.lane.b32.xlu0 %v5022, 109
      %v5045 = vpop.permute.xlu0 %5044
      %5046 = vrot.lane.b32.xlu0 %v5023, 109
      %v5047 = vpop.permute.xlu0 %5046
      %5048 = vrot.lane.b32.xlu0 %v5024, 109
      %v5049 = vpop.permute.xlu0 %5048
      %5050 = vrot.lane.b32.xlu0 %v5025, 109
      %v5051 = vpop.permute.xlu0 %5050
      %5052 = vrot.lane.b32.xlu0 %v5026, 109
      %v5053 = vpop.permute.xlu0 %5052
      %v5054 = vsel %vm427, %v5037, %v5039
      %v5055 = vsel %vm427, %v5039, %v5041
      %v5056 = vsel %vm427, %v5041, %v5043
      %v5057 = vsel %vm427, %v5043, %v5045
      %v5058 = vsel %vm427, %v5045, %v5047
      %v5059 = vsel %vm427, %v5047, %v5049
      %v5060 = vsel %vm427, %v5049, %v5051
      %v5061 = vsel %vm427, %v5051, %v5053
      %5070 = vst [vmem:[#allocation3 + $0x80] sm:$0xff] %v5054
      %5071 = vst [vmem:[#allocation3 + $0x88] sm:$0xff] %v5055
      %5072 = vst [vmem:[#allocation3 + $0x90] sm:$0xff] %v5056
      %5073 = vst [vmem:[#allocation3 + $0x98] sm:$0xff] %v5057
      %5074 = vst [vmem:[#allocation3 + $0xa0] sm:$0xff] %v5058
      %5075 = vst [vmem:[#allocation3 + $0xa8] sm:$0xff] %v5059
      %5076 = vst [vmem:[#allocation3 + $0xb0] sm:$0xff] %v5060
      %5077 = vst [vmem:[#allocation3 + $0xb8] sm:$0xff] %v5061
      %v5078 = vld [vmem:[#allocation2] sm:$0xff]
      %v5079 = vld [vmem:[#allocation2 + $0x8] sm:$0xff]
      %v5080 = vld [vmem:[#allocation2 + $0x10] sm:$0xff]
      %v5081 = vld [vmem:[#allocation2 + $0x18] sm:$0xff]
      %v5082 = vld [vmem:[#allocation2 + $0x20] sm:$0xff]
      %v5083 = vld [vmem:[#allocation2 + $0x28] sm:$0xff]
      %v5084 = vld [vmem:[#allocation2 + $0x30] sm:$0xff]
      %v5085 = vld [vmem:[#allocation2 + $0x38] sm:$0xff]
      %v5086 = vld [vmem:[#allocation2 + $0x40] sm:$0xff]
      %5096 = vrot.lane.b32.xlu0 %v5078, 101
      %v5097 = vpop.permute.xlu0 %5096
      %5098 = vrot.lane.b32.xlu0 %v5079, 101
      %v5099 = vpop.permute.xlu0 %5098
      %5100 = vrot.lane.b32.xlu0 %v5080, 101
      %v5101 = vpop.permute.xlu0 %5100
      %5102 = vrot.lane.b32.xlu0 %v5081, 101
      %v5103 = vpop.permute.xlu0 %5102
      %5104 = vrot.lane.b32.xlu0 %v5082, 101
      %v5105 = vpop.permute.xlu0 %5104
      %5106 = vrot.lane.b32.xlu0 %v5083, 101
      %v5107 = vpop.permute.xlu0 %5106
      %5108 = vrot.lane.b32.xlu0 %v5084, 101
      %v5109 = vpop.permute.xlu0 %5108
      %5110 = vrot.lane.b32.xlu0 %v5085, 101
      %v5111 = vpop.permute.xlu0 %5110
      %5112 = vrot.lane.b32.xlu0 %v5086, 101
      %v5113 = vpop.permute.xlu0 %5112
      %v5114 = vsel %vm488, %v5097, %v5099
      %v5115 = vsel %vm488, %v5099, %v5101
      %v5116 = vsel %vm488, %v5101, %v5103
      %v5117 = vsel %vm488, %v5103, %v5105
      %v5118 = vsel %vm488, %v5105, %v5107
      %v5119 = vsel %vm488, %v5107, %v5109
      %v5120 = vsel %vm488, %v5109, %v5111
      %v5121 = vsel %vm488, %v5111, %v5113
      %5130 = vst [vmem:[#allocation3 + $0xc0] sm:$0xff] %v5114
      %5131 = vst [vmem:[#allocation3 + $0xc8] sm:$0xff] %v5115
      %5132 = vst [vmem:[#allocation3 + $0xd0] sm:$0xff] %v5116
      %5133 = vst [vmem:[#allocation3 + $0xd8] sm:$0xff] %v5117
      %5134 = vst [vmem:[#allocation3 + $0xe0] sm:$0xff] %v5118
      %5135 = vst [vmem:[#allocation3 + $0xe8] sm:$0xff] %v5119
      %5136 = vst [vmem:[#allocation3 + $0xf0] sm:$0xff] %v5120
      %5137 = vst [vmem:[#allocation3 + $0xf8] sm:$0xff] %v5121
      %v5138 = vld [vmem:[#allocation2] sm:$0xff]
      %v5139 = vld [vmem:[#allocation2 + $0x8] sm:$0xff]
      %v5140 = vld [vmem:[#allocation2 + $0x10] sm:$0xff]
      %v5141 = vld [vmem:[#allocation2 + $0x18] sm:$0xff]
      %v5142 = vld [vmem:[#allocation2 + $0x20] sm:$0xff]
      %v5143 = vld [vmem:[#allocation2 + $0x28] sm:$0xff]
      %v5144 = vld [vmem:[#allocation2 + $0x30] sm:$0xff]
      %v5145 = vld [vmem:[#allocation2 + $0x38] sm:$0xff]
      %v5146 = vld [vmem:[#allocation2 + $0x40] sm:$0xff]
      %5156 = vrot.lane.b32.xlu0 %v5138, 100
      %v5157 = vpop.permute.xlu0 %5156
      %5158 = vrot.lane.b32.xlu0 %v5139, 100
      %v5159 = vpop.permute.xlu0 %5158
      %5160 = vrot.lane.b32.xlu0 %v5140, 100
      %v5161 = vpop.permute.xlu0 %5160
      %5162 = vrot.lane.b32.xlu0 %v5141, 100
      %v5163 = vpop.permute.xlu0 %5162
      %5164 = vrot.lane.b32.xlu0 %v5142, 100
      %v5165 = vpop.permute.xlu0 %5164
      %5166 = vrot.lane.b32.xlu0 %v5143, 100
      %v5167 = vpop.permute.xlu0 %5166
      %5168 = vrot.lane.b32.xlu0 %v5144, 100
      %v5169 = vpop.permute.xlu0 %5168
      %5170 = vrot.lane.b32.xlu0 %v5145, 100
      %v5171 = vpop.permute.xlu0 %5170
      %5172 = vrot.lane.b32.xlu0 %v5146, 100
      %v5173 = vpop.permute.xlu0 %5172
      %v5174 = vsel %vm549, %v5157, %v5159
      %v5175 = vsel %vm549, %v5159, %v5161
      %v5176 = vsel %vm549, %v5161, %v5163
      %v5177 = vsel %vm549, %v5163, %v5165
      %v5178 = vsel %vm549, %v5165, %v5167
      %v5179 = vsel %vm549, %v5167, %v5169
      %v5180 = vsel %vm549, %v5169, %v5171
      %v5181 = vsel %vm549, %v5171, %v5173
      %5190 = vst [vmem:[#allocation3 + $0x100] sm:$0xff] %v5174
      %5191 = vst [vmem:[#allocation3 + $0x108] sm:$0xff] %v5175
      %5192 = vst [vmem:[#allocation3 + $0x110] sm:$0xff] %v5176
      %5193 = vst [vmem:[#allocation3 + $0x118] sm:$0xff] %v5177
      %5194 = vst [vmem:[#allocation3 + $0x120] sm:$0xff] %v5178
      %5195 = vst [vmem:[#allocation3 + $0x128] sm:$0xff] %v5179
      %5196 = vst [vmem:[#allocation3 + $0x130] sm:$0xff] %v5180
      %5197 = vst [vmem:[#allocation3 + $0x138] sm:$0xff] %v5181
      %v5198 = vld [vmem:[#allocation2] sm:$0xff]
      %v5199 = vld [vmem:[#allocation2 + $0x8] sm:$0xff]
      %v5200 = vld [vmem:[#allocation2 + $0x10] sm:$0xff]
      %v5201 = vld [vmem:[#allocation2 + $0x18] sm:$0xff]
      %v5202 = vld [vmem:[#allocation2 + $0x20] sm:$0xff]
      %v5203 = vld [vmem:[#allocation2 + $0x28] sm:$0xff]
      %v5204 = vld [vmem:[#allocation2 + $0x30] sm:$0xff]
      %v5205 = vld [vmem:[#allocation2 + $0x38] sm:$0xff]
      %v5206 = vld [vmem:[#allocation2 + $0x40] sm:$0xff]
      %5216 = vrot.lane.b32.xlu0 %v5198, 99
      %v5217 = vpop.permute.xlu0 %5216
      %5218 = vrot.lane.b32.xlu0 %v5199, 99
      %v5219 = vpop.permute.xlu0 %5218
      %5220 = vrot.lane.b32.xlu0 %v5200, 99
      %v5221 = vpop.permute.xlu0 %5220
      %5222 = vrot.lane.b32.xlu0 %v5201, 99
      %v5223 = vpop.permute.xlu0 %5222
      %5224 = vrot.lane.b32.xlu0 %v5202, 99
      %v5225 = vpop.permute.xlu0 %5224
      %5226 = vrot.lane.b32.xlu0 %v5203, 99
      %v5227 = vpop.permute.xlu0 %5226
      %5228 = vrot.lane.b32.xlu0 %v5204, 99
      %v5229 = vpop.permute.xlu0 %5228
      %5230 = vrot.lane.b32.xlu0 %v5205, 99
      %v5231 = vpop.permute.xlu0 %5230
      %5232 = vrot.lane.b32.xlu0 %v5206, 99
      %v5233 = vpop.permute.xlu0 %5232
      %v5234 = vsel %vm610, %v5217, %v5219
      %v5235 = vsel %vm610, %v5219, %v5221
      %v5236 = vsel %vm610, %v5221, %v5223
      %v5237 = vsel %vm610, %v5223, %v5225
      %v5238 = vsel %vm610, %v5225, %v5227
      %v5239 = vsel %vm610, %v5227, %v5229
      %v5240 = vsel %vm610, %v5229, %v5231
      %v5241 = vsel %vm610, %v5231, %v5233
      %5250 = vst [vmem:[#allocation3 + $0x140] sm:$0xff] %v5234
      %5251 = vst [vmem:[#allocation3 + $0x148] sm:$0xff] %v5235
      %5252 = vst [vmem:[#allocation3 + $0x150] sm:$0xff] %v5236
      %5253 = vst [vmem:[#allocation3 + $0x158] sm:$0xff] %v5237
      %5254 = vst [vmem:[#allocation3 + $0x160] sm:$0xff] %v5238
      %5255 = vst [vmem:[#allocation3 + $0x168] sm:$0xff] %v5239
      %5256 = vst [vmem:[#allocation3 + $0x170] sm:$0xff] %v5240
      %5257 = vst [vmem:[#allocation3 + $0x178] sm:$0xff] %v5241
      %v5258 = vld [vmem:[#allocation2] sm:$0xff]
      %v5259 = vld [vmem:[#allocation2 + $0x8] sm:$0xff]
      %v5260 = vld [vmem:[#allocation2 + $0x10] sm:$0xff]
      %v5261 = vld [vmem:[#allocation2 + $0x18] sm:$0xff]
      %v5262 = vld [vmem:[#allocation2 + $0x20] sm:$0xff]
      %v5263 = vld [vmem:[#allocation2 + $0x28] sm:$0xff]
      %v5264 = vld [vmem:[#allocation2 + $0x30] sm:$0xff]
      %v5265 = vld [vmem:[#allocation2 + $0x38] sm:$0xff]
      %v5266 = vld [vmem:[#allocation2 + $0x40] sm:$0xff]
      %5276 = vrot.lane.b32.xlu0 %v5258, 91
      %v5277 = vpop.permute.xlu0 %5276
      %5278 = vrot.lane.b32.xlu0 %v5259, 91
      %v5279 = vpop.permute.xlu0 %5278
      %5280 = vrot.lane.b32.xlu0 %v5260, 91
      %v5281 = vpop.permute.xlu0 %5280
      %5282 = vrot.lane.b32.xlu0 %v5261, 91
      %v5283 = vpop.permute.xlu0 %5282
      %5284 = vrot.lane.b32.xlu0 %v5262, 91
      %v5285 = vpop.permute.xlu0 %5284
      %5286 = vrot.lane.b32.xlu0 %v5263, 91
      %v5287 = vpop.permute.xlu0 %5286
      %5288 = vrot.lane.b32.xlu0 %v5264, 91
      %v5289 = vpop.permute.xlu0 %5288
      %5290 = vrot.lane.b32.xlu0 %v5265, 91
      %v5291 = vpop.permute.xlu0 %5290
      %5292 = vrot.lane.b32.xlu0 %v5266, 91
      %v5293 = vpop.permute.xlu0 %5292
      %v5294 = vsel %vm671, %v5277, %v5279
      %v5295 = vsel %vm671, %v5279, %v5281
      %v5296 = vsel %vm671, %v5281, %v5283
      %v5297 = vsel %vm671, %v5283, %v5285
      %v5298 = vsel %vm671, %v5285, %v5287
      %v5299 = vsel %vm671, %v5287, %v5289
      %v5300 = vsel %vm671, %v5289, %v5291
      %v5301 = vsel %vm671, %v5291, %v5293
      %5310 = vst [vmem:[#allocation3 + $0x180] sm:$0xff] %v5294
      %5311 = vst [vmem:[#allocation3 + $0x188] sm:$0xff] %v5295
      %5312 = vst [vmem:[#allocation3 + $0x190] sm:$0xff] %v5296
      %5313 = vst [vmem:[#allocation3 + $0x198] sm:$0xff] %v5297
      %5314 = vst [vmem:[#allocation3 + $0x1a0] sm:$0xff] %v5298
      %5315 = vst [vmem:[#allocation3 + $0x1a8] sm:$0xff] %v5299
      %5316 = vst [vmem:[#allocation3 + $0x1b0] sm:$0xff] %v5300
      %5317 = vst [vmem:[#allocation3 + $0x1b8] sm:$0xff] %v5301
      %v5318 = vld [vmem:[#allocation2] sm:$0xff]
      %v5319 = vld [vmem:[#allocation2 + $0x8] sm:$0xff]
      %v5320 = vld [vmem:[#allocation2 + $0x10] sm:$0xff]
      %v5321 = vld [vmem:[#allocation2 + $0x18] sm:$0xff]
      %v5322 = vld [vmem:[#allocation2 + $0x20] sm:$0xff]
      %v5323 = vld [vmem:[#allocation2 + $0x28] sm:$0xff]
      %v5324 = vld [vmem:[#allocation2 + $0x30] sm:$0xff]
      %v5325 = vld [vmem:[#allocation2 + $0x38] sm:$0xff]
      %v5326 = vld [vmem:[#allocation2 + $0x40] sm:$0xff]
      %5336 = vrot.lane.b32.xlu0 %v5318, 90
      %v5337 = vpop.permute.xlu0 %5336
      %5338 = vrot.lane.b32.xlu0 %v5319, 90
      %v5339 = vpop.permute.xlu0 %5338
      %5340 = vrot.lane.b32.xlu0 %v5320, 90
      %v5341 = vpop.permute.xlu0 %5340
      %5342 = vrot.lane.b32.xlu0 %v5321, 90
      %v5343 = vpop.permute.xlu0 %5342
      %5344 = vrot.lane.b32.xlu0 %v5322, 90
      %v5345 = vpop.permute.xlu0 %5344
      %5346 = vrot.lane.b32.xlu0 %v5323, 90
      %v5347 = vpop.permute.xlu0 %5346
      %5348 = vrot.lane.b32.xlu0 %v5324, 90
      %v5349 = vpop.permute.xlu0 %5348
      %5350 = vrot.lane.b32.xlu0 %v5325, 90
      %v5351 = vpop.permute.xlu0 %5350
      %5352 = vrot.lane.b32.xlu0 %v5326, 90
      %v5353 = vpop.permute.xlu0 %5352
      %v5354 = vsel %vm732, %v5337, %v5339
      %v5355 = vsel %vm732, %v5339, %v5341
      %v5356 = vsel %vm732, %v5341, %v5343
      %v5357 = vsel %vm732, %v5343, %v5345
      %v5358 = vsel %vm732, %v5345, %v5347
      %v5359 = vsel %vm732, %v5347, %v5349
      %v5360 = vsel %vm732, %v5349, %v5351
      %v5361 = vsel %vm732, %v5351, %v5353
      %5370 = vst [vmem:[#allocation3 + $0x1c0] sm:$0xff] %v5354
      %5371 = vst [vmem:[#allocation3 + $0x1c8] sm:$0xff] %v5355
      %5372 = vst [vmem:[#allocation3 + $0x1d0] sm:$0xff] %v5356
      %5373 = vst [vmem:[#allocation3 + $0x1d8] sm:$0xff] %v5357
      %5374 = vst [vmem:[#allocation3 + $0x1e0] sm:$0xff] %v5358
      %5375 = vst [vmem:[#allocation3 + $0x1e8] sm:$0xff] %v5359
      %5376 = vst [vmem:[#allocation3 + $0x1f0] sm:$0xff] %v5360
      %5377 = vst [vmem:[#allocation3 + $0x1f8] sm:$0xff] %v5361
      %v5378 = vld [vmem:[#allocation2] sm:$0xff]
      %v5379 = vld [vmem:[#allocation2 + $0x8] sm:$0xff]
      %v5380 = vld [vmem:[#allocation2 + $0x10] sm:$0xff]
      %v5381 = vld [vmem:[#allocation2 + $0x18] sm:$0xff]
      %v5382 = vld [vmem:[#allocation2 + $0x20] sm:$0xff]
      %v5383 = vld [vmem:[#allocation2 + $0x28] sm:$0xff]
      %v5384 = vld [vmem:[#allocation2 + $0x30] sm:$0xff]
      %v5385 = vld [vmem:[#allocation2 + $0x38] sm:$0xff]
      %v5386 = vld [vmem:[#allocation2 + $0x40] sm:$0xff]
      %5396 = vrot.lane.b32.xlu0 %v5378, 89
      %v5397 = vpop.permute.xlu0 %5396
      %5398 = vrot.lane.b32.xlu0 %v5379, 89
      %v5399 = vpop.permute.xlu0 %5398
      %5400 = vrot.lane.b32.xlu0 %v5380, 89
      %v5401 = vpop.permute.xlu0 %5400
      %5402 = vrot.lane.b32.xlu0 %v5381, 89
      %v5403 = vpop.permute.xlu0 %5402
      %5404 = vrot.lane.b32.xlu0 %v5382, 89
      %v5405 = vpop.permute.xlu0 %5404
      %5406 = vrot.lane.b32.xlu0 %v5383, 89
      %v5407 = vpop.permute.xlu0 %5406
      %5408 = vrot.lane.b32.xlu0 %v5384, 89
      %v5409 = vpop.permute.xlu0 %5408
      %5410 = vrot.lane.b32.xlu0 %v5385, 89
      %v5411 = vpop.permute.xlu0 %5410
      %5412 = vrot.lane.b32.xlu0 %v5386, 89
      %v5413 = vpop.permute.xlu0 %5412
      %v5414 = vsel %vm793, %v5397, %v5399
      %v5415 = vsel %vm793, %v5399, %v5401
      %v5416 = vsel %vm793, %v5401, %v5403
      %v5417 = vsel %vm793, %v5403, %v5405
      %v5418 = vsel %vm793, %v5405, %v5407
      %v5419 = vsel %vm793, %v5407, %v5409
      %v5420 = vsel %vm793, %v5409, %v5411
      %v5421 = vsel %vm793, %v5411, %v5413
      %5430 = vst [vmem:[#allocation3 + $0x200] sm:$0xff] %v5414
      %5431 = vst [vmem:[#allocation3 + $0x208] sm:$0xff] %v5415
      %5432 = vst [vmem:[#allocation3 + $0x210] sm:$0xff] %v5416
      %5433 = vst [vmem:[#allocation3 + $0x218] sm:$0xff] %v5417
      %5434 = vst [vmem:[#allocation3 + $0x220] sm:$0xff] %v5418
      %5435 = vst [vmem:[#allocation3 + $0x228] sm:$0xff] %v5419
      %5436 = vst [vmem:[#allocation3 + $0x230] sm:$0xff] %v5420
      %5437 = vst [vmem:[#allocation3 + $0x238] sm:$0xff] %v5421
      %v5438 = vld [vmem:[#allocation2] sm:$0xff]
      %v5439 = vld [vmem:[#allocation2 + $0x8] sm:$0xff]
      %v5440 = vld [vmem:[#allocation2 + $0x10] sm:$0xff]
      %v5441 = vld [vmem:[#allocation2 + $0x18] sm:$0xff]
      %v5442 = vld [vmem:[#allocation2 + $0x20] sm:$0xff]
      %v5443 = vld [vmem:[#allocation2 + $0x28] sm:$0xff]
      %v5444 = vld [vmem:[#allocation2 + $0x30] sm:$0xff]
      %v5445 = vld [vmem:[#allocation2 + $0x38] sm:$0xff]
      %v5446 = vld [vmem:[#allocation2 + $0x40] sm:$0xff]
      %5456 = vrot.lane.b32.xlu0 %v5438, 11
      %v5457 = vpop.permute.xlu0 %5456
      %5458 = vrot.lane.b32.xlu0 %v5439, 11
      %v5459 = vpop.permute.xlu0 %5458
      %5460 = vrot.lane.b32.xlu0 %v5440, 11
      %v5461 = vpop.permute.xlu0 %5460
      %5462 = vrot.lane.b32.xlu0 %v5441, 11
      %v5463 = vpop.permute.xlu0 %5462
      %5464 = vrot.lane.b32.xlu0 %v5442, 11
      %v5465 = vpop.permute.xlu0 %5464
      %5466 = vrot.lane.b32.xlu0 %v5443, 11
      %v5467 = vpop.permute.xlu0 %5466
      %5468 = vrot.lane.b32.xlu0 %v5444, 11
      %v5469 = vpop.permute.xlu0 %5468
      %5470 = vrot.lane.b32.xlu0 %v5445, 11
      %v5471 = vpop.permute.xlu0 %5470
      %5472 = vrot.lane.b32.xlu0 %v5446, 11
      %v5473 = vpop.permute.xlu0 %5472
      %v5474 = vsel %vm854, %v5457, %v5459
      %v5475 = vsel %vm854, %v5459, %v5461
      %v5476 = vsel %vm854, %v5461, %v5463
      %v5477 = vsel %vm854, %v5463, %v5465
      %v5478 = vsel %vm854, %v5465, %v5467
      %v5479 = vsel %vm854, %v5467, %v5469
      %v5480 = vsel %vm854, %v5469, %v5471
      %v5481 = vsel %vm854, %v5471, %v5473
      %5490 = vst [vmem:[#allocation3 + $0x240] sm:$0xff] %v5474
      %5491 = vst [vmem:[#allocation3 + $0x248] sm:$0xff] %v5475
      %5492 = vst [vmem:[#allocation3 + $0x250] sm:$0xff] %v5476
      %5493 = vst [vmem:[#allocation3 + $0x258] sm:$0xff] %v5477
      %5494 = vst [vmem:[#allocation3 + $0x260] sm:$0xff] %v5478
      %5495 = vst [vmem:[#allocation3 + $0x268] sm:$0xff] %v5479
      %5496 = vst [vmem:[#allocation3 + $0x270] sm:$0xff] %v5480
      %5497 = vst [vmem:[#allocation3 + $0x278] sm:$0xff] %v5481
      %v5498 = vld [vmem:[#allocation2] sm:$0xff]
      %v5499 = vld [vmem:[#allocation2 + $0x8] sm:$0xff]
      %v5500 = vld [vmem:[#allocation2 + $0x10] sm:$0xff]
      %v5501 = vld [vmem:[#allocation2 + $0x18] sm:$0xff]
      %v5502 = vld [vmem:[#allocation2 + $0x20] sm:$0xff]
      %v5503 = vld [vmem:[#allocation2 + $0x28] sm:$0xff]
      %v5504 = vld [vmem:[#allocation2 + $0x30] sm:$0xff]
      %v5505 = vld [vmem:[#allocation2 + $0x38] sm:$0xff]
      %v5506 = vld [vmem:[#allocation2 + $0x40] sm:$0xff]
      %5516 = vrot.lane.b32.xlu0 %v5498, 10
      %v5517 = vpop.permute.xlu0 %5516
      %5518 = vrot.lane.b32.xlu0 %v5499, 10
      %v5519 = vpop.permute.xlu0 %5518
      %5520 = vrot.lane.b32.xlu0 %v5500, 10
      %v5521 = vpop.permute.xlu0 %5520
      %5522 = vrot.lane.b32.xlu0 %v5501, 10
      %v5523 = vpop.permute.xlu0 %5522
      %5524 = vrot.lane.b32.xlu0 %v5502, 10
      %v5525 = vpop.permute.xlu0 %5524
      %5526 = vrot.lane.b32.xlu0 %v5503, 10
      %v5527 = vpop.permute.xlu0 %5526
      %5528 = vrot.lane.b32.xlu0 %v5504, 10
      %v5529 = vpop.permute.xlu0 %5528
      %5530 = vrot.lane.b32.xlu0 %v5505, 10
      %v5531 = vpop.permute.xlu0 %5530
      %5532 = vrot.lane.b32.xlu0 %v5506, 10
      %v5533 = vpop.permute.xlu0 %5532
      %v5534 = vsel %vm915, %v5517, %v5519
      %v5535 = vsel %vm915, %v5519, %v5521
      %v5536 = vsel %vm915, %v5521, %v5523
      %v5537 = vsel %vm915, %v5523, %v5525
      %v5538 = vsel %vm915, %v5525, %v5527
      %v5539 = vsel %vm915, %v5527, %v5529
      %v5540 = vsel %vm915, %v5529, %v5531
      %v5541 = vsel %vm915, %v5531, %v5533
      %5550 = vst [vmem:[#allocation3 + $0x280] sm:$0xff] %v5534
      %5551 = vst [vmem:[#allocation3 + $0x288] sm:$0xff] %v5535
      %5552 = vst [vmem:[#allocation3 + $0x290] sm:$0xff] %v5536
      %5553 = vst [vmem:[#allocation3 + $0x298] sm:$0xff] %v5537
      %5554 = vst [vmem:[#allocation3 + $0x2a0] sm:$0xff] %v5538
      %5555 = vst [vmem:[#allocation3 + $0x2a8] sm:$0xff] %v5539
      %5556 = vst [vmem:[#allocation3 + $0x2b0] sm:$0xff] %v5540
      %5557 = vst [vmem:[#allocation3 + $0x2b8] sm:$0xff] %v5541
      %v5558 = vld [vmem:[#allocation2] sm:$0xff]
      %v5559 = vld [vmem:[#allocation2 + $0x8] sm:$0xff]
      %v5560 = vld [vmem:[#allocation2 + $0x10] sm:$0xff]
      %v5561 = vld [vmem:[#allocation2 + $0x18] sm:$0xff]
      %v5562 = vld [vmem:[#allocation2 + $0x20] sm:$0xff]
      %v5563 = vld [vmem:[#allocation2 + $0x28] sm:$0xff]
      %v5564 = vld [vmem:[#allocation2 + $0x30] sm:$0xff]
      %v5565 = vld [vmem:[#allocation2 + $0x38] sm:$0xff]
      %v5566 = vld [vmem:[#allocation2 + $0x40] sm:$0xff]
      %5576 = vrot.lane.b32.xlu0 %v5558, 9
      %v5577 = vpop.permute.xlu0 %5576
      %5578 = vrot.lane.b32.xlu0 %v5559, 9
      %v5579 = vpop.permute.xlu0 %5578
      %5580 = vrot.lane.b32.xlu0 %v5560, 9
      %v5581 = vpop.permute.xlu0 %5580
      %5582 = vrot.lane.b32.xlu0 %v5561, 9
      %v5583 = vpop.permute.xlu0 %5582
      %5584 = vrot.lane.b32.xlu0 %v5562, 9
      %v5585 = vpop.permute.xlu0 %5584
      %5586 = vrot.lane.b32.xlu0 %v5563, 9
      %v5587 = vpop.permute.xlu0 %5586
      %5588 = vrot.lane.b32.xlu0 %v5564, 9
      %v5589 = vpop.permute.xlu0 %5588
      %5590 = vrot.lane.b32.xlu0 %v5565, 9
      %v5591 = vpop.permute.xlu0 %5590
      %5592 = vrot.lane.b32.xlu0 %v5566, 9
      %v5593 = vpop.permute.xlu0 %5592
      %v5594 = vsel %vm976, %v5577, %v5579
      %v5595 = vsel %vm976, %v5579, %v5581
      %v5596 = vsel %vm976, %v5581, %v5583
      %v5597 = vsel %vm976, %v5583, %v5585
      %v5598 = vsel %vm976, %v5585, %v5587
      %v5599 = vsel %vm976, %v5587, %v5589
      %v5600 = vsel %vm976, %v5589, %v5591
      %v5601 = vsel %vm976, %v5591, %v5593
      %5610 = vst [vmem:[#allocation3 + $0x2c0] sm:$0xff] %v5594
      %5611 = vst [vmem:[#allocation3 + $0x2c8] sm:$0xff] %v5595
      %5612 = vst [vmem:[#allocation3 + $0x2d0] sm:$0xff] %v5596
      %5613 = vst [vmem:[#allocation3 + $0x2d8] sm:$0xff] %v5597
      %5614 = vst [vmem:[#allocation3 + $0x2e0] sm:$0xff] %v5598
      %5615 = vst [vmem:[#allocation3 + $0x2e8] sm:$0xff] %v5599
      %5616 = vst [vmem:[#allocation3 + $0x2f0] sm:$0xff] %v5600
      %5617 = vst [vmem:[#allocation3 + $0x2f8] sm:$0xff] %v5601
      %v5618 = vld [vmem:[#allocation2] sm:$0xff]
      %v5619 = vld [vmem:[#allocation2 + $0x8] sm:$0xff]
      %v5620 = vld [vmem:[#allocation2 + $0x10] sm:$0xff]
      %v5621 = vld [vmem:[#allocation2 + $0x18] sm:$0xff]
      %v5622 = vld [vmem:[#allocation2 + $0x20] sm:$0xff]
      %v5623 = vld [vmem:[#allocation2 + $0x28] sm:$0xff]
      %v5624 = vld [vmem:[#allocation2 + $0x30] sm:$0xff]
      %v5625 = vld [vmem:[#allocation2 + $0x38] sm:$0xff]
      %v5626 = vld [vmem:[#allocation2 + $0x40] sm:$0xff]
      %5636 = vrot.lane.b32.xlu0 %v5618, 1
      %v5637 = vpop.permute.xlu0 %5636
      %5638 = vrot.lane.b32.xlu0 %v5619, 1
      %v5639 = vpop.permute.xlu0 %5638
      %5640 = vrot.lane.b32.xlu0 %v5620, 1
      %v5641 = vpop.permute.xlu0 %5640
      %5642 = vrot.lane.b32.xlu0 %v5621, 1
      %v5643 = vpop.permute.xlu0 %5642
      %5644 = vrot.lane.b32.xlu0 %v5622, 1
      %v5645 = vpop.permute.xlu0 %5644
      %5646 = vrot.lane.b32.xlu0 %v5623, 1
      %v5647 = vpop.permute.xlu0 %5646
      %5648 = vrot.lane.b32.xlu0 %v5624, 1
      %v5649 = vpop.permute.xlu0 %5648
      %5650 = vrot.lane.b32.xlu0 %v5625, 1
      %v5651 = vpop.permute.xlu0 %5650
      %5652 = vrot.lane.b32.xlu0 %v5626, 1
      %v5653 = vpop.permute.xlu0 %5652
      %v5654 = vsel %vm1037, %v5637, %v5639
      %v5655 = vsel %vm1037, %v5639, %v5641
      %v5656 = vsel %vm1037, %v5641, %v5643
      %v5657 = vsel %vm1037, %v5643, %v5645
      %v5658 = vsel %vm1037, %v5645, %v5647
      %v5659 = vsel %vm1037, %v5647, %v5649
      %v5660 = vsel %vm1037, %v5649, %v5651
      %v5661 = vsel %vm1037, %v5651, %v5653
      %5670 = vst [vmem:[#allocation3 + $0x300] sm:$0xff] %v5654
      %5671 = vst [vmem:[#allocation3 + $0x308] sm:$0xff] %v5655
      %5672 = vst [vmem:[#allocation3 + $0x310] sm:$0xff] %v5656
      %5673 = vst [vmem:[#allocation3 + $0x318] sm:$0xff] %v5657
      %5674 = vst [vmem:[#allocation3 + $0x320] sm:$0xff] %v5658
      %5675 = vst [vmem:[#allocation3 + $0x328] sm:$0xff] %v5659
      %5676 = vst [vmem:[#allocation3 + $0x330] sm:$0xff] %v5660
      %5677 = vst [vmem:[#allocation3 + $0x338] sm:$0xff] %v5661
      %v5678 = vld [vmem:[#allocation2 + $0x8] sm:$0xff]
      %v5679 = vld [vmem:[#allocation2 + $0x10] sm:$0xff]
      %v5680 = vld [vmem:[#allocation2 + $0x18] sm:$0xff]
      %v5681 = vld [vmem:[#allocation2 + $0x20] sm:$0xff]
      %v5682 = vld [vmem:[#allocation2 + $0x28] sm:$0xff]
      %v5683 = vld [vmem:[#allocation2 + $0x30] sm:$0xff]
      %v5684 = vld [vmem:[#allocation2 + $0x38] sm:$0xff]
      %v5685 = vld [vmem:[#allocation2 + $0x40] sm:$0xff]
      %5686 = vst [vmem:[#allocation3 + $0x340] sm:$0xff] %v5678
      %5687 = vst [vmem:[#allocation3 + $0x348] sm:$0xff] %v5679
      %5688 = vst [vmem:[#allocation3 + $0x350] sm:$0xff] %v5680
      %5689 = vst [vmem:[#allocation3 + $0x358] sm:$0xff] %v5681
      %5690 = vst [vmem:[#allocation3 + $0x360] sm:$0xff] %v5682
      %5691 = vst [vmem:[#allocation3 + $0x368] sm:$0xff] %v5683
      %5692 = vst [vmem:[#allocation3 + $0x370] sm:$0xff] %v5684
      %5693 = vst [vmem:[#allocation3 + $0x378] sm:$0xff] %v5685
      %v5694 = vld [vmem:[#allocation2 + $0x8] sm:$0xff]
      %v5695 = vld [vmem:[#allocation2 + $0x10] sm:$0xff]
      %v5696 = vld [vmem:[#allocation2 + $0x18] sm:$0xff]
      %v5697 = vld [vmem:[#allocation2 + $0x20] sm:$0xff]
      %v5698 = vld [vmem:[#allocation2 + $0x28] sm:$0xff]
      %v5699 = vld [vmem:[#allocation2 + $0x30] sm:$0xff]
      %v5700 = vld [vmem:[#allocation2 + $0x38] sm:$0xff]
      %v5701 = vld [vmem:[#allocation2 + $0x40] sm:$0xff]
      %v5702 = vld [vmem:[#allocation2 + $0x48] sm:$0xff]
      %5712 = vrot.lane.b32.xlu0 %v5694, 127
      %v5713 = vpop.permute.xlu0 %5712
      %5714 = vrot.lane.b32.xlu0 %v5695, 127
      %v5715 = vpop.permute.xlu0 %5714
      %5716 = vrot.lane.b32.xlu0 %v5696, 127
      %v5717 = vpop.permute.xlu0 %5716
      %5718 = vrot.lane.b32.xlu0 %v5697, 127
      %v5719 = vpop.permute.xlu0 %5718
      %5720 = vrot.lane.b32.xlu0 %v5698, 127
      %v5721 = vpop.permute.xlu0 %5720
      %5722 = vrot.lane.b32.xlu0 %v5699, 127
      %v5723 = vpop.permute.xlu0 %5722
      %5724 = vrot.lane.b32.xlu0 %v5700, 127
      %v5725 = vpop.permute.xlu0 %5724
      %5726 = vrot.lane.b32.xlu0 %v5701, 127
      %v5727 = vpop.permute.xlu0 %5726
      %5728 = vrot.lane.b32.xlu0 %v5702, 127
      %v5729 = vpop.permute.xlu0 %5728
      %v5730 = vsel %vm1114, %v5713, %v5715
      %v5731 = vsel %vm1114, %v5715, %v5717
      %v5732 = vsel %vm1114, %v5717, %v5719
      %v5733 = vsel %vm1114, %v5719, %v5721
      %v5734 = vsel %vm1114, %v5721, %v5723
      %v5735 = vsel %vm1114, %v5723, %v5725
      %v5736 = vsel %vm1114, %v5725, %v5727
      %v5737 = vsel %vm1114, %v5727, %v5729
      %5746 = vst [vmem:[#allocation3 + $0x380] sm:$0xff] %v5730
      %5747 = vst [vmem:[#allocation3 + $0x388] sm:$0xff] %v5731
      %5748 = vst [vmem:[#allocation3 + $0x390] sm:$0xff] %v5732
      %5749 = vst [vmem:[#allocation3 + $0x398] sm:$0xff] %v5733
      %5750 = vst [vmem:[#allocation3 + $0x3a0] sm:$0xff] %v5734
      %5751 = vst [vmem:[#allocation3 + $0x3a8] sm:$0xff] %v5735
      %5752 = vst [vmem:[#allocation3 + $0x3b0] sm:$0xff] %v5736
      %5753 = vst [vmem:[#allocation3 + $0x3b8] sm:$0xff] %v5737
      %v5754 = vld [vmem:[#allocation2 + $0x8] sm:$0xff]
      %v5755 = vld [vmem:[#allocation2 + $0x10] sm:$0xff]
      %v5756 = vld [vmem:[#allocation2 + $0x18] sm:$0xff]
      %v5757 = vld [vmem:[#allocation2 + $0x20] sm:$0xff]
      %v5758 = vld [vmem:[#allocation2 + $0x28] sm:$0xff]
      %v5759 = vld [vmem:[#allocation2 + $0x30] sm:$0xff]
      %v5760 = vld [vmem:[#allocation2 + $0x38] sm:$0xff]
      %v5761 = vld [vmem:[#allocation2 + $0x40] sm:$0xff]
      %v5762 = vld [vmem:[#allocation2 + $0x48] sm:$0xff]
      %5772 = vrot.lane.b32.xlu0 %v5754, 119
      %v5773 = vpop.permute.xlu0 %5772
      %5774 = vrot.lane.b32.xlu0 %v5755, 119
      %v5775 = vpop.permute.xlu0 %5774
      %5776 = vrot.lane.b32.xlu0 %v5756, 119
      %v5777 = vpop.permute.xlu0 %5776
      %5778 = vrot.lane.b32.xlu0 %v5757, 119
      %v5779 = vpop.permute.xlu0 %5778
      %5780 = vrot.lane.b32.xlu0 %v5758, 119
      %v5781 = vpop.permute.xlu0 %5780
      %5782 = vrot.lane.b32.xlu0 %v5759, 119
      %v5783 = vpop.permute.xlu0 %5782
      %5784 = vrot.lane.b32.xlu0 %v5760, 119
      %v5785 = vpop.permute.xlu0 %5784
      %5786 = vrot.lane.b32.xlu0 %v5761, 119
      %v5787 = vpop.permute.xlu0 %5786
      %5788 = vrot.lane.b32.xlu0 %v5762, 119
      %v5789 = vpop.permute.xlu0 %5788
      %v5790 = vsel %vm1175, %v5773, %v5775
      %v5791 = vsel %vm1175, %v5775, %v5777
      %v5792 = vsel %vm1175, %v5777, %v5779
      %v5793 = vsel %vm1175, %v5779, %v5781
      %v5794 = vsel %vm1175, %v5781, %v5783
      %v5795 = vsel %vm1175, %v5783, %v5785
      %v5796 = vsel %vm1175, %v5785, %v5787
      %v5797 = vsel %vm1175, %v5787, %v5789
      %5806 = vst [vmem:[#allocation3 + $0x3c0] sm:$0xff] %v5790
      %5807 = vst [vmem:[#allocation3 + $0x3c8] sm:$0xff] %v5791
      %5808 = vst [vmem:[#allocation3 + $0x3d0] sm:$0xff] %v5792
      %5809 = vst [vmem:[#allocation3 + $0x3d8] sm:$0xff] %v5793
      %5810 = vst [vmem:[#allocation3 + $0x3e0] sm:$0xff] %v5794
      %5811 = vst [vmem:[#allocation3 + $0x3e8] sm:$0xff] %v5795
      %5812 = vst [vmem:[#allocation3 + $0x3f0] sm:$0xff] %v5796
      %5813 = vst [vmem:[#allocation3 + $0x3f8] sm:$0xff] %v5797
      %v5814 = vld [vmem:[#allocation2 + $0x8] sm:$0xff]
      %v5815 = vld [vmem:[#allocation2 + $0x10] sm:$0xff]
      %v5816 = vld [vmem:[#allocation2 + $0x18] sm:$0xff]
      %v5817 = vld [vmem:[#allocation2 + $0x20] sm:$0xff]
      %v5818 = vld [vmem:[#allocation2 + $0x28] sm:$0xff]
      %v5819 = vld [vmem:[#allocation2 + $0x30] sm:$0xff]
      %v5820 = vld [vmem:[#allocation2 + $0x38] sm:$0xff]
      %v5821 = vld [vmem:[#allocation2 + $0x40] sm:$0xff]
      %v5822 = vld [vmem:[#allocation2 + $0x48] sm:$0xff]
      %5832 = vrot.lane.b32.xlu0 %v5814, 118
      %v5833 = vpop.permute.xlu0 %5832
      %5834 = vrot.lane.b32.xlu0 %v5815, 118
      %v5835 = vpop.permute.xlu0 %5834
      %5836 = vrot.lane.b32.xlu0 %v5816, 118
      %v5837 = vpop.permute.xlu0 %5836
      %5838 = vrot.lane.b32.xlu0 %v5817, 118
      %v5839 = vpop.permute.xlu0 %5838
      %5840 = vrot.lane.b32.xlu0 %v5818, 118
      %v5841 = vpop.permute.xlu0 %5840
      %5842 = vrot.lane.b32.xlu0 %v5819, 118
      %v5843 = vpop.permute.xlu0 %5842
      %5844 = vrot.lane.b32.xlu0 %v5820, 118
      %v5845 = vpop.permute.xlu0 %5844
      %5846 = vrot.lane.b32.xlu0 %v5821, 118
      %v5847 = vpop.permute.xlu0 %5846
      %5848 = vrot.lane.b32.xlu0 %v5822, 118
      %v5849 = vpop.permute.xlu0 %5848
      %v5850 = vsel %vm1236, %v5833, %v5835
      %v5851 = vsel %vm1236, %v5835, %v5837
      %v5852 = vsel %vm1236, %v5837, %v5839
      %v5853 = vsel %vm1236, %v5839, %v5841
      %v5854 = vsel %vm1236, %v5841, %v5843
      %v5855 = vsel %vm1236, %v5843, %v5845
      %v5856 = vsel %vm1236, %v5845, %v5847
      %v5857 = vsel %vm1236, %v5847, %v5849
      %5866 = vst [vmem:[#allocation3 + $0x400] sm:$0xff] %v5850
      %5867 = vst [vmem:[#allocation3 + $0x408] sm:$0xff] %v5851
      %5868 = vst [vmem:[#allocation3 + $0x410] sm:$0xff] %v5852
      %5869 = vst [vmem:[#allocation3 + $0x418] sm:$0xff] %v5853
      %5870 = vst [vmem:[#allocation3 + $0x420] sm:$0xff] %v5854
      %5871 = vst [vmem:[#allocation3 + $0x428] sm:$0xff] %v5855
      %5872 = vst [vmem:[#allocation3 + $0x430] sm:$0xff] %v5856
      %5873 = vst [vmem:[#allocation3 + $0x438] sm:$0xff] %v5857
      %v5874 = vld [vmem:[#allocation2 + $0x8] sm:$0xff]
      %v5875 = vld [vmem:[#allocation2 + $0x10] sm:$0xff]
      %v5876 = vld [vmem:[#allocation2 + $0x18] sm:$0xff]
      %v5877 = vld [vmem:[#allocation2 + $0x20] sm:$0xff]
      %v5878 = vld [vmem:[#allocation2 + $0x28] sm:$0xff]
      %v5879 = vld [vmem:[#allocation2 + $0x30] sm:$0xff]
      %v5880 = vld [vmem:[#allocation2 + $0x38] sm:$0xff]
      %v5881 = vld [vmem:[#allocation2 + $0x40] sm:$0xff]
      %v5882 = vld [vmem:[#allocation2 + $0x48] sm:$0xff]
      %5892 = vrot.lane.b32.xlu0 %v5874, 117
      %v5893 = vpop.permute.xlu0 %5892
      %5894 = vrot.lane.b32.xlu0 %v5875, 117
      %v5895 = vpop.permute.xlu0 %5894
      %5896 = vrot.lane.b32.xlu0 %v5876, 117
      %v5897 = vpop.permute.xlu0 %5896
      %5898 = vrot.lane.b32.xlu0 %v5877, 117
      %v5899 = vpop.permute.xlu0 %5898
      %5900 = vrot.lane.b32.xlu0 %v5878, 117
      %v5901 = vpop.permute.xlu0 %5900
      %5902 = vrot.lane.b32.xlu0 %v5879, 117
      %v5903 = vpop.permute.xlu0 %5902
      %5904 = vrot.lane.b32.xlu0 %v5880, 117
      %v5905 = vpop.permute.xlu0 %5904
      %5906 = vrot.lane.b32.xlu0 %v5881, 117
      %v5907 = vpop.permute.xlu0 %5906
      %5908 = vrot.lane.b32.xlu0 %v5882, 117
      %v5909 = vpop.permute.xlu0 %5908
      %v5910 = vsel %vm1297, %v5893, %v5895
      %v5911 = vsel %vm1297, %v5895, %v5897
      %v5912 = vsel %vm1297, %v5897, %v5899
      %v5913 = vsel %vm1297, %v5899, %v5901
      %v5914 = vsel %vm1297, %v5901, %v5903
      %v5915 = vsel %vm1297, %v5903, %v5905
      %v5916 = vsel %vm1297, %v5905, %v5907
      %v5917 = vsel %vm1297, %v5907, %v5909
      %5926 = vst [vmem:[#allocation3 + $0x440] sm:$0xff] %v5910
      %5927 = vst [vmem:[#allocation3 + $0x448] sm:$0xff] %v5911
      %5928 = vst [vmem:[#allocation3 + $0x450] sm:$0xff] %v5912
      %5929 = vst [vmem:[#allocation3 + $0x458] sm:$0xff] %v5913
      %5930 = vst [vmem:[#allocation3 + $0x460] sm:$0xff] %v5914
      %5931 = vst [vmem:[#allocation3 + $0x468] sm:$0xff] %v5915
      %5932 = vst [vmem:[#allocation3 + $0x470] sm:$0xff] %v5916
      %5933 = vst [vmem:[#allocation3 + $0x478] sm:$0xff] %v5917
      %v5934 = vld [vmem:[#allocation2 + $0x8] sm:$0xff]
      %v5935 = vld [vmem:[#allocation2 + $0x10] sm:$0xff]
      %v5936 = vld [vmem:[#allocation2 + $0x18] sm:$0xff]
      %v5937 = vld [vmem:[#allocation2 + $0x20] sm:$0xff]
      %v5938 = vld [vmem:[#allocation2 + $0x28] sm:$0xff]
      %v5939 = vld [vmem:[#allocation2 + $0x30] sm:$0xff]
      %v5940 = vld [vmem:[#allocation2 + $0x38] sm:$0xff]
      %v5941 = vld [vmem:[#allocation2 + $0x40] sm:$0xff]
      %v5942 = vld [vmem:[#allocation2 + $0x48] sm:$0xff]
      %5952 = vrot.lane.b32.xlu0 %v5934, 39
      %v5953 = vpop.permute.xlu0 %5952
      %5954 = vrot.lane.b32.xlu0 %v5935, 39
      %v5955 = vpop.permute.xlu0 %5954
      %5956 = vrot.lane.b32.xlu0 %v5936, 39
      %v5957 = vpop.permute.xlu0 %5956
      %5958 = vrot.lane.b32.xlu0 %v5937, 39
      %v5959 = vpop.permute.xlu0 %5958
      %5960 = vrot.lane.b32.xlu0 %v5938, 39
      %v5961 = vpop.permute.xlu0 %5960
      %5962 = vrot.lane.b32.xlu0 %v5939, 39
      %v5963 = vpop.permute.xlu0 %5962
      %5964 = vrot.lane.b32.xlu0 %v5940, 39
      %v5965 = vpop.permute.xlu0 %5964
      %5966 = vrot.lane.b32.xlu0 %v5941, 39
      %v5967 = vpop.permute.xlu0 %5966
      %5968 = vrot.lane.b32.xlu0 %v5942, 39
      %v5969 = vpop.permute.xlu0 %5968
      %v5970 = vsel %vm1358, %v5953, %v5955
      %v5971 = vsel %vm1358, %v5955, %v5957
      %v5972 = vsel %vm1358, %v5957, %v5959
      %v5973 = vsel %vm1358, %v5959, %v5961
      %v5974 = vsel %vm1358, %v5961, %v5963
      %v5975 = vsel %vm1358, %v5963, %v5965
      %v5976 = vsel %vm1358, %v5965, %v5967
      %v5977 = vsel %vm1358, %v5967, %v5969
      %5986 = vst [vmem:[#allocation3 + $0x480] sm:$0xff] %v5970
      %5987 = vst [vmem:[#allocation3 + $0x488] sm:$0xff] %v5971
      %5988 = vst [vmem:[#allocation3 + $0x490] sm:$0xff] %v5972
      %5989 = vst [vmem:[#allocation3 + $0x498] sm:$0xff] %v5973
      %5990 = vst [vmem:[#allocation3 + $0x4a0] sm:$0xff] %v5974
      %5991 = vst [vmem:[#allocation3 + $0x4a8] sm:$0xff] %v5975
      %5992 = vst [vmem:[#allocation3 + $0x4b0] sm:$0xff] %v5976
      %5993 = vst [vmem:[#allocation3 + $0x4b8] sm:$0xff] %v5977
      %v5994 = vld [vmem:[#allocation2 + $0x8] sm:$0xff]
      %v5995 = vld [vmem:[#allocation2 + $0x10] sm:$0xff]
      %v5996 = vld [vmem:[#allocation2 + $0x18] sm:$0xff]
      %v5997 = vld [vmem:[#allocation2 + $0x20] sm:$0xff]
      %v5998 = vld [vmem:[#allocation2 + $0x28] sm:$0xff]
      %v5999 = vld [vmem:[#allocation2 + $0x30] sm:$0xff]
      %v6000 = vld [vmem:[#allocation2 + $0x38] sm:$0xff]
      %v6001 = vld [vmem:[#allocation2 + $0x40] sm:$0xff]
      %v6002 = vld [vmem:[#allocation2 + $0x48] sm:$0xff]
      %6012 = vrot.lane.b32.xlu0 %v5994, 38
      %v6013 = vpop.permute.xlu0 %6012
      %6014 = vrot.lane.b32.xlu0 %v5995, 38
      %v6015 = vpop.permute.xlu0 %6014
      %6016 = vrot.lane.b32.xlu0 %v5996, 38
      %v6017 = vpop.permute.xlu0 %6016
      %6018 = vrot.lane.b32.xlu0 %v5997, 38
      %v6019 = vpop.permute.xlu0 %6018
      %6020 = vrot.lane.b32.xlu0 %v5998, 38
      %v6021 = vpop.permute.xlu0 %6020
      %6022 = vrot.lane.b32.xlu0 %v5999, 38
      %v6023 = vpop.permute.xlu0 %6022
      %6024 = vrot.lane.b32.xlu0 %v6000, 38
      %v6025 = vpop.permute.xlu0 %6024
      %6026 = vrot.lane.b32.xlu0 %v6001, 38
      %v6027 = vpop.permute.xlu0 %6026
      %6028 = vrot.lane.b32.xlu0 %v6002, 38
      %v6029 = vpop.permute.xlu0 %6028
      %v6030 = vsel %vm1419, %v6013, %v6015
      %v6031 = vsel %vm1419, %v6015, %v6017
      %v6032 = vsel %vm1419, %v6017, %v6019
      %v6033 = vsel %vm1419, %v6019, %v6021
      %v6034 = vsel %vm1419, %v6021, %v6023
      %v6035 = vsel %vm1419, %v6023, %v6025
      %v6036 = vsel %vm1419, %v6025, %v6027
      %v6037 = vsel %vm1419, %v6027, %v6029
      %6046 = vst [vmem:[#allocation3 + $0x4c0] sm:$0xff] %v6030
      %6047 = vst [vmem:[#allocation3 + $0x4c8] sm:$0xff] %v6031
      %6048 = vst [vmem:[#allocation3 + $0x4d0] sm:$0xff] %v6032
      %6049 = vst [vmem:[#allocation3 + $0x4d8] sm:$0xff] %v6033
      %6050 = vst [vmem:[#allocation3 + $0x4e0] sm:$0xff] %v6034
      %6051 = vst [vmem:[#allocation3 + $0x4e8] sm:$0xff] %v6035
      %6052 = vst [vmem:[#allocation3 + $0x4f0] sm:$0xff] %v6036
      %6053 = vst [vmem:[#allocation3 + $0x4f8] sm:$0xff] %v6037
      %v6054 = vld [vmem:[#allocation2 + $0x8] sm:$0xff]
      %v6055 = vld [vmem:[#allocation2 + $0x10] sm:$0xff]
      %v6056 = vld [vmem:[#allocation2 + $0x18] sm:$0xff]
      %v6057 = vld [vmem:[#allocation2 + $0x20] sm:$0xff]
      %v6058 = vld [vmem:[#allocation2 + $0x28] sm:$0xff]
      %v6059 = vld [vmem:[#allocation2 + $0x30] sm:$0xff]
      %v6060 = vld [vmem:[#allocation2 + $0x38] sm:$0xff]
      %v6061 = vld [vmem:[#allocation2 + $0x40] sm:$0xff]
      %v6062 = vld [vmem:[#allocation2 + $0x48] sm:$0xff]
      %6072 = vrot.lane.b32.xlu0 %v6054, 37
      %v6073 = vpop.permute.xlu0 %6072
      %6074 = vrot.lane.b32.xlu0 %v6055, 37
      %v6075 = vpop.permute.xlu0 %6074
      %6076 = vrot.lane.b32.xlu0 %v6056, 37
      %v6077 = vpop.permute.xlu0 %6076
      %6078 = vrot.lane.b32.xlu0 %v6057, 37
      %v6079 = vpop.permute.xlu0 %6078
      %6080 = vrot.lane.b32.xlu0 %v6058, 37
      %v6081 = vpop.permute.xlu0 %6080
      %6082 = vrot.lane.b32.xlu0 %v6059, 37
      %v6083 = vpop.permute.xlu0 %6082
      %6084 = vrot.lane.b32.xlu0 %v6060, 37
      %v6085 = vpop.permute.xlu0 %6084
      %6086 = vrot.lane.b32.xlu0 %v6061, 37
      %v6087 = vpop.permute.xlu0 %6086
      %6088 = vrot.lane.b32.xlu0 %v6062, 37
      %v6089 = vpop.permute.xlu0 %6088
      %v6090 = vsel %vm1480, %v6073, %v6075
      %v6091 = vsel %vm1480, %v6075, %v6077
      %v6092 = vsel %vm1480, %v6077, %v6079
      %v6093 = vsel %vm1480, %v6079, %v6081
      %v6094 = vsel %vm1480, %v6081, %v6083
      %v6095 = vsel %vm1480, %v6083, %v6085
      %v6096 = vsel %vm1480, %v6085, %v6087
      %v6097 = vsel %vm1480, %v6087, %v6089
      %6106 = vst [vmem:[#allocation3 + $0x500] sm:$0xff] %v6090
      %6107 = vst [vmem:[#allocation3 + $0x508] sm:$0xff] %v6091
      %6108 = vst [vmem:[#allocation3 + $0x510] sm:$0xff] %v6092
      %6109 = vst [vmem:[#allocation3 + $0x518] sm:$0xff] %v6093
      %6110 = vst [vmem:[#allocation3 + $0x520] sm:$0xff] %v6094
      %6111 = vst [vmem:[#allocation3 + $0x528] sm:$0xff] %v6095
      %6112 = vst [vmem:[#allocation3 + $0x530] sm:$0xff] %v6096
      %6113 = vst [vmem:[#allocation3 + $0x538] sm:$0xff] %v6097
      %v6114 = vld [vmem:[#allocation2 + $0x8] sm:$0xff]
      %v6115 = vld [vmem:[#allocation2 + $0x10] sm:$0xff]
      %v6116 = vld [vmem:[#allocation2 + $0x18] sm:$0xff]
      %v6117 = vld [vmem:[#allocation2 + $0x20] sm:$0xff]
      %v6118 = vld [vmem:[#allocation2 + $0x28] sm:$0xff]
      %v6119 = vld [vmem:[#allocation2 + $0x30] sm:$0xff]
      %v6120 = vld [vmem:[#allocation2 + $0x38] sm:$0xff]
      %v6121 = vld [vmem:[#allocation2 + $0x40] sm:$0xff]
      %v6122 = vld [vmem:[#allocation2 + $0x48] sm:$0xff]
      %6132 = vrot.lane.b32.xlu0 %v6114, 29
      %v6133 = vpop.permute.xlu0 %6132
      %6134 = vrot.lane.b32.xlu0 %v6115, 29
      %v6135 = vpop.permute.xlu0 %6134
      %6136 = vrot.lane.b32.xlu0 %v6116, 29
      %v6137 = vpop.permute.xlu0 %6136
      %6138 = vrot.lane.b32.xlu0 %v6117, 29
      %v6139 = vpop.permute.xlu0 %6138
      %6140 = vrot.lane.b32.xlu0 %v6118, 29
      %v6141 = vpop.permute.xlu0 %6140
      %6142 = vrot.lane.b32.xlu0 %v6119, 29
      %v6143 = vpop.permute.xlu0 %6142
      %6144 = vrot.lane.b32.xlu0 %v6120, 29
      %v6145 = vpop.permute.xlu0 %6144
      %6146 = vrot.lane.b32.xlu0 %v6121, 29
      %v6147 = vpop.permute.xlu0 %6146
      %6148 = vrot.lane.b32.xlu0 %v6122, 29
      %v6149 = vpop.permute.xlu0 %6148
      %v6150 = vsel %vm1541, %v6133, %v6135
      %v6151 = vsel %vm1541, %v6135, %v6137
      %v6152 = vsel %vm1541, %v6137, %v6139
      %v6153 = vsel %vm1541, %v6139, %v6141
      %v6154 = vsel %vm1541, %v6141, %v6143
      %v6155 = vsel %vm1541, %v6143, %v6145
      %v6156 = vsel %vm1541, %v6145, %v6147
      %v6157 = vsel %vm1541, %v6147, %v6149
      %6166 = vst [vmem:[#allocation3 + $0x540] sm:$0xff] %v6150
      %6167 = vst [vmem:[#allocation3 + $0x548] sm:$0xff] %v6151
      %6168 = vst [vmem:[#allocation3 + $0x550] sm:$0xff] %v6152
      %6169 = vst [vmem:[#allocation3 + $0x558] sm:$0xff] %v6153
      %6170 = vst [vmem:[#allocation3 + $0x560] sm:$0xff] %v6154
      %6171 = vst [vmem:[#allocation3 + $0x568] sm:$0xff] %v6155
      %6172 = vst [vmem:[#allocation3 + $0x570] sm:$0xff] %v6156
      %6173 = vst [vmem:[#allocation3 + $0x578] sm:$0xff] %v6157
      %v6174 = vld [vmem:[#allocation2 + $0x8] sm:$0xff]
      %v6175 = vld [vmem:[#allocation2 + $0x10] sm:$0xff]
      %v6176 = vld [vmem:[#allocation2 + $0x18] sm:$0xff]
      %v6177 = vld [vmem:[#allocation2 + $0x20] sm:$0xff]
      %v6178 = vld [vmem:[#allocation2 + $0x28] sm:$0xff]
      %v6179 = vld [vmem:[#allocation2 + $0x30] sm:$0xff]
      %v6180 = vld [vmem:[#allocation2 + $0x38] sm:$0xff]
      %v6181 = vld [vmem:[#allocation2 + $0x40] sm:$0xff]
      %v6182 = vld [vmem:[#allocation2 + $0x48] sm:$0xff]
      %6192 = vrot.lane.b32.xlu0 %v6174, 28
      %v6193 = vpop.permute.xlu0 %6192
      %6194 = vrot.lane.b32.xlu0 %v6175, 28
      %v6195 = vpop.permute.xlu0 %6194
      %6196 = vrot.lane.b32.xlu0 %v6176, 28
      %v6197 = vpop.permute.xlu0 %6196
      %6198 = vrot.lane.b32.xlu0 %v6177, 28
      %v6199 = vpop.permute.xlu0 %6198
      %6200 = vrot.lane.b32.xlu0 %v6178, 28
      %v6201 = vpop.permute.xlu0 %6200
      %6202 = vrot.lane.b32.xlu0 %v6179, 28
      %v6203 = vpop.permute.xlu0 %6202
      %6204 = vrot.lane.b32.xlu0 %v6180, 28
      %v6205 = vpop.permute.xlu0 %6204
      %6206 = vrot.lane.b32.xlu0 %v6181, 28
      %v6207 = vpop.permute.xlu0 %6206
      %6208 = vrot.lane.b32.xlu0 %v6182, 28
      %v6209 = vpop.permute.xlu0 %6208
      %v6210 = vsel %vm1602, %v6193, %v6195
      %v6211 = vsel %vm1602, %v6195, %v6197
      %v6212 = vsel %vm1602, %v6197, %v6199
      %v6213 = vsel %vm1602, %v6199, %v6201
      %v6214 = vsel %vm1602, %v6201, %v6203
      %v6215 = vsel %vm1602, %v6203, %v6205
      %v6216 = vsel %vm1602, %v6205, %v6207
      %v6217 = vsel %vm1602, %v6207, %v6209
      %6226 = vst [vmem:[#allocation3 + $0x580] sm:$0xff] %v6210
      %6227 = vst [vmem:[#allocation3 + $0x588] sm:$0xff] %v6211
      %6228 = vst [vmem:[#allocation3 + $0x590] sm:$0xff] %v6212
      %6229 = vst [vmem:[#allocation3 + $0x598] sm:$0xff] %v6213
      %6230 = vst [vmem:[#allocation3 + $0x5a0] sm:$0xff] %v6214
      %6231 = vst [vmem:[#allocation3 + $0x5a8] sm:$0xff] %v6215
      %6232 = vst [vmem:[#allocation3 + $0x5b0] sm:$0xff] %v6216
      %6233 = vst [vmem:[#allocation3 + $0x5b8] sm:$0xff] %v6217
      %v6234 = vld [vmem:[#allocation2 + $0x8] sm:$0xff]
      %v6235 = vld [vmem:[#allocation2 + $0x10] sm:$0xff]
      %v6236 = vld [vmem:[#allocation2 + $0x18] sm:$0xff]
      %v6237 = vld [vmem:[#allocation2 + $0x20] sm:$0xff]
      %v6238 = vld [vmem:[#allocation2 + $0x28] sm:$0xff]
      %v6239 = vld [vmem:[#allocation2 + $0x30] sm:$0xff]
      %v6240 = vld [vmem:[#allocation2 + $0x38] sm:$0xff]
      %v6241 = vld [vmem:[#allocation2 + $0x40] sm:$0xff]
      %v6242 = vld [vmem:[#allocation2 + $0x48] sm:$0xff]
      %6252 = vrot.lane.b32.xlu0 %v6234, 27
      %v6253 = vpop.permute.xlu0 %6252
      %6254 = vrot.lane.b32.xlu0 %v6235, 27
      %v6255 = vpop.permute.xlu0 %6254
      %6256 = vrot.lane.b32.xlu0 %v6236, 27
      %v6257 = vpop.permute.xlu0 %6256
      %6258 = vrot.lane.b32.xlu0 %v6237, 27
      %v6259 = vpop.permute.xlu0 %6258
      %6260 = vrot.lane.b32.xlu0 %v6238, 27
      %v6261 = vpop.permute.xlu0 %6260
      %6262 = vrot.lane.b32.xlu0 %v6239, 27
      %v6263 = vpop.permute.xlu0 %6262
      %6264 = vrot.lane.b32.xlu0 %v6240, 27
      %v6265 = vpop.permute.xlu0 %6264
      %6266 = vrot.lane.b32.xlu0 %v6241, 27
      %v6267 = vpop.permute.xlu0 %6266
      %6268 = vrot.lane.b32.xlu0 %v6242, 27
      %v6269 = vpop.permute.xlu0 %6268
      %v6270 = vsel %vm1663, %v6253, %v6255
      %v6271 = vsel %vm1663, %v6255, %v6257
      %v6272 = vsel %vm1663, %v6257, %v6259
      %v6273 = vsel %vm1663, %v6259, %v6261
      %v6274 = vsel %vm1663, %v6261, %v6263
      %v6275 = vsel %vm1663, %v6263, %v6265
      %v6276 = vsel %vm1663, %v6265, %v6267
      %v6277 = vsel %vm1663, %v6267, %v6269
      %6286 = vst [vmem:[#allocation3 + $0x5c0] sm:$0xff] %v6270
      %6287 = vst [vmem:[#allocation3 + $0x5c8] sm:$0xff] %v6271
      %6288 = vst [vmem:[#allocation3 + $0x5d0] sm:$0xff] %v6272
      %6289 = vst [vmem:[#allocation3 + $0x5d8] sm:$0xff] %v6273
      %6290 = vst [vmem:[#allocation3 + $0x5e0] sm:$0xff] %v6274
      %6291 = vst [vmem:[#allocation3 + $0x5e8] sm:$0xff] %v6275
      %6292 = vst [vmem:[#allocation3 + $0x5f0] sm:$0xff] %v6276
      %6293 = vst [vmem:[#allocation3 + $0x5f8] sm:$0xff] %v6277
      %v6294 = vld [vmem:[#allocation2 + $0x8] sm:$0xff]
      %v6295 = vld [vmem:[#allocation2 + $0x10] sm:$0xff]
      %v6296 = vld [vmem:[#allocation2 + $0x18] sm:$0xff]
      %v6297 = vld [vmem:[#allocation2 + $0x20] sm:$0xff]
      %v6298 = vld [vmem:[#allocation2 + $0x28] sm:$0xff]
      %v6299 = vld [vmem:[#allocation2 + $0x30] sm:$0xff]
      %v6300 = vld [vmem:[#allocation2 + $0x38] sm:$0xff]
      %v6301 = vld [vmem:[#allocation2 + $0x40] sm:$0xff]
      %v6302 = vld [vmem:[#allocation2 + $0x48] sm:$0xff]
      %6312 = vrot.lane.b32.xlu0 %v6294, 19
      %v6313 = vpop.permute.xlu0 %6312
      %6314 = vrot.lane.b32.xlu0 %v6295, 19
      %v6315 = vpop.permute.xlu0 %6314
      %6316 = vrot.lane.b32.xlu0 %v6296, 19
      %v6317 = vpop.permute.xlu0 %6316
      %6318 = vrot.lane.b32.xlu0 %v6297, 19
      %v6319 = vpop.permute.xlu0 %6318
      %6320 = vrot.lane.b32.xlu0 %v6298, 19
      %v6321 = vpop.permute.xlu0 %6320
      %6322 = vrot.lane.b32.xlu0 %v6299, 19
      %v6323 = vpop.permute.xlu0 %6322
      %6324 = vrot.lane.b32.xlu0 %v6300, 19
      %v6325 = vpop.permute.xlu0 %6324
      %6326 = vrot.lane.b32.xlu0 %v6301, 19
      %v6327 = vpop.permute.xlu0 %6326
      %6328 = vrot.lane.b32.xlu0 %v6302, 19
      %v6329 = vpop.permute.xlu0 %6328
      %v6330 = vsel %vm1724, %v6313, %v6315
      %v6331 = vsel %vm1724, %v6315, %v6317
      %v6332 = vsel %vm1724, %v6317, %v6319
      %v6333 = vsel %vm1724, %v6319, %v6321
      %v6334 = vsel %vm1724, %v6321, %v6323
      %v6335 = vsel %vm1724, %v6323, %v6325
      %v6336 = vsel %vm1724, %v6325, %v6327
      %v6337 = vsel %vm1724, %v6327, %v6329
      %6346 = vst [vmem:[#allocation3 + $0x600] sm:$0xff] %v6330
      %6347 = vst [vmem:[#allocation3 + $0x608] sm:$0xff] %v6331
      %6348 = vst [vmem:[#allocation3 + $0x610] sm:$0xff] %v6332
      %6349 = vst [vmem:[#allocation3 + $0x618] sm:$0xff] %v6333
      %6350 = vst [vmem:[#allocation3 + $0x620] sm:$0xff] %v6334
      %6351 = vst [vmem:[#allocation3 + $0x628] sm:$0xff] %v6335
      %6352 = vst [vmem:[#allocation3 + $0x630] sm:$0xff] %v6336
      %6353 = vst [vmem:[#allocation3 + $0x638] sm:$0xff] %v6337
      %v6354 = vld [vmem:[#allocation2 + $0x8] sm:$0xff]
      %v6355 = vld [vmem:[#allocation2 + $0x10] sm:$0xff]
      %v6356 = vld [vmem:[#allocation2 + $0x18] sm:$0xff]
      %v6357 = vld [vmem:[#allocation2 + $0x20] sm:$0xff]
      %v6358 = vld [vmem:[#allocation2 + $0x28] sm:$0xff]
      %v6359 = vld [vmem:[#allocation2 + $0x30] sm:$0xff]
      %v6360 = vld [vmem:[#allocation2 + $0x38] sm:$0xff]
      %v6361 = vld [vmem:[#allocation2 + $0x40] sm:$0xff]
      %v6362 = vld [vmem:[#allocation2 + $0x48] sm:$0xff]
      %6372 = vrot.lane.b32.xlu0 %v6354, 18
      %v6373 = vpop.permute.xlu0 %6372
      %6374 = vrot.lane.b32.xlu0 %v6355, 18
      %v6375 = vpop.permute.xlu0 %6374
      %6376 = vrot.lane.b32.xlu0 %v6356, 18
      %v6377 = vpop.permute.xlu0 %6376
      %6378 = vrot.lane.b32.xlu0 %v6357, 18
      %v6379 = vpop.permute.xlu0 %6378
      %6380 = vrot.lane.b32.xlu0 %v6358, 18
      %v6381 = vpop.permute.xlu0 %6380
      %6382 = vrot.lane.b32.xlu0 %v6359, 18
      %v6383 = vpop.permute.xlu0 %6382
      %6384 = vrot.lane.b32.xlu0 %v6360, 18
      %v6385 = vpop.permute.xlu0 %6384
      %6386 = vrot.lane.b32.xlu0 %v6361, 18
      %v6387 = vpop.permute.xlu0 %6386
      %6388 = vrot.lane.b32.xlu0 %v6362, 18
      %v6389 = vpop.permute.xlu0 %6388
      %v6390 = vsel %vm1785, %v6373, %v6375
      %v6391 = vsel %vm1785, %v6375, %v6377
      %v6392 = vsel %vm1785, %v6377, %v6379
      %v6393 = vsel %vm1785, %v6379, %v6381
      %v6394 = vsel %vm1785, %v6381, %v6383
      %v6395 = vsel %vm1785, %v6383, %v6385
      %v6396 = vsel %vm1785, %v6385, %v6387
      %v6397 = vsel %vm1785, %v6387, %v6389
      %6406 = vst [vmem:[#allocation3 + $0x640] sm:$0xff] %v6390
      %6407 = vst [vmem:[#allocation3 + $0x648] sm:$0xff] %v6391
      %6408 = vst [vmem:[#allocation3 + $0x650] sm:$0xff] %v6392
      %6409 = vst [vmem:[#allocation3 + $0x658] sm:$0xff] %v6393
      %6410 = vst [vmem:[#allocation3 + $0x660] sm:$0xff] %v6394
      %6411 = vst [vmem:[#allocation3 + $0x668] sm:$0xff] %v6395
      %6412 = vst [vmem:[#allocation3 + $0x670] sm:$0xff] %v6396
      %6413 = vst [vmem:[#allocation3 + $0x678] sm:$0xff] %v6397
      %v6414 = vld [vmem:[#allocation2 + $0x8] sm:$0xff]
      %v6415 = vld [vmem:[#allocation2 + $0x10] sm:$0xff]
      %v6416 = vld [vmem:[#allocation2 + $0x18] sm:$0xff]
      %v6417 = vld [vmem:[#allocation2 + $0x20] sm:$0xff]
      %v6418 = vld [vmem:[#allocation2 + $0x28] sm:$0xff]
      %v6419 = vld [vmem:[#allocation2 + $0x30] sm:$0xff]
      %v6420 = vld [vmem:[#allocation2 + $0x38] sm:$0xff]
      %v6421 = vld [vmem:[#allocation2 + $0x40] sm:$0xff]
      %v6422 = vld [vmem:[#allocation2 + $0x48] sm:$0xff]
      %6432 = vrot.lane.b32.xlu0 %v6414, 17
      %v6433 = vpop.permute.xlu0 %6432
      %6434 = vrot.lane.b32.xlu0 %v6415, 17
      %v6435 = vpop.permute.xlu0 %6434
      %6436 = vrot.lane.b32.xlu0 %v6416, 17
      %v6437 = vpop.permute.xlu0 %6436
      %6438 = vrot.lane.b32.xlu0 %v6417, 17
      %v6439 = vpop.permute.xlu0 %6438
      %6440 = vrot.lane.b32.xlu0 %v6418, 17
      %v6441 = vpop.permute.xlu0 %6440
      %6442 = vrot.lane.b32.xlu0 %v6419, 17
      %v6443 = vpop.permute.xlu0 %6442
      %6444 = vrot.lane.b32.xlu0 %v6420, 17
      %v6445 = vpop.permute.xlu0 %6444
      %6446 = vrot.lane.b32.xlu0 %v6421, 17
      %v6447 = vpop.permute.xlu0 %6446
      %6448 = vrot.lane.b32.xlu0 %v6422, 17
      %v6449 = vpop.permute.xlu0 %6448
      %v6450 = vsel %vm1846, %v6433, %v6435
      %v6451 = vsel %vm1846, %v6435, %v6437
      %v6452 = vsel %vm1846, %v6437, %v6439
      %v6453 = vsel %vm1846, %v6439, %v6441
      %v6454 = vsel %vm1846, %v6441, %v6443
      %v6455 = vsel %vm1846, %v6443, %v6445
      %v6456 = vsel %vm1846, %v6445, %v6447
      %v6457 = vsel %vm1846, %v6447, %v6449
      %6466 = vst [vmem:[#allocation3 + $0x680] sm:$0xff] %v6450
      %6467 = vst [vmem:[#allocation3 + $0x688] sm:$0xff] %v6451
      %6468 = vst [vmem:[#allocation3 + $0x690] sm:$0xff] %v6452
      %6469 = vst [vmem:[#allocation3 + $0x698] sm:$0xff] %v6453
      %6470 = vst [vmem:[#allocation3 + $0x6a0] sm:$0xff] %v6454
      %6471 = vst [vmem:[#allocation3 + $0x6a8] sm:$0xff] %v6455
      %6472 = vst [vmem:[#allocation3 + $0x6b0] sm:$0xff] %v6456
      %6473 = vst [vmem:[#allocation3 + $0x6b8] sm:$0xff] %v6457
      %v6474 = vld [vmem:[%s3] sm:$0xff]
      %v6475 = vld [vmem:[#allocation3] sm:$0xff]
      %v6476 = vld [vmem:[#allocation3 + $0x8] sm:$0xff]
      %v6477 = vld [vmem:[#allocation3 + $0x10] sm:$0xff]
      %v6478 = vld [vmem:[#allocation3 + $0x18] sm:$0xff]
      %v6479 = vld [vmem:[#allocation3 + $0x20] sm:$0xff]
      %v6480 = vld [vmem:[#allocation3 + $0x28] sm:$0xff]
      %v6481 = vld [vmem:[#allocation3 + $0x30] sm:$0xff]
      %v6482 = vld [vmem:[#allocation3 + $0x38] sm:$0xff]
      %v6483 = vld [vmem:[#allocation3 + $0x40] sm:$0xff]
      %v6484 = vld [vmem:[#allocation3 + $0x48] sm:$0xff]
      %v6485 = vld [vmem:[#allocation3 + $0x50] sm:$0xff]
      %v6486 = vld [vmem:[#allocation3 + $0x58] sm:$0xff]
      %v6487 = vld [vmem:[#allocation3 + $0x60] sm:$0xff]
      %v6488 = vld [vmem:[#allocation3 + $0x68] sm:$0xff]
      %v6489 = vld [vmem:[#allocation3 + $0x70] sm:$0xff]
      %v6490 = vld [vmem:[#allocation3 + $0x78] sm:$0xff]
      %v6491 = vld [vmem:[#allocation3 + $0x80] sm:$0xff]
      %v6492 = vld [vmem:[#allocation3 + $0x88] sm:$0xff]
      %v6493 = vld [vmem:[#allocation3 + $0x90] sm:$0xff]
      %v6494 = vld [vmem:[#allocation3 + $0x98] sm:$0xff]
      %v6495 = vld [vmem:[#allocation3 + $0xa0] sm:$0xff]
      %v6496 = vld [vmem:[#allocation3 + $0xa8] sm:$0xff]
      %v6497 = vld [vmem:[#allocation3 + $0xb0] sm:$0xff]
      %v6498 = vld [vmem:[#allocation3 + $0xb8] sm:$0xff]
      %v6499 = vld [vmem:[#allocation3 + $0xc0] sm:$0xff]
      %v6500 = vld [vmem:[#allocation3 + $0xc8] sm:$0xff]
      %v6501 = vld [vmem:[#allocation3 + $0xd0] sm:$0xff]
      %v6502 = vld [vmem:[#allocation3 + $0xd8] sm:$0xff]
      %v6503 = vld [vmem:[#allocation3 + $0xe0] sm:$0xff]
      %v6504 = vld [vmem:[#allocation3 + $0xe8] sm:$0xff]
      %v6505 = vld [vmem:[#allocation3 + $0xf0] sm:$0xff]
      %v6506 = vld [vmem:[#allocation3 + $0xf8] sm:$0xff]
      %v6507 = vld [vmem:[#allocation3 + $0x100] sm:$0xff]
      %v6508 = vld [vmem:[#allocation3 + $0x108] sm:$0xff]
      %v6509 = vld [vmem:[#allocation3 + $0x110] sm:$0xff]
      %v6510 = vld [vmem:[#allocation3 + $0x118] sm:$0xff]
      %v6511 = vld [vmem:[#allocation3 + $0x120] sm:$0xff]
      %v6512 = vld [vmem:[#allocation3 + $0x128] sm:$0xff]
      %v6513 = vld [vmem:[#allocation3 + $0x130] sm:$0xff]
      %v6514 = vld [vmem:[#allocation3 + $0x138] sm:$0xff]
      %v6515 = vld [vmem:[#allocation3 + $0x140] sm:$0xff]
      %v6516 = vld [vmem:[#allocation3 + $0x148] sm:$0xff]
      %v6517 = vld [vmem:[#allocation3 + $0x150] sm:$0xff]
      %v6518 = vld [vmem:[#allocation3 + $0x158] sm:$0xff]
      %v6519 = vld [vmem:[#allocation3 + $0x160] sm:$0xff]
      %v6520 = vld [vmem:[#allocation3 + $0x168] sm:$0xff]
      %v6521 = vld [vmem:[#allocation3 + $0x170] sm:$0xff]
      %v6522 = vld [vmem:[#allocation3 + $0x178] sm:$0xff]
      %v6523 = vld [vmem:[#allocation3 + $0x180] sm:$0xff]
      %v6524 = vld [vmem:[#allocation3 + $0x188] sm:$0xff]
      %v6525 = vld [vmem:[#allocation3 + $0x190] sm:$0xff]
      %v6526 = vld [vmem:[#allocation3 + $0x198] sm:$0xff]
      %v6527 = vld [vmem:[#allocation3 + $0x1a0] sm:$0xff]
      %v6528 = vld [vmem:[#allocation3 + $0x1a8] sm:$0xff]
      %v6529 = vld [vmem:[#allocation3 + $0x1b0] sm:$0xff]
      %v6530 = vld [vmem:[#allocation3 + $0x1b8] sm:$0xff]
      %v6531 = vld [vmem:[#allocation3 + $0x1c0] sm:$0xff]
      %v6532 = vld [vmem:[#allocation3 + $0x1c8] sm:$0xff]
      %v6533 = vld [vmem:[#allocation3 + $0x1d0] sm:$0xff]
      %v6534 = vld [vmem:[#allocation3 + $0x1d8] sm:$0xff]
      %v6535 = vld [vmem:[#allocation3 + $0x1e0] sm:$0xff]
      %v6536 = vld [vmem:[#allocation3 + $0x1e8] sm:$0xff]
      %v6537 = vld [vmem:[#allocation3 + $0x1f0] sm:$0xff]
      %v6538 = vld [vmem:[#allocation3 + $0x1f8] sm:$0xff]
      %v6539 = vld [vmem:[#allocation3 + $0x200] sm:$0xff]
      %v6540 = vld [vmem:[#allocation3 + $0x208] sm:$0xff]
      %v6541 = vld [vmem:[#allocation3 + $0x210] sm:$0xff]
      %v6542 = vld [vmem:[#allocation3 + $0x218] sm:$0xff]
      %v6543 = vld [vmem:[#allocation3 + $0x220] sm:$0xff]
      %v6544 = vld [vmem:[#allocation3 + $0x228] sm:$0xff]
      %v6545 = vld [vmem:[#allocation3 + $0x230] sm:$0xff]
      %v6546 = vld [vmem:[#allocation3 + $0x238] sm:$0xff]
      %v6547 = vld [vmem:[#allocation3 + $0x240] sm:$0xff]
      %v6548 = vld [vmem:[#allocation3 + $0x248] sm:$0xff]
      %v6549 = vld [vmem:[#allocation3 + $0x250] sm:$0xff]
      %v6550 = vld [vmem:[#allocation3 + $0x258] sm:$0xff]
      %v6551 = vld [vmem:[#allocation3 + $0x260] sm:$0xff]
      %v6552 = vld [vmem:[#allocation3 + $0x268] sm:$0xff]
      %v6553 = vld [vmem:[#allocation3 + $0x270] sm:$0xff]
      %v6554 = vld [vmem:[#allocation3 + $0x278] sm:$0xff]
      %v6555 = vld [vmem:[#allocation3 + $0x280] sm:$0xff]
      %v6556 = vld [vmem:[#allocation3 + $0x288] sm:$0xff]
      %v6557 = vld [vmem:[#allocation3 + $0x290] sm:$0xff]
      %v6558 = vld [vmem:[#allocation3 + $0x298] sm:$0xff]
      %v6559 = vld [vmem:[#allocation3 + $0x2a0] sm:$0xff]
      %v6560 = vld [vmem:[#allocation3 + $0x2a8] sm:$0xff]
      %v6561 = vld [vmem:[#allocation3 + $0x2b0] sm:$0xff]
      %v6562 = vld [vmem:[#allocation3 + $0x2b8] sm:$0xff]
      %v6563 = vld [vmem:[#allocation3 + $0x2c0] sm:$0xff]
      %v6564 = vld [vmem:[#allocation3 + $0x2c8] sm:$0xff]
      %v6565 = vld [vmem:[#allocation3 + $0x2d0] sm:$0xff]
      %v6566 = vld [vmem:[#allocation3 + $0x2d8] sm:$0xff]
      %v6567 = vld [vmem:[#allocation3 + $0x2e0] sm:$0xff]
      %v6568 = vld [vmem:[#allocation3 + $0x2e8] sm:$0xff]
      %v6569 = vld [vmem:[#allocation3 + $0x2f0] sm:$0xff]
      %v6570 = vld [vmem:[#allocation3 + $0x2f8] sm:$0xff]
      %v6571 = vld [vmem:[#allocation3 + $0x300] sm:$0xff]
      %v6572 = vld [vmem:[#allocation3 + $0x308] sm:$0xff]
      %v6573 = vld [vmem:[#allocation3 + $0x310] sm:$0xff]
      %v6574 = vld [vmem:[#allocation3 + $0x318] sm:$0xff]
      %v6575 = vld [vmem:[#allocation3 + $0x320] sm:$0xff]
      %v6576 = vld [vmem:[#allocation3 + $0x328] sm:$0xff]
      %v6577 = vld [vmem:[#allocation3 + $0x330] sm:$0xff]
      %v6578 = vld [vmem:[#allocation3 + $0x338] sm:$0xff]
      %v6579 = vld [vmem:[#allocation3 + $0x340] sm:$0xff]
      %v6580 = vld [vmem:[#allocation3 + $0x348] sm:$0xff]
      %v6581 = vld [vmem:[#allocation3 + $0x350] sm:$0xff]
      %v6582 = vld [vmem:[#allocation3 + $0x358] sm:$0xff]
      %v6583 = vld [vmem:[#allocation3 + $0x360] sm:$0xff]
      %v6584 = vld [vmem:[#allocation3 + $0x368] sm:$0xff]
      %v6585 = vld [vmem:[#allocation3 + $0x370] sm:$0xff]
      %v6586 = vld [vmem:[#allocation3 + $0x378] sm:$0xff]
      %v6587 = vld [vmem:[#allocation3 + $0x380] sm:$0xff]
      %v6588 = vld [vmem:[#allocation3 + $0x388] sm:$0xff]
      %v6589 = vld [vmem:[#allocation3 + $0x390] sm:$0xff]
      %v6590 = vld [vmem:[#allocation3 + $0x398] sm:$0xff]
      %v6591 = vld [vmem:[#allocation3 + $0x3a0] sm:$0xff]
      %v6592 = vld [vmem:[#allocation3 + $0x3a8] sm:$0xff]
      %v6593 = vld [vmem:[#allocation3 + $0x3b0] sm:$0xff]
      %v6594 = vld [vmem:[#allocation3 + $0x3b8] sm:$0xff]
      %v6595 = vld [vmem:[#allocation3 + $0x3c0] sm:$0xff]
      %v6596 = vld [vmem:[#allocation3 + $0x3c8] sm:$0xff]
      %v6597 = vld [vmem:[#allocation3 + $0x3d0] sm:$0xff]
      %v6598 = vld [vmem:[#allocation3 + $0x3d8] sm:$0xff]
      %v6599 = vld [vmem:[#allocation3 + $0x3e0] sm:$0xff]
      %v6600 = vld [vmem:[#allocation3 + $0x3e8] sm:$0xff]
      %v6601 = vld [vmem:[#allocation3 + $0x3f0] sm:$0xff]
      %v6602 = vld [vmem:[#allocation3 + $0x3f8] sm:$0xff]
      %v6603 = vld [vmem:[#allocation3 + $0x400] sm:$0xff]
      %v6604 = vld [vmem:[#allocation3 + $0x408] sm:$0xff]
      %v6605 = vld [vmem:[#allocation3 + $0x410] sm:$0xff]
      %v6606 = vld [vmem:[#allocation3 + $0x418] sm:$0xff]
      %v6607 = vld [vmem:[#allocation3 + $0x420] sm:$0xff]
      %v6608 = vld [vmem:[#allocation3 + $0x428] sm:$0xff]
      %v6609 = vld [vmem:[#allocation3 + $0x430] sm:$0xff]
      %v6610 = vld [vmem:[#allocation3 + $0x438] sm:$0xff]
      %v6611 = vld [vmem:[#allocation3 + $0x440] sm:$0xff]
      %v6612 = vld [vmem:[#allocation3 + $0x448] sm:$0xff]
      %v6613 = vld [vmem:[#allocation3 + $0x450] sm:$0xff]
      %v6614 = vld [vmem:[#allocation3 + $0x458] sm:$0xff]
      %v6615 = vld [vmem:[#allocation3 + $0x460] sm:$0xff]
      %v6616 = vld [vmem:[#allocation3 + $0x468] sm:$0xff]
      %v6617 = vld [vmem:[#allocation3 + $0x470] sm:$0xff]
      %v6618 = vld [vmem:[#allocation3 + $0x478] sm:$0xff]
      %v6619 = vld [vmem:[#allocation3 + $0x480] sm:$0xff]
      %v6620 = vld [vmem:[#allocation3 + $0x488] sm:$0xff]
      %v6621 = vld [vmem:[#allocation3 + $0x490] sm:$0xff]
      %v6622 = vld [vmem:[#allocation3 + $0x498] sm:$0xff]
      %v6623 = vld [vmem:[#allocation3 + $0x4a0] sm:$0xff]
      %v6624 = vld [vmem:[#allocation3 + $0x4a8] sm:$0xff]
      %v6625 = vld [vmem:[#allocation3 + $0x4b0] sm:$0xff]
      %v6626 = vld [vmem:[#allocation3 + $0x4b8] sm:$0xff]
      %v6627 = vld [vmem:[#allocation3 + $0x4c0] sm:$0xff]
      %v6628 = vld [vmem:[#allocation3 + $0x4c8] sm:$0xff]
      %v6629 = vld [vmem:[#allocation3 + $0x4d0] sm:$0xff]
      %v6630 = vld [vmem:[#allocation3 + $0x4d8] sm:$0xff]
      %v6631 = vld [vmem:[#allocation3 + $0x4e0] sm:$0xff]
      %v6632 = vld [vmem:[#allocation3 + $0x4e8] sm:$0xff]
      %v6633 = vld [vmem:[#allocation3 + $0x4f0] sm:$0xff]
      %v6634 = vld [vmem:[#allocation3 + $0x4f8] sm:$0xff]
      %v6635 = vld [vmem:[#allocation3 + $0x500] sm:$0xff]
      %v6636 = vld [vmem:[#allocation3 + $0x508] sm:$0xff]
      %v6637 = vld [vmem:[#allocation3 + $0x510] sm:$0xff]
      %v6638 = vld [vmem:[#allocation3 + $0x518] sm:$0xff]
      %v6639 = vld [vmem:[#allocation3 + $0x520] sm:$0xff]
      %v6640 = vld [vmem:[#allocation3 + $0x528] sm:$0xff]
      %v6641 = vld [vmem:[#allocation3 + $0x530] sm:$0xff]
      %v6642 = vld [vmem:[#allocation3 + $0x538] sm:$0xff]
      %v6643 = vld [vmem:[#allocation3 + $0x540] sm:$0xff]
      %v6644 = vld [vmem:[#allocation3 + $0x548] sm:$0xff]
      %v6645 = vld [vmem:[#allocation3 + $0x550] sm:$0xff]
      %v6646 = vld [vmem:[#allocation3 + $0x558] sm:$0xff]
      %v6647 = vld [vmem:[#allocation3 + $0x560] sm:$0xff]
      %v6648 = vld [vmem:[#allocation3 + $0x568] sm:$0xff]
      %v6649 = vld [vmem:[#allocation3 + $0x570] sm:$0xff]
      %v6650 = vld [vmem:[#allocation3 + $0x578] sm:$0xff]
      %v6651 = vld [vmem:[#allocation3 + $0x580] sm:$0xff]
      %v6652 = vld [vmem:[#allocation3 + $0x588] sm:$0xff]
      %v6653 = vld [vmem:[#allocation3 + $0x590] sm:$0xff]
      %v6654 = vld [vmem:[#allocation3 + $0x598] sm:$0xff]
      %v6655 = vld [vmem:[#allocation3 + $0x5a0] sm:$0xff]
      %v6656 = vld [vmem:[#allocation3 + $0x5a8] sm:$0xff]
      %v6657 = vld [vmem:[#allocation3 + $0x5b0] sm:$0xff]
      %v6658 = vld [vmem:[#allocation3 + $0x5b8] sm:$0xff]
      %v6659 = vld [vmem:[#allocation3 + $0x5c0] sm:$0xff]
      %v6660 = vld [vmem:[#allocation3 + $0x5c8] sm:$0xff]
      %v6661 = vld [vmem:[#allocation3 + $0x5d0] sm:$0xff]
      %v6662 = vld [vmem:[#allocation3 + $0x5d8] sm:$0xff]
      %v6663 = vld [vmem:[#allocation3 + $0x5e0] sm:$0xff]
      %v6664 = vld [vmem:[#allocation3 + $0x5e8] sm:$0xff]
      %v6665 = vld [vmem:[#allocation3 + $0x5f0] sm:$0xff]
      %v6666 = vld [vmem:[#allocation3 + $0x5f8] sm:$0xff]
      %v6667 = vld [vmem:[#allocation3 + $0x600] sm:$0xff]
      %v6668 = vld [vmem:[#allocation3 + $0x608] sm:$0xff]
      %v6669 = vld [vmem:[#allocation3 + $0x610] sm:$0xff]
      %v6670 = vld [vmem:[#allocation3 + $0x618] sm:$0xff]
      %v6671 = vld [vmem:[#allocation3 + $0x620] sm:$0xff]
      %v6672 = vld [vmem:[#allocation3 + $0x628] sm:$0xff]
      %v6673 = vld [vmem:[#allocation3 + $0x630] sm:$0xff]
      %v6674 = vld [vmem:[#allocation3 + $0x638] sm:$0xff]
      %v6675 = vld [vmem:[#allocation3 + $0x640] sm:$0xff]
      %v6676 = vld [vmem:[#allocation3 + $0x648] sm:$0xff]
      %v6677 = vld [vmem:[#allocation3 + $0x650] sm:$0xff]
      %v6678 = vld [vmem:[#allocation3 + $0x658] sm:$0xff]
      %v6679 = vld [vmem:[#allocation3 + $0x660] sm:$0xff]
      %v6680 = vld [vmem:[#allocation3 + $0x668] sm:$0xff]
      %v6681 = vld [vmem:[#allocation3 + $0x670] sm:$0xff]
      %v6682 = vld [vmem:[#allocation3 + $0x678] sm:$0xff]
      %v6683 = vld [vmem:[#allocation3 + $0x680] sm:$0xff]
      %v6684 = vld [vmem:[#allocation3 + $0x688] sm:$0xff]
      %v6685 = vld [vmem:[#allocation3 + $0x690] sm:$0xff]
      %v6686 = vld [vmem:[#allocation3 + $0x698] sm:$0xff]
      %v6687 = vld [vmem:[#allocation3 + $0x6a0] sm:$0xff]
      %v6688 = vld [vmem:[#allocation3 + $0x6a8] sm:$0xff]
      %v6689 = vld [vmem:[#allocation3 + $0x6b0] sm:$0xff]
      %v6690 = vld [vmem:[#allocation3 + $0x6b8] sm:$0xff]
      %v6692 = vcombine.high %v6474, %v6474
      %v6694 = vunpack.c.l.s4 1983009808
      %v6695 = vunpack.c.0.s8 %v6694
      %v6696 = vlaneseq
      %v6697 = vshrl.u32 %v6696, 7
      %v6698 = vsub.s32 %v6695, %v6697
      %v6699 = vrot.slane %v6474, %v6698
      %v6701 = vunpack.c.l.s4 1983009808
      %v6702 = vunpack.c.0.s8 %v6701
      %v6703 = vlaneseq
      %v6704 = vshrl.u32 %v6703, 7
      %v6705 = vsub.s32 %v6702, %v6704
      %v6706 = vrot.slane %v6692, %v6705
      %v6707 = vcombine.high %v6699, %v6699
      %v6708 = vcombine.high %v6706, %v6706
      %v6713 = vsel %vm2116, %v6708, 0
      %6715 = vmatprep.subr.bf16.mxu0 %v6476
      %6716 = vmatpush1.bf16.msra.mxu0 %v6475
      %6717 = vmatprep.subr.bf16.mxu0 %v6484
      %6718 = vmatpush1.bf16.msra.mxu0 %v6483
      %6719 = vmatprep.subr.bf16.mxu0 %v6492
      %6720 = vmatpush1.bf16.msra.mxu0 %v6491
      %6721 = vmatprep.subr.bf16.mxu0 %v6500
      %6722 = vmatpush1.bf16.msra.mxu0 %v6499
      %6723 = vmatprep.subr.bf16.mxu0 %v6508
      %6724 = vmatpush1.bf16.msra.mxu0 %v6507
      %6725 = vmatprep.subr.bf16.mxu0 %v6516
      %6726 = vmatpush1.bf16.msra.mxu0 %v6515
      %6727 = vmatprep.subr.bf16.mxu0 %v6524
      %6728 = vmatpush1.bf16.msra.mxu0 %v6523
      %6729 = vmatprep.subr.bf16.mxu0 %v6532
      %6730 = vmatpush1.bf16.msra.mxu0 %v6531
      %6731 = vmatprep.subr.bf16.mxu0 %v6540
      %6732 = vmatpush1.bf16.msra.mxu0 %v6539
      %6733 = vmatprep.subr.bf16.mxu0 %v6548
      %6734 = vmatpush1.bf16.msra.mxu0 %v6547
      %6735 = vmatprep.subr.bf16.mxu0 %v6556
      %6736 = vmatpush1.bf16.msra.mxu0 %v6555
      %6737 = vmatprep.subr.bf16.mxu0 %v6564
      %6738 = vmatpush1.bf16.msra.mxu0 %v6563
      %6739 = vmatprep.subr.bf16.mxu0 %v6572
      %6740 = vmatpush1.bf16.msra.mxu0 %v6571
      %6741 = vmatprep.subr.bf16.mxu0 %v6580
      %6742 = vmatpush1.bf16.msra.mxu0 %v6579
      %6743 = vmatprep.subr.bf16.mxu0 %v6588
      %6744 = vmatpush1.bf16.msra.mxu0 %v6587
      %6745 = vmatprep.subr.bf16.mxu0 %v6596
      %6746 = vmatpush1.bf16.msra.mxu0 %v6595
      %6747 = vmatprep.mubr.bf16.mxu0 %v6707
      %6748 = vmatmul.mubr.bf16.gmra.mrb[0].mxu0 %v6699
      %v6749 = vpop.f32.mrb[0].mxu0
      %v6750 = vadd.f32 0.0, %v6749
      %v6751 = vpop.f32.mrb[0].mxu0
      %v6752 = vadd.f32 0.0, %v6751
      %v6753 = vpop.f32.mrb[0].mxu0
      %v6754 = vpop.f32.mrb[0].mxu0
      %6755 = vdwg.mxu0
      %6756 = vmatprep.subr.bf16.mxu0 %v6604
      %6757 = vmatpush1.bf16.msra.mxu0 %v6603
      %6758 = vmatprep.subr.bf16.mxu0 %v6612
      %6759 = vmatpush1.bf16.msra.mxu0 %v6611
      %6760 = vmatprep.subr.bf16.mxu0 %v6620
      %6761 = vmatpush1.bf16.msra.mxu0 %v6619
      %6762 = vmatprep.subr.bf16.mxu0 %v6628
      %6763 = vmatpush1.bf16.msra.mxu0 %v6627
      %6764 = vmatprep.subr.bf16.mxu0 %v6636
      %6765 = vmatpush1.bf16.msra.mxu0 %v6635
      %6766 = vmatprep.subr.bf16.mxu0 %v6644
      %6767 = vmatpush1.bf16.msra.mxu0 %v6643
      %6768 = vmatprep.subr.bf16.mxu0 %v6652
      %6769 = vmatpush1.bf16.msra.mxu0 %v6651
      %6770 = vmatprep.subr.bf16.mxu0 %v6660
      %6771 = vmatpush1.bf16.msra.mxu0 %v6659
      %6772 = vmatprep.subr.bf16.mxu0 %v6668
      %6773 = vmatpush1.bf16.msra.mxu0 %v6667
      %6774 = vmatprep.subr.bf16.mxu0 %v6676
      %6775 = vmatpush1.bf16.msra.mxu0 %v6675
      %6776 = vmatprep.subr.bf16.mxu0 %v6684
      %6777 = vmatpush1.bf16.msra.mxu0 %v6683
      %6778 = vmatprep.subr.bf16.mxu0 0
      %6779 = vmatpush1.bf16.msra.mxu0 0
      %6780 = vmatprep.subr.bf16.mxu0 0
      %6781 = vmatpush1.bf16.msra.mxu0 0
      %6782 = vmatprep.subr.bf16.mxu0 0
      %6783 = vmatpush1.bf16.msra.mxu0 0
      %6784 = vmatprep.subr.bf16.mxu0 0
      %6785 = vmatpush1.bf16.msra.mxu0 0
      %6786 = vmatprep.subr.bf16.mxu0 0
      %6787 = vmatpush1.bf16.msra.mxu0 0
      %6788 = vmatprep.mubr.bf16.mxu0 %v6713
      %6789 = vmatmul.mubr.bf16.gmra.mrb[0].mxu0 %v6706
      %v6790 = vpop.f32.mrb[0].mxu0
      %v6791 = vadd.f32 %v6750, %v6790
      %v6792 = vpop.f32.mrb[0].mxu0
      %v6793 = vadd.f32 %v6752, %v6792
      %v6794 = vpop.f32.mrb[0].mxu0
      %v6795 = vpop.f32.mrb[0].mxu0
      %6796 = vdwg.mxu0
      %6797 = vmatprep.subr.bf16.mxu0 %v6478
      %6798 = vmatpush1.bf16.msra.mxu0 %v6477
      %6799 = vmatprep.subr.bf16.mxu0 %v6486
      %6800 = vmatpush1.bf16.msra.mxu0 %v6485
      %6801 = vmatprep.subr.bf16.mxu0 %v6494
      %6802 = vmatpush1.bf16.msra.mxu0 %v6493
      %6803 = vmatprep.subr.bf16.mxu0 %v6502
      %6804 = vmatpush1.bf16.msra.mxu0 %v6501
      %6805 = vmatprep.subr.bf16.mxu0 %v6510
      %6806 = vmatpush1.bf16.msra.mxu0 %v6509
      %6807 = vmatprep.subr.bf16.mxu0 %v6518
      %6808 = vmatpush1.bf16.msra.mxu0 %v6517
      %6809 = vmatprep.subr.bf16.mxu0 %v6526
      %6810 = vmatpush1.bf16.msra.mxu0 %v6525
      %6811 = vmatprep.subr.bf16.mxu0 %v6534
      %6812 = vmatpush1.bf16.msra.mxu0 %v6533
      %6813 = vmatprep.subr.bf16.mxu0 %v6542
      %6814 = vmatpush1.bf16.msra.mxu0 %v6541
      %6815 = vmatprep.subr.bf16.mxu0 %v6550
      %6816 = vmatpush1.bf16.msra.mxu0 %v6549
      %6817 = vmatprep.subr.bf16.mxu0 %v6558
      %6818 = vmatpush1.bf16.msra.mxu0 %v6557
      %6819 = vmatprep.subr.bf16.mxu0 %v6566
      %6820 = vmatpush1.bf16.msra.mxu0 %v6565
      %6821 = vmatprep.subr.bf16.mxu0 %v6574
      %6822 = vmatpush1.bf16.msra.mxu0 %v6573
      %6823 = vmatprep.subr.bf16.mxu0 %v6582
      %6824 = vmatpush1.bf16.msra.mxu0 %v6581
      %6825 = vmatprep.subr.bf16.mxu0 %v6590
      %6826 = vmatpush1.bf16.msra.mxu0 %v6589
      %6827 = vmatprep.subr.bf16.mxu0 %v6598
      %6828 = vmatpush1.bf16.msra.mxu0 %v6597
      %6829 = vmatprep.mubr.bf16.mxu0 %v6707
      %6830 = vmatmul.mubr.bf16.gmra.mrb[0].mxu0 %v6699
      %v6831 = vpop.f32.mrb[0].mxu0
      %v6832 = vadd.f32 0.0, %v6831
      %v6833 = vpop.f32.mrb[0].mxu0
      %v6834 = vadd.f32 0.0, %v6833
      %v6835 = vpop.f32.mrb[0].mxu0
      %v6836 = vpop.f32.mrb[0].mxu0
      %6837 = vdwg.mxu0
      %6838 = vmatprep.subr.bf16.mxu0 %v6606
      %6839 = vmatpush1.bf16.msra.mxu0 %v6605
      %6840 = vmatprep.subr.bf16.mxu0 %v6614
      %6841 = vmatpush1.bf16.msra.mxu0 %v6613
      %6842 = vmatprep.subr.bf16.mxu0 %v6622
      %6843 = vmatpush1.bf16.msra.mxu0 %v6621
      %6844 = vmatprep.subr.bf16.mxu0 %v6630
      %6845 = vmatpush1.bf16.msra.mxu0 %v6629
      %6846 = vmatprep.subr.bf16.mxu0 %v6638
      %6847 = vmatpush1.bf16.msra.mxu0 %v6637
      %6848 = vmatprep.subr.bf16.mxu0 %v6646
      %6849 = vmatpush1.bf16.msra.mxu0 %v6645
      %6850 = vmatprep.subr.bf16.mxu0 %v6654
      %6851 = vmatpush1.bf16.msra.mxu0 %v6653
      %6852 = vmatprep.subr.bf16.mxu0 %v6662
      %6853 = vmatpush1.bf16.msra.mxu0 %v6661
      %6854 = vmatprep.subr.bf16.mxu0 %v6670
      %6855 = vmatpush1.bf16.msra.mxu0 %v6669
      %6856 = vmatprep.subr.bf16.mxu0 %v6678
      %6857 = vmatpush1.bf16.msra.mxu0 %v6677
      %6858 = vmatprep.subr.bf16.mxu0 %v6686
      %6859 = vmatpush1.bf16.msra.mxu0 %v6685
      %6860 = vmatprep.subr.bf16.mxu0 0
      %6861 = vmatpush1.bf16.msra.mxu0 0
      %6862 = vmatprep.subr.bf16.mxu0 0
      %6863 = vmatpush1.bf16.msra.mxu0 0
      %6864 = vmatprep.subr.bf16.mxu0 0
      %6865 = vmatpush1.bf16.msra.mxu0 0
      %6866 = vmatprep.subr.bf16.mxu0 0
      %6867 = vmatpush1.bf16.msra.mxu0 0
      %6868 = vmatprep.subr.bf16.mxu0 0
      %6869 = vmatpush1.bf16.msra.mxu0 0
      %6870 = vmatprep.mubr.bf16.mxu0 %v6713
      %6871 = vmatmul.mubr.bf16.gmra.mrb[0].mxu0 %v6706
      %v6872 = vpop.f32.mrb[0].mxu0
      %v6873 = vadd.f32 %v6832, %v6872
      %v6874 = vpop.f32.mrb[0].mxu0
      %v6875 = vadd.f32 %v6834, %v6874
      %v6876 = vpop.f32.mrb[0].mxu0
      %v6877 = vpop.f32.mrb[0].mxu0
      %6878 = vdwg.mxu0
      %6879 = vmatprep.subr.bf16.mxu0 %v6480
      %6880 = vmatpush1.bf16.msra.mxu0 %v6479
      %6881 = vmatprep.subr.bf16.mxu0 %v6488
      %6882 = vmatpush1.bf16.msra.mxu0 %v6487
      %6883 = vmatprep.subr.bf16.mxu0 %v6496
      %6884 = vmatpush1.bf16.msra.mxu0 %v6495
      %6885 = vmatprep.subr.bf16.mxu0 %v6504
      %6886 = vmatpush1.bf16.msra.mxu0 %v6503
      %6887 = vmatprep.subr.bf16.mxu0 %v6512
      %6888 = vmatpush1.bf16.msra.mxu0 %v6511
      %6889 = vmatprep.subr.bf16.mxu0 %v6520
      %6890 = vmatpush1.bf16.msra.mxu0 %v6519
      %6891 = vmatprep.subr.bf16.mxu0 %v6528
      %6892 = vmatpush1.bf16.msra.mxu0 %v6527
      %6893 = vmatprep.subr.bf16.mxu0 %v6536
      %6894 = vmatpush1.bf16.msra.mxu0 %v6535
      %6895 = vmatprep.subr.bf16.mxu0 %v6544
      %6896 = vmatpush1.bf16.msra.mxu0 %v6543
      %6897 = vmatprep.subr.bf16.mxu0 %v6552
      %6898 = vmatpush1.bf16.msra.mxu0 %v6551
      %6899 = vmatprep.subr.bf16.mxu0 %v6560
      %6900 = vmatpush1.bf16.msra.mxu0 %v6559
      %6901 = vmatprep.subr.bf16.mxu0 %v6568
      %6902 = vmatpush1.bf16.msra.mxu0 %v6567
      %6903 = vmatprep.subr.bf16.mxu0 %v6576
      %6904 = vmatpush1.bf16.msra.mxu0 %v6575
      %6905 = vmatprep.subr.bf16.mxu0 %v6584
      %6906 = vmatpush1.bf16.msra.mxu0 %v6583
      %6907 = vmatprep.subr.bf16.mxu0 %v6592
      %6908 = vmatpush1.bf16.msra.mxu0 %v6591
      %6909 = vmatprep.subr.bf16.mxu0 %v6600
      %6910 = vmatpush1.bf16.msra.mxu0 %v6599
      %6911 = vmatprep.mubr.bf16.mxu0 %v6707
      %6912 = vmatmul.mubr.bf16.gmra.mrb[0].mxu0 %v6699
      %v6913 = vpop.f32.mrb[0].mxu0
      %v6914 = vadd.f32 0.0, %v6913
      %v6915 = vpop.f32.mrb[0].mxu0
      %v6916 = vadd.f32 0.0, %v6915
      %v6917 = vpop.f32.mrb[0].mxu0
      %v6918 = vpop.f32.mrb[0].mxu0
      %6919 = vdwg.mxu0
      %6920 = vmatprep.subr.bf16.mxu0 %v6608
      %6921 = vmatpush1.bf16.msra.mxu0 %v6607
      %6922 = vmatprep.subr.bf16.mxu0 %v6616
      %6923 = vmatpush1.bf16.msra.mxu0 %v6615
      %6924 = vmatprep.subr.bf16.mxu0 %v6624
      %6925 = vmatpush1.bf16.msra.mxu0 %v6623
      %6926 = vmatprep.subr.bf16.mxu0 %v6632
      %6927 = vmatpush1.bf16.msra.mxu0 %v6631
      %6928 = vmatprep.subr.bf16.mxu0 %v6640
      %6929 = vmatpush1.bf16.msra.mxu0 %v6639
      %6930 = vmatprep.subr.bf16.mxu0 %v6648
      %6931 = vmatpush1.bf16.msra.mxu0 %v6647
      %6932 = vmatprep.subr.bf16.mxu0 %v6656
      %6933 = vmatpush1.bf16.msra.mxu0 %v6655
      %6934 = vmatprep.subr.bf16.mxu0 %v6664
      %6935 = vmatpush1.bf16.msra.mxu0 %v6663
      %6936 = vmatprep.subr.bf16.mxu0 %v6672
      %6937 = vmatpush1.bf16.msra.mxu0 %v6671
      %6938 = vmatprep.subr.bf16.mxu0 %v6680
      %6939 = vmatpush1.bf16.msra.mxu0 %v6679
      %6940 = vmatprep.subr.bf16.mxu0 %v6688
      %6941 = vmatpush1.bf16.msra.mxu0 %v6687
      %6942 = vmatprep.subr.bf16.mxu0 0
      %6943 = vmatpush1.bf16.msra.mxu0 0
      %6944 = vmatprep.subr.bf16.mxu0 0
      %6945 = vmatpush1.bf16.msra.mxu0 0
      %6946 = vmatprep.subr.bf16.mxu0 0
      %6947 = vmatpush1.bf16.msra.mxu0 0
      %6948 = vmatprep.subr.bf16.mxu0 0
      %6949 = vmatpush1.bf16.msra.mxu0 0
      %6950 = vmatprep.subr.bf16.mxu0 0
      %6951 = vmatpush1.bf16.msra.mxu0 0
      %6952 = vmatprep.mubr.bf16.mxu0 %v6713
      %6953 = vmatmul.mubr.bf16.gmra.mrb[0].mxu0 %v6706
      %v6954 = vpop.f32.mrb[0].mxu0
      %v6955 = vadd.f32 %v6914, %v6954
      %v6956 = vpop.f32.mrb[0].mxu0
      %v6957 = vadd.f32 %v6916, %v6956
      %v6958 = vpop.f32.mrb[0].mxu0
      %v6959 = vpop.f32.mrb[0].mxu0
      %6960 = vdwg.mxu0
      %6961 = vmatprep.subr.bf16.mxu0 %v6482
      %6962 = vmatpush1.bf16.msra.mxu0 %v6481
      %6963 = vmatprep.subr.bf16.mxu0 %v6490
      %6964 = vmatpush1.bf16.msra.mxu0 %v6489
      %6965 = vmatprep.subr.bf16.mxu0 %v6498
      %6966 = vmatpush1.bf16.msra.mxu0 %v6497
      %6967 = vmatprep.subr.bf16.mxu0 %v6506
      %6968 = vmatpush1.bf16.msra.mxu0 %v6505
      %6969 = vmatprep.subr.bf16.mxu0 %v6514
      %6970 = vmatpush1.bf16.msra.mxu0 %v6513
      %6971 = vmatprep.subr.bf16.mxu0 %v6522
      %6972 = vmatpush1.bf16.msra.mxu0 %v6521
      %6973 = vmatprep.subr.bf16.mxu0 %v6530
      %6974 = vmatpush1.bf16.msra.mxu0 %v6529
      %6975 = vmatprep.subr.bf16.mxu0 %v6538
      %6976 = vmatpush1.bf16.msra.mxu0 %v6537
      %6977 = vmatprep.subr.bf16.mxu0 %v6546
      %6978 = vmatpush1.bf16.msra.mxu0 %v6545
      %6979 = vmatprep.subr.bf16.mxu0 %v6554
      %6980 = vmatpush1.bf16.msra.mxu0 %v6553
      %6981 = vmatprep.subr.bf16.mxu0 %v6562
      %6982 = vmatpush1.bf16.msra.mxu0 %v6561
      %6983 = vmatprep.subr.bf16.mxu0 %v6570
      %6984 = vmatpush1.bf16.msra.mxu0 %v6569
      %6985 = vmatprep.subr.bf16.mxu0 %v6578
      %6986 = vmatpush1.bf16.msra.mxu0 %v6577
      %6987 = vmatprep.subr.bf16.mxu0 %v6586
      %6988 = vmatpush1.bf16.msra.mxu0 %v6585
      %6989 = vmatprep.subr.bf16.mxu0 %v6594
      %6990 = vmatpush1.bf16.msra.mxu0 %v6593
      %6991 = vmatprep.subr.bf16.mxu0 %v6602
      %6992 = vmatpush1.bf16.msra.mxu0 %v6601
      %6993 = vmatprep.mubr.bf16.mxu0 %v6707
      %6994 = vmatmul.mubr.bf16.gmra.mrb[0].mxu0 %v6699
      %v6995 = vpop.f32.mrb[0].mxu0
      %v6996 = vadd.f32 0.0, %v6995
      %v6997 = vpop.f32.mrb[0].mxu0
      %v6998 = vadd.f32 0.0, %v6997
      %v6999 = vpop.f32.mrb[0].mxu0
      %v7000 = vpop.f32.mrb[0].mxu0
      %7001 = vdwg.mxu0
      %7002 = vmatprep.subr.bf16.mxu0 %v6610
      %7003 = vmatpush1.bf16.msra.mxu0 %v6609
      %7004 = vmatprep.subr.bf16.mxu0 %v6618
      %7005 = vmatpush1.bf16.msra.mxu0 %v6617
      %7006 = vmatprep.subr.bf16.mxu0 %v6626
      %7007 = vmatpush1.bf16.msra.mxu0 %v6625
      %7008 = vmatprep.subr.bf16.mxu0 %v6634
      %7009 = vmatpush1.bf16.msra.mxu0 %v6633
      %7010 = vmatprep.subr.bf16.mxu0 %v6642
      %7011 = vmatpush1.bf16.msra.mxu0 %v6641
      %7012 = vmatprep.subr.bf16.mxu0 %v6650
      %7013 = vmatpush1.bf16.msra.mxu0 %v6649
      %7014 = vmatprep.subr.bf16.mxu0 %v6658
      %7015 = vmatpush1.bf16.msra.mxu0 %v6657
      %7016 = vmatprep.subr.bf16.mxu0 %v6666
      %7017 = vmatpush1.bf16.msra.mxu0 %v6665
      %7018 = vmatprep.subr.bf16.mxu0 %v6674
      %7019 = vmatpush1.bf16.msra.mxu0 %v6673
      %7020 = vmatprep.subr.bf16.mxu0 %v6682
      %7021 = vmatpush1.bf16.msra.mxu0 %v6681
      %7022 = vmatprep.subr.bf16.mxu0 %v6690
      %7023 = vmatpush1.bf16.msra.mxu0 %v6689
      %7024 = vmatprep.subr.bf16.mxu0 0
      %7025 = vmatpush1.bf16.msra.mxu0 0
      %7026 = vmatprep.subr.bf16.mxu0 0
      %7027 = vmatpush1.bf16.msra.mxu0 0
      %7028 = vmatprep.subr.bf16.mxu0 0
      %7029 = vmatpush1.bf16.msra.mxu0 0
      %7030 = vmatprep.subr.bf16.mxu0 0
      %7031 = vmatpush1.bf16.msra.mxu0 0
      %7032 = vmatprep.subr.bf16.mxu0 0
      %7033 = vmatpush1.bf16.msra.mxu0 0
      %7034 = vmatprep.mubr.bf16.mxu0 %v6713
      %7035 = vmatmul.mubr.bf16.gmra.mrb[0].mxu0 %v6706
      %v7036 = vpop.f32.mrb[0].mxu0
      %v7037 = vadd.f32 %v6996, %v7036
      %v7038 = vpop.f32.mrb[0].mxu0
      %v7039 = vadd.f32 %v6998, %v7038
      %v7040 = vpop.f32.mrb[0].mxu0
      %v7041 = vpop.f32.mrb[0].mxu0
      %7042 = vdwg.mxu0
      %v7043 = vmul.f32 %v6791, %v2452
      %v7044 = vmul.f32 %v6793, %v2456
      %v7045 = vmul.f32 %v6873, %v2460
      %v7046 = vmul.f32 %v6875, %v2464
      %v7047 = vmul.f32 %v6955, %v2468
      %v7048 = vmul.f32 %v6957, %v2472
      %v7049 = vmul.f32 %v7037, %v2476
      %v7050 = vmul.f32 %v7039, %v2480
      %vm7051 = vcmask 1043456
      %v7052 = vsel %vm7051, %v7043, 0.0
      %v7053 = vsel %vm7051, %v7044, 0.0
      %v7054 = vadd.f32 %v7052, %v7053
      %v7055 = vsel %vm7051, %v7045, 0.0
      %v7056 = vadd.f32 %v7054, %v7055
      %v7057 = vsel %vm7051, %v7046, 0.0
      %v7058 = vadd.f32 %v7056, %v7057
      %v7059 = vsel %vm7051, %v7047, 0.0
      %v7060 = vadd.f32 %v7058, %v7059
      %v7061 = vsel %vm7051, %v7048, 0.0
      %v7062 = vadd.f32 %v7060, %v7061
      %v7063 = vsel %vm7051, %v7049, 0.0
      %v7064 = vadd.f32 %v7062, %v7063
      %v7065 = vsel %vm7051, %v7050, 0.0
      %v7066 = vadd.f32 %v7064, %v7065
      %7067 = vadd.xlane.f32.xlu0 %v7066
      %v7068 = vpop.xlane.xlu0 %7067
      %v7069 = vmul.f32 %v7043, %v7043
      %v7070 = vmul.f32 %v7044, %v7044
      %v7071 = vmul.f32 %v7045, %v7045
      %v7072 = vmul.f32 %v7046, %v7046
      %v7073 = vmul.f32 %v7047, %v7047
      %v7074 = vmul.f32 %v7048, %v7048
      %v7075 = vmul.f32 %v7049, %v7049
      %v7076 = vmul.f32 %v7050, %v7050
      %v7077 = vsel %vm7051, %v7069, 0.0
      %v7078 = vsel %vm7051, %v7070, 0.0
      %v7079 = vadd.f32 %v7077, %v7078
      %v7080 = vsel %vm7051, %v7071, 0.0
      %v7081 = vadd.f32 %v7079, %v7080
      %v7082 = vsel %vm7051, %v7072, 0.0
      %v7083 = vadd.f32 %v7081, %v7082
      %v7084 = vsel %vm7051, %v7073, 0.0
      %v7085 = vadd.f32 %v7083, %v7084
      %v7086 = vsel %vm7051, %v7074, 0.0
      %v7087 = vadd.f32 %v7085, %v7086
      %v7088 = vsel %vm7051, %v7075, 0.0
      %v7089 = vadd.f32 %v7087, %v7088
      %v7090 = vsel %vm7051, %v7076, 0.0
      %v7091 = vadd.f32 %v7089, %v7090
      %7092 = vadd.xlane.f32.xlu0 %v7091
      %v7093 = vpop.xlane.xlu0 %7092
      %v7094 = vmul.f32 %v7068, 0.001953125
      %v7095 = vmul.f32 %v7093, 0.001953125
      %v7096 = vmul.f32 %v7094, %v7094
      %v7097 = vsub.f32 %v7095, %v7096
      %v7098 = vsub.f32 %v6791, %v7094
      %v7099 = vsub.f32 %v6793, %v7094
      %v7100 = vsub.f32 %v6873, %v7094
      %v7101 = vsub.f32 %v6875, %v7094
      %v7102 = vsub.f32 %v6955, %v7094
      %v7103 = vsub.f32 %v6957, %v7094
      %v7104 = vsub.f32 %v7037, %v7094
      %v7105 = vsub.f32 %v7039, %v7094
      %v7106 = vadd.f32 %v7097, 1e-05
      %v7107 = vrsqrt.pop %v7106
      %v7108 = vmul.f32 %v7098, %v7107
      %v7109 = vmul.f32 %v7099, %v7107
      %v7110 = vmul.f32 %v7100, %v7107
      %v7111 = vmul.f32 %v7101, %v7107
      %v7112 = vmul.f32 %v7102, %v7107
      %v7113 = vmul.f32 %v7103, %v7107
      %v7114 = vmul.f32 %v7104, %v7107
      %v7115 = vmul.f32 %v7105, %v7107
      %vm7116 = vcmp.ge.f32.partialorder %v7108, 0.0
      %vm7117 = vcmp.ge.f32.partialorder %v7109, 0.0
      %vm7118 = vcmp.ge.f32.partialorder %v7110, 0.0
      %vm7119 = vcmp.ge.f32.partialorder %v7111, 0.0
      %vm7120 = vcmp.ge.f32.partialorder %v7112, 0.0
      %vm7121 = vcmp.ge.f32.partialorder %v7113, 0.0
      %vm7122 = vcmp.ge.f32.partialorder %v7114, 0.0
      %vm7123 = vcmp.ge.f32.partialorder %v7115, 0.0
      %v7124 = vmul.f32 %v7108, 0.05
      %v7125 = vmul.f32 %v7109, 0.05
      %v7126 = vmul.f32 %v7110, 0.05
      %v7127 = vmul.f32 %v7111, 0.05
      %v7128 = vmul.f32 %v7112, 0.05
      %v7129 = vmul.f32 %v7113, 0.05
      %v7130 = vmul.f32 %v7114, 0.05
      %v7131 = vmul.f32 %v7115, 0.05
      %v7132 = vsel %vm7116, %v7108, %v7124
      %v7133 = vsel %vm7117, %v7109, %v7125
      %v7134 = vsel %vm7118, %v7110, %v7126
      %v7135 = vsel %vm7119, %v7111, %v7127
      %v7136 = vsel %vm7120, %v7112, %v7128
      %v7137 = vsel %vm7121, %v7113, %v7129
      %v7138 = vsel %vm7122, %v7114, %v7130
      %v7139 = vsel %vm7123, %v7115, %v7131
      %v7140 = vmul.f32 %v7132, %v2452
      %v7141 = vmul.f32 %v7133, %v2456
      %v7142 = vmul.f32 %v7134, %v2460
      %v7143 = vmul.f32 %v7135, %v2464
      %v7144 = vmul.f32 %v7136, %v2468
      %v7145 = vmul.f32 %v7137, %v2472
      %v7146 = vmul.f32 %v7138, %v2476
      %v7147 = vmul.f32 %v7139, %v2480
      %v7156 = vcombine.low %v7140, %v7141
      %v7157 = vcombine.low %v7142, %v7143
      %v7158 = vcombine.low %v7144, %v7145
      %v7159 = vcombine.low %v7146, %v7147
      %7164 = vst [vmem:[%s224] sm:$0xff] %v7156
      %7165 = vst [vmem:[%s224 + $0x8] sm:$0xff] %v7157
      %7166 = vst [vmem:[%s224 + $0x10] sm:$0xff] %v7158
      %7167 = vst [vmem:[%s224 + $0x18] sm:$0xff] %v7159
      %p7168 = scmp.lt.s32.totalorder %s16, 1
      %s7169 = scalar_select %p7168, %s16, 1
      %s7170 = smul.addr %s7169, 8
      %s7171 = smul.addr %s7170, 4
      %s7172 = scalar_lea.vmem %s5, %s7171
      // Predicated region
      $region41: #{upconv_block.1} parent=39 // pred_check
        %p7173 = pneg %p144
      $region42: #{upconv_block.1} parent=39 // pred_check_branch
        %7175 = sbr.rel (%p7173) target = $region44
      $region43: #{upconv_block.1} parent=39 // pred_region
        _
      $region44: #{upconv_block.1} parent=39 // pred_fallthru
        _
    $region40: #{upconv_block.1} parent=5 // pred_fallthru
      _
    %p7176 = scmp.le.s32.totalorder 2, %s11
    // Predicated region
    $region45: #{upconv_block.1} parent=5 // pred_check
      %p7177 = pneg %p7176
    $region46: #{upconv_block.1} parent=5 // pred_check_branch
      %7179 = sbr.rel (%p7177) target = $region48
    $region47: #{upconv_block.1} parent=5 // pred_region
      %s7180 = ssub.s32 %s11, 2
      // Predicated region
      $region49: #{upconv_block.1} parent=47 // pred_check
        %p7181 = pneg %p150
      $region50: #{upconv_block.1} parent=47 // pred_check_branch
        %7183 = sbr.rel (%p7181) target = $region52
      $region51: #{upconv_block.1} parent=47 // pred_region
        %p7184 = scmp.lt.s32.totalorder %s17, 1
        %s7185 = scalar_select %p7184, %s17, 1
        %s7186 = smul.addr %s7185, 8
        %s7187 = smul.addr %s7186, 4
        %s7188 = scalar_lea.vmem %s5, %s7187
      $region52: #{upconv_block.1} parent=47 // pred_fallthru
        _
    $region48: #{upconv_block.1} parent=5 // pred_fallthru
      _
  $region6: #{upconv_block.1} parent=0 // loop_footer
    %s15 = sadd.s32 1, %s11
  $region7: #{upconv_block.1} parent=0 // loop_footer_branch
    %10 = sbr.rel target = $region3
  $region8: #{upconv_block.1} parent=0 // loop_exit
    _

</llo_original>
